<compile_context>
chip_gen: v7x
topology: tpu7x:2x2x1
jax: 0.10.0
libtpu: 0.0.40
codegen_flags: <defaults>
</compile_context>

<pallas_src>
import jax
import jax.numpy as jnp
from jax.experimental import pallas as pl
from jax.experimental.pallas import tpu as pltpu


ENC_CHANNELS = [(1, 16), (16, 32), (32, 64), (64, 128), (128, 256)]
DEC_CHANNELS = [(256, 128), (128, 64), (64, 32), (32, 16), (16, 1)]
KSIZE = 3
LEAKY_SLOPE = 0.1


# ----------------------------------------------------------------------------
# In-kernel helpers (pure value math: iota / where / dot — no scratch, no
# gather/scatter/strided ops, so lowering is maximally robust).
# ----------------------------------------------------------------------------
def _conv_sel(l_out, l_in, k):
    """0/1 matrix S (l_out, l_in): S[o, i] = 1 iff i == 2*o + k - 1.
    Conv1d stride=2, padding=1, kernel=3; out-of-range i simply never matches,
    which implements the zero padding for free."""
    o = jax.lax.broadcasted_iota(jnp.int32, (l_out, l_in), 0)
    i = jax.lax.broadcasted_iota(jnp.int32, (l_out, l_in), 1)
    return jnp.where(i == 2 * o + (k - 1), 1.0, 0.0).astype(jnp.float32)


def _tconv_sel(l_out, l_in, k):
    """0/1 matrix S (l_out, l_in): S[t, i] = 1 iff 2*i == t + 1 - k.
    ConvTranspose1d stride=2, padding=1, kernel=3 (scatter form y[2i-1+k] += x[i]W[k])."""
    t = jax.lax.broadcasted_iota(jnp.int32, (l_out, l_in), 0)
    i = jax.lax.broadcasted_iota(jnp.int32, (l_out, l_in), 1)
    return jnp.where(2 * i == t + (1 - k), 1.0, 0.0).astype(jnp.float32)


def _tap_gemm_layer(h, w_ref, b_ref, sels):
    """y = sum_k (sels[k] @ h) @ W_k + b.

    h:      (L_in, C_in)  f32 activation (NLC, one sample)
    w_ref:  (K, C_in, C_out) bf16 weight slabs
    b_ref:  (1, C_out)    f32 bias
    sels:   K selection matrices (L_out, L_in) f32
    Channel-mix GEMMs run with bf16 inputs + f32 accumulation on the MXU.
    """
    acc = None
    for k in range(KSIZE):
        tap = jnp.dot(sels[k], h, preferred_element_type=jnp.float32)      # exact select
        part = jnp.dot(tap.astype(jnp.bfloat16), w_ref[k],
                       preferred_element_type=jnp.float32)
        acc = part if acc is None else acc + part
    return acc + b_ref[...]                                                # broadcast bias


def _leaky(y):
    return jnp.where(y >= 0.0, y, LEAKY_SLOPE * y)


# ----------------------------------------------------------------------------
# Fused whole-network kernel (one grid step == one batch sample)
# ----------------------------------------------------------------------------
def _make_kernel(l_in):
    # Static per-layer length schedule.
    enc_lens = []
    l = l_in
    for _ in ENC_CHANNELS:
        lo = (l + 2 * 1 - KSIZE) // 2 + 1          # PyTorch Conv1d length formula
        enc_lens.append((l, lo))
        l = lo
    dec_lens = []
    for idx in range(len(DEC_CHANNELS)):
        out_pad = 1 if idx < len(DEC_CHANNELS) - 1 else 0
        lo = (l - 1) * 2 - 2 * 1 + KSIZE + out_pad  # ConvTranspose1d length formula
        dec_lens.append((l, lo))
        l = lo
    final_len = l
    assert final_len <= l_in, (final_len, l_in)

    n_enc = len(ENC_CHANNELS)

    def kernel(x_ref, *refs):
        o_ref = refs[-1]
        wb = refs[:-1]

        h = x_ref[...].astype(jnp.float32)          # (L, 1)  NLC, one sample

        # ---- encoder: Conv1d(s=2,p=1) + LeakyReLU(0.1) + Dropout(identity) ----
        for idx in range(n_enc):
            li, lo = enc_lens[idx]
            w_ref, b_ref = wb[2 * idx], wb[2 * idx + 1]
            sels = [_conv_sel(lo, li, k) for k in range(KSIZE)]
            h = _leaky(_tap_gemm_layer(h, w_ref, b_ref, sels))

        # ---- decoder: ConvTranspose1d(s=2,p=1) + LeakyReLU / Sigmoid ----------
        for idx in range(len(DEC_CHANNELS)):
            li, lo = dec_lens[idx]
            w_ref = wb[2 * (n_enc + idx)]
            b_ref = wb[2 * (n_enc + idx) + 1]
            last = idx == len(DEC_CHANNELS) - 1
            # Last layer: compute l_in rows directly so the final right-pad back to
            # the input length is just a mask (no concat); extra rows are zeroed
            # AFTER the sigmoid, matching F.pad(sigmoid(...), (0, pad)).
            eff_lo = l_in if last else lo
            sels = [_tconv_sel(eff_lo, li, k) for k in range(KSIZE)]
            y = _tap_gemm_layer(h, w_ref, b_ref, sels)
            if last:
                y = 1.0 / (1.0 + jnp.exp(-y))                      # sigmoid (EUP)
                row = jax.lax.broadcasted_iota(jnp.int32, y.shape, 0)
                y = jnp.where(row < lo, y, 0.0)                    # F.pad tail == 0
            else:
                y = _leaky(y)
            h = y

        o_ref[...] = h.astype(o_ref.dtype)                         # (L, 1)

    return kernel


# ----------------------------------------------------------------------------
# One-time parameter preprocessing (hoisted weight prep)
# ----------------------------------------------------------------------------
def preprocess_params(params):
    """Per layer: weights -> (K, C_in, C_out) bf16 tap slabs, bias -> (1, C_out) f32."""
    enc_params, dec_params = params
    flat = []
    for (w, b) in enc_params:      # PyTorch Conv1d layout: (C_out, C_in, K)
        flat.append(jnp.transpose(w, (2, 1, 0)).astype(jnp.bfloat16))
        flat.append(b.reshape(1, -1).astype(jnp.float32))
    for (w, b) in dec_params:      # PyTorch ConvTranspose1d layout: (C_in, C_out, K)
        flat.append(jnp.transpose(w, (2, 0, 1)).astype(jnp.bfloat16))
        flat.append(b.reshape(1, -1).astype(jnp.float32))
    return tuple(flat)


# ----------------------------------------------------------------------------
# Forward pass (single fused pallas_call)
# ----------------------------------------------------------------------------
def autoencoder_forward(x, flat_params):
    """x: (B, 1, L) float32 (NCL, PyTorch layout) -> (B, 1, L)."""
    B, _, L = x.shape
    x_nlc = jnp.transpose(x, (0, 2, 1)).astype(jnp.float32)       # (B, L, 1)

    kernel = _make_kernel(L)

    in_specs = [pl.BlockSpec((None, L, 1), lambda b: (b, 0, 0))]  # one sample per step
    for p in flat_params:                                         # full weights, resident
        in_specs.append(pl.BlockSpec(p.shape, lambda b, _n=p.ndim: (0,) * _n))

    out_nlc = pl.pallas_call(
        kernel,
        out_shape=jax.ShapeDtypeStruct((B, L, 1), jnp.float32),
        grid=(B,),
        in_specs=in_specs,
        out_specs=pl.BlockSpec((None, L, 1), lambda b: (b, 0, 0)),
        compiler_params=pltpu.CompilerParams(
            dimension_semantics=("parallel",),    # v7x: both TensorCores split the batch
        ),
    )(x_nlc, *flat_params)

    return jnp.transpose(out_nlc, (0, 2, 1))                      # back to NCL


# ----------------------------------------------------------------------------
# Parameter init (PyTorch-like uniform init)
# ----------------------------------------------------------------------------
def init_params(key):
    enc, dec = [], []
    for (cin, cout) in ENC_CHANNELS:
        key, kw, kb = jax.random.split(key, 3)
        bound = 1.0 / jnp.sqrt(cin * KSIZE)
        w = jax.random.uniform(kw, (cout, cin, KSIZE), jnp.float32, -bound, bound)
        bb = jax.random.uniform(kb, (cout,), jnp.float32, -bound, bound)
        enc.append((w, bb))
    for (cin, cout) in DEC_CHANNELS:
        key, kw, kb = jax.random.split(key, 3)
        bound = 1.0 / jnp.sqrt(cin * KSIZE)
        # PyTorch ConvTranspose1d weight layout: (C_in, C_out, K)
        w = jax.random.uniform(kw, (cin, cout, KSIZE), jnp.float32, -bound, bound)
        bb = jax.random.uniform(kb, (cout,), jnp.float32, -bound, bound)
        dec.append((w, bb))
    return enc, dec


# ----------------------------------------------------------------------------
if __name__ == "__main__":
    key = jax.random.PRNGKey(0)
    key, kx = jax.random.split(key)

    # Small input consistent with the module: batch=2, 1 channel, length=64 (NCL).
    x = jax.random.uniform(kx, (2, 1, 64), jnp.float32)

    params = init_params(key)
    flat = preprocess_params(params)     # one-time (hoisted) weight prep

    fwd = jax.jit(autoencoder_forward)
    out = fwd(x, flat)
    jax.block_until_ready(out)

    assert out.shape == x.shape, (out.shape, x.shape)
    assert bool(jnp.all(jnp.isfinite(out)))
    print("KERNEL_OK")
</pallas_src>

<mosaic_0001>
module attributes {stable_mosaic.version = 11 : i64} {
  func.func @kernel(%arg0: i32, %arg1: memref<1x64x1xf32, #tpu.memory_space<vmem>>, %arg2: memref<3x1x16xbf16, #tpu.memory_space<vmem>>, %arg3: memref<1x16xf32, #tpu.memory_space<vmem>>, %arg4: memref<3x16x32xbf16, #tpu.memory_space<vmem>>, %arg5: memref<1x32xf32, #tpu.memory_space<vmem>>, %arg6: memref<3x32x64xbf16, #tpu.memory_space<vmem>>, %arg7: memref<1x64xf32, #tpu.memory_space<vmem>>, %arg8: memref<3x64x128xbf16, #tpu.memory_space<vmem>>, %arg9: memref<1x128xf32, #tpu.memory_space<vmem>>, %arg10: memref<3x128x256xbf16, #tpu.memory_space<vmem>>, %arg11: memref<1x256xf32, #tpu.memory_space<vmem>>, %arg12: memref<3x256x128xbf16, #tpu.memory_space<vmem>>, %arg13: memref<1x128xf32, #tpu.memory_space<vmem>>, %arg14: memref<3x128x64xbf16, #tpu.memory_space<vmem>>, %arg15: memref<1x64xf32, #tpu.memory_space<vmem>>, %arg16: memref<3x64x32xbf16, #tpu.memory_space<vmem>>, %arg17: memref<1x32xf32, #tpu.memory_space<vmem>>, %arg18: memref<3x32x16xbf16, #tpu.memory_space<vmem>>, %arg19: memref<1x16xf32, #tpu.memory_space<vmem>>, %arg20: memref<3x16x1xbf16, #tpu.memory_space<vmem>>, %arg21: memref<1x1xf32, #tpu.memory_space<vmem>>, %arg22: memref<1x64x1xf32, #tpu.memory_space<vmem>>) attributes {dimension_semantics = [#tpu.dimension_semantics<parallel>], iteration_bounds = array<i64: 2>, scalar_prefetch = 0 : i64, scratch_operands = 0 : i64, tpu.core_type = #tpu.core_type<tc>, window_params = [{transform_indices = @transform_0, window_bounds = array<i64: 1, 64, 1>}, {pipeline_mode = #tpu.pipeline_mode<synchronous>, transform_indices = @transform_1, window_bounds = array<i64: 3, 1, 16>}, {pipeline_mode = #tpu.pipeline_mode<synchronous>, transform_indices = @transform_2, window_bounds = array<i64: 1, 16>}, {pipeline_mode = #tpu.pipeline_mode<synchronous>, transform_indices = @transform_3, window_bounds = array<i64: 3, 16, 32>}, {pipeline_mode = #tpu.pipeline_mode<synchronous>, transform_indices = @transform_4, window_bounds = array<i64: 1, 32>}, {pipeline_mode = #tpu.pipeline_mode<synchronous>, transform_indices = @transform_5, window_bounds = array<i64: 3, 32, 64>}, {pipeline_mode = #tpu.pipeline_mode<synchronous>, transform_indices = @transform_6, window_bounds = array<i64: 1, 64>}, {pipeline_mode = #tpu.pipeline_mode<synchronous>, transform_indices = @transform_7, window_bounds = array<i64: 3, 64, 128>}, {pipeline_mode = #tpu.pipeline_mode<synchronous>, transform_indices = @transform_8, window_bounds = array<i64: 1, 128>}, {pipeline_mode = #tpu.pipeline_mode<synchronous>, transform_indices = @transform_9, window_bounds = array<i64: 3, 128, 256>}, {pipeline_mode = #tpu.pipeline_mode<synchronous>, transform_indices = @transform_10, window_bounds = array<i64: 1, 256>}, {pipeline_mode = #tpu.pipeline_mode<synchronous>, transform_indices = @transform_11, window_bounds = array<i64: 3, 256, 128>}, {pipeline_mode = #tpu.pipeline_mode<synchronous>, transform_indices = @transform_12, window_bounds = array<i64: 1, 128>}, {pipeline_mode = #tpu.pipeline_mode<synchronous>, transform_indices = @transform_13, window_bounds = array<i64: 3, 128, 64>}, {pipeline_mode = #tpu.pipeline_mode<synchronous>, transform_indices = @transform_14, window_bounds = array<i64: 1, 64>}, {pipeline_mode = #tpu.pipeline_mode<synchronous>, transform_indices = @transform_15, window_bounds = array<i64: 3, 64, 32>}, {pipeline_mode = #tpu.pipeline_mode<synchronous>, transform_indices = @transform_16, window_bounds = array<i64: 1, 32>}, {pipeline_mode = #tpu.pipeline_mode<synchronous>, transform_indices = @transform_17, window_bounds = array<i64: 3, 32, 16>}, {pipeline_mode = #tpu.pipeline_mode<synchronous>, transform_indices = @transform_18, window_bounds = array<i64: 1, 16>}, {pipeline_mode = #tpu.pipeline_mode<synchronous>, transform_indices = @transform_19, window_bounds = array<i64: 3, 16, 1>}, {pipeline_mode = #tpu.pipeline_mode<synchronous>, transform_indices = @transform_20, window_bounds = array<i64: 1, 1>}, {transform_indices = @transform_21, window_bounds = array<i64: 1, 64, 1>}]} {
    %c0 = arith.constant 0 : index
    %c0_0 = arith.constant 0 : index
    %c0_1 = arith.constant 0 : index
    %0 = vector.load %arg1[%c0, %c0_0, %c0_1] : memref<1x64x1xf32, #tpu.memory_space<vmem>>, vector<1x64x1xf32>
    %1 = vector.shape_cast %0 : vector<1x64x1xf32> to vector<64x1xf32>
    %2 = tpu.iota {dimensions = array<i32: 0>} : vector<32x64xi32>
    %3 = tpu.iota {dimensions = array<i32: 1>} : vector<32x64xi32>
    %c2_i32 = arith.constant 2 : i32
    %4 = vector.broadcast %c2_i32 : i32 to vector<32x64xi32>
    %5 = arith.muli %4, %2 : vector<32x64xi32>
    %c-1_i32 = arith.constant -1 : i32
    %6 = vector.broadcast %c-1_i32 : i32 to vector<32x64xi32>
    %7 = arith.addi %5, %6 : vector<32x64xi32>
    %8 = arith.cmpi eq, %3, %7 : vector<32x64xi32>
    %cst = arith.constant 1.000000e+00 : f32
    %cst_2 = arith.constant 0.000000e+00 : f32
    %9 = vector.broadcast %cst : f32 to vector<32x64xf32>
    %10 = vector.broadcast %cst_2 : f32 to vector<32x64xf32>
    %11 = arith.select %8, %9, %10 : vector<32x64xi1>, vector<32x64xf32>
    %12 = tpu.iota {dimensions = array<i32: 0>} : vector<32x64xi32>
    %13 = tpu.iota {dimensions = array<i32: 1>} : vector<32x64xi32>
    %c2_i32_3 = arith.constant 2 : i32
    %14 = vector.broadcast %c2_i32_3 : i32 to vector<32x64xi32>
    %15 = arith.muli %14, %12 : vector<32x64xi32>
    %c0_i32 = arith.constant 0 : i32
    %16 = vector.broadcast %c0_i32 : i32 to vector<32x64xi32>
    %17 = arith.addi %15, %16 : vector<32x64xi32>
    %18 = arith.cmpi eq, %13, %17 : vector<32x64xi32>
    %cst_4 = arith.constant 1.000000e+00 : f32
    %cst_5 = arith.constant 0.000000e+00 : f32
    %19 = vector.broadcast %cst_4 : f32 to vector<32x64xf32>
    %20 = vector.broadcast %cst_5 : f32 to vector<32x64xf32>
    %21 = arith.select %18, %19, %20 : vector<32x64xi1>, vector<32x64xf32>
    %22 = tpu.iota {dimensions = array<i32: 0>} : vector<32x64xi32>
    %23 = tpu.iota {dimensions = array<i32: 1>} : vector<32x64xi32>
    %c2_i32_6 = arith.constant 2 : i32
    %24 = vector.broadcast %c2_i32_6 : i32 to vector<32x64xi32>
    %25 = arith.muli %24, %22 : vector<32x64xi32>
    %c1_i32 = arith.constant 1 : i32
    %26 = vector.broadcast %c1_i32 : i32 to vector<32x64xi32>
    %27 = arith.addi %25, %26 : vector<32x64xi32>
    %28 = arith.cmpi eq, %23, %27 : vector<32x64xi32>
    %cst_7 = arith.constant 1.000000e+00 : f32
    %cst_8 = arith.constant 0.000000e+00 : f32
    %29 = vector.broadcast %cst_7 : f32 to vector<32x64xf32>
    %30 = vector.broadcast %cst_8 : f32 to vector<32x64xf32>
    %31 = arith.select %28, %29, %30 : vector<32x64xi1>, vector<32x64xf32>
    %cst_9 = arith.constant dense<0.000000e+00> : vector<32x1xf32>
    %32 = tpu.matmul %11, %1, %cst_9 {dimension_numbers = #tpu.dot_dimension_numbers<[1], [0], [0], [1], [0, 0, 1, 1], [], []>} : vector<32x64xf32>, vector<64x1xf32>, vector<32x1xf32> -> vector<32x1xf32>
    %33 = arith.truncf %32 : vector<32x1xf32> to vector<32x1xbf16>
    %c0_10 = arith.constant 0 : index
    %c0_11 = arith.constant 0 : index
    %c0_12 = arith.constant 0 : index
    %34 = vector.load %arg2[%c0_10, %c0_11, %c0_12] : memref<3x1x16xbf16, #tpu.memory_space<vmem>>, vector<1x1x16xbf16>
    %35 = vector.shape_cast %34 : vector<1x1x16xbf16> to vector<1x16xbf16>
    %cst_13 = arith.constant dense<0.000000e+00> : vector<32x16xf32>
    %36 = tpu.matmul %33, %35, %cst_13 {dimension_numbers = #tpu.dot_dimension_numbers<[1], [0], [0], [1], [0, 0, 1, 1], [], []>} : vector<32x1xbf16>, vector<1x16xbf16>, vector<32x16xf32> -> vector<32x16xf32>
    %cst_14 = arith.constant dense<0.000000e+00> : vector<32x1xf32>
    %37 = tpu.matmul %21, %1, %cst_14 {dimension_numbers = #tpu.dot_dimension_numbers<[1], [0], [0], [1], [0, 0, 1, 1], [], []>} : vector<32x64xf32>, vector<64x1xf32>, vector<32x1xf32> -> vector<32x1xf32>
    %38 = arith.truncf %37 : vector<32x1xf32> to vector<32x1xbf16>
    %c1 = arith.constant 1 : index
    %c0_15 = arith.constant 0 : index
    %c0_16 = arith.constant 0 : index
    %39 = vector.load %arg2[%c1, %c0_15, %c0_16] : memref<3x1x16xbf16, #tpu.memory_space<vmem>>, vector<1x1x16xbf16>
    %40 = vector.shape_cast %39 : vector<1x1x16xbf16> to vector<1x16xbf16>
    %cst_17 = arith.constant dense<0.000000e+00> : vector<32x16xf32>
    %41 = tpu.matmul %38, %40, %cst_17 {dimension_numbers = #tpu.dot_dimension_numbers<[1], [0], [0], [1], [0, 0, 1, 1], [], []>} : vector<32x1xbf16>, vector<1x16xbf16>, vector<32x16xf32> -> vector<32x16xf32>
    %42 = arith.addf %36, %41 : vector<32x16xf32>
    %cst_18 = arith.constant dense<0.000000e+00> : vector<32x1xf32>
    %43 = tpu.matmul %31, %1, %cst_18 {dimension_numbers = #tpu.dot_dimension_numbers<[1], [0], [0], [1], [0, 0, 1, 1], [], []>} : vector<32x64xf32>, vector<64x1xf32>, vector<32x1xf32> -> vector<32x1xf32>
    %44 = arith.truncf %43 : vector<32x1xf32> to vector<32x1xbf16>
    %c2 = arith.constant 2 : index
    %c0_19 = arith.constant 0 : index
    %c0_20 = arith.constant 0 : index
    %45 = vector.load %arg2[%c2, %c0_19, %c0_20] : memref<3x1x16xbf16, #tpu.memory_space<vmem>>, vector<1x1x16xbf16>
    %46 = vector.shape_cast %45 : vector<1x1x16xbf16> to vector<1x16xbf16>
    %cst_21 = arith.constant dense<0.000000e+00> : vector<32x16xf32>
    %47 = tpu.matmul %44, %46, %cst_21 {dimension_numbers = #tpu.dot_dimension_numbers<[1], [0], [0], [1], [0, 0, 1, 1], [], []>} : vector<32x1xbf16>, vector<1x16xbf16>, vector<32x16xf32> -> vector<32x16xf32>
    %48 = arith.addf %42, %47 : vector<32x16xf32>
    %c0_22 = arith.constant 0 : index
    %c0_23 = arith.constant 0 : index
    %49 = vector.load %arg3[%c0_22, %c0_23] : memref<1x16xf32, #tpu.memory_space<vmem>>, vector<1x16xf32>
    %50 = vector.broadcast %49 : vector<1x16xf32> to vector<32x16xf32>
    %51 = arith.addf %48, %50 : vector<32x16xf32>
    %cst_24 = arith.constant 0.000000e+00 : f32
    %52 = vector.broadcast %cst_24 : f32 to vector<32x16xf32>
    %53 = arith.cmpf oge, %51, %52 : vector<32x16xf32>
    %cst_25 = arith.constant 1.000000e-01 : f32
    %54 = vector.broadcast %cst_25 : f32 to vector<32x16xf32>
    %55 = arith.mulf %54, %51 : vector<32x16xf32>
    %56 = arith.select %53, %51, %55 : vector<32x16xi1>, vector<32x16xf32>
    %57 = tpu.iota {dimensions = array<i32: 0>} : vector<16x32xi32>
    %58 = tpu.iota {dimensions = array<i32: 1>} : vector<16x32xi32>
    %c2_i32_26 = arith.constant 2 : i32
    %59 = vector.broadcast %c2_i32_26 : i32 to vector<16x32xi32>
    %60 = arith.muli %59, %57 : vector<16x32xi32>
    %c-1_i32_27 = arith.constant -1 : i32
    %61 = vector.broadcast %c-1_i32_27 : i32 to vector<16x32xi32>
    %62 = arith.addi %60, %61 : vector<16x32xi32>
    %63 = arith.cmpi eq, %58, %62 : vector<16x32xi32>
    %cst_28 = arith.constant 1.000000e+00 : f32
    %cst_29 = arith.constant 0.000000e+00 : f32
    %64 = vector.broadcast %cst_28 : f32 to vector<16x32xf32>
    %65 = vector.broadcast %cst_29 : f32 to vector<16x32xf32>
    %66 = arith.select %63, %64, %65 : vector<16x32xi1>, vector<16x32xf32>
    %67 = tpu.iota {dimensions = array<i32: 0>} : vector<16x32xi32>
    %68 = tpu.iota {dimensions = array<i32: 1>} : vector<16x32xi32>
    %c2_i32_30 = arith.constant 2 : i32
    %69 = vector.broadcast %c2_i32_30 : i32 to vector<16x32xi32>
    %70 = arith.muli %69, %67 : vector<16x32xi32>
    %c0_i32_31 = arith.constant 0 : i32
    %71 = vector.broadcast %c0_i32_31 : i32 to vector<16x32xi32>
    %72 = arith.addi %70, %71 : vector<16x32xi32>
    %73 = arith.cmpi eq, %68, %72 : vector<16x32xi32>
    %cst_32 = arith.constant 1.000000e+00 : f32
    %cst_33 = arith.constant 0.000000e+00 : f32
    %74 = vector.broadcast %cst_32 : f32 to vector<16x32xf32>
    %75 = vector.broadcast %cst_33 : f32 to vector<16x32xf32>
    %76 = arith.select %73, %74, %75 : vector<16x32xi1>, vector<16x32xf32>
    %77 = tpu.iota {dimensions = array<i32: 0>} : vector<16x32xi32>
    %78 = tpu.iota {dimensions = array<i32: 1>} : vector<16x32xi32>
    %c2_i32_34 = arith.constant 2 : i32
    %79 = vector.broadcast %c2_i32_34 : i32 to vector<16x32xi32>
    %80 = arith.muli %79, %77 : vector<16x32xi32>
    %c1_i32_35 = arith.constant 1 : i32
    %81 = vector.broadcast %c1_i32_35 : i32 to vector<16x32xi32>
    %82 = arith.addi %80, %81 : vector<16x32xi32>
    %83 = arith.cmpi eq, %78, %82 : vector<16x32xi32>
    %cst_36 = arith.constant 1.000000e+00 : f32
    %cst_37 = arith.constant 0.000000e+00 : f32
    %84 = vector.broadcast %cst_36 : f32 to vector<16x32xf32>
    %85 = vector.broadcast %cst_37 : f32 to vector<16x32xf32>
    %86 = arith.select %83, %84, %85 : vector<16x32xi1>, vector<16x32xf32>
    %cst_38 = arith.constant dense<0.000000e+00> : vector<16x16xf32>
    %87 = tpu.matmul %66, %56, %cst_38 {dimension_numbers = #tpu.dot_dimension_numbers<[1], [0], [0], [1], [0, 0, 1, 1], [], []>} : vector<16x32xf32>, vector<32x16xf32>, vector<16x16xf32> -> vector<16x16xf32>
    %88 = arith.truncf %87 : vector<16x16xf32> to vector<16x16xbf16>
    %c0_39 = arith.constant 0 : index
    %c0_40 = arith.constant 0 : index
    %c0_41 = arith.constant 0 : index
    %89 = vector.load %arg4[%c0_39, %c0_40, %c0_41] : memref<3x16x32xbf16, #tpu.memory_space<vmem>>, vector<1x16x32xbf16>
    %90 = vector.shape_cast %89 : vector<1x16x32xbf16> to vector<16x32xbf16>
    %cst_42 = arith.constant dense<0.000000e+00> : vector<16x32xf32>
    %91 = tpu.matmul %88, %90, %cst_42 {dimension_numbers = #tpu.dot_dimension_numbers<[1], [0], [0], [1], [0, 0, 1, 1], [], []>} : vector<16x16xbf16>, vector<16x32xbf16>, vector<16x32xf32> -> vector<16x32xf32>
    %cst_43 = arith.constant dense<0.000000e+00> : vector<16x16xf32>
    %92 = tpu.matmul %76, %56, %cst_43 {dimension_numbers = #tpu.dot_dimension_numbers<[1], [0], [0], [1], [0, 0, 1, 1], [], []>} : vector<16x32xf32>, vector<32x16xf32>, vector<16x16xf32> -> vector<16x16xf32>
    %93 = arith.truncf %92 : vector<16x16xf32> to vector<16x16xbf16>
    %c1_44 = arith.constant 1 : index
    %c0_45 = arith.constant 0 : index
    %c0_46 = arith.constant 0 : index
    %94 = vector.load %arg4[%c1_44, %c0_45, %c0_46] : memref<3x16x32xbf16, #tpu.memory_space<vmem>>, vector<1x16x32xbf16>
    %95 = vector.shape_cast %94 : vector<1x16x32xbf16> to vector<16x32xbf16>
    %cst_47 = arith.constant dense<0.000000e+00> : vector<16x32xf32>
    %96 = tpu.matmul %93, %95, %cst_47 {dimension_numbers = #tpu.dot_dimension_numbers<[1], [0], [0], [1], [0, 0, 1, 1], [], []>} : vector<16x16xbf16>, vector<16x32xbf16>, vector<16x32xf32> -> vector<16x32xf32>
    %97 = arith.addf %91, %96 : vector<16x32xf32>
    %cst_48 = arith.constant dense<0.000000e+00> : vector<16x16xf32>
    %98 = tpu.matmul %86, %56, %cst_48 {dimension_numbers = #tpu.dot_dimension_numbers<[1], [0], [0], [1], [0, 0, 1, 1], [], []>} : vector<16x32xf32>, vector<32x16xf32>, vector<16x16xf32> -> vector<16x16xf32>
    %99 = arith.truncf %98 : vector<16x16xf32> to vector<16x16xbf16>
    %c2_49 = arith.constant 2 : index
    %c0_50 = arith.constant 0 : index
    %c0_51 = arith.constant 0 : index
    %100 = vector.load %arg4[%c2_49, %c0_50, %c0_51] : memref<3x16x32xbf16, #tpu.memory_space<vmem>>, vector<1x16x32xbf16>
    %101 = vector.shape_cast %100 : vector<1x16x32xbf16> to vector<16x32xbf16>
    %cst_52 = arith.constant dense<0.000000e+00> : vector<16x32xf32>
    %102 = tpu.matmul %99, %101, %cst_52 {dimension_numbers = #tpu.dot_dimension_numbers<[1], [0], [0], [1], [0, 0, 1, 1], [], []>} : vector<16x16xbf16>, vector<16x32xbf16>, vector<16x32xf32> -> vector<16x32xf32>
    %103 = arith.addf %97, %102 : vector<16x32xf32>
    %c0_53 = arith.constant 0 : index
    %c0_54 = arith.constant 0 : index
    %104 = vector.load %arg5[%c0_53, %c0_54] : memref<1x32xf32, #tpu.memory_space<vmem>>, vector<1x32xf32>
    %105 = vector.broadcast %104 : vector<1x32xf32> to vector<16x32xf32>
    %106 = arith.addf %103, %105 : vector<16x32xf32>
    %cst_55 = arith.constant 0.000000e+00 : f32
    %107 = vector.broadcast %cst_55 : f32 to vector<16x32xf32>
    %108 = arith.cmpf oge, %106, %107 : vector<16x32xf32>
    %cst_56 = arith.constant 1.000000e-01 : f32
    %109 = vector.broadcast %cst_56 : f32 to vector<16x32xf32>
    %110 = arith.mulf %109, %106 : vector<16x32xf32>
    %111 = arith.select %108, %106, %110 : vector<16x32xi1>, vector<16x32xf32>
    %112 = tpu.iota {dimensions = array<i32: 0>} : vector<8x16xi32>
    %113 = tpu.iota {dimensions = array<i32: 1>} : vector<8x16xi32>
    %c2_i32_57 = arith.constant 2 : i32
    %114 = vector.broadcast %c2_i32_57 : i32 to vector<8x16xi32>
    %115 = arith.muli %114, %112 : vector<8x16xi32>
    %c-1_i32_58 = arith.constant -1 : i32
    %116 = vector.broadcast %c-1_i32_58 : i32 to vector<8x16xi32>
    %117 = arith.addi %115, %116 : vector<8x16xi32>
    %118 = arith.cmpi eq, %113, %117 : vector<8x16xi32>
    %cst_59 = arith.constant 1.000000e+00 : f32
    %cst_60 = arith.constant 0.000000e+00 : f32
    %119 = vector.broadcast %cst_59 : f32 to vector<8x16xf32>
    %120 = vector.broadcast %cst_60 : f32 to vector<8x16xf32>
    %121 = arith.select %118, %119, %120 : vector<8x16xi1>, vector<8x16xf32>
    %122 = tpu.iota {dimensions = array<i32: 0>} : vector<8x16xi32>
    %123 = tpu.iota {dimensions = array<i32: 1>} : vector<8x16xi32>
    %c2_i32_61 = arith.constant 2 : i32
    %124 = vector.broadcast %c2_i32_61 : i32 to vector<8x16xi32>
    %125 = arith.muli %124, %122 : vector<8x16xi32>
    %c0_i32_62 = arith.constant 0 : i32
    %126 = vector.broadcast %c0_i32_62 : i32 to vector<8x16xi32>
    %127 = arith.addi %125, %126 : vector<8x16xi32>
    %128 = arith.cmpi eq, %123, %127 : vector<8x16xi32>
    %cst_63 = arith.constant 1.000000e+00 : f32
    %cst_64 = arith.constant 0.000000e+00 : f32
    %129 = vector.broadcast %cst_63 : f32 to vector<8x16xf32>
    %130 = vector.broadcast %cst_64 : f32 to vector<8x16xf32>
    %131 = arith.select %128, %129, %130 : vector<8x16xi1>, vector<8x16xf32>
    %132 = tpu.iota {dimensions = array<i32: 0>} : vector<8x16xi32>
    %133 = tpu.iota {dimensions = array<i32: 1>} : vector<8x16xi32>
    %c2_i32_65 = arith.constant 2 : i32
    %134 = vector.broadcast %c2_i32_65 : i32 to vector<8x16xi32>
    %135 = arith.muli %134, %132 : vector<8x16xi32>
    %c1_i32_66 = arith.constant 1 : i32
    %136 = vector.broadcast %c1_i32_66 : i32 to vector<8x16xi32>
    %137 = arith.addi %135, %136 : vector<8x16xi32>
    %138 = arith.cmpi eq, %133, %137 : vector<8x16xi32>
    %cst_67 = arith.constant 1.000000e+00 : f32
    %cst_68 = arith.constant 0.000000e+00 : f32
    %139 = vector.broadcast %cst_67 : f32 to vector<8x16xf32>
    %140 = vector.broadcast %cst_68 : f32 to vector<8x16xf32>
    %141 = arith.select %138, %139, %140 : vector<8x16xi1>, vector<8x16xf32>
    %cst_69 = arith.constant dense<0.000000e+00> : vector<8x32xf32>
    %142 = tpu.matmul %121, %111, %cst_69 {dimension_numbers = #tpu.dot_dimension_numbers<[1], [0], [0], [1], [0, 0, 1, 1], [], []>} : vector<8x16xf32>, vector<16x32xf32>, vector<8x32xf32> -> vector<8x32xf32>
    %143 = arith.truncf %142 : vector<8x32xf32> to vector<8x32xbf16>
    %c0_70 = arith.constant 0 : index
    %c0_71 = arith.constant 0 : index
    %c0_72 = arith.constant 0 : index
    %144 = vector.load %arg6[%c0_70, %c0_71, %c0_72] : memref<3x32x64xbf16, #tpu.memory_space<vmem>>, vector<1x32x64xbf16>
    %145 = vector.shape_cast %144 : vector<1x32x64xbf16> to vector<32x64xbf16>
    %cst_73 = arith.constant dense<0.000000e+00> : vector<8x64xf32>
    %146 = tpu.matmul %143, %145, %cst_73 {dimension_numbers = #tpu.dot_dimension_numbers<[1], [0], [0], [1], [0, 0, 1, 1], [], []>} : vector<8x32xbf16>, vector<32x64xbf16>, vector<8x64xf32> -> vector<8x64xf32>
    %cst_74 = arith.constant dense<0.000000e+00> : vector<8x32xf32>
    %147 = tpu.matmul %131, %111, %cst_74 {dimension_numbers = #tpu.dot_dimension_numbers<[1], [0], [0], [1], [0, 0, 1, 1], [], []>} : vector<8x16xf32>, vector<16x32xf32>, vector<8x32xf32> -> vector<8x32xf32>
    %148 = arith.truncf %147 : vector<8x32xf32> to vector<8x32xbf16>
    %c1_75 = arith.constant 1 : index
    %c0_76 = arith.constant 0 : index
    %c0_77 = arith.constant 0 : index
    %149 = vector.load %arg6[%c1_75, %c0_76, %c0_77] : memref<3x32x64xbf16, #tpu.memory_space<vmem>>, vector<1x32x64xbf16>
    %150 = vector.shape_cast %149 : vector<1x32x64xbf16> to vector<32x64xbf16>
    %cst_78 = arith.constant dense<0.000000e+00> : vector<8x64xf32>
    %151 = tpu.matmul %148, %150, %cst_78 {dimension_numbers = #tpu.dot_dimension_numbers<[1], [0], [0], [1], [0, 0, 1, 1], [], []>} : vector<8x32xbf16>, vector<32x64xbf16>, vector<8x64xf32> -> vector<8x64xf32>
    %152 = arith.addf %146, %151 : vector<8x64xf32>
    %cst_79 = arith.constant dense<0.000000e+00> : vector<8x32xf32>
    %153 = tpu.matmul %141, %111, %cst_79 {dimension_numbers = #tpu.dot_dimension_numbers<[1], [0], [0], [1], [0, 0, 1, 1], [], []>} : vector<8x16xf32>, vector<16x32xf32>, vector<8x32xf32> -> vector<8x32xf32>
    %154 = arith.truncf %153 : vector<8x32xf32> to vector<8x32xbf16>
    %c2_80 = arith.constant 2 : index
    %c0_81 = arith.constant 0 : index
    %c0_82 = arith.constant 0 : index
    %155 = vector.load %arg6[%c2_80, %c0_81, %c0_82] : memref<3x32x64xbf16, #tpu.memory_space<vmem>>, vector<1x32x64xbf16>
    %156 = vector.shape_cast %155 : vector<1x32x64xbf16> to vector<32x64xbf16>
    %cst_83 = arith.constant dense<0.000000e+00> : vector<8x64xf32>
    %157 = tpu.matmul %154, %156, %cst_83 {dimension_numbers = #tpu.dot_dimension_numbers<[1], [0], [0], [1], [0, 0, 1, 1], [], []>} : vector<8x32xbf16>, vector<32x64xbf16>, vector<8x64xf32> -> vector<8x64xf32>
    %158 = arith.addf %152, %157 : vector<8x64xf32>
    %c0_84 = arith.constant 0 : index
    %c0_85 = arith.constant 0 : index
    %159 = vector.load %arg7[%c0_84, %c0_85] : memref<1x64xf32, #tpu.memory_space<vmem>>, vector<1x64xf32>
    %160 = vector.broadcast %159 : vector<1x64xf32> to vector<8x64xf32>
    %161 = arith.addf %158, %160 : vector<8x64xf32>
    %cst_86 = arith.constant 0.000000e+00 : f32
    %162 = vector.broadcast %cst_86 : f32 to vector<8x64xf32>
    %163 = arith.cmpf oge, %161, %162 : vector<8x64xf32>
    %cst_87 = arith.constant 1.000000e-01 : f32
    %164 = vector.broadcast %cst_87 : f32 to vector<8x64xf32>
    %165 = arith.mulf %164, %161 : vector<8x64xf32>
    %166 = arith.select %163, %161, %165 : vector<8x64xi1>, vector<8x64xf32>
    %167 = tpu.iota {dimensions = array<i32: 0>} : vector<4x8xi32>
    %168 = tpu.iota {dimensions = array<i32: 1>} : vector<4x8xi32>
    %c2_i32_88 = arith.constant 2 : i32
    %169 = vector.broadcast %c2_i32_88 : i32 to vector<4x8xi32>
    %170 = arith.muli %169, %167 : vector<4x8xi32>
    %c-1_i32_89 = arith.constant -1 : i32
    %171 = vector.broadcast %c-1_i32_89 : i32 to vector<4x8xi32>
    %172 = arith.addi %170, %171 : vector<4x8xi32>
    %173 = arith.cmpi eq, %168, %172 : vector<4x8xi32>
    %cst_90 = arith.constant 1.000000e+00 : f32
    %cst_91 = arith.constant 0.000000e+00 : f32
    %174 = vector.broadcast %cst_90 : f32 to vector<4x8xf32>
    %175 = vector.broadcast %cst_91 : f32 to vector<4x8xf32>
    %176 = arith.select %173, %174, %175 : vector<4x8xi1>, vector<4x8xf32>
    %177 = tpu.iota {dimensions = array<i32: 0>} : vector<4x8xi32>
    %178 = tpu.iota {dimensions = array<i32: 1>} : vector<4x8xi32>
    %c2_i32_92 = arith.constant 2 : i32
    %179 = vector.broadcast %c2_i32_92 : i32 to vector<4x8xi32>
    %180 = arith.muli %179, %177 : vector<4x8xi32>
    %c0_i32_93 = arith.constant 0 : i32
    %181 = vector.broadcast %c0_i32_93 : i32 to vector<4x8xi32>
    %182 = arith.addi %180, %181 : vector<4x8xi32>
    %183 = arith.cmpi eq, %178, %182 : vector<4x8xi32>
    %cst_94 = arith.constant 1.000000e+00 : f32
    %cst_95 = arith.constant 0.000000e+00 : f32
    %184 = vector.broadcast %cst_94 : f32 to vector<4x8xf32>
    %185 = vector.broadcast %cst_95 : f32 to vector<4x8xf32>
    %186 = arith.select %183, %184, %185 : vector<4x8xi1>, vector<4x8xf32>
    %187 = tpu.iota {dimensions = array<i32: 0>} : vector<4x8xi32>
    %188 = tpu.iota {dimensions = array<i32: 1>} : vector<4x8xi32>
    %c2_i32_96 = arith.constant 2 : i32
    %189 = vector.broadcast %c2_i32_96 : i32 to vector<4x8xi32>
    %190 = arith.muli %189, %187 : vector<4x8xi32>
    %c1_i32_97 = arith.constant 1 : i32
    %191 = vector.broadcast %c1_i32_97 : i32 to vector<4x8xi32>
    %192 = arith.addi %190, %191 : vector<4x8xi32>
    %193 = arith.cmpi eq, %188, %192 : vector<4x8xi32>
    %cst_98 = arith.constant 1.000000e+00 : f32
    %cst_99 = arith.constant 0.000000e+00 : f32
    %194 = vector.broadcast %cst_98 : f32 to vector<4x8xf32>
    %195 = vector.broadcast %cst_99 : f32 to vector<4x8xf32>
    %196 = arith.select %193, %194, %195 : vector<4x8xi1>, vector<4x8xf32>
    %cst_100 = arith.constant dense<0.000000e+00> : vector<4x64xf32>
    %197 = tpu.matmul %176, %166, %cst_100 {dimension_numbers = #tpu.dot_dimension_numbers<[1], [0], [0], [1], [0, 0, 1, 1], [], []>} : vector<4x8xf32>, vector<8x64xf32>, vector<4x64xf32> -> vector<4x64xf32>
    %198 = arith.truncf %197 : vector<4x64xf32> to vector<4x64xbf16>
    %c0_101 = arith.constant 0 : index
    %c0_102 = arith.constant 0 : index
    %c0_103 = arith.constant 0 : index
    %199 = vector.load %arg8[%c0_101, %c0_102, %c0_103] : memref<3x64x128xbf16, #tpu.memory_space<vmem>>, vector<1x64x128xbf16>
    %200 = vector.shape_cast %199 : vector<1x64x128xbf16> to vector<64x128xbf16>
    %cst_104 = arith.constant dense<0.000000e+00> : vector<4x128xf32>
    %201 = tpu.matmul %198, %200, %cst_104 {dimension_numbers = #tpu.dot_dimension_numbers<[1], [0], [0], [1], [0, 0, 1, 1], [], []>} : vector<4x64xbf16>, vector<64x128xbf16>, vector<4x128xf32> -> vector<4x128xf32>
    %cst_105 = arith.constant dense<0.000000e+00> : vector<4x64xf32>
    %202 = tpu.matmul %186, %166, %cst_105 {dimension_numbers = #tpu.dot_dimension_numbers<[1], [0], [0], [1], [0, 0, 1, 1], [], []>} : vector<4x8xf32>, vector<8x64xf32>, vector<4x64xf32> -> vector<4x64xf32>
    %203 = arith.truncf %202 : vector<4x64xf32> to vector<4x64xbf16>
    %c1_106 = arith.constant 1 : index
    %c0_107 = arith.constant 0 : index
    %c0_108 = arith.constant 0 : index
    %204 = vector.load %arg8[%c1_106, %c0_107, %c0_108] : memref<3x64x128xbf16, #tpu.memory_space<vmem>>, vector<1x64x128xbf16>
    %205 = vector.shape_cast %204 : vector<1x64x128xbf16> to vector<64x128xbf16>
    %cst_109 = arith.constant dense<0.000000e+00> : vector<4x128xf32>
    %206 = tpu.matmul %203, %205, %cst_109 {dimension_numbers = #tpu.dot_dimension_numbers<[1], [0], [0], [1], [0, 0, 1, 1], [], []>} : vector<4x64xbf16>, vector<64x128xbf16>, vector<4x128xf32> -> vector<4x128xf32>
    %207 = arith.addf %201, %206 : vector<4x128xf32>
    %cst_110 = arith.constant dense<0.000000e+00> : vector<4x64xf32>
    %208 = tpu.matmul %196, %166, %cst_110 {dimension_numbers = #tpu.dot_dimension_numbers<[1], [0], [0], [1], [0, 0, 1, 1], [], []>} : vector<4x8xf32>, vector<8x64xf32>, vector<4x64xf32> -> vector<4x64xf32>
    %209 = arith.truncf %208 : vector<4x64xf32> to vector<4x64xbf16>
    %c2_111 = arith.constant 2 : index
    %c0_112 = arith.constant 0 : index
    %c0_113 = arith.constant 0 : index
    %210 = vector.load %arg8[%c2_111, %c0_112, %c0_113] : memref<3x64x128xbf16, #tpu.memory_space<vmem>>, vector<1x64x128xbf16>
    %211 = vector.shape_cast %210 : vector<1x64x128xbf16> to vector<64x128xbf16>
    %cst_114 = arith.constant dense<0.000000e+00> : vector<4x128xf32>
    %212 = tpu.matmul %209, %211, %cst_114 {dimension_numbers = #tpu.dot_dimension_numbers<[1], [0], [0], [1], [0, 0, 1, 1], [], []>} : vector<4x64xbf16>, vector<64x128xbf16>, vector<4x128xf32> -> vector<4x128xf32>
    %213 = arith.addf %207, %212 : vector<4x128xf32>
    %c0_115 = arith.constant 0 : index
    %c0_116 = arith.constant 0 : index
    %214 = vector.load %arg9[%c0_115, %c0_116] : memref<1x128xf32, #tpu.memory_space<vmem>>, vector<1x128xf32>
    %215 = vector.broadcast %214 : vector<1x128xf32> to vector<4x128xf32>
    %216 = arith.addf %213, %215 : vector<4x128xf32>
    %cst_117 = arith.constant 0.000000e+00 : f32
    %217 = vector.broadcast %cst_117 : f32 to vector<4x128xf32>
    %218 = arith.cmpf oge, %216, %217 : vector<4x128xf32>
    %cst_118 = arith.constant 1.000000e-01 : f32
    %219 = vector.broadcast %cst_118 : f32 to vector<4x128xf32>
    %220 = arith.mulf %219, %216 : vector<4x128xf32>
    %221 = arith.select %218, %216, %220 : vector<4x128xi1>, vector<4x128xf32>
    %222 = tpu.iota {dimensions = array<i32: 0>} : vector<2x4xi32>
    %223 = tpu.iota {dimensions = array<i32: 1>} : vector<2x4xi32>
    %c2_i32_119 = arith.constant 2 : i32
    %224 = vector.broadcast %c2_i32_119 : i32 to vector<2x4xi32>
    %225 = arith.muli %224, %222 : vector<2x4xi32>
    %c-1_i32_120 = arith.constant -1 : i32
    %226 = vector.broadcast %c-1_i32_120 : i32 to vector<2x4xi32>
    %227 = arith.addi %225, %226 : vector<2x4xi32>
    %228 = arith.cmpi eq, %223, %227 : vector<2x4xi32>
    %cst_121 = arith.constant 1.000000e+00 : f32
    %cst_122 = arith.constant 0.000000e+00 : f32
    %229 = vector.broadcast %cst_121 : f32 to vector<2x4xf32>
    %230 = vector.broadcast %cst_122 : f32 to vector<2x4xf32>
    %231 = arith.select %228, %229, %230 : vector<2x4xi1>, vector<2x4xf32>
    %232 = tpu.iota {dimensions = array<i32: 0>} : vector<2x4xi32>
    %233 = tpu.iota {dimensions = array<i32: 1>} : vector<2x4xi32>
    %c2_i32_123 = arith.constant 2 : i32
    %234 = vector.broadcast %c2_i32_123 : i32 to vector<2x4xi32>
    %235 = arith.muli %234, %232 : vector<2x4xi32>
    %c0_i32_124 = arith.constant 0 : i32
    %236 = vector.broadcast %c0_i32_124 : i32 to vector<2x4xi32>
    %237 = arith.addi %235, %236 : vector<2x4xi32>
    %238 = arith.cmpi eq, %233, %237 : vector<2x4xi32>
    %cst_125 = arith.constant 1.000000e+00 : f32
    %cst_126 = arith.constant 0.000000e+00 : f32
    %239 = vector.broadcast %cst_125 : f32 to vector<2x4xf32>
    %240 = vector.broadcast %cst_126 : f32 to vector<2x4xf32>
    %241 = arith.select %238, %239, %240 : vector<2x4xi1>, vector<2x4xf32>
    %242 = tpu.iota {dimensions = array<i32: 0>} : vector<2x4xi32>
    %243 = tpu.iota {dimensions = array<i32: 1>} : vector<2x4xi32>
    %c2_i32_127 = arith.constant 2 : i32
    %244 = vector.broadcast %c2_i32_127 : i32 to vector<2x4xi32>
    %245 = arith.muli %244, %242 : vector<2x4xi32>
    %c1_i32_128 = arith.constant 1 : i32
    %246 = vector.broadcast %c1_i32_128 : i32 to vector<2x4xi32>
    %247 = arith.addi %245, %246 : vector<2x4xi32>
    %248 = arith.cmpi eq, %243, %247 : vector<2x4xi32>
    %cst_129 = arith.constant 1.000000e+00 : f32
    %cst_130 = arith.constant 0.000000e+00 : f32
    %249 = vector.broadcast %cst_129 : f32 to vector<2x4xf32>
    %250 = vector.broadcast %cst_130 : f32 to vector<2x4xf32>
    %251 = arith.select %248, %249, %250 : vector<2x4xi1>, vector<2x4xf32>
    %cst_131 = arith.constant dense<0.000000e+00> : vector<2x128xf32>
    %252 = tpu.matmul %231, %221, %cst_131 {dimension_numbers = #tpu.dot_dimension_numbers<[1], [0], [0], [1], [0, 0, 1, 1], [], []>} : vector<2x4xf32>, vector<4x128xf32>, vector<2x128xf32> -> vector<2x128xf32>
    %253 = arith.truncf %252 : vector<2x128xf32> to vector<2x128xbf16>
    %c0_132 = arith.constant 0 : index
    %c0_133 = arith.constant 0 : index
    %c0_134 = arith.constant 0 : index
    %254 = vector.load %arg10[%c0_132, %c0_133, %c0_134] : memref<3x128x256xbf16, #tpu.memory_space<vmem>>, vector<1x128x256xbf16>
    %255 = vector.shape_cast %254 : vector<1x128x256xbf16> to vector<128x256xbf16>
    %cst_135 = arith.constant dense<0.000000e+00> : vector<2x256xf32>
    %256 = tpu.matmul %253, %255, %cst_135 {dimension_numbers = #tpu.dot_dimension_numbers<[1], [0], [0], [1], [0, 0, 1, 1], [], []>} : vector<2x128xbf16>, vector<128x256xbf16>, vector<2x256xf32> -> vector<2x256xf32>
    %cst_136 = arith.constant dense<0.000000e+00> : vector<2x128xf32>
    %257 = tpu.matmul %241, %221, %cst_136 {dimension_numbers = #tpu.dot_dimension_numbers<[1], [0], [0], [1], [0, 0, 1, 1], [], []>} : vector<2x4xf32>, vector<4x128xf32>, vector<2x128xf32> -> vector<2x128xf32>
    %258 = arith.truncf %257 : vector<2x128xf32> to vector<2x128xbf16>
    %c1_137 = arith.constant 1 : index
    %c0_138 = arith.constant 0 : index
    %c0_139 = arith.constant 0 : index
    %259 = vector.load %arg10[%c1_137, %c0_138, %c0_139] : memref<3x128x256xbf16, #tpu.memory_space<vmem>>, vector<1x128x256xbf16>
    %260 = vector.shape_cast %259 : vector<1x128x256xbf16> to vector<128x256xbf16>
    %cst_140 = arith.constant dense<0.000000e+00> : vector<2x256xf32>
    %261 = tpu.matmul %258, %260, %cst_140 {dimension_numbers = #tpu.dot_dimension_numbers<[1], [0], [0], [1], [0, 0, 1, 1], [], []>} : vector<2x128xbf16>, vector<128x256xbf16>, vector<2x256xf32> -> vector<2x256xf32>
    %262 = arith.addf %256, %261 : vector<2x256xf32>
    %cst_141 = arith.constant dense<0.000000e+00> : vector<2x128xf32>
    %263 = tpu.matmul %251, %221, %cst_141 {dimension_numbers = #tpu.dot_dimension_numbers<[1], [0], [0], [1], [0, 0, 1, 1], [], []>} : vector<2x4xf32>, vector<4x128xf32>, vector<2x128xf32> -> vector<2x128xf32>
    %264 = arith.truncf %263 : vector<2x128xf32> to vector<2x128xbf16>
    %c2_142 = arith.constant 2 : index
    %c0_143 = arith.constant 0 : index
    %c0_144 = arith.constant 0 : index
    %265 = vector.load %arg10[%c2_142, %c0_143, %c0_144] : memref<3x128x256xbf16, #tpu.memory_space<vmem>>, vector<1x128x256xbf16>
    %266 = vector.shape_cast %265 : vector<1x128x256xbf16> to vector<128x256xbf16>
    %cst_145 = arith.constant dense<0.000000e+00> : vector<2x256xf32>
    %267 = tpu.matmul %264, %266, %cst_145 {dimension_numbers = #tpu.dot_dimension_numbers<[1], [0], [0], [1], [0, 0, 1, 1], [], []>} : vector<2x128xbf16>, vector<128x256xbf16>, vector<2x256xf32> -> vector<2x256xf32>
    %268 = arith.addf %262, %267 : vector<2x256xf32>
    %c0_146 = arith.constant 0 : index
    %c0_147 = arith.constant 0 : index
    %269 = vector.load %arg11[%c0_146, %c0_147] : memref<1x256xf32, #tpu.memory_space<vmem>>, vector<1x256xf32>
    %270 = vector.broadcast %269 : vector<1x256xf32> to vector<2x256xf32>
    %271 = arith.addf %268, %270 : vector<2x256xf32>
    %cst_148 = arith.constant 0.000000e+00 : f32
    %272 = vector.broadcast %cst_148 : f32 to vector<2x256xf32>
    %273 = arith.cmpf oge, %271, %272 : vector<2x256xf32>
    %cst_149 = arith.constant 1.000000e-01 : f32
    %274 = vector.broadcast %cst_149 : f32 to vector<2x256xf32>
    %275 = arith.mulf %274, %271 : vector<2x256xf32>
    %276 = arith.select %273, %271, %275 : vector<2x256xi1>, vector<2x256xf32>
    %277 = tpu.iota {dimensions = array<i32: 0>} : vector<4x2xi32>
    %278 = tpu.iota {dimensions = array<i32: 1>} : vector<4x2xi32>
    %c2_i32_150 = arith.constant 2 : i32
    %279 = vector.broadcast %c2_i32_150 : i32 to vector<4x2xi32>
    %280 = arith.muli %279, %278 : vector<4x2xi32>
    %c1_i32_151 = arith.constant 1 : i32
    %281 = vector.broadcast %c1_i32_151 : i32 to vector<4x2xi32>
    %282 = arith.addi %277, %281 : vector<4x2xi32>
    %283 = arith.cmpi eq, %280, %282 : vector<4x2xi32>
    %cst_152 = arith.constant 1.000000e+00 : f32
    %cst_153 = arith.constant 0.000000e+00 : f32
    %284 = vector.broadcast %cst_152 : f32 to vector<4x2xf32>
    %285 = vector.broadcast %cst_153 : f32 to vector<4x2xf32>
    %286 = arith.select %283, %284, %285 : vector<4x2xi1>, vector<4x2xf32>
    %287 = tpu.iota {dimensions = array<i32: 0>} : vector<4x2xi32>
    %288 = tpu.iota {dimensions = array<i32: 1>} : vector<4x2xi32>
    %c2_i32_154 = arith.constant 2 : i32
    %289 = vector.broadcast %c2_i32_154 : i32 to vector<4x2xi32>
    %290 = arith.muli %289, %288 : vector<4x2xi32>
    %c0_i32_155 = arith.constant 0 : i32
    %291 = vector.broadcast %c0_i32_155 : i32 to vector<4x2xi32>
    %292 = arith.addi %287, %291 : vector<4x2xi32>
    %293 = arith.cmpi eq, %290, %292 : vector<4x2xi32>
    %cst_156 = arith.constant 1.000000e+00 : f32
    %cst_157 = arith.constant 0.000000e+00 : f32
    %294 = vector.broadcast %cst_156 : f32 to vector<4x2xf32>
    %295 = vector.broadcast %cst_157 : f32 to vector<4x2xf32>
    %296 = arith.select %293, %294, %295 : vector<4x2xi1>, vector<4x2xf32>
    %297 = tpu.iota {dimensions = array<i32: 0>} : vector<4x2xi32>
    %298 = tpu.iota {dimensions = array<i32: 1>} : vector<4x2xi32>
    %c2_i32_158 = arith.constant 2 : i32
    %299 = vector.broadcast %c2_i32_158 : i32 to vector<4x2xi32>
    %300 = arith.muli %299, %298 : vector<4x2xi32>
    %c-1_i32_159 = arith.constant -1 : i32
    %301 = vector.broadcast %c-1_i32_159 : i32 to vector<4x2xi32>
    %302 = arith.addi %297, %301 : vector<4x2xi32>
    %303 = arith.cmpi eq, %300, %302 : vector<4x2xi32>
    %cst_160 = arith.constant 1.000000e+00 : f32
    %cst_161 = arith.constant 0.000000e+00 : f32
    %304 = vector.broadcast %cst_160 : f32 to vector<4x2xf32>
    %305 = vector.broadcast %cst_161 : f32 to vector<4x2xf32>
    %306 = arith.select %303, %304, %305 : vector<4x2xi1>, vector<4x2xf32>
    %cst_162 = arith.constant dense<0.000000e+00> : vector<4x256xf32>
    %307 = tpu.matmul %286, %276, %cst_162 {dimension_numbers = #tpu.dot_dimension_numbers<[1], [0], [0], [1], [0, 0, 1, 1], [], []>} : vector<4x2xf32>, vector<2x256xf32>, vector<4x256xf32> -> vector<4x256xf32>
    %308 = arith.truncf %307 : vector<4x256xf32> to vector<4x256xbf16>
    %c0_163 = arith.constant 0 : index
    %c0_164 = arith.constant 0 : index
    %c0_165 = arith.constant 0 : index
    %309 = vector.load %arg12[%c0_163, %c0_164, %c0_165] : memref<3x256x128xbf16, #tpu.memory_space<vmem>>, vector<1x256x128xbf16>
    %310 = vector.shape_cast %309 : vector<1x256x128xbf16> to vector<256x128xbf16>
    %cst_166 = arith.constant dense<0.000000e+00> : vector<4x128xf32>
    %311 = tpu.matmul %308, %310, %cst_166 {dimension_numbers = #tpu.dot_dimension_numbers<[1], [0], [0], [1], [0, 0, 1, 1], [], []>} : vector<4x256xbf16>, vector<256x128xbf16>, vector<4x128xf32> -> vector<4x128xf32>
    %cst_167 = arith.constant dense<0.000000e+00> : vector<4x256xf32>
    %312 = tpu.matmul %296, %276, %cst_167 {dimension_numbers = #tpu.dot_dimension_numbers<[1], [0], [0], [1], [0, 0, 1, 1], [], []>} : vector<4x2xf32>, vector<2x256xf32>, vector<4x256xf32> -> vector<4x256xf32>
    %313 = arith.truncf %312 : vector<4x256xf32> to vector<4x256xbf16>
    %c1_168 = arith.constant 1 : index
    %c0_169 = arith.constant 0 : index
    %c0_170 = arith.constant 0 : index
    %314 = vector.load %arg12[%c1_168, %c0_169, %c0_170] : memref<3x256x128xbf16, #tpu.memory_space<vmem>>, vector<1x256x128xbf16>
    %315 = vector.shape_cast %314 : vector<1x256x128xbf16> to vector<256x128xbf16>
    %cst_171 = arith.constant dense<0.000000e+00> : vector<4x128xf32>
    %316 = tpu.matmul %313, %315, %cst_171 {dimension_numbers = #tpu.dot_dimension_numbers<[1], [0], [0], [1], [0, 0, 1, 1], [], []>} : vector<4x256xbf16>, vector<256x128xbf16>, vector<4x128xf32> -> vector<4x128xf32>
    %317 = arith.addf %311, %316 : vector<4x128xf32>
    %cst_172 = arith.constant dense<0.000000e+00> : vector<4x256xf32>
    %318 = tpu.matmul %306, %276, %cst_172 {dimension_numbers = #tpu.dot_dimension_numbers<[1], [0], [0], [1], [0, 0, 1, 1], [], []>} : vector<4x2xf32>, vector<2x256xf32>, vector<4x256xf32> -> vector<4x256xf32>
    %319 = arith.truncf %318 : vector<4x256xf32> to vector<4x256xbf16>
    %c2_173 = arith.constant 2 : index
    %c0_174 = arith.constant 0 : index
    %c0_175 = arith.constant 0 : index
    %320 = vector.load %arg12[%c2_173, %c0_174, %c0_175] : memref<3x256x128xbf16, #tpu.memory_space<vmem>>, vector<1x256x128xbf16>
    %321 = vector.shape_cast %320 : vector<1x256x128xbf16> to vector<256x128xbf16>
    %cst_176 = arith.constant dense<0.000000e+00> : vector<4x128xf32>
    %322 = tpu.matmul %319, %321, %cst_176 {dimension_numbers = #tpu.dot_dimension_numbers<[1], [0], [0], [1], [0, 0, 1, 1], [], []>} : vector<4x256xbf16>, vector<256x128xbf16>, vector<4x128xf32> -> vector<4x128xf32>
    %323 = arith.addf %317, %322 : vector<4x128xf32>
    %c0_177 = arith.constant 0 : index
    %c0_178 = arith.constant 0 : index
    %324 = vector.load %arg13[%c0_177, %c0_178] : memref<1x128xf32, #tpu.memory_space<vmem>>, vector<1x128xf32>
    %325 = vector.broadcast %324 : vector<1x128xf32> to vector<4x128xf32>
    %326 = arith.addf %323, %325 : vector<4x128xf32>
    %cst_179 = arith.constant 0.000000e+00 : f32
    %327 = vector.broadcast %cst_179 : f32 to vector<4x128xf32>
    %328 = arith.cmpf oge, %326, %327 : vector<4x128xf32>
    %cst_180 = arith.constant 1.000000e-01 : f32
    %329 = vector.broadcast %cst_180 : f32 to vector<4x128xf32>
    %330 = arith.mulf %329, %326 : vector<4x128xf32>
    %331 = arith.select %328, %326, %330 : vector<4x128xi1>, vector<4x128xf32>
    %332 = tpu.iota {dimensions = array<i32: 0>} : vector<8x4xi32>
    %333 = tpu.iota {dimensions = array<i32: 1>} : vector<8x4xi32>
    %c2_i32_181 = arith.constant 2 : i32
    %334 = vector.broadcast %c2_i32_181 : i32 to vector<8x4xi32>
    %335 = arith.muli %334, %333 : vector<8x4xi32>
    %c1_i32_182 = arith.constant 1 : i32
    %336 = vector.broadcast %c1_i32_182 : i32 to vector<8x4xi32>
    %337 = arith.addi %332, %336 : vector<8x4xi32>
    %338 = arith.cmpi eq, %335, %337 : vector<8x4xi32>
    %cst_183 = arith.constant 1.000000e+00 : f32
    %cst_184 = arith.constant 0.000000e+00 : f32
    %339 = vector.broadcast %cst_183 : f32 to vector<8x4xf32>
    %340 = vector.broadcast %cst_184 : f32 to vector<8x4xf32>
    %341 = arith.select %338, %339, %340 : vector<8x4xi1>, vector<8x4xf32>
    %342 = tpu.iota {dimensions = array<i32: 0>} : vector<8x4xi32>
    %343 = tpu.iota {dimensions = array<i32: 1>} : vector<8x4xi32>
    %c2_i32_185 = arith.constant 2 : i32
    %344 = vector.broadcast %c2_i32_185 : i32 to vector<8x4xi32>
    %345 = arith.muli %344, %343 : vector<8x4xi32>
    %c0_i32_186 = arith.constant 0 : i32
    %346 = vector.broadcast %c0_i32_186 : i32 to vector<8x4xi32>
    %347 = arith.addi %342, %346 : vector<8x4xi32>
    %348 = arith.cmpi eq, %345, %347 : vector<8x4xi32>
    %cst_187 = arith.constant 1.000000e+00 : f32
    %cst_188 = arith.constant 0.000000e+00 : f32
    %349 = vector.broadcast %cst_187 : f32 to vector<8x4xf32>
    %350 = vector.broadcast %cst_188 : f32 to vector<8x4xf32>
    %351 = arith.select %348, %349, %350 : vector<8x4xi1>, vector<8x4xf32>
    %352 = tpu.iota {dimensions = array<i32: 0>} : vector<8x4xi32>
    %353 = tpu.iota {dimensions = array<i32: 1>} : vector<8x4xi32>
    %c2_i32_189 = arith.constant 2 : i32
    %354 = vector.broadcast %c2_i32_189 : i32 to vector<8x4xi32>
    %355 = arith.muli %354, %353 : vector<8x4xi32>
    %c-1_i32_190 = arith.constant -1 : i32
    %356 = vector.broadcast %c-1_i32_190 : i32 to vector<8x4xi32>
    %357 = arith.addi %352, %356 : vector<8x4xi32>
    %358 = arith.cmpi eq, %355, %357 : vector<8x4xi32>
    %cst_191 = arith.constant 1.000000e+00 : f32
    %cst_192 = arith.constant 0.000000e+00 : f32
    %359 = vector.broadcast %cst_191 : f32 to vector<8x4xf32>
    %360 = vector.broadcast %cst_192 : f32 to vector<8x4xf32>
    %361 = arith.select %358, %359, %360 : vector<8x4xi1>, vector<8x4xf32>
    %cst_193 = arith.constant dense<0.000000e+00> : vector<8x128xf32>
    %362 = tpu.matmul %341, %331, %cst_193 {dimension_numbers = #tpu.dot_dimension_numbers<[1], [0], [0], [1], [0, 0, 1, 1], [], []>} : vector<8x4xf32>, vector<4x128xf32>, vector<8x128xf32> -> vector<8x128xf32>
    %363 = arith.truncf %362 : vector<8x128xf32> to vector<8x128xbf16>
    %c0_194 = arith.constant 0 : index
    %c0_195 = arith.constant 0 : index
    %c0_196 = arith.constant 0 : index
    %364 = vector.load %arg14[%c0_194, %c0_195, %c0_196] : memref<3x128x64xbf16, #tpu.memory_space<vmem>>, vector<1x128x64xbf16>
    %365 = vector.shape_cast %364 : vector<1x128x64xbf16> to vector<128x64xbf16>
    %cst_197 = arith.constant dense<0.000000e+00> : vector<8x64xf32>
    %366 = tpu.matmul %363, %365, %cst_197 {dimension_numbers = #tpu.dot_dimension_numbers<[1], [0], [0], [1], [0, 0, 1, 1], [], []>} : vector<8x128xbf16>, vector<128x64xbf16>, vector<8x64xf32> -> vector<8x64xf32>
    %cst_198 = arith.constant dense<0.000000e+00> : vector<8x128xf32>
    %367 = tpu.matmul %351, %331, %cst_198 {dimension_numbers = #tpu.dot_dimension_numbers<[1], [0], [0], [1], [0, 0, 1, 1], [], []>} : vector<8x4xf32>, vector<4x128xf32>, vector<8x128xf32> -> vector<8x128xf32>
    %368 = arith.truncf %367 : vector<8x128xf32> to vector<8x128xbf16>
    %c1_199 = arith.constant 1 : index
    %c0_200 = arith.constant 0 : index
    %c0_201 = arith.constant 0 : index
    %369 = vector.load %arg14[%c1_199, %c0_200, %c0_201] : memref<3x128x64xbf16, #tpu.memory_space<vmem>>, vector<1x128x64xbf16>
    %370 = vector.shape_cast %369 : vector<1x128x64xbf16> to vector<128x64xbf16>
    %cst_202 = arith.constant dense<0.000000e+00> : vector<8x64xf32>
    %371 = tpu.matmul %368, %370, %cst_202 {dimension_numbers = #tpu.dot_dimension_numbers<[1], [0], [0], [1], [0, 0, 1, 1], [], []>} : vector<8x128xbf16>, vector<128x64xbf16>, vector<8x64xf32> -> vector<8x64xf32>
    %372 = arith.addf %366, %371 : vector<8x64xf32>
    %cst_203 = arith.constant dense<0.000000e+00> : vector<8x128xf32>
    %373 = tpu.matmul %361, %331, %cst_203 {dimension_numbers = #tpu.dot_dimension_numbers<[1], [0], [0], [1], [0, 0, 1, 1], [], []>} : vector<8x4xf32>, vector<4x128xf32>, vector<8x128xf32> -> vector<8x128xf32>
    %374 = arith.truncf %373 : vector<8x128xf32> to vector<8x128xbf16>
    %c2_204 = arith.constant 2 : index
    %c0_205 = arith.constant 0 : index
    %c0_206 = arith.constant 0 : index
    %375 = vector.load %arg14[%c2_204, %c0_205, %c0_206] : memref<3x128x64xbf16, #tpu.memory_space<vmem>>, vector<1x128x64xbf16>
    %376 = vector.shape_cast %375 : vector<1x128x64xbf16> to vector<128x64xbf16>
    %cst_207 = arith.constant dense<0.000000e+00> : vector<8x64xf32>
    %377 = tpu.matmul %374, %376, %cst_207 {dimension_numbers = #tpu.dot_dimension_numbers<[1], [0], [0], [1], [0, 0, 1, 1], [], []>} : vector<8x128xbf16>, vector<128x64xbf16>, vector<8x64xf32> -> vector<8x64xf32>
    %378 = arith.addf %372, %377 : vector<8x64xf32>
    %c0_208 = arith.constant 0 : index
    %c0_209 = arith.constant 0 : index
    %379 = vector.load %arg15[%c0_208, %c0_209] : memref<1x64xf32, #tpu.memory_space<vmem>>, vector<1x64xf32>
    %380 = vector.broadcast %379 : vector<1x64xf32> to vector<8x64xf32>
    %381 = arith.addf %378, %380 : vector<8x64xf32>
    %cst_210 = arith.constant 0.000000e+00 : f32
    %382 = vector.broadcast %cst_210 : f32 to vector<8x64xf32>
    %383 = arith.cmpf oge, %381, %382 : vector<8x64xf32>
    %cst_211 = arith.constant 1.000000e-01 : f32
    %384 = vector.broadcast %cst_211 : f32 to vector<8x64xf32>
    %385 = arith.mulf %384, %381 : vector<8x64xf32>
    %386 = arith.select %383, %381, %385 : vector<8x64xi1>, vector<8x64xf32>
    %387 = tpu.iota {dimensions = array<i32: 0>} : vector<16x8xi32>
    %388 = tpu.iota {dimensions = array<i32: 1>} : vector<16x8xi32>
    %c2_i32_212 = arith.constant 2 : i32
    %389 = vector.broadcast %c2_i32_212 : i32 to vector<16x8xi32>
    %390 = arith.muli %389, %388 : vector<16x8xi32>
    %c1_i32_213 = arith.constant 1 : i32
    %391 = vector.broadcast %c1_i32_213 : i32 to vector<16x8xi32>
    %392 = arith.addi %387, %391 : vector<16x8xi32>
    %393 = arith.cmpi eq, %390, %392 : vector<16x8xi32>
    %cst_214 = arith.constant 1.000000e+00 : f32
    %cst_215 = arith.constant 0.000000e+00 : f32
    %394 = vector.broadcast %cst_214 : f32 to vector<16x8xf32>
    %395 = vector.broadcast %cst_215 : f32 to vector<16x8xf32>
    %396 = arith.select %393, %394, %395 : vector<16x8xi1>, vector<16x8xf32>
    %397 = tpu.iota {dimensions = array<i32: 0>} : vector<16x8xi32>
    %398 = tpu.iota {dimensions = array<i32: 1>} : vector<16x8xi32>
    %c2_i32_216 = arith.constant 2 : i32
    %399 = vector.broadcast %c2_i32_216 : i32 to vector<16x8xi32>
    %400 = arith.muli %399, %398 : vector<16x8xi32>
    %c0_i32_217 = arith.constant 0 : i32
    %401 = vector.broadcast %c0_i32_217 : i32 to vector<16x8xi32>
    %402 = arith.addi %397, %401 : vector<16x8xi32>
    %403 = arith.cmpi eq, %400, %402 : vector<16x8xi32>
    %cst_218 = arith.constant 1.000000e+00 : f32
    %cst_219 = arith.constant 0.000000e+00 : f32
    %404 = vector.broadcast %cst_218 : f32 to vector<16x8xf32>
    %405 = vector.broadcast %cst_219 : f32 to vector<16x8xf32>
    %406 = arith.select %403, %404, %405 : vector<16x8xi1>, vector<16x8xf32>
    %407 = tpu.iota {dimensions = array<i32: 0>} : vector<16x8xi32>
    %408 = tpu.iota {dimensions = array<i32: 1>} : vector<16x8xi32>
    %c2_i32_220 = arith.constant 2 : i32
    %409 = vector.broadcast %c2_i32_220 : i32 to vector<16x8xi32>
    %410 = arith.muli %409, %408 : vector<16x8xi32>
    %c-1_i32_221 = arith.constant -1 : i32
    %411 = vector.broadcast %c-1_i32_221 : i32 to vector<16x8xi32>
    %412 = arith.addi %407, %411 : vector<16x8xi32>
    %413 = arith.cmpi eq, %410, %412 : vector<16x8xi32>
    %cst_222 = arith.constant 1.000000e+00 : f32
    %cst_223 = arith.constant 0.000000e+00 : f32
    %414 = vector.broadcast %cst_222 : f32 to vector<16x8xf32>
    %415 = vector.broadcast %cst_223 : f32 to vector<16x8xf32>
    %416 = arith.select %413, %414, %415 : vector<16x8xi1>, vector<16x8xf32>
    %cst_224 = arith.constant dense<0.000000e+00> : vector<16x64xf32>
    %417 = tpu.matmul %396, %386, %cst_224 {dimension_numbers = #tpu.dot_dimension_numbers<[1], [0], [0], [1], [0, 0, 1, 1], [], []>} : vector<16x8xf32>, vector<8x64xf32>, vector<16x64xf32> -> vector<16x64xf32>
    %418 = arith.truncf %417 : vector<16x64xf32> to vector<16x64xbf16>
    %c0_225 = arith.constant 0 : index
    %c0_226 = arith.constant 0 : index
    %c0_227 = arith.constant 0 : index
    %419 = vector.load %arg16[%c0_225, %c0_226, %c0_227] : memref<3x64x32xbf16, #tpu.memory_space<vmem>>, vector<1x64x32xbf16>
    %420 = vector.shape_cast %419 : vector<1x64x32xbf16> to vector<64x32xbf16>
    %cst_228 = arith.constant dense<0.000000e+00> : vector<16x32xf32>
    %421 = tpu.matmul %418, %420, %cst_228 {dimension_numbers = #tpu.dot_dimension_numbers<[1], [0], [0], [1], [0, 0, 1, 1], [], []>} : vector<16x64xbf16>, vector<64x32xbf16>, vector<16x32xf32> -> vector<16x32xf32>
    %cst_229 = arith.constant dense<0.000000e+00> : vector<16x64xf32>
    %422 = tpu.matmul %406, %386, %cst_229 {dimension_numbers = #tpu.dot_dimension_numbers<[1], [0], [0], [1], [0, 0, 1, 1], [], []>} : vector<16x8xf32>, vector<8x64xf32>, vector<16x64xf32> -> vector<16x64xf32>
    %423 = arith.truncf %422 : vector<16x64xf32> to vector<16x64xbf16>
    %c1_230 = arith.constant 1 : index
    %c0_231 = arith.constant 0 : index
    %c0_232 = arith.constant 0 : index
    %424 = vector.load %arg16[%c1_230, %c0_231, %c0_232] : memref<3x64x32xbf16, #tpu.memory_space<vmem>>, vector<1x64x32xbf16>
    %425 = vector.shape_cast %424 : vector<1x64x32xbf16> to vector<64x32xbf16>
    %cst_233 = arith.constant dense<0.000000e+00> : vector<16x32xf32>
    %426 = tpu.matmul %423, %425, %cst_233 {dimension_numbers = #tpu.dot_dimension_numbers<[1], [0], [0], [1], [0, 0, 1, 1], [], []>} : vector<16x64xbf16>, vector<64x32xbf16>, vector<16x32xf32> -> vector<16x32xf32>
    %427 = arith.addf %421, %426 : vector<16x32xf32>
    %cst_234 = arith.constant dense<0.000000e+00> : vector<16x64xf32>
    %428 = tpu.matmul %416, %386, %cst_234 {dimension_numbers = #tpu.dot_dimension_numbers<[1], [0], [0], [1], [0, 0, 1, 1], [], []>} : vector<16x8xf32>, vector<8x64xf32>, vector<16x64xf32> -> vector<16x64xf32>
    %429 = arith.truncf %428 : vector<16x64xf32> to vector<16x64xbf16>
    %c2_235 = arith.constant 2 : index
    %c0_236 = arith.constant 0 : index
    %c0_237 = arith.constant 0 : index
    %430 = vector.load %arg16[%c2_235, %c0_236, %c0_237] : memref<3x64x32xbf16, #tpu.memory_space<vmem>>, vector<1x64x32xbf16>
    %431 = vector.shape_cast %430 : vector<1x64x32xbf16> to vector<64x32xbf16>
    %cst_238 = arith.constant dense<0.000000e+00> : vector<16x32xf32>
    %432 = tpu.matmul %429, %431, %cst_238 {dimension_numbers = #tpu.dot_dimension_numbers<[1], [0], [0], [1], [0, 0, 1, 1], [], []>} : vector<16x64xbf16>, vector<64x32xbf16>, vector<16x32xf32> -> vector<16x32xf32>
    %433 = arith.addf %427, %432 : vector<16x32xf32>
    %c0_239 = arith.constant 0 : index
    %c0_240 = arith.constant 0 : index
    %434 = vector.load %arg17[%c0_239, %c0_240] : memref<1x32xf32, #tpu.memory_space<vmem>>, vector<1x32xf32>
    %435 = vector.broadcast %434 : vector<1x32xf32> to vector<16x32xf32>
    %436 = arith.addf %433, %435 : vector<16x32xf32>
    %cst_241 = arith.constant 0.000000e+00 : f32
    %437 = vector.broadcast %cst_241 : f32 to vector<16x32xf32>
    %438 = arith.cmpf oge, %436, %437 : vector<16x32xf32>
    %cst_242 = arith.constant 1.000000e-01 : f32
    %439 = vector.broadcast %cst_242 : f32 to vector<16x32xf32>
    %440 = arith.mulf %439, %436 : vector<16x32xf32>
    %441 = arith.select %438, %436, %440 : vector<16x32xi1>, vector<16x32xf32>
    %442 = tpu.iota {dimensions = array<i32: 0>} : vector<32x16xi32>
    %443 = tpu.iota {dimensions = array<i32: 1>} : vector<32x16xi32>
    %c2_i32_243 = arith.constant 2 : i32
    %444 = vector.broadcast %c2_i32_243 : i32 to vector<32x16xi32>
    %445 = arith.muli %444, %443 : vector<32x16xi32>
    %c1_i32_244 = arith.constant 1 : i32
    %446 = vector.broadcast %c1_i32_244 : i32 to vector<32x16xi32>
    %447 = arith.addi %442, %446 : vector<32x16xi32>
    %448 = arith.cmpi eq, %445, %447 : vector<32x16xi32>
    %cst_245 = arith.constant 1.000000e+00 : f32
    %cst_246 = arith.constant 0.000000e+00 : f32
    %449 = vector.broadcast %cst_245 : f32 to vector<32x16xf32>
    %450 = vector.broadcast %cst_246 : f32 to vector<32x16xf32>
    %451 = arith.select %448, %449, %450 : vector<32x16xi1>, vector<32x16xf32>
    %452 = tpu.iota {dimensions = array<i32: 0>} : vector<32x16xi32>
    %453 = tpu.iota {dimensions = array<i32: 1>} : vector<32x16xi32>
    %c2_i32_247 = arith.constant 2 : i32
    %454 = vector.broadcast %c2_i32_247 : i32 to vector<32x16xi32>
    %455 = arith.muli %454, %453 : vector<32x16xi32>
    %c0_i32_248 = arith.constant 0 : i32
    %456 = vector.broadcast %c0_i32_248 : i32 to vector<32x16xi32>
    %457 = arith.addi %452, %456 : vector<32x16xi32>
    %458 = arith.cmpi eq, %455, %457 : vector<32x16xi32>
    %cst_249 = arith.constant 1.000000e+00 : f32
    %cst_250 = arith.constant 0.000000e+00 : f32
    %459 = vector.broadcast %cst_249 : f32 to vector<32x16xf32>
    %460 = vector.broadcast %cst_250 : f32 to vector<32x16xf32>
    %461 = arith.select %458, %459, %460 : vector<32x16xi1>, vector<32x16xf32>
    %462 = tpu.iota {dimensions = array<i32: 0>} : vector<32x16xi32>
    %463 = tpu.iota {dimensions = array<i32: 1>} : vector<32x16xi32>
    %c2_i32_251 = arith.constant 2 : i32
    %464 = vector.broadcast %c2_i32_251 : i32 to vector<32x16xi32>
    %465 = arith.muli %464, %463 : vector<32x16xi32>
    %c-1_i32_252 = arith.constant -1 : i32
    %466 = vector.broadcast %c-1_i32_252 : i32 to vector<32x16xi32>
    %467 = arith.addi %462, %466 : vector<32x16xi32>
    %468 = arith.cmpi eq, %465, %467 : vector<32x16xi32>
    %cst_253 = arith.constant 1.000000e+00 : f32
    %cst_254 = arith.constant 0.000000e+00 : f32
    %469 = vector.broadcast %cst_253 : f32 to vector<32x16xf32>
    %470 = vector.broadcast %cst_254 : f32 to vector<32x16xf32>
    %471 = arith.select %468, %469, %470 : vector<32x16xi1>, vector<32x16xf32>
    %cst_255 = arith.constant dense<0.000000e+00> : vector<32x32xf32>
    %472 = tpu.matmul %451, %441, %cst_255 {dimension_numbers = #tpu.dot_dimension_numbers<[1], [0], [0], [1], [0, 0, 1, 1], [], []>} : vector<32x16xf32>, vector<16x32xf32>, vector<32x32xf32> -> vector<32x32xf32>
    %473 = arith.truncf %472 : vector<32x32xf32> to vector<32x32xbf16>
    %c0_256 = arith.constant 0 : index
    %c0_257 = arith.constant 0 : index
    %c0_258 = arith.constant 0 : index
    %474 = vector.load %arg18[%c0_256, %c0_257, %c0_258] : memref<3x32x16xbf16, #tpu.memory_space<vmem>>, vector<1x32x16xbf16>
    %475 = vector.shape_cast %474 : vector<1x32x16xbf16> to vector<32x16xbf16>
    %cst_259 = arith.constant dense<0.000000e+00> : vector<32x16xf32>
    %476 = tpu.matmul %473, %475, %cst_259 {dimension_numbers = #tpu.dot_dimension_numbers<[1], [0], [0], [1], [0, 0, 1, 1], [], []>} : vector<32x32xbf16>, vector<32x16xbf16>, vector<32x16xf32> -> vector<32x16xf32>
    %cst_260 = arith.constant dense<0.000000e+00> : vector<32x32xf32>
    %477 = tpu.matmul %461, %441, %cst_260 {dimension_numbers = #tpu.dot_dimension_numbers<[1], [0], [0], [1], [0, 0, 1, 1], [], []>} : vector<32x16xf32>, vector<16x32xf32>, vector<32x32xf32> -> vector<32x32xf32>
    %478 = arith.truncf %477 : vector<32x32xf32> to vector<32x32xbf16>
    %c1_261 = arith.constant 1 : index
    %c0_262 = arith.constant 0 : index
    %c0_263 = arith.constant 0 : index
    %479 = vector.load %arg18[%c1_261, %c0_262, %c0_263] : memref<3x32x16xbf16, #tpu.memory_space<vmem>>, vector<1x32x16xbf16>
    %480 = vector.shape_cast %479 : vector<1x32x16xbf16> to vector<32x16xbf16>
    %cst_264 = arith.constant dense<0.000000e+00> : vector<32x16xf32>
    %481 = tpu.matmul %478, %480, %cst_264 {dimension_numbers = #tpu.dot_dimension_numbers<[1], [0], [0], [1], [0, 0, 1, 1], [], []>} : vector<32x32xbf16>, vector<32x16xbf16>, vector<32x16xf32> -> vector<32x16xf32>
    %482 = arith.addf %476, %481 : vector<32x16xf32>
    %cst_265 = arith.constant dense<0.000000e+00> : vector<32x32xf32>
    %483 = tpu.matmul %471, %441, %cst_265 {dimension_numbers = #tpu.dot_dimension_numbers<[1], [0], [0], [1], [0, 0, 1, 1], [], []>} : vector<32x16xf32>, vector<16x32xf32>, vector<32x32xf32> -> vector<32x32xf32>
    %484 = arith.truncf %483 : vector<32x32xf32> to vector<32x32xbf16>
    %c2_266 = arith.constant 2 : index
    %c0_267 = arith.constant 0 : index
    %c0_268 = arith.constant 0 : index
    %485 = vector.load %arg18[%c2_266, %c0_267, %c0_268] : memref<3x32x16xbf16, #tpu.memory_space<vmem>>, vector<1x32x16xbf16>
    %486 = vector.shape_cast %485 : vector<1x32x16xbf16> to vector<32x16xbf16>
    %cst_269 = arith.constant dense<0.000000e+00> : vector<32x16xf32>
    %487 = tpu.matmul %484, %486, %cst_269 {dimension_numbers = #tpu.dot_dimension_numbers<[1], [0], [0], [1], [0, 0, 1, 1], [], []>} : vector<32x32xbf16>, vector<32x16xbf16>, vector<32x16xf32> -> vector<32x16xf32>
    %488 = arith.addf %482, %487 : vector<32x16xf32>
    %c0_270 = arith.constant 0 : index
    %c0_271 = arith.constant 0 : index
    %489 = vector.load %arg19[%c0_270, %c0_271] : memref<1x16xf32, #tpu.memory_space<vmem>>, vector<1x16xf32>
    %490 = vector.broadcast %489 : vector<1x16xf32> to vector<32x16xf32>
    %491 = arith.addf %488, %490 : vector<32x16xf32>
    %cst_272 = arith.constant 0.000000e+00 : f32
    %492 = vector.broadcast %cst_272 : f32 to vector<32x16xf32>
    %493 = arith.cmpf oge, %491, %492 : vector<32x16xf32>
    %cst_273 = arith.constant 1.000000e-01 : f32
    %494 = vector.broadcast %cst_273 : f32 to vector<32x16xf32>
    %495 = arith.mulf %494, %491 : vector<32x16xf32>
    %496 = arith.select %493, %491, %495 : vector<32x16xi1>, vector<32x16xf32>
    %497 = tpu.iota {dimensions = array<i32: 0>} : vector<64x32xi32>
    %498 = tpu.iota {dimensions = array<i32: 1>} : vector<64x32xi32>
    %c2_i32_274 = arith.constant 2 : i32
    %499 = vector.broadcast %c2_i32_274 : i32 to vector<64x32xi32>
    %500 = arith.muli %499, %498 : vector<64x32xi32>
    %c1_i32_275 = arith.constant 1 : i32
    %501 = vector.broadcast %c1_i32_275 : i32 to vector<64x32xi32>
    %502 = arith.addi %497, %501 : vector<64x32xi32>
    %503 = arith.cmpi eq, %500, %502 : vector<64x32xi32>
    %cst_276 = arith.constant 1.000000e+00 : f32
    %cst_277 = arith.constant 0.000000e+00 : f32
    %504 = vector.broadcast %cst_276 : f32 to vector<64x32xf32>
    %505 = vector.broadcast %cst_277 : f32 to vector<64x32xf32>
    %506 = arith.select %503, %504, %505 : vector<64x32xi1>, vector<64x32xf32>
    %507 = tpu.iota {dimensions = array<i32: 0>} : vector<64x32xi32>
    %508 = tpu.iota {dimensions = array<i32: 1>} : vector<64x32xi32>
    %c2_i32_278 = arith.constant 2 : i32
    %509 = vector.broadcast %c2_i32_278 : i32 to vector<64x32xi32>
    %510 = arith.muli %509, %508 : vector<64x32xi32>
    %c0_i32_279 = arith.constant 0 : i32
    %511 = vector.broadcast %c0_i32_279 : i32 to vector<64x32xi32>
    %512 = arith.addi %507, %511 : vector<64x32xi32>
    %513 = arith.cmpi eq, %510, %512 : vector<64x32xi32>
    %cst_280 = arith.constant 1.000000e+00 : f32
    %cst_281 = arith.constant 0.000000e+00 : f32
    %514 = vector.broadcast %cst_280 : f32 to vector<64x32xf32>
    %515 = vector.broadcast %cst_281 : f32 to vector<64x32xf32>
    %516 = arith.select %513, %514, %515 : vector<64x32xi1>, vector<64x32xf32>
    %517 = tpu.iota {dimensions = array<i32: 0>} : vector<64x32xi32>
    %518 = tpu.iota {dimensions = array<i32: 1>} : vector<64x32xi32>
    %c2_i32_282 = arith.constant 2 : i32
    %519 = vector.broadcast %c2_i32_282 : i32 to vector<64x32xi32>
    %520 = arith.muli %519, %518 : vector<64x32xi32>
    %c-1_i32_283 = arith.constant -1 : i32
    %521 = vector.broadcast %c-1_i32_283 : i32 to vector<64x32xi32>
    %522 = arith.addi %517, %521 : vector<64x32xi32>
    %523 = arith.cmpi eq, %520, %522 : vector<64x32xi32>
    %cst_284 = arith.constant 1.000000e+00 : f32
    %cst_285 = arith.constant 0.000000e+00 : f32
    %524 = vector.broadcast %cst_284 : f32 to vector<64x32xf32>
    %525 = vector.broadcast %cst_285 : f32 to vector<64x32xf32>
    %526 = arith.select %523, %524, %525 : vector<64x32xi1>, vector<64x32xf32>
    %cst_286 = arith.constant dense<0.000000e+00> : vector<64x16xf32>
    %527 = tpu.matmul %506, %496, %cst_286 {dimension_numbers = #tpu.dot_dimension_numbers<[1], [0], [0], [1], [0, 0, 1, 1], [], []>} : vector<64x32xf32>, vector<32x16xf32>, vector<64x16xf32> -> vector<64x16xf32>
    %528 = arith.truncf %527 : vector<64x16xf32> to vector<64x16xbf16>
    %c0_287 = arith.constant 0 : index
    %c0_288 = arith.constant 0 : index
    %c0_289 = arith.constant 0 : index
    %529 = vector.load %arg20[%c0_287, %c0_288, %c0_289] : memref<3x16x1xbf16, #tpu.memory_space<vmem>>, vector<1x16x1xbf16>
    %530 = vector.shape_cast %529 : vector<1x16x1xbf16> to vector<16x1xbf16>
    %cst_290 = arith.constant dense<0.000000e+00> : vector<64x1xf32>
    %531 = tpu.matmul %528, %530, %cst_290 {dimension_numbers = #tpu.dot_dimension_numbers<[1], [0], [0], [1], [0, 0, 1, 1], [], []>} : vector<64x16xbf16>, vector<16x1xbf16>, vector<64x1xf32> -> vector<64x1xf32>
    %cst_291 = arith.constant dense<0.000000e+00> : vector<64x16xf32>
    %532 = tpu.matmul %516, %496, %cst_291 {dimension_numbers = #tpu.dot_dimension_numbers<[1], [0], [0], [1], [0, 0, 1, 1], [], []>} : vector<64x32xf32>, vector<32x16xf32>, vector<64x16xf32> -> vector<64x16xf32>
    %533 = arith.truncf %532 : vector<64x16xf32> to vector<64x16xbf16>
    %c1_292 = arith.constant 1 : index
    %c0_293 = arith.constant 0 : index
    %c0_294 = arith.constant 0 : index
    %534 = vector.load %arg20[%c1_292, %c0_293, %c0_294] : memref<3x16x1xbf16, #tpu.memory_space<vmem>>, vector<1x16x1xbf16>
    %535 = vector.shape_cast %534 : vector<1x16x1xbf16> to vector<16x1xbf16>
    %cst_295 = arith.constant dense<0.000000e+00> : vector<64x1xf32>
    %536 = tpu.matmul %533, %535, %cst_295 {dimension_numbers = #tpu.dot_dimension_numbers<[1], [0], [0], [1], [0, 0, 1, 1], [], []>} : vector<64x16xbf16>, vector<16x1xbf16>, vector<64x1xf32> -> vector<64x1xf32>
    %537 = arith.addf %531, %536 : vector<64x1xf32>
    %cst_296 = arith.constant dense<0.000000e+00> : vector<64x16xf32>
    %538 = tpu.matmul %526, %496, %cst_296 {dimension_numbers = #tpu.dot_dimension_numbers<[1], [0], [0], [1], [0, 0, 1, 1], [], []>} : vector<64x32xf32>, vector<32x16xf32>, vector<64x16xf32> -> vector<64x16xf32>
    %539 = arith.truncf %538 : vector<64x16xf32> to vector<64x16xbf16>
    %c2_297 = arith.constant 2 : index
    %c0_298 = arith.constant 0 : index
    %c0_299 = arith.constant 0 : index
    %540 = vector.load %arg20[%c2_297, %c0_298, %c0_299] : memref<3x16x1xbf16, #tpu.memory_space<vmem>>, vector<1x16x1xbf16>
    %541 = vector.shape_cast %540 : vector<1x16x1xbf16> to vector<16x1xbf16>
    %cst_300 = arith.constant dense<0.000000e+00> : vector<64x1xf32>
    %542 = tpu.matmul %539, %541, %cst_300 {dimension_numbers = #tpu.dot_dimension_numbers<[1], [0], [0], [1], [0, 0, 1, 1], [], []>} : vector<64x16xbf16>, vector<16x1xbf16>, vector<64x1xf32> -> vector<64x1xf32>
    %543 = arith.addf %537, %542 : vector<64x1xf32>
    %c0_301 = arith.constant 0 : index
    %c0_302 = arith.constant 0 : index
    %544 = vector.load %arg21[%c0_301, %c0_302] : memref<1x1xf32, #tpu.memory_space<vmem>>, vector<1x1xf32>
    %545 = vector.broadcast %544 : vector<1x1xf32> to vector<64x1xf32>
    %546 = arith.addf %543, %545 : vector<64x1xf32>
    %cst_303 = arith.constant 0.000000e+00 : f32
    %547 = vector.broadcast %cst_303 : f32 to vector<64x1xf32>
    %548 = arith.subf %547, %546 : vector<64x1xf32>
    %549 = math.exp %548 : vector<64x1xf32>
    %cst_304 = arith.constant 1.000000e+00 : f32
    %550 = vector.broadcast %cst_304 : f32 to vector<64x1xf32>
    %551 = arith.addf %550, %549 : vector<64x1xf32>
    %cst_305 = arith.constant 1.000000e+00 : f32
    %552 = vector.broadcast %cst_305 : f32 to vector<64x1xf32>
    %553 = arith.divf %552, %551 : vector<64x1xf32>
    %554 = tpu.iota {dimensions = array<i32: 0>} : vector<64x1xi32>
    %c63_i32 = arith.constant 63 : i32
    %555 = vector.broadcast %c63_i32 : i32 to vector<64x1xi32>
    %556 = arith.cmpi slt, %554, %555 : vector<64x1xi32>
    %cst_306 = arith.constant 0.000000e+00 : f32
    %557 = vector.broadcast %cst_306 : f32 to vector<64x1xf32>
    %558 = arith.select %556, %553, %557 : vector<64x1xi1>, vector<64x1xf32>
    %c0_307 = arith.constant 0 : index
    %c0_308 = arith.constant 0 : index
    %c0_309 = arith.constant 0 : index
    %559 = vector.load %arg22[%c0_307, %c0_308, %c0_309] : memref<1x64x1xf32, #tpu.memory_space<vmem>>, vector<1x64x1xf32>
    %560 = vector.shape_cast %559 : vector<1x64x1xf32> to vector<64x1xf32>
    %561 = vector.shape_cast %558 : vector<64x1xf32> to vector<1x64x1xf32>
    tpu.vector_store %arg22[%c0_307, %c0_308, %c0_309], %561 {strides = array<i32>} : memref<1x64x1xf32, #tpu.memory_space<vmem>>, vector<1x64x1xf32>,
    return
  }
  func.func @transform_0(%arg0: i32) -> (i32, i32, i32) {
    %c0_i32 = arith.constant 0 : i32
    %c0_i32_0 = arith.constant 0 : i32
    %c0_i32_1 = arith.constant 0 : i32
    return %arg0, %c0_i32, %c0_i32_0 : i32, i32, i32
  }
  func.func @transform_1(%arg0: i32) -> (i32, i32, i32) {
    %c0_i32 = arith.constant 0 : i32
    %c0_i32_0 = arith.constant 0 : i32
    %c0_i32_1 = arith.constant 0 : i32
    %c0_i32_2 = arith.constant 0 : i32
    return %c0_i32, %c0_i32_0, %c0_i32_1 : i32, i32, i32
  }
  func.func @transform_2(%arg0: i32) -> (i32, i32) {
    %c0_i32 = arith.constant 0 : i32
    %c0_i32_0 = arith.constant 0 : i32
    %c0_i32_1 = arith.constant 0 : i32
    return %c0_i32, %c0_i32_0 : i32, i32
  }
  func.func @transform_3(%arg0: i32) -> (i32, i32, i32) {
    %c0_i32 = arith.constant 0 : i32
    %c0_i32_0 = arith.constant 0 : i32
    %c0_i32_1 = arith.constant 0 : i32
    %c0_i32_2 = arith.constant 0 : i32
    return %c0_i32, %c0_i32_0, %c0_i32_1 : i32, i32, i32
  }
  func.func @transform_4(%arg0: i32) -> (i32, i32) {
    %c0_i32 = arith.constant 0 : i32
    %c0_i32_0 = arith.constant 0 : i32
    %c0_i32_1 = arith.constant 0 : i32
    return %c0_i32, %c0_i32_0 : i32, i32
  }
  func.func @transform_5(%arg0: i32) -> (i32, i32, i32) {
    %c0_i32 = arith.constant 0 : i32
    %c0_i32_0 = arith.constant 0 : i32
    %c0_i32_1 = arith.constant 0 : i32
    %c0_i32_2 = arith.constant 0 : i32
    return %c0_i32, %c0_i32_0, %c0_i32_1 : i32, i32, i32
  }
  func.func @transform_6(%arg0: i32) -> (i32, i32) {
    %c0_i32 = arith.constant 0 : i32
    %c0_i32_0 = arith.constant 0 : i32
    %c0_i32_1 = arith.constant 0 : i32
    return %c0_i32, %c0_i32_0 : i32, i32
  }
  func.func @transform_7(%arg0: i32) -> (i32, i32, i32) {
    %c0_i32 = arith.constant 0 : i32
    %c0_i32_0 = arith.constant 0 : i32
    %c0_i32_1 = arith.constant 0 : i32
    %c0_i32_2 = arith.constant 0 : i32
    return %c0_i32, %c0_i32_0, %c0_i32_1 : i32, i32, i32
  }
  func.func @transform_8(%arg0: i32) -> (i32, i32) {
    %c0_i32 = arith.constant 0 : i32
    %c0_i32_0 = arith.constant 0 : i32
    %c0_i32_1 = arith.constant 0 : i32
    return %c0_i32, %c0_i32_0 : i32, i32
  }
  func.func @transform_9(%arg0: i32) -> (i32, i32, i32) {
    %c0_i32 = arith.constant 0 : i32
    %c0_i32_0 = arith.constant 0 : i32
    %c0_i32_1 = arith.constant 0 : i32
    %c0_i32_2 = arith.constant 0 : i32
    return %c0_i32, %c0_i32_0, %c0_i32_1 : i32, i32, i32
  }
  func.func @transform_10(%arg0: i32) -> (i32, i32) {
    %c0_i32 = arith.constant 0 : i32
    %c0_i32_0 = arith.constant 0 : i32
    %c0_i32_1 = arith.constant 0 : i32
    return %c0_i32, %c0_i32_0 : i32, i32
  }
  func.func @transform_11(%arg0: i32) -> (i32, i32, i32) {
    %c0_i32 = arith.constant 0 : i32
    %c0_i32_0 = arith.constant 0 : i32
    %c0_i32_1 = arith.constant 0 : i32
    %c0_i32_2 = arith.constant 0 : i32
    return %c0_i32, %c0_i32_0, %c0_i32_1 : i32, i32, i32
  }
  func.func @transform_12(%arg0: i32) -> (i32, i32) {
    %c0_i32 = arith.constant 0 : i32
    %c0_i32_0 = arith.constant 0 : i32
    %c0_i32_1 = arith.constant 0 : i32
    return %c0_i32, %c0_i32_0 : i32, i32
  }
  func.func @transform_13(%arg0: i32) -> (i32, i32, i32) {
    %c0_i32 = arith.constant 0 : i32
    %c0_i32_0 = arith.constant 0 : i32
    %c0_i32_1 = arith.constant 0 : i32
    %c0_i32_2 = arith.constant 0 : i32
    return %c0_i32, %c0_i32_0, %c0_i32_1 : i32, i32, i32
  }
  func.func @transform_14(%arg0: i32) -> (i32, i32) {
    %c0_i32 = arith.constant 0 : i32
    %c0_i32_0 = arith.constant 0 : i32
    %c0_i32_1 = arith.constant 0 : i32
    return %c0_i32, %c0_i32_0 : i32, i32
  }
  func.func @transform_15(%arg0: i32) -> (i32, i32, i32) {
    %c0_i32 = arith.constant 0 : i32
    %c0_i32_0 = arith.constant 0 : i32
    %c0_i32_1 = arith.constant 0 : i32
    %c0_i32_2 = arith.constant 0 : i32
    return %c0_i32, %c0_i32_0, %c0_i32_1 : i32, i32, i32
  }
  func.func @transform_16(%arg0: i32) -> (i32, i32) {
    %c0_i32 = arith.constant 0 : i32
    %c0_i32_0 = arith.constant 0 : i32
    %c0_i32_1 = arith.constant 0 : i32
    return %c0_i32, %c0_i32_0 : i32, i32
  }
  func.func @transform_17(%arg0: i32) -> (i32, i32, i32) {
    %c0_i32 = arith.constant 0 : i32
    %c0_i32_0 = arith.constant 0 : i32
    %c0_i32_1 = arith.constant 0 : i32
    %c0_i32_2 = arith.constant 0 : i32
    return %c0_i32, %c0_i32_0, %c0_i32_1 : i32, i32, i32
  }
  func.func @transform_18(%arg0: i32) -> (i32, i32) {
    %c0_i32 = arith.constant 0 : i32
    %c0_i32_0 = arith.constant 0 : i32
    %c0_i32_1 = arith.constant 0 : i32
    return %c0_i32, %c0_i32_0 : i32, i32
  }
  func.func @transform_19(%arg0: i32) -> (i32, i32, i32) {
    %c0_i32 = arith.constant 0 : i32
    %c0_i32_0 = arith.constant 0 : i32
    %c0_i32_1 = arith.constant 0 : i32
    %c0_i32_2 = arith.constant 0 : i32
    return %c0_i32, %c0_i32_0, %c0_i32_1 : i32, i32, i32
  }
  func.func @transform_20(%arg0: i32) -> (i32, i32) {
    %c0_i32 = arith.constant 0 : i32
    %c0_i32_0 = arith.constant 0 : i32
    %c0_i32_1 = arith.constant 0 : i32
    return %c0_i32, %c0_i32_0 : i32, i32
  }
  func.func @transform_21(%arg0: i32) -> (i32, i32, i32) {
    %c0_i32 = arith.constant 0 : i32
    %c0_i32_0 = arith.constant 0 : i32
    %c0_i32_1 = arith.constant 0 : i32
    return %arg0, %c0_i32, %c0_i32_0 : i32, i32, i32
  }
}

</mosaic_0001>

<llo_original>
// kernel: autoencoder_forward.1
$region0: #{autoencoder_forward.1}
  #allocation0 [shape = 'u32[]', space=smem, size = 0x4, offset = 0x4, fixed_abs, tag = 'smem constant byte address 0x4 - core index']
  #allocation1 [shape = 'u32[144,128]{1,0:T(1,128)}', space=vmem, size = 0x12000, scoped, tag = 'internal scratch']
  #allocation2 [shape = 'f32[1,1]{1,0:T(1,128)S(1)}', space=vmem, size = 0x200, scoped, tag = 'scoped memory for autoencoder_forward.1']
  %s0 = inlined_call_operand.vmem [shape: f32[2,64,1], index: 0, kind: input, shape index: {}]
  %s1 = inlined_call_operand.vmem [shape: bf16[3,1,16], index: 1, kind: input, shape index: {}]
  %s2 = inlined_call_operand.vmem [shape: f32[1,16], index: 2, kind: input, shape index: {}]
  %s3 = inlined_call_operand.vmem [shape: bf16[3,16,32], index: 3, kind: input, shape index: {}]
  %s4 = inlined_call_operand.vmem [shape: f32[1,32], index: 4, kind: input, shape index: {}]
  %s5 = inlined_call_operand.vmem [shape: bf16[3,32,64], index: 5, kind: input, shape index: {}]
  %s6 = inlined_call_operand.vmem [shape: f32[1,64], index: 6, kind: input, shape index: {}]
  %s7 = inlined_call_operand.vmem [shape: bf16[3,64,128], index: 7, kind: input, shape index: {}]
  %s8 = inlined_call_operand.vmem [shape: f32[1,128], index: 8, kind: input, shape index: {}]
  %s9 = inlined_call_operand.vmem [shape: bf16[3,128,256], index: 9, kind: input, shape index: {}]
  %s10 = inlined_call_operand.vmem [shape: f32[1,256], index: 10, kind: input, shape index: {}]
  %s11 = inlined_call_operand.hbm [shape: bf16[3,256,128], index: 11, kind: input, shape index: {}]
  %s12 = inlined_call_operand.vmem [shape: f32[1,128], index: 12, kind: input, shape index: {}]
  %s13 = inlined_call_operand.vmem [shape: bf16[3,128,64], index: 13, kind: input, shape index: {}]
  %s14 = inlined_call_operand.vmem [shape: f32[1,64], index: 14, kind: input, shape index: {}]
  %s15 = inlined_call_operand.vmem [shape: bf16[3,64,32], index: 15, kind: input, shape index: {}]
  %s16 = inlined_call_operand.vmem [shape: f32[1,32], index: 16, kind: input, shape index: {}]
  %s17 = inlined_call_operand.vmem [shape: bf16[3,32,16], index: 17, kind: input, shape index: {}]
  %s18 = inlined_call_operand.vmem [shape: f32[1,16], index: 18, kind: input, shape index: {}]
  %s19 = inlined_call_operand.vmem [shape: bf16[3,16,1], index: 19, kind: input, shape index: {}]
  %s20 = inlined_call_operand.<no memory space> [shape: f32[1,1], index: 20, kind: input, shape index: {}]
  %s21 = inlined_call_operand.vmem [shape: f32[2,64,1], index: 21, kind: output, shape index: {}]
  %s22 = sld [smem:[#allocation0]]
  $region121: #{autoencoder_forward.1} parent=0
    _
  %s24 = ssub.s32 1, %s22
  %s25 = scalar_select 0, %s24, %s22
  %v26 = vstv %s20
  %27 = vst [vmem:[#allocation2] sm:$0x1] %v26
  $region1: #{autoencoder_forward.1} parent=0
    #allocation3 [shape = 'u8[196608]{0}', space=vmem, size = 0x30000, scoped, tag = 'input window, operand 11, single buffered']
    #allocation4 [shape = 's32[2]{0}', space=sflag, size = 0x8, scoped, tag = 'scoped memory for autoencoder_forward.1']
    %28 = vsyncpa [#allocation4], 0
    loop: start=0, step=1, limit=4
    $region2: #{autoencoder_forward.1} parent=1 // loop_pre_header
      _
    $region3: #{autoencoder_forward.1} parent=1 // loop_header
      %s30 = sphi 0, %s34
      %p31 = scmp.ge.s32.totalorder %s30, 4
      %s40 = sphi 0, %s42
      %s43 = sphi 0, %s40
      %s44 = sphi 0, %s43
      %s60 = sphi 0, %s44
      %s64 = sphi 0, %s64
      %s66 = sphi 0, %s64
      %s67 = sphi 0, %s66
      %s81 = sphi 0, %s67
      %s85 = sphi 0, %s85
      %s87 = sphi 0, %s85
      %s88 = sphi 0, %s87
      %s102 = sphi 0, %s88
      %s106 = sphi 0, %s106
      %s108 = sphi 0, %s106
      %s109 = sphi 0, %s108
      %s123 = sphi 0, %s109
      %s127 = sphi 0, %s127
      %s129 = sphi 0, %s127
      %s130 = sphi 0, %s129
      %s144 = sphi 0, %s130
      %s148 = sphi 0, %s148
      %s150 = sphi 0, %s148
      %s151 = sphi 0, %s150
      %s165 = sphi 0, %s151
      %s169 = sphi 0, %s169
      %s171 = sphi 0, %s169
      %s172 = sphi 0, %s171
      %s186 = sphi 0, %s172
      %s190 = sphi 0, %s190
      %s192 = sphi 0, %s190
      %s193 = sphi 0, %s192
      %s207 = sphi 0, %s193
      %s211 = sphi 0, %s211
      %s213 = sphi 0, %s211
      %s214 = sphi 0, %s213
      %s228 = sphi 0, %s214
      %s232 = sphi 0, %s232
      %s234 = sphi 0, %s232
      %s235 = sphi 0, %s234
      %s249 = sphi 0, %s235
      %s253 = sphi 0, %s253
      %s255 = sphi 0, %s253
      %s256 = sphi 0, %s255
      %s270 = sphi 0, %s256
      %s274 = sphi 0, %s274
      %s276 = sphi 0, %s274
      %s277 = sphi 0, %s276
      %s291 = sphi 0, %s277
      %s295 = sphi 0, %s295
      %s297 = sphi 0, %s295
      %s298 = sphi 0, %s297
      %s312 = sphi 0, %s298
      %s316 = sphi 0, %s316
      %s318 = sphi 0, %s316
      %s319 = sphi 0, %s318
      %s333 = sphi 0, %s319
      %s337 = sphi 0, %s337
      %s339 = sphi 0, %s337
      %s340 = sphi 0, %s339
      %s354 = sphi 0, %s340
      %s358 = sphi 0, %s358
      %s360 = sphi 0, %s358
      %s361 = sphi 0, %s360
      %s375 = sphi 0, %s361
      %s379 = sphi 0, %s379
      %s381 = sphi 0, %s379
      %s382 = sphi 0, %s381
      %s396 = sphi 0, %s382
      %s400 = sphi 0, %s400
      %s402 = sphi 0, %s400
      %s403 = sphi 0, %s402
      %s417 = sphi 0, %s403
      %s421 = sphi 0, %s421
      %s423 = sphi 0, %s421
      %s424 = sphi 0, %s423
      %s438 = sphi 0, %s424
      %s442 = sphi 0, %s442
      %s444 = sphi 0, %s442
      %s445 = sphi 0, %s444
      %s459 = sphi 0, %s445
      %s463 = sphi 0, %s463
      %s465 = sphi 0, %s463
      %s466 = sphi 0, %s465
      %s480 = sphi 0, %s466
      %s486 = sphi 0, %s488
      %s489 = sphi 0, %s486
      %s490 = sphi 0, %s489
      %s506 = sphi 0, %s490
    $region4: #{autoencoder_forward.1} parent=1 // loop_header_branch
      %33 = sbr.rel (%p31) target = $region8
    $region5: #{autoencoder_forward.1} parent=1 // loop_body
      %s35 = ssub.s32 %s30, 1
      %s36 = ssub.s32 %s30, 2
      %s37 = sadd.s32 %s30, 1
      %s38 = ssub.s32 %s30, %s37
      %p39 = scmp.eq.s32.totalorder %s38, 0
      %s41 = sadd.s32 %s40, 1
      %s42 = scalar_select %p39, %s40, %s41
      %p45 = pneg %p39
      %p46 = scmp.eq.s32.totalorder %s30, 1
      %p47 = por %p45, %p46
      %p48 = scmp.ne.s32.totalorder %s40, %s43
      %p49 = scmp.eq.s32.totalorder %s30, 0
      %p50 = por %p48, %p49
      %p51 = scmp.ne.s32.totalorder %s40, %s43
      %p52 = scmp.eq.s32.totalorder %s35, 1
      %p53 = por %p51, %p52
      %p54 = scmp.ne.s32.totalorder %s43, %s44
      %p55 = scmp.eq.s32.totalorder %s35, 0
      %p56 = por %p54, %p55
      %p57 = scmp.ne.s32.totalorder %s43, %s44
      %p58 = scmp.eq.s32.totalorder %s36, 1
      %p59 = por %p57, %p58
      %p61 = scmp.ne.s32.totalorder %s44, %s60
      %p62 = scmp.eq.s32.totalorder %s36, 0
      %p63 = por %p61, %p62
      %s65 = sadd.s32 %s64, 1
      %p68 = scmp.eq.s32.totalorder %s30, 1
      %p69 = scmp.ne.s32.totalorder %s64, %s66
      %p70 = scmp.eq.s32.totalorder %s30, 0
      %p71 = por %p69, %p70
      %p72 = scmp.ne.s32.totalorder %s64, %s66
      %p73 = scmp.eq.s32.totalorder %s35, 1
      %p74 = por %p72, %p73
      %p75 = scmp.ne.s32.totalorder %s66, %s67
      %p76 = scmp.eq.s32.totalorder %s35, 0
      %p77 = por %p75, %p76
      %p78 = scmp.ne.s32.totalorder %s66, %s67
      %p79 = scmp.eq.s32.totalorder %s36, 1
      %p80 = por %p78, %p79
      %p82 = scmp.ne.s32.totalorder %s67, %s81
      %p83 = scmp.eq.s32.totalorder %s36, 0
      %p84 = por %p82, %p83
      %s86 = sadd.s32 %s85, 1
      %p89 = scmp.eq.s32.totalorder %s30, 1
      %p90 = scmp.ne.s32.totalorder %s85, %s87
      %p91 = scmp.eq.s32.totalorder %s30, 0
      %p92 = por %p90, %p91
      %p93 = scmp.ne.s32.totalorder %s85, %s87
      %p94 = scmp.eq.s32.totalorder %s35, 1
      %p95 = por %p93, %p94
      %p96 = scmp.ne.s32.totalorder %s87, %s88
      %p97 = scmp.eq.s32.totalorder %s35, 0
      %p98 = por %p96, %p97
      %p99 = scmp.ne.s32.totalorder %s87, %s88
      %p100 = scmp.eq.s32.totalorder %s36, 1
      %p101 = por %p99, %p100
      %p103 = scmp.ne.s32.totalorder %s88, %s102
      %p104 = scmp.eq.s32.totalorder %s36, 0
      %p105 = por %p103, %p104
      %s107 = sadd.s32 %s106, 1
      %p110 = scmp.eq.s32.totalorder %s30, 1
      %p111 = scmp.ne.s32.totalorder %s106, %s108
      %p112 = scmp.eq.s32.totalorder %s30, 0
      %p113 = por %p111, %p112
      %p114 = scmp.ne.s32.totalorder %s106, %s108
      %p115 = scmp.eq.s32.totalorder %s35, 1
      %p116 = por %p114, %p115
      %p117 = scmp.ne.s32.totalorder %s108, %s109
      %p118 = scmp.eq.s32.totalorder %s35, 0
      %p119 = por %p117, %p118
      %p120 = scmp.ne.s32.totalorder %s108, %s109
      %p121 = scmp.eq.s32.totalorder %s36, 1
      %p122 = por %p120, %p121
      %p124 = scmp.ne.s32.totalorder %s109, %s123
      %p125 = scmp.eq.s32.totalorder %s36, 0
      %p126 = por %p124, %p125
      %s128 = sadd.s32 %s127, 1
      %p131 = scmp.eq.s32.totalorder %s30, 1
      %p132 = scmp.ne.s32.totalorder %s127, %s129
      %p133 = scmp.eq.s32.totalorder %s30, 0
      %p134 = por %p132, %p133
      %p135 = scmp.ne.s32.totalorder %s127, %s129
      %p136 = scmp.eq.s32.totalorder %s35, 1
      %p137 = por %p135, %p136
      %p138 = scmp.ne.s32.totalorder %s129, %s130
      %p139 = scmp.eq.s32.totalorder %s35, 0
      %p140 = por %p138, %p139
      %p141 = scmp.ne.s32.totalorder %s129, %s130
      %p142 = scmp.eq.s32.totalorder %s36, 1
      %p143 = por %p141, %p142
      %p145 = scmp.ne.s32.totalorder %s130, %s144
      %p146 = scmp.eq.s32.totalorder %s36, 0
      %p147 = por %p145, %p146
      %s149 = sadd.s32 %s148, 1
      %p152 = scmp.eq.s32.totalorder %s30, 1
      %p153 = scmp.ne.s32.totalorder %s148, %s150
      %p154 = scmp.eq.s32.totalorder %s30, 0
      %p155 = por %p153, %p154
      %p156 = scmp.ne.s32.totalorder %s148, %s150
      %p157 = scmp.eq.s32.totalorder %s35, 1
      %p158 = por %p156, %p157
      %p159 = scmp.ne.s32.totalorder %s150, %s151
      %p160 = scmp.eq.s32.totalorder %s35, 0
      %p161 = por %p159, %p160
      %p162 = scmp.ne.s32.totalorder %s150, %s151
      %p163 = scmp.eq.s32.totalorder %s36, 1
      %p164 = por %p162, %p163
      %p166 = scmp.ne.s32.totalorder %s151, %s165
      %p167 = scmp.eq.s32.totalorder %s36, 0
      %p168 = por %p166, %p167
      %s170 = sadd.s32 %s169, 1
      %p173 = scmp.eq.s32.totalorder %s30, 1
      %p174 = scmp.ne.s32.totalorder %s169, %s171
      %p175 = scmp.eq.s32.totalorder %s30, 0
      %p176 = por %p174, %p175
      %p177 = scmp.ne.s32.totalorder %s169, %s171
      %p178 = scmp.eq.s32.totalorder %s35, 1
      %p179 = por %p177, %p178
      %p180 = scmp.ne.s32.totalorder %s171, %s172
      %p181 = scmp.eq.s32.totalorder %s35, 0
      %p182 = por %p180, %p181
      %p183 = scmp.ne.s32.totalorder %s171, %s172
      %p184 = scmp.eq.s32.totalorder %s36, 1
      %p185 = por %p183, %p184
      %p187 = scmp.ne.s32.totalorder %s172, %s186
      %p188 = scmp.eq.s32.totalorder %s36, 0
      %p189 = por %p187, %p188
      %s191 = sadd.s32 %s190, 1
      %p194 = scmp.eq.s32.totalorder %s30, 1
      %p195 = scmp.ne.s32.totalorder %s190, %s192
      %p196 = scmp.eq.s32.totalorder %s30, 0
      %p197 = por %p195, %p196
      %p198 = scmp.ne.s32.totalorder %s190, %s192
      %p199 = scmp.eq.s32.totalorder %s35, 1
      %p200 = por %p198, %p199
      %p201 = scmp.ne.s32.totalorder %s192, %s193
      %p202 = scmp.eq.s32.totalorder %s35, 0
      %p203 = por %p201, %p202
      %p204 = scmp.ne.s32.totalorder %s192, %s193
      %p205 = scmp.eq.s32.totalorder %s36, 1
      %p206 = por %p204, %p205
      %p208 = scmp.ne.s32.totalorder %s193, %s207
      %p209 = scmp.eq.s32.totalorder %s36, 0
      %p210 = por %p208, %p209
      %s212 = sadd.s32 %s211, 1
      %p215 = scmp.eq.s32.totalorder %s30, 1
      %p216 = scmp.ne.s32.totalorder %s211, %s213
      %p217 = scmp.eq.s32.totalorder %s30, 0
      %p218 = por %p216, %p217
      %p219 = scmp.ne.s32.totalorder %s211, %s213
      %p220 = scmp.eq.s32.totalorder %s35, 1
      %p221 = por %p219, %p220
      %p222 = scmp.ne.s32.totalorder %s213, %s214
      %p223 = scmp.eq.s32.totalorder %s35, 0
      %p224 = por %p222, %p223
      %p225 = scmp.ne.s32.totalorder %s213, %s214
      %p226 = scmp.eq.s32.totalorder %s36, 1
      %p227 = por %p225, %p226
      %p229 = scmp.ne.s32.totalorder %s214, %s228
      %p230 = scmp.eq.s32.totalorder %s36, 0
      %p231 = por %p229, %p230
      %s233 = sadd.s32 %s232, 1
      %p236 = scmp.eq.s32.totalorder %s30, 1
      %p237 = scmp.ne.s32.totalorder %s232, %s234
      %p238 = scmp.eq.s32.totalorder %s30, 0
      %p239 = por %p237, %p238
      %p240 = scmp.ne.s32.totalorder %s232, %s234
      %p241 = scmp.eq.s32.totalorder %s35, 1
      %p242 = por %p240, %p241
      %p243 = scmp.ne.s32.totalorder %s234, %s235
      %p244 = scmp.eq.s32.totalorder %s35, 0
      %p245 = por %p243, %p244
      %p246 = scmp.ne.s32.totalorder %s234, %s235
      %p247 = scmp.eq.s32.totalorder %s36, 1
      %p248 = por %p246, %p247
      %p250 = scmp.ne.s32.totalorder %s235, %s249
      %p251 = scmp.eq.s32.totalorder %s36, 0
      %p252 = por %p250, %p251
      %s254 = sadd.s32 %s253, 1
      %p257 = scmp.eq.s32.totalorder %s30, 1
      %p258 = scmp.ne.s32.totalorder %s253, %s255
      %p259 = scmp.eq.s32.totalorder %s30, 0
      %p260 = por %p258, %p259
      %p261 = scmp.ne.s32.totalorder %s253, %s255
      %p262 = scmp.eq.s32.totalorder %s35, 1
      %p263 = por %p261, %p262
      %p264 = scmp.ne.s32.totalorder %s255, %s256
      %p265 = scmp.eq.s32.totalorder %s35, 0
      %p266 = por %p264, %p265
      %p267 = scmp.ne.s32.totalorder %s255, %s256
      %p268 = scmp.eq.s32.totalorder %s36, 1
      %p269 = por %p267, %p268
      %p271 = scmp.ne.s32.totalorder %s256, %s270
      %p272 = scmp.eq.s32.totalorder %s36, 0
      %p273 = por %p271, %p272
      %s275 = sadd.s32 %s274, 1
      %p278 = scmp.eq.s32.totalorder %s30, 1
      %p279 = scmp.ne.s32.totalorder %s274, %s276
      %p280 = scmp.eq.s32.totalorder %s30, 0
      %p281 = por %p279, %p280
      %p282 = scmp.ne.s32.totalorder %s274, %s276
      %p283 = scmp.eq.s32.totalorder %s35, 1
      %p284 = por %p282, %p283
      %p285 = scmp.ne.s32.totalorder %s276, %s277
      %p286 = scmp.eq.s32.totalorder %s35, 0
      %p287 = por %p285, %p286
      %p288 = scmp.ne.s32.totalorder %s276, %s277
      %p289 = scmp.eq.s32.totalorder %s36, 1
      %p290 = por %p288, %p289
      %p292 = scmp.ne.s32.totalorder %s277, %s291
      %p293 = scmp.eq.s32.totalorder %s36, 0
      %p294 = por %p292, %p293
      %s296 = sadd.s32 %s295, 1
      %p299 = scmp.eq.s32.totalorder %s30, 1
      %p300 = scmp.ne.s32.totalorder %s295, %s297
      %p301 = scmp.eq.s32.totalorder %s30, 0
      %p302 = por %p300, %p301
      %p303 = scmp.ne.s32.totalorder %s295, %s297
      %p304 = scmp.eq.s32.totalorder %s35, 1
      %p305 = por %p303, %p304
      %p306 = scmp.ne.s32.totalorder %s297, %s298
      %p307 = scmp.eq.s32.totalorder %s35, 0
      %p308 = por %p306, %p307
      %p309 = scmp.ne.s32.totalorder %s297, %s298
      %p310 = scmp.eq.s32.totalorder %s36, 1
      %p311 = por %p309, %p310
      %p313 = scmp.ne.s32.totalorder %s298, %s312
      %p314 = scmp.eq.s32.totalorder %s36, 0
      %p315 = por %p313, %p314
      %s317 = sadd.s32 %s316, 1
      %p320 = scmp.eq.s32.totalorder %s30, 1
      %p321 = scmp.ne.s32.totalorder %s316, %s318
      %p322 = scmp.eq.s32.totalorder %s30, 0
      %p323 = por %p321, %p322
      %p324 = scmp.ne.s32.totalorder %s316, %s318
      %p325 = scmp.eq.s32.totalorder %s35, 1
      %p326 = por %p324, %p325
      %p327 = scmp.ne.s32.totalorder %s318, %s319
      %p328 = scmp.eq.s32.totalorder %s35, 0
      %p329 = por %p327, %p328
      %p330 = scmp.ne.s32.totalorder %s318, %s319
      %p331 = scmp.eq.s32.totalorder %s36, 1
      %p332 = por %p330, %p331
      %p334 = scmp.ne.s32.totalorder %s319, %s333
      %p335 = scmp.eq.s32.totalorder %s36, 0
      %p336 = por %p334, %p335
      %s338 = sadd.s32 %s337, 1
      %p341 = scmp.eq.s32.totalorder %s30, 1
      %p342 = scmp.ne.s32.totalorder %s337, %s339
      %p343 = scmp.eq.s32.totalorder %s30, 0
      %p344 = por %p342, %p343
      %p345 = scmp.ne.s32.totalorder %s337, %s339
      %p346 = scmp.eq.s32.totalorder %s35, 1
      %p347 = por %p345, %p346
      %p348 = scmp.ne.s32.totalorder %s339, %s340
      %p349 = scmp.eq.s32.totalorder %s35, 0
      %p350 = por %p348, %p349
      %p351 = scmp.ne.s32.totalorder %s339, %s340
      %p352 = scmp.eq.s32.totalorder %s36, 1
      %p353 = por %p351, %p352
      %p355 = scmp.ne.s32.totalorder %s340, %s354
      %p356 = scmp.eq.s32.totalorder %s36, 0
      %p357 = por %p355, %p356
      %s359 = sadd.s32 %s358, 1
      %p362 = scmp.eq.s32.totalorder %s30, 1
      %p363 = scmp.ne.s32.totalorder %s358, %s360
      %p364 = scmp.eq.s32.totalorder %s30, 0
      %p365 = por %p363, %p364
      %p366 = scmp.ne.s32.totalorder %s358, %s360
      %p367 = scmp.eq.s32.totalorder %s35, 1
      %p368 = por %p366, %p367
      %p369 = scmp.ne.s32.totalorder %s360, %s361
      %p370 = scmp.eq.s32.totalorder %s35, 0
      %p371 = por %p369, %p370
      %p372 = scmp.ne.s32.totalorder %s360, %s361
      %p373 = scmp.eq.s32.totalorder %s36, 1
      %p374 = por %p372, %p373
      %p376 = scmp.ne.s32.totalorder %s361, %s375
      %p377 = scmp.eq.s32.totalorder %s36, 0
      %p378 = por %p376, %p377
      %s380 = sadd.s32 %s379, 1
      %p383 = scmp.eq.s32.totalorder %s30, 1
      %p384 = scmp.ne.s32.totalorder %s379, %s381
      %p385 = scmp.eq.s32.totalorder %s30, 0
      %p386 = por %p384, %p385
      %p387 = scmp.ne.s32.totalorder %s379, %s381
      %p388 = scmp.eq.s32.totalorder %s35, 1
      %p389 = por %p387, %p388
      %p390 = scmp.ne.s32.totalorder %s381, %s382
      %p391 = scmp.eq.s32.totalorder %s35, 0
      %p392 = por %p390, %p391
      %p393 = scmp.ne.s32.totalorder %s381, %s382
      %p394 = scmp.eq.s32.totalorder %s36, 1
      %p395 = por %p393, %p394
      %p397 = scmp.ne.s32.totalorder %s382, %s396
      %p398 = scmp.eq.s32.totalorder %s36, 0
      %p399 = por %p397, %p398
      %s401 = sadd.s32 %s400, 1
      %p404 = scmp.eq.s32.totalorder %s30, 1
      %p405 = scmp.ne.s32.totalorder %s400, %s402
      %p406 = scmp.eq.s32.totalorder %s30, 0
      %p407 = por %p405, %p406
      %p408 = scmp.ne.s32.totalorder %s400, %s402
      %p409 = scmp.eq.s32.totalorder %s35, 1
      %p410 = por %p408, %p409
      %p411 = scmp.ne.s32.totalorder %s402, %s403
      %p412 = scmp.eq.s32.totalorder %s35, 0
      %p413 = por %p411, %p412
      %p414 = scmp.ne.s32.totalorder %s402, %s403
      %p415 = scmp.eq.s32.totalorder %s36, 1
      %p416 = por %p414, %p415
      %p418 = scmp.ne.s32.totalorder %s403, %s417
      %p419 = scmp.eq.s32.totalorder %s36, 0
      %p420 = por %p418, %p419
      %s422 = sadd.s32 %s421, 1
      %p425 = scmp.eq.s32.totalorder %s30, 1
      %p426 = scmp.ne.s32.totalorder %s421, %s423
      %p427 = scmp.eq.s32.totalorder %s30, 0
      %p428 = por %p426, %p427
      %p429 = scmp.ne.s32.totalorder %s421, %s423
      %p430 = scmp.eq.s32.totalorder %s35, 1
      %p431 = por %p429, %p430
      %p432 = scmp.ne.s32.totalorder %s423, %s424
      %p433 = scmp.eq.s32.totalorder %s35, 0
      %p434 = por %p432, %p433
      %p435 = scmp.ne.s32.totalorder %s423, %s424
      %p436 = scmp.eq.s32.totalorder %s36, 1
      %p437 = por %p435, %p436
      %p439 = scmp.ne.s32.totalorder %s424, %s438
      %p440 = scmp.eq.s32.totalorder %s36, 0
      %p441 = por %p439, %p440
      %s443 = sadd.s32 %s442, 1
      %p446 = scmp.eq.s32.totalorder %s30, 1
      %p447 = scmp.ne.s32.totalorder %s442, %s444
      %p448 = scmp.eq.s32.totalorder %s30, 0
      %p449 = por %p447, %p448
      %p450 = scmp.ne.s32.totalorder %s442, %s444
      %p451 = scmp.eq.s32.totalorder %s35, 1
      %p452 = por %p450, %p451
      %p453 = scmp.ne.s32.totalorder %s444, %s445
      %p454 = scmp.eq.s32.totalorder %s35, 0
      %p455 = por %p453, %p454
      %p456 = scmp.ne.s32.totalorder %s444, %s445
      %p457 = scmp.eq.s32.totalorder %s36, 1
      %p458 = por %p456, %p457
      %p460 = scmp.ne.s32.totalorder %s445, %s459
      %p461 = scmp.eq.s32.totalorder %s36, 0
      %p462 = por %p460, %p461
      %s464 = sadd.s32 %s463, 1
      %p467 = scmp.eq.s32.totalorder %s30, 1
      %p468 = scmp.ne.s32.totalorder %s463, %s465
      %p469 = scmp.eq.s32.totalorder %s30, 0
      %p470 = por %p468, %p469
      %p471 = scmp.ne.s32.totalorder %s463, %s465
      %p472 = scmp.eq.s32.totalorder %s35, 1
      %p473 = por %p471, %p472
      %p474 = scmp.ne.s32.totalorder %s465, %s466
      %p475 = scmp.eq.s32.totalorder %s35, 0
      %p476 = por %p474, %p475
      %p477 = scmp.ne.s32.totalorder %s465, %s466
      %p478 = scmp.eq.s32.totalorder %s36, 1
      %p479 = por %p477, %p478
      %p481 = scmp.ne.s32.totalorder %s466, %s480
      %p482 = scmp.eq.s32.totalorder %s36, 0
      %p483 = por %p481, %p482
      %s484 = ssub.s32 %s30, %s37
      %p485 = scmp.eq.s32.totalorder %s484, 0
      %s487 = sadd.s32 %s486, 1
      %s488 = scalar_select %p485, %s486, %s487
      %p491 = pneg %p485
      %p492 = scmp.eq.s32.totalorder %s30, 1
      %p493 = por %p491, %p492
      %p494 = scmp.ne.s32.totalorder %s486, %s489
      %p495 = scmp.eq.s32.totalorder %s30, 0
      %p496 = por %p494, %p495
      %p497 = scmp.ne.s32.totalorder %s486, %s489
      %p498 = scmp.eq.s32.totalorder %s35, 1
      %p499 = por %p497, %p498
      %p500 = scmp.ne.s32.totalorder %s489, %s490
      %p501 = scmp.eq.s32.totalorder %s35, 0
      %p502 = por %p500, %p501
      %p503 = scmp.ne.s32.totalorder %s489, %s490
      %p504 = scmp.eq.s32.totalorder %s36, 1
      %p505 = por %p503, %p504
      %p507 = scmp.ne.s32.totalorder %s490, %s506
      %p508 = scmp.eq.s32.totalorder %s36, 0
      %p509 = por %p507, %p508
      %p510 = scmp.le.s32.totalorder 1, %s30
      %p511 = scmp.lt.s32.totalorder %s30, 3
      %p512 = pnand %p510, %p511
      %p513 = pneg %p512
      // Predicated region
      $region9: #{autoencoder_forward.1} parent=5 // pred_check
        _
      $region10: #{autoencoder_forward.1} parent=5 // pred_check_branch
        %515 = sbr.rel (%p512) target = $region12
      $region11: #{autoencoder_forward.1} parent=5 // pred_region
        %s516 = ssub.s32 %s30, 1
        // Predicated region
        $region13: #{autoencoder_forward.1} parent=11 // pred_check
          %p517 = pneg %p77
        $region14: #{autoencoder_forward.1} parent=11 // pred_check_branch
          %519 = sbr.rel (%p517) target = $region16
        $region15: #{autoencoder_forward.1} parent=11 // pred_region
          _
        $region16: #{autoencoder_forward.1} parent=11 // pred_fallthru
          _
        // Predicated region
        $region17: #{autoencoder_forward.1} parent=11 // pred_check
          %p520 = pneg %p98
        $region18: #{autoencoder_forward.1} parent=11 // pred_check_branch
          %522 = sbr.rel (%p520) target = $region20
        $region19: #{autoencoder_forward.1} parent=11 // pred_region
          _
        $region20: #{autoencoder_forward.1} parent=11 // pred_fallthru
          _
        // Predicated region
        $region21: #{autoencoder_forward.1} parent=11 // pred_check
          %p523 = pneg %p119
        $region22: #{autoencoder_forward.1} parent=11 // pred_check_branch
          %525 = sbr.rel (%p523) target = $region24
        $region23: #{autoencoder_forward.1} parent=11 // pred_region
          _
        $region24: #{autoencoder_forward.1} parent=11 // pred_fallthru
          _
        // Predicated region
        $region25: #{autoencoder_forward.1} parent=11 // pred_check
          %p526 = pneg %p140
        $region26: #{autoencoder_forward.1} parent=11 // pred_check_branch
          %528 = sbr.rel (%p526) target = $region28
        $region27: #{autoencoder_forward.1} parent=11 // pred_region
          _
        $region28: #{autoencoder_forward.1} parent=11 // pred_fallthru
          _
        // Predicated region
        $region29: #{autoencoder_forward.1} parent=11 // pred_check
          %p529 = pneg %p161
        $region30: #{autoencoder_forward.1} parent=11 // pred_check_branch
          %531 = sbr.rel (%p529) target = $region32
        $region31: #{autoencoder_forward.1} parent=11 // pred_region
          _
        $region32: #{autoencoder_forward.1} parent=11 // pred_fallthru
          _
        // Predicated region
        $region33: #{autoencoder_forward.1} parent=11 // pred_check
          %p532 = pneg %p182
        $region34: #{autoencoder_forward.1} parent=11 // pred_check_branch
          %534 = sbr.rel (%p532) target = $region36
        $region35: #{autoencoder_forward.1} parent=11 // pred_region
          _
        $region36: #{autoencoder_forward.1} parent=11 // pred_fallthru
          _
        // Predicated region
        $region37: #{autoencoder_forward.1} parent=11 // pred_check
          %p535 = pneg %p203
        $region38: #{autoencoder_forward.1} parent=11 // pred_check_branch
          %537 = sbr.rel (%p535) target = $region40
        $region39: #{autoencoder_forward.1} parent=11 // pred_region
          _
        $region40: #{autoencoder_forward.1} parent=11 // pred_fallthru
          _
        // Predicated region
        $region41: #{autoencoder_forward.1} parent=11 // pred_check
          %p538 = pneg %p224
        $region42: #{autoencoder_forward.1} parent=11 // pred_check_branch
          %540 = sbr.rel (%p538) target = $region44
        $region43: #{autoencoder_forward.1} parent=11 // pred_region
          _
        $region44: #{autoencoder_forward.1} parent=11 // pred_fallthru
          _
        // Predicated region
        $region45: #{autoencoder_forward.1} parent=11 // pred_check
          %p541 = pneg %p245
        $region46: #{autoencoder_forward.1} parent=11 // pred_check_branch
          %543 = sbr.rel (%p541) target = $region48
        $region47: #{autoencoder_forward.1} parent=11 // pred_region
          _
        $region48: #{autoencoder_forward.1} parent=11 // pred_fallthru
          _
        // Predicated region
        $region49: #{autoencoder_forward.1} parent=11 // pred_check
          %p544 = pneg %p266
        $region50: #{autoencoder_forward.1} parent=11 // pred_check_branch
          %546 = sbr.rel (%p544) target = $region52
        $region51: #{autoencoder_forward.1} parent=11 // pred_region
          _
        $region52: #{autoencoder_forward.1} parent=11 // pred_fallthru
          _
        // Predicated region
        $region53: #{autoencoder_forward.1} parent=11 // pred_check
          %p547 = pneg %p287
        $region54: #{autoencoder_forward.1} parent=11 // pred_check_branch
          %549 = sbr.rel (%p547) target = $region56
        $region55: #{autoencoder_forward.1} parent=11 // pred_region
          %s551 = ssub.s32 6144, 6144
          %552 = vsyncadd [#allocation4], %s551
          %s553 = sshll.u32 [#allocation3], 4
          %s554 = int_to_ptr.vmem [resolvable:$true] %s553
          %559 = dma.hbm_to_vmem [thread:$0]  %s11, 6144, %s554, [#allocation4], 64, 64, 4
        $region56: #{autoencoder_forward.1} parent=11 // pred_fallthru
          _
        // Predicated region
        $region57: #{autoencoder_forward.1} parent=11 // pred_check
          %p560 = pneg %p308
        $region58: #{autoencoder_forward.1} parent=11 // pred_check_branch
          %562 = sbr.rel (%p560) target = $region60
        $region59: #{autoencoder_forward.1} parent=11 // pred_region
          _
        $region60: #{autoencoder_forward.1} parent=11 // pred_fallthru
          _
        // Predicated region
        $region61: #{autoencoder_forward.1} parent=11 // pred_check
          %p563 = pneg %p329
        $region62: #{autoencoder_forward.1} parent=11 // pred_check_branch
          %565 = sbr.rel (%p563) target = $region64
        $region63: #{autoencoder_forward.1} parent=11 // pred_region
          _
        $region64: #{autoencoder_forward.1} parent=11 // pred_fallthru
          _
        // Predicated region
        $region65: #{autoencoder_forward.1} parent=11 // pred_check
          %p566 = pneg %p350
        $region66: #{autoencoder_forward.1} parent=11 // pred_check_branch
          %568 = sbr.rel (%p566) target = $region68
        $region67: #{autoencoder_forward.1} parent=11 // pred_region
          _
        $region68: #{autoencoder_forward.1} parent=11 // pred_fallthru
          _
        // Predicated region
        $region69: #{autoencoder_forward.1} parent=11 // pred_check
          %p569 = pneg %p371
        $region70: #{autoencoder_forward.1} parent=11 // pred_check_branch
          %571 = sbr.rel (%p569) target = $region72
        $region71: #{autoencoder_forward.1} parent=11 // pred_region
          _
        $region72: #{autoencoder_forward.1} parent=11 // pred_fallthru
          _
        // Predicated region
        $region73: #{autoencoder_forward.1} parent=11 // pred_check
          %p572 = pneg %p392
        $region74: #{autoencoder_forward.1} parent=11 // pred_check_branch
          %574 = sbr.rel (%p572) target = $region76
        $region75: #{autoencoder_forward.1} parent=11 // pred_region
          _
        $region76: #{autoencoder_forward.1} parent=11 // pred_fallthru
          _
        // Predicated region
        $region77: #{autoencoder_forward.1} parent=11 // pred_check
          %p575 = pneg %p413
        $region78: #{autoencoder_forward.1} parent=11 // pred_check_branch
          %577 = sbr.rel (%p575) target = $region80
        $region79: #{autoencoder_forward.1} parent=11 // pred_region
          _
        $region80: #{autoencoder_forward.1} parent=11 // pred_fallthru
          _
        // Predicated region
        $region81: #{autoencoder_forward.1} parent=11 // pred_check
          %p578 = pneg %p434
        $region82: #{autoencoder_forward.1} parent=11 // pred_check_branch
          %580 = sbr.rel (%p578) target = $region84
        $region83: #{autoencoder_forward.1} parent=11 // pred_region
          _
        $region84: #{autoencoder_forward.1} parent=11 // pred_fallthru
          _
        // Predicated region
        $region85: #{autoencoder_forward.1} parent=11 // pred_check
          %p581 = pneg %p455
        $region86: #{autoencoder_forward.1} parent=11 // pred_check_branch
          %583 = sbr.rel (%p581) target = $region88
        $region87: #{autoencoder_forward.1} parent=11 // pred_region
          _
        $region88: #{autoencoder_forward.1} parent=11 // pred_fallthru
          _
        // Predicated region
        $region89: #{autoencoder_forward.1} parent=11 // pred_check
          %p584 = pneg %p476
        $region90: #{autoencoder_forward.1} parent=11 // pred_check_branch
          %586 = sbr.rel (%p584) target = $region92
        $region91: #{autoencoder_forward.1} parent=11 // pred_region
          _
        $region92: #{autoencoder_forward.1} parent=11 // pred_fallthru
          _
      $region12: #{autoencoder_forward.1} parent=5 // pred_fallthru
        _
      %p587 = scmp.lt.s32.totalorder %s30, 2
      // Predicated region
      $region93: #{autoencoder_forward.1} parent=5 // pred_check
        %p588 = pneg %p587
      $region94: #{autoencoder_forward.1} parent=5 // pred_check_branch
        %590 = sbr.rel (%p588) target = $region96
      $region95: #{autoencoder_forward.1} parent=5 // pred_region
        // Predicated region
        $region97: #{autoencoder_forward.1} parent=95 // pred_check
          %p591 = pneg %p50
        $region98: #{autoencoder_forward.1} parent=95 // pred_check_branch
          %593 = sbr.rel (%p591) target = $region100
        $region99: #{autoencoder_forward.1} parent=95 // pred_region
          %p594 = scmp.lt.s32.totalorder %s30, 1
          %s595 = scalar_select %p594, %s30, 1
          %s596 = smul.addr %s595, 8
          %s597 = smul.addr %s596, 8
          %s598 = scalar_lea.vmem %s0, %s597
        $region100: #{autoencoder_forward.1} parent=95 // pred_fallthru
          _
      $region96: #{autoencoder_forward.1} parent=5 // pred_fallthru
        _
      %p599 = scmp.le.s32.totalorder 1, %s30
      %p600 = scmp.lt.s32.totalorder %s30, 3
      %p601 = pnand %p599, %p600
      %p602 = pneg %p601
      // Predicated region
      $region101: #{autoencoder_forward.1} parent=5 // pred_check
        _
      $region102: #{autoencoder_forward.1} parent=5 // pred_check_branch
        %604 = sbr.rel (%p601) target = $region104
      $region103: #{autoencoder_forward.1} parent=5 // pred_region
        %s605 = ssub.s32 %s30, 1
        // Predicated region
        $region105: #{autoencoder_forward.1} parent=103 // pred_check
          %p606 = pneg %p287
        $region106: #{autoencoder_forward.1} parent=103 // pred_check_branch
          %608 = sbr.rel (%p606) target = $region108
        $region107: #{autoencoder_forward.1} parent=103 // pred_region
          %609 = dma.done [#allocation4], 6144
        $region108: #{autoencoder_forward.1} parent=103 // pred_fallthru
          _
        %p610 = scmp.lt.s32.totalorder %s35, 1
        %s611 = scalar_select %p610, %s35, 1
        %s612 = smul.addr %s611, 8
        %s613 = smul.addr %s612, 8
        %s614 = scalar_lea.vmem %s0, %s613
        %p615 = pneg %p56
        %p616 = pneg %p53
        %p617 = pneg %p77
        %p618 = pneg %p74
        %p619 = pneg %p98
        %p620 = pneg %p95
        %p621 = pneg %p119
        %p622 = pneg %p116
        %p623 = pneg %p140
        %p624 = pneg %p137
        %p625 = pneg %p161
        %p626 = pneg %p158
        %p627 = pneg %p182
        %p628 = pneg %p179
        %p629 = pneg %p203
        %p630 = pneg %p200
        %p631 = pneg %p224
        %p632 = pneg %p221
        %p633 = pneg %p245
        %p634 = pneg %p242
        %p635 = pneg %p266
        %p636 = pneg %p263
        %p637 = pneg %p287
        %p638 = pneg %p284
        %p639 = pneg %p308
        %p640 = pneg %p305
        %p641 = pneg %p329
        %p642 = pneg %p326
        %p643 = pneg %p350
        %p644 = pneg %p347
        %p645 = pneg %p371
        %p646 = pneg %p368
        %p647 = pneg %p392
        %p648 = pneg %p389
        %p649 = pneg %p413
        %p650 = pneg %p410
        %p651 = pneg %p434
        %p652 = pneg %p431
        %p653 = pneg %p455
        %p654 = pneg %p452
        %p655 = pneg %p476
        %p656 = pneg %p473
        %p657 = pneg %p502
        %p658 = pneg %p499
        %p659 = scmp.lt.s32.totalorder %s35, 1
        %s660 = scalar_select %p659, %s35, 1
        %s661 = smul.addr %s660, 8
        %s662 = smul.addr %s661, 8
        %s663 = scalar_lea.vmem %s21, %s662
        %p664 = scmp.lt.s32.totalorder %s35, 1
        %s665 = scalar_select %p664, %s35, 1
        %s666 = smul.addr %s665, 8
        %s667 = smul.addr %s666, 8
        %s668 = scalar_lea.vmem %s0, %s667
        %p669 = scmp.lt.s32.totalorder %s35, 1
        %s670 = scalar_select %p669, %s35, 1
        %s671 = smul.addr %s670, 8
        %s672 = smul.addr %s671, 8
        %s673 = scalar_lea.vmem %s21, %s672
        %v675 = vld [vmem:[%s668] sm:$0xff]
        %v676 = vld [vmem:[%s668 + $0x8] sm:$0xff]
        %v677 = vld [vmem:[%s668 + $0x10] sm:$0xff]
        %v678 = vld [vmem:[%s668 + $0x18] sm:$0xff]
        %v679 = vld [vmem:[%s668 + $0x20] sm:$0xff]
        %v680 = vld [vmem:[%s668 + $0x28] sm:$0xff]
        %v681 = vld [vmem:[%s668 + $0x30] sm:$0xff]
        %v682 = vld [vmem:[%s668 + $0x38] sm:$0xff]
        %v683 = vlaneseq
        %v684 = vshrl.u32 %v683, 7
        %v685 = vadd.s32 %v684, 8
        %v686 = vadd.s32 %v684, 16
        %v687 = vadd.s32 %v684, 24
        %v688 = vlaneseq
        %v689 = vand.u32 %v688, 127
        %v690 = vmul.u32 %v684, 2
        %v691 = vmul.u32 %v685, 2
        %v692 = vmul.u32 %v686, 2
        %v693 = vmul.u32 %v687, 2
        %v694 = vadd.s32 %v690, 4294967295
        %v695 = vadd.s32 %v691, 4294967295
        %v696 = vadd.s32 %v692, 4294967295
        %v697 = vadd.s32 %v693, 4294967295
        %vm698 = vcmp.eq.s32.totalorder %v689, %v694
        %vm699 = vcmp.eq.s32.totalorder %v689, %v695
        %vm700 = vcmp.eq.s32.totalorder %v689, %v696
        %vm701 = vcmp.eq.s32.totalorder %v689, %v697
        %v702 = vsel %vm698, 1.0, 0.0
        %v703 = vsel %vm699, 1.0, 0.0
        %v704 = vsel %vm700, 1.0, 0.0
        %v705 = vsel %vm701, 1.0, 0.0
        %vm706 = vcmp.eq.s32.totalorder %v689, %v690
        %vm707 = vcmp.eq.s32.totalorder %v689, %v691
        %vm708 = vcmp.eq.s32.totalorder %v689, %v692
        %vm709 = vcmp.eq.s32.totalorder %v689, %v693
        %v710 = vsel %vm706, 1.0, 0.0
        %v711 = vsel %vm707, 1.0, 0.0
        %v712 = vsel %vm708, 1.0, 0.0
        %v713 = vsel %vm709, 1.0, 0.0
        %v714 = vadd.s32 %v690, 1
        %v715 = vadd.s32 %v691, 1
        %v716 = vadd.s32 %v692, 1
        %v717 = vadd.s32 %v693, 1
        %vm718 = vcmp.eq.s32.totalorder %v689, %v714
        %vm719 = vcmp.eq.s32.totalorder %v689, %v715
        %vm720 = vcmp.eq.s32.totalorder %v689, %v716
        %vm721 = vcmp.eq.s32.totalorder %v689, %v717
        %v722 = vsel %vm718, 1.0, 0.0
        %v723 = vsel %vm719, 1.0, 0.0
        %v724 = vsel %vm720, 1.0, 0.0
        %v725 = vsel %vm721, 1.0, 0.0
        %vm726 = vcmask 523264
        %v728 = vsel %vm726, %v702, 0
        %v731 = vsel %vm726, %v703, 0
        %v734 = vsel %vm726, %v704, 0
        %v737 = vsel %vm726, %v705, 0
        %739 = vmatprep.subr.mxu0 0.0
        %740 = vmatpush1.msra.mxu0 %v675
        %741 = vmatprep.subr.mxu0 0.0
        %742 = vmatpush1.msra.mxu0 %v676
        %743 = vmatprep.subr.mxu0 0.0
        %744 = vmatpush1.msra.mxu0 %v677
        %745 = vmatprep.subr.mxu0 0.0
        %746 = vmatpush1.msra.mxu0 %v678
        %747 = vmatprep.subr.mxu0 0.0
        %748 = vmatpush1.msra.mxu0 %v679
        %749 = vmatprep.subr.mxu0 0.0
        %750 = vmatpush1.msra.mxu0 %v680
        %751 = vmatprep.subr.mxu0 0.0
        %752 = vmatpush1.msra.mxu0 %v681
        %753 = vmatprep.subr.mxu0 0.0
        %754 = vmatpush1.msra.mxu0 %v682
        %755 = vmatprep.subr.mxu0 0.0
        %756 = vmatpush1.msra.mxu0 0.0
        %757 = vmatprep.subr.mxu0 0.0
        %758 = vmatpush1.msra.mxu0 0.0
        %759 = vmatprep.subr.mxu0 0.0
        %760 = vmatpush1.msra.mxu0 0.0
        %761 = vmatprep.subr.mxu0 0.0
        %762 = vmatpush1.msra.mxu0 0.0
        %763 = vmatprep.subr.mxu0 0.0
        %764 = vmatpush1.msra.mxu0 0.0
        %765 = vmatprep.subr.mxu0 0.0
        %766 = vmatpush1.msra.mxu0 0.0
        %767 = vmatprep.subr.mxu0 0.0
        %768 = vmatpush1.msra.mxu0 0.0
        %769 = vmatprep.subr.mxu0 0.0
        %770 = vmatpush1.msra.mxu0 0.0
        %771 = vmatprep.subr.mxu0 0.0
        %772 = vmatpush1.msra.mxu0 0.0
        %773 = vmatprep.subr.mxu0 0.0
        %774 = vmatpush1.msra.mxu0 0.0
        %775 = vmatprep.subr.mxu0 0.0
        %776 = vmatpush1.msra.mxu0 0.0
        %777 = vmatprep.subr.mxu0 0.0
        %778 = vmatpush1.msra.mxu0 0.0
        %779 = vmatprep.subr.mxu0 0.0
        %780 = vmatpush1.msra.mxu0 0.0
        %781 = vmatprep.subr.mxu0 0.0
        %782 = vmatpush1.msra.mxu0 0.0
        %783 = vmatprep.subr.mxu0 0.0
        %784 = vmatpush1.msra.mxu0 0.0
        %785 = vmatprep.subr.mxu0 0.0
        %786 = vmatpush1.msra.mxu0 0.0
        %787 = vmatprep.subr.mxu0 0.0
        %788 = vmatpush1.msra.mxu0 0.0
        %789 = vmatprep.subr.mxu0 0.0
        %790 = vmatpush1.msra.mxu0 0.0
        %791 = vmatprep.subr.mxu0 0.0
        %792 = vmatpush1.msra.mxu0 0.0
        %793 = vmatprep.subr.mxu0 0.0
        %794 = vmatpush1.msra.mxu0 0.0
        %795 = vmatprep.subr.mxu0 0.0
        %796 = vmatpush1.msra.mxu0 0.0
        %797 = vmatprep.subr.mxu0 0.0
        %798 = vmatpush1.msra.mxu0 0.0
        %799 = vmatprep.subr.mxu0 0.0
        %800 = vmatpush1.msra.mxu0 0.0
        %801 = vmatprep.subr.mxu0 0.0
        %802 = vmatpush1.msra.mxu0 0.0
        %803 = vmatprep.mubr.f32.mxu0 0.0
        %804 = vmatmul.mubr.f32.gmra.mrb[0].mxu0 %v728
        %v805 = vpop.f32.mrb[0].mxu0
        %v806 = vadd.f32 0.0, %v805
        %v807 = vpop.f32.mrb[0].mxu0
        %808 = vmatprep.mubr.f32.mxu0 0.0
        %809 = vmatmul.mubr.f32.gmra.mrb[0].mxu0 %v731
        %v810 = vpop.f32.mrb[0].mxu0
        %v811 = vadd.f32 0.0, %v810
        %v812 = vpop.f32.mrb[0].mxu0
        %813 = vmatprep.mubr.f32.mxu0 0.0
        %814 = vmatmul.mubr.f32.gmra.mrb[0].mxu0 %v734
        %v815 = vpop.f32.mrb[0].mxu0
        %v816 = vadd.f32 0.0, %v815
        %v817 = vpop.f32.mrb[0].mxu0
        %818 = vmatprep.mubr.f32.mxu0 0.0
        %819 = vmatmul.mubr.f32.gmra.mrb[0].mxu0 %v737
        %v820 = vpop.f32.mrb[0].mxu0
        %v821 = vadd.f32 0.0, %v820
        %v822 = vpop.f32.mrb[0].mxu0
        %823 = vdwg.mxu0
        %v824 = vpack.c.bf16 %v811, %v806
        %v825 = vpack.c.bf16 %v821, %v816
        %v826 = vld [vmem:[%s1] sm:$0x1]
        %v828 = vsel %vm726, %v710, 0
        %v831 = vsel %vm726, %v711, 0
        %v834 = vsel %vm726, %v712, 0
        %v837 = vsel %vm726, %v713, 0
        %839 = vmatprep.subr.mxu0 0.0
        %840 = vmatpush1.msra.mxu0 %v675
        %841 = vmatprep.subr.mxu0 0.0
        %842 = vmatpush1.msra.mxu0 %v676
        %843 = vmatprep.subr.mxu0 0.0
        %844 = vmatpush1.msra.mxu0 %v677
        %845 = vmatprep.subr.mxu0 0.0
        %846 = vmatpush1.msra.mxu0 %v678
        %847 = vmatprep.subr.mxu0 0.0
        %848 = vmatpush1.msra.mxu0 %v679
        %849 = vmatprep.subr.mxu0 0.0
        %850 = vmatpush1.msra.mxu0 %v680
        %851 = vmatprep.subr.mxu0 0.0
        %852 = vmatpush1.msra.mxu0 %v681
        %853 = vmatprep.subr.mxu0 0.0
        %854 = vmatpush1.msra.mxu0 %v682
        %855 = vmatprep.subr.mxu0 0.0
        %856 = vmatpush1.msra.mxu0 0.0
        %857 = vmatprep.subr.mxu0 0.0
        %858 = vmatpush1.msra.mxu0 0.0
        %859 = vmatprep.subr.mxu0 0.0
        %860 = vmatpush1.msra.mxu0 0.0
        %861 = vmatprep.subr.mxu0 0.0
        %862 = vmatpush1.msra.mxu0 0.0
        %863 = vmatprep.subr.mxu0 0.0
        %864 = vmatpush1.msra.mxu0 0.0
        %865 = vmatprep.subr.mxu0 0.0
        %866 = vmatpush1.msra.mxu0 0.0
        %867 = vmatprep.subr.mxu0 0.0
        %868 = vmatpush1.msra.mxu0 0.0
        %869 = vmatprep.subr.mxu0 0.0
        %870 = vmatpush1.msra.mxu0 0.0
        %871 = vmatprep.subr.mxu0 0.0
        %872 = vmatpush1.msra.mxu0 0.0
        %873 = vmatprep.subr.mxu0 0.0
        %874 = vmatpush1.msra.mxu0 0.0
        %875 = vmatprep.subr.mxu0 0.0
        %876 = vmatpush1.msra.mxu0 0.0
        %877 = vmatprep.subr.mxu0 0.0
        %878 = vmatpush1.msra.mxu0 0.0
        %879 = vmatprep.subr.mxu0 0.0
        %880 = vmatpush1.msra.mxu0 0.0
        %881 = vmatprep.subr.mxu0 0.0
        %882 = vmatpush1.msra.mxu0 0.0
        %883 = vmatprep.subr.mxu0 0.0
        %884 = vmatpush1.msra.mxu0 0.0
        %885 = vmatprep.subr.mxu0 0.0
        %886 = vmatpush1.msra.mxu0 0.0
        %887 = vmatprep.subr.mxu0 0.0
        %888 = vmatpush1.msra.mxu0 0.0
        %889 = vmatprep.subr.mxu0 0.0
        %890 = vmatpush1.msra.mxu0 0.0
        %891 = vmatprep.subr.mxu0 0.0
        %892 = vmatpush1.msra.mxu0 0.0
        %893 = vmatprep.subr.mxu0 0.0
        %894 = vmatpush1.msra.mxu0 0.0
        %895 = vmatprep.subr.mxu0 0.0
        %896 = vmatpush1.msra.mxu0 0.0
        %897 = vmatprep.subr.mxu0 0.0
        %898 = vmatpush1.msra.mxu0 0.0
        %899 = vmatprep.subr.mxu0 0.0
        %900 = vmatpush1.msra.mxu0 0.0
        %901 = vmatprep.subr.mxu0 0.0
        %902 = vmatpush1.msra.mxu0 0.0
        %903 = vmatprep.mubr.f32.mxu0 0.0
        %904 = vmatmul.mubr.f32.gmra.mrb[0].mxu0 %v828
        %v905 = vpop.f32.mrb[0].mxu0
        %v906 = vadd.f32 0.0, %v905
        %v907 = vpop.f32.mrb[0].mxu0
        %908 = vmatprep.mubr.f32.mxu0 0.0
        %909 = vmatmul.mubr.f32.gmra.mrb[0].mxu0 %v831
        %v910 = vpop.f32.mrb[0].mxu0
        %v911 = vadd.f32 0.0, %v910
        %v912 = vpop.f32.mrb[0].mxu0
        %913 = vmatprep.mubr.f32.mxu0 0.0
        %914 = vmatmul.mubr.f32.gmra.mrb[0].mxu0 %v834
        %v915 = vpop.f32.mrb[0].mxu0
        %v916 = vadd.f32 0.0, %v915
        %v917 = vpop.f32.mrb[0].mxu0
        %918 = vmatprep.mubr.f32.mxu0 0.0
        %919 = vmatmul.mubr.f32.gmra.mrb[0].mxu0 %v837
        %v920 = vpop.f32.mrb[0].mxu0
        %v921 = vadd.f32 0.0, %v920
        %v922 = vpop.f32.mrb[0].mxu0
        %923 = vdwg.mxu0
        %v924 = vpack.c.bf16 %v911, %v906
        %v925 = vpack.c.bf16 %v921, %v916
        %s926 = scalar_lea.vmem %s1, 1
        %v927 = vld [vmem:[%s926] sm:$0x1]
        %vm928 = vcmask 7168
        %v930 = vsel %vm928, %v924, 0
        %v933 = vsel %vm928, %v925, 0
        %vm935 = vcmask 1040384
        %v936 = vsel 0, 4294967295, 65535
        %v937 = vsel %vm935, %v936, 0
        %v939 = vand.u32 %v927, %v937
        %941 = vmatprep.subr.bf16.mxu0 0
        %942 = vmatpush1.bf16.msra.mxu0 %v939
        %943 = vmatprep.subr.bf16.mxu0 0
        %944 = vmatpush1.bf16.msra.mxu0 0
        %945 = vmatprep.subr.bf16.mxu0 0
        %946 = vmatpush1.bf16.msra.mxu0 0
        %947 = vmatprep.subr.bf16.mxu0 0
        %948 = vmatpush1.bf16.msra.mxu0 0
        %949 = vmatprep.subr.bf16.mxu0 0
        %950 = vmatpush1.bf16.msra.mxu0 0
        %951 = vmatprep.subr.bf16.mxu0 0
        %952 = vmatpush1.bf16.msra.mxu0 0
        %953 = vmatprep.subr.bf16.mxu0 0
        %954 = vmatpush1.bf16.msra.mxu0 0
        %955 = vmatprep.subr.bf16.mxu0 0
        %956 = vmatpush1.bf16.msra.mxu0 0
        %957 = vmatprep.subr.bf16.mxu0 0
        %958 = vmatpush1.bf16.msra.mxu0 0
        %959 = vmatprep.subr.bf16.mxu0 0
        %960 = vmatpush1.bf16.msra.mxu0 0
        %961 = vmatprep.subr.bf16.mxu0 0
        %962 = vmatpush1.bf16.msra.mxu0 0
        %963 = vmatprep.subr.bf16.mxu0 0
        %964 = vmatpush1.bf16.msra.mxu0 0
        %965 = vmatprep.subr.bf16.mxu0 0
        %966 = vmatpush1.bf16.msra.mxu0 0
        %967 = vmatprep.subr.bf16.mxu0 0
        %968 = vmatpush1.bf16.msra.mxu0 0
        %969 = vmatprep.subr.bf16.mxu0 0
        %970 = vmatpush1.bf16.msra.mxu0 0
        %971 = vmatprep.subr.bf16.mxu0 0
        %972 = vmatpush1.bf16.msra.mxu0 0
        %973 = vmatprep.mubr.bf16.mxu0 0
        %974 = vmatmul.mubr.bf16.gmra.mrb[0].mxu0 %v930
        %v975 = vpop.f32.mrb[0].mxu0
        %v976 = vadd.f32 0.0, %v975
        %v977 = vpop.f32.mrb[0].mxu0
        %v978 = vpop.f32.mrb[0].mxu0
        %v979 = vadd.f32 0.0, %v978
        %v980 = vpop.f32.mrb[0].mxu0
        %981 = vmatprep.mubr.bf16.mxu0 0
        %982 = vmatmul.mubr.bf16.gmra.mrb[0].mxu0 %v933
        %v983 = vpop.f32.mrb[0].mxu0
        %v984 = vadd.f32 0.0, %v983
        %v985 = vpop.f32.mrb[0].mxu0
        %v986 = vpop.f32.mrb[0].mxu0
        %v987 = vadd.f32 0.0, %v986
        %v988 = vpop.f32.mrb[0].mxu0
        %989 = vdwg.mxu0
        %v991 = vsel %vm928, %v824, 0
        %v994 = vsel %vm928, %v825, 0
        %v997 = vand.u32 %v826, %v937
        %999 = vmatprep.subr.bf16.mxu0 0
        %1000 = vmatpush1.bf16.msra.mxu0 %v997
        %1001 = vmatprep.subr.bf16.mxu0 0
        %1002 = vmatpush1.bf16.msra.mxu0 0
        %1003 = vmatprep.subr.bf16.mxu0 0
        %1004 = vmatpush1.bf16.msra.mxu0 0
        %1005 = vmatprep.subr.bf16.mxu0 0
        %1006 = vmatpush1.bf16.msra.mxu0 0
        %1007 = vmatprep.subr.bf16.mxu0 0
        %1008 = vmatpush1.bf16.msra.mxu0 0
        %1009 = vmatprep.subr.bf16.mxu0 0
        %1010 = vmatpush1.bf16.msra.mxu0 0
        %1011 = vmatprep.subr.bf16.mxu0 0
        %1012 = vmatpush1.bf16.msra.mxu0 0
        %1013 = vmatprep.subr.bf16.mxu0 0
        %1014 = vmatpush1.bf16.msra.mxu0 0
        %1015 = vmatprep.subr.bf16.mxu0 0
        %1016 = vmatpush1.bf16.msra.mxu0 0
        %1017 = vmatprep.subr.bf16.mxu0 0
        %1018 = vmatpush1.bf16.msra.mxu0 0
        %1019 = vmatprep.subr.bf16.mxu0 0
        %1020 = vmatpush1.bf16.msra.mxu0 0
        %1021 = vmatprep.subr.bf16.mxu0 0
        %1022 = vmatpush1.bf16.msra.mxu0 0
        %1023 = vmatprep.subr.bf16.mxu0 0
        %1024 = vmatpush1.bf16.msra.mxu0 0
        %1025 = vmatprep.subr.bf16.mxu0 0
        %1026 = vmatpush1.bf16.msra.mxu0 0
        %1027 = vmatprep.subr.bf16.mxu0 0
        %1028 = vmatpush1.bf16.msra.mxu0 0
        %1029 = vmatprep.subr.bf16.mxu0 0
        %1030 = vmatpush1.bf16.msra.mxu0 0
        %1031 = vmatprep.mubr.bf16.mxu0 0
        %1032 = vmatmul.mubr.bf16.gmra.mrb[0].mxu0 %v991
        %v1033 = vpop.f32.mrb[0].mxu0
        %v1034 = vadd.f32 %v976, %v1033
        %v1035 = vpop.f32.mrb[0].mxu0
        %v1036 = vpop.f32.mrb[0].mxu0
        %v1037 = vadd.f32 %v979, %v1036
        %v1038 = vpop.f32.mrb[0].mxu0
        %1039 = vmatprep.mubr.bf16.mxu0 0
        %1040 = vmatmul.mubr.bf16.gmra.mrb[0].mxu0 %v994
        %v1041 = vpop.f32.mrb[0].mxu0
        %v1042 = vadd.f32 %v984, %v1041
        %v1043 = vpop.f32.mrb[0].mxu0
        %v1044 = vpop.f32.mrb[0].mxu0
        %v1045 = vadd.f32 %v987, %v1044
        %v1046 = vpop.f32.mrb[0].mxu0
        %1047 = vdwg.mxu0
        %v1049 = vsel %vm726, %v722, 0
        %v1052 = vsel %vm726, %v723, 0
        %v1055 = vsel %vm726, %v724, 0
        %v1058 = vsel %vm726, %v725, 0
        %1060 = vmatprep.subr.mxu0 0.0
        %1061 = vmatpush1.msra.mxu0 %v675
        %1062 = vmatprep.subr.mxu0 0.0
        %1063 = vmatpush1.msra.mxu0 %v676
        %1064 = vmatprep.subr.mxu0 0.0
        %1065 = vmatpush1.msra.mxu0 %v677
        %1066 = vmatprep.subr.mxu0 0.0
        %1067 = vmatpush1.msra.mxu0 %v678
        %1068 = vmatprep.subr.mxu0 0.0
        %1069 = vmatpush1.msra.mxu0 %v679
        %1070 = vmatprep.subr.mxu0 0.0
        %1071 = vmatpush1.msra.mxu0 %v680
        %1072 = vmatprep.subr.mxu0 0.0
        %1073 = vmatpush1.msra.mxu0 %v681
        %1074 = vmatprep.subr.mxu0 0.0
        %1075 = vmatpush1.msra.mxu0 %v682
        %1076 = vmatprep.subr.mxu0 0.0
        %1077 = vmatpush1.msra.mxu0 0.0
        %1078 = vmatprep.subr.mxu0 0.0
        %1079 = vmatpush1.msra.mxu0 0.0
        %1080 = vmatprep.subr.mxu0 0.0
        %1081 = vmatpush1.msra.mxu0 0.0
        %1082 = vmatprep.subr.mxu0 0.0
        %1083 = vmatpush1.msra.mxu0 0.0
        %1084 = vmatprep.subr.mxu0 0.0
        %1085 = vmatpush1.msra.mxu0 0.0
        %1086 = vmatprep.subr.mxu0 0.0
        %1087 = vmatpush1.msra.mxu0 0.0
        %1088 = vmatprep.subr.mxu0 0.0
        %1089 = vmatpush1.msra.mxu0 0.0
        %1090 = vmatprep.subr.mxu0 0.0
        %1091 = vmatpush1.msra.mxu0 0.0
        %1092 = vmatprep.subr.mxu0 0.0
        %1093 = vmatpush1.msra.mxu0 0.0
        %1094 = vmatprep.subr.mxu0 0.0
        %1095 = vmatpush1.msra.mxu0 0.0
        %1096 = vmatprep.subr.mxu0 0.0
        %1097 = vmatpush1.msra.mxu0 0.0
        %1098 = vmatprep.subr.mxu0 0.0
        %1099 = vmatpush1.msra.mxu0 0.0
        %1100 = vmatprep.subr.mxu0 0.0
        %1101 = vmatpush1.msra.mxu0 0.0
        %1102 = vmatprep.subr.mxu0 0.0
        %1103 = vmatpush1.msra.mxu0 0.0
        %1104 = vmatprep.subr.mxu0 0.0
        %1105 = vmatpush1.msra.mxu0 0.0
        %1106 = vmatprep.subr.mxu0 0.0
        %1107 = vmatpush1.msra.mxu0 0.0
        %1108 = vmatprep.subr.mxu0 0.0
        %1109 = vmatpush1.msra.mxu0 0.0
        %1110 = vmatprep.subr.mxu0 0.0
        %1111 = vmatpush1.msra.mxu0 0.0
        %1112 = vmatprep.subr.mxu0 0.0
        %1113 = vmatpush1.msra.mxu0 0.0
        %1114 = vmatprep.subr.mxu0 0.0
        %1115 = vmatpush1.msra.mxu0 0.0
        %1116 = vmatprep.subr.mxu0 0.0
        %1117 = vmatpush1.msra.mxu0 0.0
        %1118 = vmatprep.subr.mxu0 0.0
        %1119 = vmatpush1.msra.mxu0 0.0
        %1120 = vmatprep.subr.mxu0 0.0
        %1121 = vmatpush1.msra.mxu0 0.0
        %1122 = vmatprep.subr.mxu0 0.0
        %1123 = vmatpush1.msra.mxu0 0.0
        %1124 = vmatprep.mubr.f32.mxu0 0.0
        %1125 = vmatmul.mubr.f32.gmra.mrb[0].mxu0 %v1049
        %v1126 = vpop.f32.mrb[0].mxu0
        %v1127 = vadd.f32 0.0, %v1126
        %v1128 = vpop.f32.mrb[0].mxu0
        %1129 = vmatprep.mubr.f32.mxu0 0.0
        %1130 = vmatmul.mubr.f32.gmra.mrb[0].mxu0 %v1052
        %v1131 = vpop.f32.mrb[0].mxu0
        %v1132 = vadd.f32 0.0, %v1131
        %v1133 = vpop.f32.mrb[0].mxu0
        %1134 = vmatprep.mubr.f32.mxu0 0.0
        %1135 = vmatmul.mubr.f32.gmra.mrb[0].mxu0 %v1055
        %v1136 = vpop.f32.mrb[0].mxu0
        %v1137 = vadd.f32 0.0, %v1136
        %v1138 = vpop.f32.mrb[0].mxu0
        %1139 = vmatprep.mubr.f32.mxu0 0.0
        %1140 = vmatmul.mubr.f32.gmra.mrb[0].mxu0 %v1058
        %v1141 = vpop.f32.mrb[0].mxu0
        %v1142 = vadd.f32 0.0, %v1141
        %v1143 = vpop.f32.mrb[0].mxu0
        %1144 = vdwg.mxu0
        %v1145 = vpack.c.bf16 %v1132, %v1127
        %v1146 = vpack.c.bf16 %v1142, %v1137
        %s1147 = scalar_lea.vmem %s1, 2
        %v1148 = vld [vmem:[%s1147] sm:$0x1]
        %v1150 = vsel %vm928, %v1145, 0
        %v1153 = vsel %vm928, %v1146, 0
        %v1156 = vand.u32 %v1148, %v937
        %1158 = vmatprep.subr.bf16.mxu0 0
        %1159 = vmatpush1.bf16.msra.mxu0 %v1156
        %1160 = vmatprep.subr.bf16.mxu0 0
        %1161 = vmatpush1.bf16.msra.mxu0 0
        %1162 = vmatprep.subr.bf16.mxu0 0
        %1163 = vmatpush1.bf16.msra.mxu0 0
        %1164 = vmatprep.subr.bf16.mxu0 0
        %1165 = vmatpush1.bf16.msra.mxu0 0
        %1166 = vmatprep.subr.bf16.mxu0 0
        %1167 = vmatpush1.bf16.msra.mxu0 0
        %1168 = vmatprep.subr.bf16.mxu0 0
        %1169 = vmatpush1.bf16.msra.mxu0 0
        %1170 = vmatprep.subr.bf16.mxu0 0
        %1171 = vmatpush1.bf16.msra.mxu0 0
        %1172 = vmatprep.subr.bf16.mxu0 0
        %1173 = vmatpush1.bf16.msra.mxu0 0
        %1174 = vmatprep.subr.bf16.mxu0 0
        %1175 = vmatpush1.bf16.msra.mxu0 0
        %1176 = vmatprep.subr.bf16.mxu0 0
        %1177 = vmatpush1.bf16.msra.mxu0 0
        %1178 = vmatprep.subr.bf16.mxu0 0
        %1179 = vmatpush1.bf16.msra.mxu0 0
        %1180 = vmatprep.subr.bf16.mxu0 0
        %1181 = vmatpush1.bf16.msra.mxu0 0
        %1182 = vmatprep.subr.bf16.mxu0 0
        %1183 = vmatpush1.bf16.msra.mxu0 0
        %1184 = vmatprep.subr.bf16.mxu0 0
        %1185 = vmatpush1.bf16.msra.mxu0 0
        %1186 = vmatprep.subr.bf16.mxu0 0
        %1187 = vmatpush1.bf16.msra.mxu0 0
        %1188 = vmatprep.subr.bf16.mxu0 0
        %1189 = vmatpush1.bf16.msra.mxu0 0
        %1190 = vmatprep.mubr.bf16.mxu0 0
        %1191 = vmatmul.mubr.bf16.gmra.mrb[0].mxu0 %v1150
        %v1192 = vpop.f32.mrb[0].mxu0
        %v1193 = vadd.f32 0.0, %v1192
        %v1194 = vpop.f32.mrb[0].mxu0
        %v1195 = vpop.f32.mrb[0].mxu0
        %v1196 = vadd.f32 0.0, %v1195
        %v1197 = vpop.f32.mrb[0].mxu0
        %1198 = vmatprep.mubr.bf16.mxu0 0
        %1199 = vmatmul.mubr.bf16.gmra.mrb[0].mxu0 %v1153
        %v1200 = vpop.f32.mrb[0].mxu0
        %v1201 = vadd.f32 0.0, %v1200
        %v1202 = vpop.f32.mrb[0].mxu0
        %v1203 = vpop.f32.mrb[0].mxu0
        %v1204 = vadd.f32 0.0, %v1203
        %v1205 = vpop.f32.mrb[0].mxu0
        %1206 = vdwg.mxu0
        %v1207 = vadd.f32 %v1034, %v1193
        %v1208 = vadd.f32 %v1037, %v1196
        %v1209 = vadd.f32 %v1042, %v1201
        %v1210 = vadd.f32 %v1045, %v1204
        %v1211 = vld [vmem:[%s2] sm:$0x1]
        %v1213 = vlaneseq
        %v1214 = vshrl.u32 %v1213, 7
        %v1215 = vsub.s32 0, %v1214
        %v1216 = vrot.slane %v1211, %v1215
        %v1218 = vadd.f32 %v1207, %v1216
        %v1219 = vadd.f32 %v1208, %v1216
        %v1220 = vadd.f32 %v1209, %v1216
        %v1221 = vadd.f32 %v1210, %v1216
        %vm1222 = vcmp.ge.f32.partialorder %v1218, 0.0
        %vm1223 = vcmp.ge.f32.partialorder %v1219, 0.0
        %vm1224 = vcmp.ge.f32.partialorder %v1220, 0.0
        %vm1225 = vcmp.ge.f32.partialorder %v1221, 0.0
        %v1226 = vmul.f32 %v1218, 0.1
        %v1227 = vmul.f32 %v1219, 0.1
        %v1228 = vmul.f32 %v1220, 0.1
        %v1229 = vmul.f32 %v1221, 0.1
        %v1230 = vsel %vm1222, %v1218, %v1226
        %v1231 = vsel %vm1223, %v1219, %v1227
        %v1232 = vsel %vm1224, %v1220, %v1228
        %v1233 = vsel %vm1225, %v1221, %v1229
        %vm1234 = vcmask 261120
        %v1235 = vsel %vm1234, %v702, 0
        %v1237 = vsel %vm1234, %v703, 0
        %1239 = vmatprep.subr.mxu0 0.0
        %1240 = vmatpush1.msra.mxu0 %v1230
        %1241 = vmatprep.subr.mxu0 0.0
        %1242 = vmatpush1.msra.mxu0 %v1231
        %1243 = vmatprep.subr.mxu0 0.0
        %1244 = vmatpush1.msra.mxu0 %v1232
        %1245 = vmatprep.subr.mxu0 0.0
        %1246 = vmatpush1.msra.mxu0 %v1233
        %1247 = vmatprep.subr.mxu0 0.0
        %1248 = vmatpush1.msra.mxu0 0.0
        %1249 = vmatprep.subr.mxu0 0.0
        %1250 = vmatpush1.msra.mxu0 0.0
        %1251 = vmatprep.subr.mxu0 0.0
        %1252 = vmatpush1.msra.mxu0 0.0
        %1253 = vmatprep.subr.mxu0 0.0
        %1254 = vmatpush1.msra.mxu0 0.0
        %1255 = vmatprep.subr.mxu0 0.0
        %1256 = vmatpush1.msra.mxu0 0.0
        %1257 = vmatprep.subr.mxu0 0.0
        %1258 = vmatpush1.msra.mxu0 0.0
        %1259 = vmatprep.subr.mxu0 0.0
        %1260 = vmatpush1.msra.mxu0 0.0
        %1261 = vmatprep.subr.mxu0 0.0
        %1262 = vmatpush1.msra.mxu0 0.0
        %1263 = vmatprep.subr.mxu0 0.0
        %1264 = vmatpush1.msra.mxu0 0.0
        %1265 = vmatprep.subr.mxu0 0.0
        %1266 = vmatpush1.msra.mxu0 0.0
        %1267 = vmatprep.subr.mxu0 0.0
        %1268 = vmatpush1.msra.mxu0 0.0
        %1269 = vmatprep.subr.mxu0 0.0
        %1270 = vmatpush1.msra.mxu0 0.0
        %1271 = vmatprep.subr.mxu0 0.0
        %1272 = vmatpush1.msra.mxu0 0.0
        %1273 = vmatprep.subr.mxu0 0.0
        %1274 = vmatpush1.msra.mxu0 0.0
        %1275 = vmatprep.subr.mxu0 0.0
        %1276 = vmatpush1.msra.mxu0 0.0
        %1277 = vmatprep.subr.mxu0 0.0
        %1278 = vmatpush1.msra.mxu0 0.0
        %1279 = vmatprep.subr.mxu0 0.0
        %1280 = vmatpush1.msra.mxu0 0.0
        %1281 = vmatprep.subr.mxu0 0.0
        %1282 = vmatpush1.msra.mxu0 0.0
        %1283 = vmatprep.subr.mxu0 0.0
        %1284 = vmatpush1.msra.mxu0 0.0
        %1285 = vmatprep.subr.mxu0 0.0
        %1286 = vmatpush1.msra.mxu0 0.0
        %1287 = vmatprep.subr.mxu0 0.0
        %1288 = vmatpush1.msra.mxu0 0.0
        %1289 = vmatprep.subr.mxu0 0.0
        %1290 = vmatpush1.msra.mxu0 0.0
        %1291 = vmatprep.subr.mxu0 0.0
        %1292 = vmatpush1.msra.mxu0 0.0
        %1293 = vmatprep.subr.mxu0 0.0
        %1294 = vmatpush1.msra.mxu0 0.0
        %1295 = vmatprep.subr.mxu0 0.0
        %1296 = vmatpush1.msra.mxu0 0.0
        %1297 = vmatprep.subr.mxu0 0.0
        %1298 = vmatpush1.msra.mxu0 0.0
        %1299 = vmatprep.subr.mxu0 0.0
        %1300 = vmatpush1.msra.mxu0 0.0
        %1301 = vmatprep.subr.mxu0 0.0
        %1302 = vmatpush1.msra.mxu0 0.0
        %1303 = vmatprep.mubr.f32.mxu0 0.0
        %1304 = vmatmul.mubr.f32.gmra.mrb[0].mxu0 %v1235
        %v1305 = vpop.f32.mrb[0].mxu0
        %v1306 = vadd.f32 0.0, %v1305
        %v1307 = vpop.f32.mrb[0].mxu0
        %1308 = vmatprep.mubr.f32.mxu0 0.0
        %1309 = vmatmul.mubr.f32.gmra.mrb[0].mxu0 %v1237
        %v1310 = vpop.f32.mrb[0].mxu0
        %v1311 = vadd.f32 0.0, %v1310
        %v1312 = vpop.f32.mrb[0].mxu0
        %1313 = vdwg.mxu0
        %v1314 = vpack.c.bf16 %v1311, %v1306
        %v1315 = vld [vmem:[%s3] sm:$0xf]
        %v1316 = vld [vmem:[%s3 + $0x4] sm:$0xf]
        %v1317 = vsel %vm1234, %v710, 0
        %v1319 = vsel %vm1234, %v711, 0
        %1321 = vmatprep.subr.mxu0 0.0
        %1322 = vmatpush1.msra.mxu0 %v1230
        %1323 = vmatprep.subr.mxu0 0.0
        %1324 = vmatpush1.msra.mxu0 %v1231
        %1325 = vmatprep.subr.mxu0 0.0
        %1326 = vmatpush1.msra.mxu0 %v1232
        %1327 = vmatprep.subr.mxu0 0.0
        %1328 = vmatpush1.msra.mxu0 %v1233
        %1329 = vmatprep.subr.mxu0 0.0
        %1330 = vmatpush1.msra.mxu0 0.0
        %1331 = vmatprep.subr.mxu0 0.0
        %1332 = vmatpush1.msra.mxu0 0.0
        %1333 = vmatprep.subr.mxu0 0.0
        %1334 = vmatpush1.msra.mxu0 0.0
        %1335 = vmatprep.subr.mxu0 0.0
        %1336 = vmatpush1.msra.mxu0 0.0
        %1337 = vmatprep.subr.mxu0 0.0
        %1338 = vmatpush1.msra.mxu0 0.0
        %1339 = vmatprep.subr.mxu0 0.0
        %1340 = vmatpush1.msra.mxu0 0.0
        %1341 = vmatprep.subr.mxu0 0.0
        %1342 = vmatpush1.msra.mxu0 0.0
        %1343 = vmatprep.subr.mxu0 0.0
        %1344 = vmatpush1.msra.mxu0 0.0
        %1345 = vmatprep.subr.mxu0 0.0
        %1346 = vmatpush1.msra.mxu0 0.0
        %1347 = vmatprep.subr.mxu0 0.0
        %1348 = vmatpush1.msra.mxu0 0.0
        %1349 = vmatprep.subr.mxu0 0.0
        %1350 = vmatpush1.msra.mxu0 0.0
        %1351 = vmatprep.subr.mxu0 0.0
        %1352 = vmatpush1.msra.mxu0 0.0
        %1353 = vmatprep.subr.mxu0 0.0
        %1354 = vmatpush1.msra.mxu0 0.0
        %1355 = vmatprep.subr.mxu0 0.0
        %1356 = vmatpush1.msra.mxu0 0.0
        %1357 = vmatprep.subr.mxu0 0.0
        %1358 = vmatpush1.msra.mxu0 0.0
        %1359 = vmatprep.subr.mxu0 0.0
        %1360 = vmatpush1.msra.mxu0 0.0
        %1361 = vmatprep.subr.mxu0 0.0
        %1362 = vmatpush1.msra.mxu0 0.0
        %1363 = vmatprep.subr.mxu0 0.0
        %1364 = vmatpush1.msra.mxu0 0.0
        %1365 = vmatprep.subr.mxu0 0.0
        %1366 = vmatpush1.msra.mxu0 0.0
        %1367 = vmatprep.subr.mxu0 0.0
        %1368 = vmatpush1.msra.mxu0 0.0
        %1369 = vmatprep.subr.mxu0 0.0
        %1370 = vmatpush1.msra.mxu0 0.0
        %1371 = vmatprep.subr.mxu0 0.0
        %1372 = vmatpush1.msra.mxu0 0.0
        %1373 = vmatprep.subr.mxu0 0.0
        %1374 = vmatpush1.msra.mxu0 0.0
        %1375 = vmatprep.subr.mxu0 0.0
        %1376 = vmatpush1.msra.mxu0 0.0
        %1377 = vmatprep.subr.mxu0 0.0
        %1378 = vmatpush1.msra.mxu0 0.0
        %1379 = vmatprep.subr.mxu0 0.0
        %1380 = vmatpush1.msra.mxu0 0.0
        %1381 = vmatprep.subr.mxu0 0.0
        %1382 = vmatpush1.msra.mxu0 0.0
        %1383 = vmatprep.subr.mxu0 0.0
        %1384 = vmatpush1.msra.mxu0 0.0
        %1385 = vmatprep.mubr.f32.mxu0 0.0
        %1386 = vmatmul.mubr.f32.gmra.mrb[0].mxu0 %v1317
        %v1387 = vpop.f32.mrb[0].mxu0
        %v1388 = vadd.f32 0.0, %v1387
        %v1389 = vpop.f32.mrb[0].mxu0
        %1390 = vmatprep.mubr.f32.mxu0 0.0
        %1391 = vmatmul.mubr.f32.gmra.mrb[0].mxu0 %v1319
        %v1392 = vpop.f32.mrb[0].mxu0
        %v1393 = vadd.f32 0.0, %v1392
        %v1394 = vpop.f32.mrb[0].mxu0
        %1395 = vdwg.mxu0
        %v1396 = vpack.c.bf16 %v1393, %v1388
        %s1397 = scalar_lea.vmem %s3, 8
        %v1398 = vld [vmem:[%s1397] sm:$0xf]
        %v1399 = vld [vmem:[%s1397 + $0x4] sm:$0xf]
        %v1402 = vunpack.c.l.b16 %v1398
        %v1403 = vunpack.c.l.b16 %v1399
        %v1404 = vpack.c.b16 %v1403, %v1402
        %vm1406 = vcmask 130048
        %v1408 = vsel %vm1406, %v1396, 0
        %1410 = vmatprep.subr.bf16.mxu0 0
        %1411 = vmatpush1.bf16.msra.mxu0 %v1404
        %1412 = vmatprep.subr.bf16.mxu0 0
        %1413 = vmatpush1.bf16.msra.mxu0 0
        %1414 = vmatprep.subr.bf16.mxu0 0
        %1415 = vmatpush1.bf16.msra.mxu0 0
        %1416 = vmatprep.subr.bf16.mxu0 0
        %1417 = vmatpush1.bf16.msra.mxu0 0
        %1418 = vmatprep.subr.bf16.mxu0 0
        %1419 = vmatpush1.bf16.msra.mxu0 0
        %1420 = vmatprep.subr.bf16.mxu0 0
        %1421 = vmatpush1.bf16.msra.mxu0 0
        %1422 = vmatprep.subr.bf16.mxu0 0
        %1423 = vmatpush1.bf16.msra.mxu0 0
        %1424 = vmatprep.subr.bf16.mxu0 0
        %1425 = vmatpush1.bf16.msra.mxu0 0
        %1426 = vmatprep.subr.bf16.mxu0 0
        %1427 = vmatpush1.bf16.msra.mxu0 0
        %1428 = vmatprep.subr.bf16.mxu0 0
        %1429 = vmatpush1.bf16.msra.mxu0 0
        %1430 = vmatprep.subr.bf16.mxu0 0
        %1431 = vmatpush1.bf16.msra.mxu0 0
        %1432 = vmatprep.subr.bf16.mxu0 0
        %1433 = vmatpush1.bf16.msra.mxu0 0
        %1434 = vmatprep.subr.bf16.mxu0 0
        %1435 = vmatpush1.bf16.msra.mxu0 0
        %1436 = vmatprep.subr.bf16.mxu0 0
        %1437 = vmatpush1.bf16.msra.mxu0 0
        %1438 = vmatprep.subr.bf16.mxu0 0
        %1439 = vmatpush1.bf16.msra.mxu0 0
        %1440 = vmatprep.subr.bf16.mxu0 0
        %1441 = vmatpush1.bf16.msra.mxu0 0
        %1442 = vmatprep.mubr.bf16.mxu0 0
        %1443 = vmatmul.mubr.bf16.gmra.mrb[0].mxu0 %v1408
        %v1444 = vpop.f32.mrb[0].mxu0
        %v1445 = vadd.f32 0.0, %v1444
        %v1446 = vpop.f32.mrb[0].mxu0
        %v1447 = vpop.f32.mrb[0].mxu0
        %v1448 = vadd.f32 0.0, %v1447
        %v1449 = vpop.f32.mrb[0].mxu0
        %1450 = vdwg.mxu0
        %v1453 = vunpack.c.l.b16 %v1315
        %v1454 = vunpack.c.l.b16 %v1316
        %v1455 = vpack.c.b16 %v1454, %v1453
        %v1458 = vsel %vm1406, %v1314, 0
        %1460 = vmatprep.subr.bf16.mxu0 0
        %1461 = vmatpush1.bf16.msra.mxu0 %v1455
        %1462 = vmatprep.subr.bf16.mxu0 0
        %1463 = vmatpush1.bf16.msra.mxu0 0
        %1464 = vmatprep.subr.bf16.mxu0 0
        %1465 = vmatpush1.bf16.msra.mxu0 0
        %1466 = vmatprep.subr.bf16.mxu0 0
        %1467 = vmatpush1.bf16.msra.mxu0 0
        %1468 = vmatprep.subr.bf16.mxu0 0
        %1469 = vmatpush1.bf16.msra.mxu0 0
        %1470 = vmatprep.subr.bf16.mxu0 0
        %1471 = vmatpush1.bf16.msra.mxu0 0
        %1472 = vmatprep.subr.bf16.mxu0 0
        %1473 = vmatpush1.bf16.msra.mxu0 0
        %1474 = vmatprep.subr.bf16.mxu0 0
        %1475 = vmatpush1.bf16.msra.mxu0 0
        %1476 = vmatprep.subr.bf16.mxu0 0
        %1477 = vmatpush1.bf16.msra.mxu0 0
        %1478 = vmatprep.subr.bf16.mxu0 0
        %1479 = vmatpush1.bf16.msra.mxu0 0
        %1480 = vmatprep.subr.bf16.mxu0 0
        %1481 = vmatpush1.bf16.msra.mxu0 0
        %1482 = vmatprep.subr.bf16.mxu0 0
        %1483 = vmatpush1.bf16.msra.mxu0 0
        %1484 = vmatprep.subr.bf16.mxu0 0
        %1485 = vmatpush1.bf16.msra.mxu0 0
        %1486 = vmatprep.subr.bf16.mxu0 0
        %1487 = vmatpush1.bf16.msra.mxu0 0
        %1488 = vmatprep.subr.bf16.mxu0 0
        %1489 = vmatpush1.bf16.msra.mxu0 0
        %1490 = vmatprep.subr.bf16.mxu0 0
        %1491 = vmatpush1.bf16.msra.mxu0 0
        %1492 = vmatprep.mubr.bf16.mxu0 0
        %1493 = vmatmul.mubr.bf16.gmra.mrb[0].mxu0 %v1458
        %v1494 = vpop.f32.mrb[0].mxu0
        %v1495 = vadd.f32 %v1445, %v1494
        %v1496 = vpop.f32.mrb[0].mxu0
        %v1497 = vpop.f32.mrb[0].mxu0
        %v1498 = vadd.f32 %v1448, %v1497
        %v1499 = vpop.f32.mrb[0].mxu0
        %1500 = vdwg.mxu0
        %v1501 = vsel %vm1234, %v722, 0
        %v1503 = vsel %vm1234, %v723, 0
        %1505 = vmatprep.subr.mxu0 0.0
        %1506 = vmatpush1.msra.mxu0 %v1230
        %1507 = vmatprep.subr.mxu0 0.0
        %1508 = vmatpush1.msra.mxu0 %v1231
        %1509 = vmatprep.subr.mxu0 0.0
        %1510 = vmatpush1.msra.mxu0 %v1232
        %1511 = vmatprep.subr.mxu0 0.0
        %1512 = vmatpush1.msra.mxu0 %v1233
        %1513 = vmatprep.subr.mxu0 0.0
        %1514 = vmatpush1.msra.mxu0 0.0
        %1515 = vmatprep.subr.mxu0 0.0
        %1516 = vmatpush1.msra.mxu0 0.0
        %1517 = vmatprep.subr.mxu0 0.0
        %1518 = vmatpush1.msra.mxu0 0.0
        %1519 = vmatprep.subr.mxu0 0.0
        %1520 = vmatpush1.msra.mxu0 0.0
        %1521 = vmatprep.subr.mxu0 0.0
        %1522 = vmatpush1.msra.mxu0 0.0
        %1523 = vmatprep.subr.mxu0 0.0
        %1524 = vmatpush1.msra.mxu0 0.0
        %1525 = vmatprep.subr.mxu0 0.0
        %1526 = vmatpush1.msra.mxu0 0.0
        %1527 = vmatprep.subr.mxu0 0.0
        %1528 = vmatpush1.msra.mxu0 0.0
        %1529 = vmatprep.subr.mxu0 0.0
        %1530 = vmatpush1.msra.mxu0 0.0
        %1531 = vmatprep.subr.mxu0 0.0
        %1532 = vmatpush1.msra.mxu0 0.0
        %1533 = vmatprep.subr.mxu0 0.0
        %1534 = vmatpush1.msra.mxu0 0.0
        %1535 = vmatprep.subr.mxu0 0.0
        %1536 = vmatpush1.msra.mxu0 0.0
        %1537 = vmatprep.subr.mxu0 0.0
        %1538 = vmatpush1.msra.mxu0 0.0
        %1539 = vmatprep.subr.mxu0 0.0
        %1540 = vmatpush1.msra.mxu0 0.0
        %1541 = vmatprep.subr.mxu0 0.0
        %1542 = vmatpush1.msra.mxu0 0.0
        %1543 = vmatprep.subr.mxu0 0.0
        %1544 = vmatpush1.msra.mxu0 0.0
        %1545 = vmatprep.subr.mxu0 0.0
        %1546 = vmatpush1.msra.mxu0 0.0
        %1547 = vmatprep.subr.mxu0 0.0
        %1548 = vmatpush1.msra.mxu0 0.0
        %1549 = vmatprep.subr.mxu0 0.0
        %1550 = vmatpush1.msra.mxu0 0.0
        %1551 = vmatprep.subr.mxu0 0.0
        %1552 = vmatpush1.msra.mxu0 0.0
        %1553 = vmatprep.subr.mxu0 0.0
        %1554 = vmatpush1.msra.mxu0 0.0
        %1555 = vmatprep.subr.mxu0 0.0
        %1556 = vmatpush1.msra.mxu0 0.0
        %1557 = vmatprep.subr.mxu0 0.0
        %1558 = vmatpush1.msra.mxu0 0.0
        %1559 = vmatprep.subr.mxu0 0.0
        %1560 = vmatpush1.msra.mxu0 0.0
        %1561 = vmatprep.subr.mxu0 0.0
        %1562 = vmatpush1.msra.mxu0 0.0
        %1563 = vmatprep.subr.mxu0 0.0
        %1564 = vmatpush1.msra.mxu0 0.0
        %1565 = vmatprep.subr.mxu0 0.0
        %1566 = vmatpush1.msra.mxu0 0.0
        %1567 = vmatprep.subr.mxu0 0.0
        %1568 = vmatpush1.msra.mxu0 0.0
        %1569 = vmatprep.mubr.f32.mxu0 0.0
        %1570 = vmatmul.mubr.f32.gmra.mrb[0].mxu0 %v1501
        %v1571 = vpop.f32.mrb[0].mxu0
        %v1572 = vadd.f32 0.0, %v1571
        %v1573 = vpop.f32.mrb[0].mxu0
        %1574 = vmatprep.mubr.f32.mxu0 0.0
        %1575 = vmatmul.mubr.f32.gmra.mrb[0].mxu0 %v1503
        %v1576 = vpop.f32.mrb[0].mxu0
        %v1577 = vadd.f32 0.0, %v1576
        %v1578 = vpop.f32.mrb[0].mxu0
        %1579 = vdwg.mxu0
        %v1580 = vpack.c.bf16 %v1577, %v1572
        %s1581 = scalar_lea.vmem %s3, 16
        %v1582 = vld [vmem:[%s1581] sm:$0xf]
        %v1583 = vld [vmem:[%s1581 + $0x4] sm:$0xf]
        %v1586 = vunpack.c.l.b16 %v1582
        %v1587 = vunpack.c.l.b16 %v1583
        %v1588 = vpack.c.b16 %v1587, %v1586
        %v1591 = vsel %vm1406, %v1580, 0
        %1593 = vmatprep.subr.bf16.mxu0 0
        %1594 = vmatpush1.bf16.msra.mxu0 %v1588
        %1595 = vmatprep.subr.bf16.mxu0 0
        %1596 = vmatpush1.bf16.msra.mxu0 0
        %1597 = vmatprep.subr.bf16.mxu0 0
        %1598 = vmatpush1.bf16.msra.mxu0 0
        %1599 = vmatprep.subr.bf16.mxu0 0
        %1600 = vmatpush1.bf16.msra.mxu0 0
        %1601 = vmatprep.subr.bf16.mxu0 0
        %1602 = vmatpush1.bf16.msra.mxu0 0
        %1603 = vmatprep.subr.bf16.mxu0 0
        %1604 = vmatpush1.bf16.msra.mxu0 0
        %1605 = vmatprep.subr.bf16.mxu0 0
        %1606 = vmatpush1.bf16.msra.mxu0 0
        %1607 = vmatprep.subr.bf16.mxu0 0
        %1608 = vmatpush1.bf16.msra.mxu0 0
        %1609 = vmatprep.subr.bf16.mxu0 0
        %1610 = vmatpush1.bf16.msra.mxu0 0
        %1611 = vmatprep.subr.bf16.mxu0 0
        %1612 = vmatpush1.bf16.msra.mxu0 0
        %1613 = vmatprep.subr.bf16.mxu0 0
        %1614 = vmatpush1.bf16.msra.mxu0 0
        %1615 = vmatprep.subr.bf16.mxu0 0
        %1616 = vmatpush1.bf16.msra.mxu0 0
        %1617 = vmatprep.subr.bf16.mxu0 0
        %1618 = vmatpush1.bf16.msra.mxu0 0
        %1619 = vmatprep.subr.bf16.mxu0 0
        %1620 = vmatpush1.bf16.msra.mxu0 0
        %1621 = vmatprep.subr.bf16.mxu0 0
        %1622 = vmatpush1.bf16.msra.mxu0 0
        %1623 = vmatprep.subr.bf16.mxu0 0
        %1624 = vmatpush1.bf16.msra.mxu0 0
        %1625 = vmatprep.mubr.bf16.mxu0 0
        %1626 = vmatmul.mubr.bf16.gmra.mrb[0].mxu0 %v1591
        %v1627 = vpop.f32.mrb[0].mxu0
        %v1628 = vadd.f32 0.0, %v1627
        %v1629 = vpop.f32.mrb[0].mxu0
        %v1630 = vpop.f32.mrb[0].mxu0
        %v1631 = vadd.f32 0.0, %v1630
        %v1632 = vpop.f32.mrb[0].mxu0
        %1633 = vdwg.mxu0
        %v1634 = vadd.f32 %v1495, %v1628
        %v1635 = vadd.f32 %v1498, %v1631
        %v1636 = vld [vmem:[%s4] sm:$0x1]
        %v1638 = vlaneseq
        %v1639 = vshrl.u32 %v1638, 7
        %v1640 = vsub.s32 0, %v1639
        %v1641 = vrot.slane %v1636, %v1640
        %v1643 = vadd.f32 %v1634, %v1641
        %v1644 = vadd.f32 %v1635, %v1641
        %vm1645 = vcmp.ge.f32.partialorder %v1643, 0.0
        %vm1646 = vcmp.ge.f32.partialorder %v1644, 0.0
        %v1647 = vmul.f32 %v1643, 0.1
        %v1648 = vmul.f32 %v1644, 0.1
        %v1649 = vsel %vm1645, %v1643, %v1647
        %v1650 = vsel %vm1646, %v1644, %v1648
        %v1651 = vsel %vm1406, %v702, 0
        %1653 = vmatprep.subr.mxu0 0.0
        %1654 = vmatpush1.msra.mxu0 %v1649
        %1655 = vmatprep.subr.mxu0 0.0
        %1656 = vmatpush1.msra.mxu0 %v1650
        %1657 = vmatprep.subr.mxu0 0.0
        %1658 = vmatpush1.msra.mxu0 0.0
        %1659 = vmatprep.subr.mxu0 0.0
        %1660 = vmatpush1.msra.mxu0 0.0
        %1661 = vmatprep.subr.mxu0 0.0
        %1662 = vmatpush1.msra.mxu0 0.0
        %1663 = vmatprep.subr.mxu0 0.0
        %1664 = vmatpush1.msra.mxu0 0.0
        %1665 = vmatprep.subr.mxu0 0.0
        %1666 = vmatpush1.msra.mxu0 0.0
        %1667 = vmatprep.subr.mxu0 0.0
        %1668 = vmatpush1.msra.mxu0 0.0
        %1669 = vmatprep.subr.mxu0 0.0
        %1670 = vmatpush1.msra.mxu0 0.0
        %1671 = vmatprep.subr.mxu0 0.0
        %1672 = vmatpush1.msra.mxu0 0.0
        %1673 = vmatprep.subr.mxu0 0.0
        %1674 = vmatpush1.msra.mxu0 0.0
        %1675 = vmatprep.subr.mxu0 0.0
        %1676 = vmatpush1.msra.mxu0 0.0
        %1677 = vmatprep.subr.mxu0 0.0
        %1678 = vmatpush1.msra.mxu0 0.0
        %1679 = vmatprep.subr.mxu0 0.0
        %1680 = vmatpush1.msra.mxu0 0.0
        %1681 = vmatprep.subr.mxu0 0.0
        %1682 = vmatpush1.msra.mxu0 0.0
        %1683 = vmatprep.subr.mxu0 0.0
        %1684 = vmatpush1.msra.mxu0 0.0
        %1685 = vmatprep.subr.mxu0 0.0
        %1686 = vmatpush1.msra.mxu0 0.0
        %1687 = vmatprep.subr.mxu0 0.0
        %1688 = vmatpush1.msra.mxu0 0.0
        %1689 = vmatprep.subr.mxu0 0.0
        %1690 = vmatpush1.msra.mxu0 0.0
        %1691 = vmatprep.subr.mxu0 0.0
        %1692 = vmatpush1.msra.mxu0 0.0
        %1693 = vmatprep.subr.mxu0 0.0
        %1694 = vmatpush1.msra.mxu0 0.0
        %1695 = vmatprep.subr.mxu0 0.0
        %1696 = vmatpush1.msra.mxu0 0.0
        %1697 = vmatprep.subr.mxu0 0.0
        %1698 = vmatpush1.msra.mxu0 0.0
        %1699 = vmatprep.subr.mxu0 0.0
        %1700 = vmatpush1.msra.mxu0 0.0
        %1701 = vmatprep.subr.mxu0 0.0
        %1702 = vmatpush1.msra.mxu0 0.0
        %1703 = vmatprep.subr.mxu0 0.0
        %1704 = vmatpush1.msra.mxu0 0.0
        %1705 = vmatprep.subr.mxu0 0.0
        %1706 = vmatpush1.msra.mxu0 0.0
        %1707 = vmatprep.subr.mxu0 0.0
        %1708 = vmatpush1.msra.mxu0 0.0
        %1709 = vmatprep.subr.mxu0 0.0
        %1710 = vmatpush1.msra.mxu0 0.0
        %1711 = vmatprep.subr.mxu0 0.0
        %1712 = vmatpush1.msra.mxu0 0.0
        %1713 = vmatprep.subr.mxu0 0.0
        %1714 = vmatpush1.msra.mxu0 0.0
        %1715 = vmatprep.subr.mxu0 0.0
        %1716 = vmatpush1.msra.mxu0 0.0
        %1717 = vmatprep.mubr.f32.mxu0 0.0
        %1718 = vmatmul.mubr.f32.gmra.mrb[0].mxu0 %v1651
        %v1719 = vpop.f32.mrb[0].mxu0
        %v1720 = vadd.f32 0.0, %v1719
        %v1721 = vpop.f32.mrb[0].mxu0
        %1722 = vdwg.mxu0
        %v1723 = vpack.c.bf16 %v1720, %v1720
        %v1724 = vld [vmem:[%s5] sm:$0xf]
        %v1725 = vld [vmem:[%s5 + $0x4] sm:$0xf]
        %v1726 = vld [vmem:[%s5 + $0x8] sm:$0xf]
        %v1727 = vld [vmem:[%s5 + $0xc] sm:$0xf]
        %v1728 = vsel %vm1406, %v710, 0
        %1730 = vmatprep.subr.mxu0 0.0
        %1731 = vmatpush1.msra.mxu0 %v1649
        %1732 = vmatprep.subr.mxu0 0.0
        %1733 = vmatpush1.msra.mxu0 %v1650
        %1734 = vmatprep.subr.mxu0 0.0
        %1735 = vmatpush1.msra.mxu0 0.0
        %1736 = vmatprep.subr.mxu0 0.0
        %1737 = vmatpush1.msra.mxu0 0.0
        %1738 = vmatprep.subr.mxu0 0.0
        %1739 = vmatpush1.msra.mxu0 0.0
        %1740 = vmatprep.subr.mxu0 0.0
        %1741 = vmatpush1.msra.mxu0 0.0
        %1742 = vmatprep.subr.mxu0 0.0
        %1743 = vmatpush1.msra.mxu0 0.0
        %1744 = vmatprep.subr.mxu0 0.0
        %1745 = vmatpush1.msra.mxu0 0.0
        %1746 = vmatprep.subr.mxu0 0.0
        %1747 = vmatpush1.msra.mxu0 0.0
        %1748 = vmatprep.subr.mxu0 0.0
        %1749 = vmatpush1.msra.mxu0 0.0
        %1750 = vmatprep.subr.mxu0 0.0
        %1751 = vmatpush1.msra.mxu0 0.0
        %1752 = vmatprep.subr.mxu0 0.0
        %1753 = vmatpush1.msra.mxu0 0.0
        %1754 = vmatprep.subr.mxu0 0.0
        %1755 = vmatpush1.msra.mxu0 0.0
        %1756 = vmatprep.subr.mxu0 0.0
        %1757 = vmatpush1.msra.mxu0 0.0
        %1758 = vmatprep.subr.mxu0 0.0
        %1759 = vmatpush1.msra.mxu0 0.0
        %1760 = vmatprep.subr.mxu0 0.0
        %1761 = vmatpush1.msra.mxu0 0.0
        %1762 = vmatprep.subr.mxu0 0.0
        %1763 = vmatpush1.msra.mxu0 0.0
        %1764 = vmatprep.subr.mxu0 0.0
        %1765 = vmatpush1.msra.mxu0 0.0
        %1766 = vmatprep.subr.mxu0 0.0
        %1767 = vmatpush1.msra.mxu0 0.0
        %1768 = vmatprep.subr.mxu0 0.0
        %1769 = vmatpush1.msra.mxu0 0.0
        %1770 = vmatprep.subr.mxu0 0.0
        %1771 = vmatpush1.msra.mxu0 0.0
        %1772 = vmatprep.subr.mxu0 0.0
        %1773 = vmatpush1.msra.mxu0 0.0
        %1774 = vmatprep.subr.mxu0 0.0
        %1775 = vmatpush1.msra.mxu0 0.0
        %1776 = vmatprep.subr.mxu0 0.0
        %1777 = vmatpush1.msra.mxu0 0.0
        %1778 = vmatprep.subr.mxu0 0.0
        %1779 = vmatpush1.msra.mxu0 0.0
        %1780 = vmatprep.subr.mxu0 0.0
        %1781 = vmatpush1.msra.mxu0 0.0
        %1782 = vmatprep.subr.mxu0 0.0
        %1783 = vmatpush1.msra.mxu0 0.0
        %1784 = vmatprep.subr.mxu0 0.0
        %1785 = vmatpush1.msra.mxu0 0.0
        %1786 = vmatprep.subr.mxu0 0.0
        %1787 = vmatpush1.msra.mxu0 0.0
        %1788 = vmatprep.subr.mxu0 0.0
        %1789 = vmatpush1.msra.mxu0 0.0
        %1790 = vmatprep.subr.mxu0 0.0
        %1791 = vmatpush1.msra.mxu0 0.0
        %1792 = vmatprep.subr.mxu0 0.0
        %1793 = vmatpush1.msra.mxu0 0.0
        %1794 = vmatprep.mubr.f32.mxu0 0.0
        %1795 = vmatmul.mubr.f32.gmra.mrb[0].mxu0 %v1728
        %v1796 = vpop.f32.mrb[0].mxu0
        %v1797 = vadd.f32 0.0, %v1796
        %v1798 = vpop.f32.mrb[0].mxu0
        %1799 = vdwg.mxu0
        %v1800 = vpack.c.bf16 %v1797, %v1797
        %s1801 = scalar_lea.vmem %s5, 16
        %v1802 = vld [vmem:[%s1801] sm:$0xf]
        %v1803 = vld [vmem:[%s1801 + $0x4] sm:$0xf]
        %v1804 = vld [vmem:[%s1801 + $0x8] sm:$0xf]
        %v1805 = vld [vmem:[%s1801 + $0xc] sm:$0xf]
        %v1810 = vunpack.c.l.b16 %v1802
        %v1811 = vunpack.c.l.b16 %v1803
        %v1812 = vunpack.c.l.b16 %v1804
        %v1813 = vunpack.c.l.b16 %v1805
        %v1814 = vpack.c.b16 %v1811, %v1810
        %v1815 = vpack.c.b16 %v1813, %v1812
        %v1819 = vsel %vm1234, %v1800, 0
        %1821 = vmatprep.subr.bf16.mxu0 0
        %1822 = vmatpush1.bf16.msra.mxu0 %v1814
        %1823 = vmatprep.subr.bf16.mxu0 0
        %1824 = vmatpush1.bf16.msra.mxu0 %v1815
        %1825 = vmatprep.subr.bf16.mxu0 0
        %1826 = vmatpush1.bf16.msra.mxu0 0
        %1827 = vmatprep.subr.bf16.mxu0 0
        %1828 = vmatpush1.bf16.msra.mxu0 0
        %1829 = vmatprep.subr.bf16.mxu0 0
        %1830 = vmatpush1.bf16.msra.mxu0 0
        %1831 = vmatprep.subr.bf16.mxu0 0
        %1832 = vmatpush1.bf16.msra.mxu0 0
        %1833 = vmatprep.subr.bf16.mxu0 0
        %1834 = vmatpush1.bf16.msra.mxu0 0
        %1835 = vmatprep.subr.bf16.mxu0 0
        %1836 = vmatpush1.bf16.msra.mxu0 0
        %1837 = vmatprep.subr.bf16.mxu0 0
        %1838 = vmatpush1.bf16.msra.mxu0 0
        %1839 = vmatprep.subr.bf16.mxu0 0
        %1840 = vmatpush1.bf16.msra.mxu0 0
        %1841 = vmatprep.subr.bf16.mxu0 0
        %1842 = vmatpush1.bf16.msra.mxu0 0
        %1843 = vmatprep.subr.bf16.mxu0 0
        %1844 = vmatpush1.bf16.msra.mxu0 0
        %1845 = vmatprep.subr.bf16.mxu0 0
        %1846 = vmatpush1.bf16.msra.mxu0 0
        %1847 = vmatprep.subr.bf16.mxu0 0
        %1848 = vmatpush1.bf16.msra.mxu0 0
        %1849 = vmatprep.subr.bf16.mxu0 0
        %1850 = vmatpush1.bf16.msra.mxu0 0
        %1851 = vmatprep.subr.bf16.mxu0 0
        %1852 = vmatpush1.bf16.msra.mxu0 0
        %1853 = vmatprep.mubr.bf16.mxu0 0
        %1854 = vmatmul.mubr.bf16.gmra.mrb[0].mxu0 %v1819
        %v1855 = vpop.f32.mrb[0].mxu0
        %v1856 = vadd.f32 0.0, %v1855
        %v1857 = vpop.f32.mrb[0].mxu0
        %v1858 = vpop.f32.mrb[0].mxu0
        %v1859 = vpop.f32.mrb[0].mxu0
        %1860 = vdwg.mxu0
        %v1865 = vunpack.c.l.b16 %v1724
        %v1866 = vunpack.c.l.b16 %v1725
        %v1867 = vunpack.c.l.b16 %v1726
        %v1868 = vunpack.c.l.b16 %v1727
        %v1869 = vpack.c.b16 %v1866, %v1865
        %v1870 = vpack.c.b16 %v1868, %v1867
        %v1874 = vsel %vm1234, %v1723, 0
        %1876 = vmatprep.subr.bf16.mxu0 0
        %1877 = vmatpush1.bf16.msra.mxu0 %v1869
        %1878 = vmatprep.subr.bf16.mxu0 0
        %1879 = vmatpush1.bf16.msra.mxu0 %v1870
        %1880 = vmatprep.subr.bf16.mxu0 0
        %1881 = vmatpush1.bf16.msra.mxu0 0
        %1882 = vmatprep.subr.bf16.mxu0 0
        %1883 = vmatpush1.bf16.msra.mxu0 0
        %1884 = vmatprep.subr.bf16.mxu0 0
        %1885 = vmatpush1.bf16.msra.mxu0 0
        %1886 = vmatprep.subr.bf16.mxu0 0
        %1887 = vmatpush1.bf16.msra.mxu0 0
        %1888 = vmatprep.subr.bf16.mxu0 0
        %1889 = vmatpush1.bf16.msra.mxu0 0
        %1890 = vmatprep.subr.bf16.mxu0 0
        %1891 = vmatpush1.bf16.msra.mxu0 0
        %1892 = vmatprep.subr.bf16.mxu0 0
        %1893 = vmatpush1.bf16.msra.mxu0 0
        %1894 = vmatprep.subr.bf16.mxu0 0
        %1895 = vmatpush1.bf16.msra.mxu0 0
        %1896 = vmatprep.subr.bf16.mxu0 0
        %1897 = vmatpush1.bf16.msra.mxu0 0
        %1898 = vmatprep.subr.bf16.mxu0 0
        %1899 = vmatpush1.bf16.msra.mxu0 0
        %1900 = vmatprep.subr.bf16.mxu0 0
        %1901 = vmatpush1.bf16.msra.mxu0 0
        %1902 = vmatprep.subr.bf16.mxu0 0
        %1903 = vmatpush1.bf16.msra.mxu0 0
        %1904 = vmatprep.subr.bf16.mxu0 0
        %1905 = vmatpush1.bf16.msra.mxu0 0
        %1906 = vmatprep.subr.bf16.mxu0 0
        %1907 = vmatpush1.bf16.msra.mxu0 0
        %1908 = vmatprep.mubr.bf16.mxu0 0
        %1909 = vmatmul.mubr.bf16.gmra.mrb[0].mxu0 %v1874
        %v1910 = vpop.f32.mrb[0].mxu0
        %v1911 = vadd.f32 %v1856, %v1910
        %v1912 = vpop.f32.mrb[0].mxu0
        %v1913 = vpop.f32.mrb[0].mxu0
        %v1914 = vpop.f32.mrb[0].mxu0
        %1915 = vdwg.mxu0
        %v1916 = vsel %vm1406, %v722, 0
        %1918 = vmatprep.subr.mxu0 0.0
        %1919 = vmatpush1.msra.mxu0 %v1649
        %1920 = vmatprep.subr.mxu0 0.0
        %1921 = vmatpush1.msra.mxu0 %v1650
        %1922 = vmatprep.subr.mxu0 0.0
        %1923 = vmatpush1.msra.mxu0 0.0
        %1924 = vmatprep.subr.mxu0 0.0
        %1925 = vmatpush1.msra.mxu0 0.0
        %1926 = vmatprep.subr.mxu0 0.0
        %1927 = vmatpush1.msra.mxu0 0.0
        %1928 = vmatprep.subr.mxu0 0.0
        %1929 = vmatpush1.msra.mxu0 0.0
        %1930 = vmatprep.subr.mxu0 0.0
        %1931 = vmatpush1.msra.mxu0 0.0
        %1932 = vmatprep.subr.mxu0 0.0
        %1933 = vmatpush1.msra.mxu0 0.0
        %1934 = vmatprep.subr.mxu0 0.0
        %1935 = vmatpush1.msra.mxu0 0.0
        %1936 = vmatprep.subr.mxu0 0.0
        %1937 = vmatpush1.msra.mxu0 0.0
        %1938 = vmatprep.subr.mxu0 0.0
        %1939 = vmatpush1.msra.mxu0 0.0
        %1940 = vmatprep.subr.mxu0 0.0
        %1941 = vmatpush1.msra.mxu0 0.0
        %1942 = vmatprep.subr.mxu0 0.0
        %1943 = vmatpush1.msra.mxu0 0.0
        %1944 = vmatprep.subr.mxu0 0.0
        %1945 = vmatpush1.msra.mxu0 0.0
        %1946 = vmatprep.subr.mxu0 0.0
        %1947 = vmatpush1.msra.mxu0 0.0
        %1948 = vmatprep.subr.mxu0 0.0
        %1949 = vmatpush1.msra.mxu0 0.0
        %1950 = vmatprep.subr.mxu0 0.0
        %1951 = vmatpush1.msra.mxu0 0.0
        %1952 = vmatprep.subr.mxu0 0.0
        %1953 = vmatpush1.msra.mxu0 0.0
        %1954 = vmatprep.subr.mxu0 0.0
        %1955 = vmatpush1.msra.mxu0 0.0
        %1956 = vmatprep.subr.mxu0 0.0
        %1957 = vmatpush1.msra.mxu0 0.0
        %1958 = vmatprep.subr.mxu0 0.0
        %1959 = vmatpush1.msra.mxu0 0.0
        %1960 = vmatprep.subr.mxu0 0.0
        %1961 = vmatpush1.msra.mxu0 0.0
        %1962 = vmatprep.subr.mxu0 0.0
        %1963 = vmatpush1.msra.mxu0 0.0
        %1964 = vmatprep.subr.mxu0 0.0
        %1965 = vmatpush1.msra.mxu0 0.0
        %1966 = vmatprep.subr.mxu0 0.0
        %1967 = vmatpush1.msra.mxu0 0.0
        %1968 = vmatprep.subr.mxu0 0.0
        %1969 = vmatpush1.msra.mxu0 0.0
        %1970 = vmatprep.subr.mxu0 0.0
        %1971 = vmatpush1.msra.mxu0 0.0
        %1972 = vmatprep.subr.mxu0 0.0
        %1973 = vmatpush1.msra.mxu0 0.0
        %1974 = vmatprep.subr.mxu0 0.0
        %1975 = vmatpush1.msra.mxu0 0.0
        %1976 = vmatprep.subr.mxu0 0.0
        %1977 = vmatpush1.msra.mxu0 0.0
        %1978 = vmatprep.subr.mxu0 0.0
        %1979 = vmatpush1.msra.mxu0 0.0
        %1980 = vmatprep.subr.mxu0 0.0
        %1981 = vmatpush1.msra.mxu0 0.0
        %1982 = vmatprep.mubr.f32.mxu0 0.0
        %1983 = vmatmul.mubr.f32.gmra.mrb[0].mxu0 %v1916
        %v1984 = vpop.f32.mrb[0].mxu0
        %v1985 = vadd.f32 0.0, %v1984
        %v1986 = vpop.f32.mrb[0].mxu0
        %1987 = vdwg.mxu0
        %v1988 = vpack.c.bf16 %v1985, %v1985
        %s1989 = scalar_lea.vmem %s5, 32
        %v1990 = vld [vmem:[%s1989] sm:$0xf]
        %v1991 = vld [vmem:[%s1989 + $0x4] sm:$0xf]
        %v1992 = vld [vmem:[%s1989 + $0x8] sm:$0xf]
        %v1993 = vld [vmem:[%s1989 + $0xc] sm:$0xf]
        %v1998 = vunpack.c.l.b16 %v1990
        %v1999 = vunpack.c.l.b16 %v1991
        %v2000 = vunpack.c.l.b16 %v1992
        %v2001 = vunpack.c.l.b16 %v1993
        %v2002 = vpack.c.b16 %v1999, %v1998
        %v2003 = vpack.c.b16 %v2001, %v2000
        %v2007 = vsel %vm1234, %v1988, 0
        %2009 = vmatprep.subr.bf16.mxu0 0
        %2010 = vmatpush1.bf16.msra.mxu0 %v2002
        %2011 = vmatprep.subr.bf16.mxu0 0
        %2012 = vmatpush1.bf16.msra.mxu0 %v2003
        %2013 = vmatprep.subr.bf16.mxu0 0
        %2014 = vmatpush1.bf16.msra.mxu0 0
        %2015 = vmatprep.subr.bf16.mxu0 0
        %2016 = vmatpush1.bf16.msra.mxu0 0
        %2017 = vmatprep.subr.bf16.mxu0 0
        %2018 = vmatpush1.bf16.msra.mxu0 0
        %2019 = vmatprep.subr.bf16.mxu0 0
        %2020 = vmatpush1.bf16.msra.mxu0 0
        %2021 = vmatprep.subr.bf16.mxu0 0
        %2022 = vmatpush1.bf16.msra.mxu0 0
        %2023 = vmatprep.subr.bf16.mxu0 0
        %2024 = vmatpush1.bf16.msra.mxu0 0
        %2025 = vmatprep.subr.bf16.mxu0 0
        %2026 = vmatpush1.bf16.msra.mxu0 0
        %2027 = vmatprep.subr.bf16.mxu0 0
        %2028 = vmatpush1.bf16.msra.mxu0 0
        %2029 = vmatprep.subr.bf16.mxu0 0
        %2030 = vmatpush1.bf16.msra.mxu0 0
        %2031 = vmatprep.subr.bf16.mxu0 0
        %2032 = vmatpush1.bf16.msra.mxu0 0
        %2033 = vmatprep.subr.bf16.mxu0 0
        %2034 = vmatpush1.bf16.msra.mxu0 0
        %2035 = vmatprep.subr.bf16.mxu0 0
        %2036 = vmatpush1.bf16.msra.mxu0 0
        %2037 = vmatprep.subr.bf16.mxu0 0
        %2038 = vmatpush1.bf16.msra.mxu0 0
        %2039 = vmatprep.subr.bf16.mxu0 0
        %2040 = vmatpush1.bf16.msra.mxu0 0
        %2041 = vmatprep.mubr.bf16.mxu0 0
        %2042 = vmatmul.mubr.bf16.gmra.mrb[0].mxu0 %v2007
        %v2043 = vpop.f32.mrb[0].mxu0
        %v2044 = vadd.f32 0.0, %v2043
        %v2045 = vpop.f32.mrb[0].mxu0
        %v2046 = vpop.f32.mrb[0].mxu0
        %v2047 = vpop.f32.mrb[0].mxu0
        %2048 = vdwg.mxu0
        %v2049 = vadd.f32 %v1911, %v2044
        %v2050 = vld [vmem:[%s6] sm:$0x1]
        %v2052 = vlaneseq
        %v2053 = vshrl.u32 %v2052, 7
        %v2054 = vsub.s32 0, %v2053
        %v2055 = vrot.slane %v2050, %v2054
        %v2057 = vadd.f32 %v2049, %v2055
        %vm2058 = vcmp.ge.f32.partialorder %v2057, 0.0
        %v2059 = vmul.f32 %v2057, 0.1
        %v2060 = vsel %vm2058, %v2057, %v2059
        %vm2061 = vcmask 64512
        %v2062 = vsel %vm2061, %v702, 0
        %2064 = vmatprep.subr.mxu0 0.0
        %2065 = vmatpush1.msra.mxu0 %v2060
        %2066 = vmatprep.subr.mxu0 0.0
        %2067 = vmatpush1.msra.mxu0 0.0
        %2068 = vmatprep.subr.mxu0 0.0
        %2069 = vmatpush1.msra.mxu0 0.0
        %2070 = vmatprep.subr.mxu0 0.0
        %2071 = vmatpush1.msra.mxu0 0.0
        %2072 = vmatprep.subr.mxu0 0.0
        %2073 = vmatpush1.msra.mxu0 0.0
        %2074 = vmatprep.subr.mxu0 0.0
        %2075 = vmatpush1.msra.mxu0 0.0
        %2076 = vmatprep.subr.mxu0 0.0
        %2077 = vmatpush1.msra.mxu0 0.0
        %2078 = vmatprep.subr.mxu0 0.0
        %2079 = vmatpush1.msra.mxu0 0.0
        %2080 = vmatprep.subr.mxu0 0.0
        %2081 = vmatpush1.msra.mxu0 0.0
        %2082 = vmatprep.subr.mxu0 0.0
        %2083 = vmatpush1.msra.mxu0 0.0
        %2084 = vmatprep.subr.mxu0 0.0
        %2085 = vmatpush1.msra.mxu0 0.0
        %2086 = vmatprep.subr.mxu0 0.0
        %2087 = vmatpush1.msra.mxu0 0.0
        %2088 = vmatprep.subr.mxu0 0.0
        %2089 = vmatpush1.msra.mxu0 0.0
        %2090 = vmatprep.subr.mxu0 0.0
        %2091 = vmatpush1.msra.mxu0 0.0
        %2092 = vmatprep.subr.mxu0 0.0
        %2093 = vmatpush1.msra.mxu0 0.0
        %2094 = vmatprep.subr.mxu0 0.0
        %2095 = vmatpush1.msra.mxu0 0.0
        %2096 = vmatprep.subr.mxu0 0.0
        %2097 = vmatpush1.msra.mxu0 0.0
        %2098 = vmatprep.subr.mxu0 0.0
        %2099 = vmatpush1.msra.mxu0 0.0
        %2100 = vmatprep.subr.mxu0 0.0
        %2101 = vmatpush1.msra.mxu0 0.0
        %2102 = vmatprep.subr.mxu0 0.0
        %2103 = vmatpush1.msra.mxu0 0.0
        %2104 = vmatprep.subr.mxu0 0.0
        %2105 = vmatpush1.msra.mxu0 0.0
        %2106 = vmatprep.subr.mxu0 0.0
        %2107 = vmatpush1.msra.mxu0 0.0
        %2108 = vmatprep.subr.mxu0 0.0
        %2109 = vmatpush1.msra.mxu0 0.0
        %2110 = vmatprep.subr.mxu0 0.0
        %2111 = vmatpush1.msra.mxu0 0.0
        %2112 = vmatprep.subr.mxu0 0.0
        %2113 = vmatpush1.msra.mxu0 0.0
        %2114 = vmatprep.subr.mxu0 0.0
        %2115 = vmatpush1.msra.mxu0 0.0
        %2116 = vmatprep.subr.mxu0 0.0
        %2117 = vmatpush1.msra.mxu0 0.0
        %2118 = vmatprep.subr.mxu0 0.0
        %2119 = vmatpush1.msra.mxu0 0.0
        %2120 = vmatprep.subr.mxu0 0.0
        %2121 = vmatpush1.msra.mxu0 0.0
        %2122 = vmatprep.subr.mxu0 0.0
        %2123 = vmatpush1.msra.mxu0 0.0
        %2124 = vmatprep.subr.mxu0 0.0
        %2125 = vmatpush1.msra.mxu0 0.0
        %2126 = vmatprep.subr.mxu0 0.0
        %2127 = vmatpush1.msra.mxu0 0.0
        %2128 = vmatprep.mubr.f32.mxu0 0.0
        %2129 = vmatmul.mubr.f32.gmra.mrb[0].mxu0 %v2062
        %v2130 = vpop.f32.mrb[0].mxu0
        %v2131 = vadd.f32 0.0, %v2130
        %v2132 = vpop.f32.mrb[0].mxu0
        %2133 = vdwg.mxu0
        %v2134 = vpack.c.bf16 %v2131, %v2131
        %v2135 = vld [vmem:[%s7] sm:$0xf]
        %v2136 = vld [vmem:[%s7 + $0x4] sm:$0xf]
        %v2137 = vld [vmem:[%s7 + $0x8] sm:$0xf]
        %v2138 = vld [vmem:[%s7 + $0xc] sm:$0xf]
        %v2139 = vld [vmem:[%s7 + $0x10] sm:$0xf]
        %v2140 = vld [vmem:[%s7 + $0x14] sm:$0xf]
        %v2141 = vld [vmem:[%s7 + $0x18] sm:$0xf]
        %v2142 = vld [vmem:[%s7 + $0x1c] sm:$0xf]
        %v2143 = vsel %vm2061, %v710, 0
        %2145 = vmatprep.subr.mxu0 0.0
        %2146 = vmatpush1.msra.mxu0 %v2060
        %2147 = vmatprep.subr.mxu0 0.0
        %2148 = vmatpush1.msra.mxu0 0.0
        %2149 = vmatprep.subr.mxu0 0.0
        %2150 = vmatpush1.msra.mxu0 0.0
        %2151 = vmatprep.subr.mxu0 0.0
        %2152 = vmatpush1.msra.mxu0 0.0
        %2153 = vmatprep.subr.mxu0 0.0
        %2154 = vmatpush1.msra.mxu0 0.0
        %2155 = vmatprep.subr.mxu0 0.0
        %2156 = vmatpush1.msra.mxu0 0.0
        %2157 = vmatprep.subr.mxu0 0.0
        %2158 = vmatpush1.msra.mxu0 0.0
        %2159 = vmatprep.subr.mxu0 0.0
        %2160 = vmatpush1.msra.mxu0 0.0
        %2161 = vmatprep.subr.mxu0 0.0
        %2162 = vmatpush1.msra.mxu0 0.0
        %2163 = vmatprep.subr.mxu0 0.0
        %2164 = vmatpush1.msra.mxu0 0.0
        %2165 = vmatprep.subr.mxu0 0.0
        %2166 = vmatpush1.msra.mxu0 0.0
        %2167 = vmatprep.subr.mxu0 0.0
        %2168 = vmatpush1.msra.mxu0 0.0
        %2169 = vmatprep.subr.mxu0 0.0
        %2170 = vmatpush1.msra.mxu0 0.0
        %2171 = vmatprep.subr.mxu0 0.0
        %2172 = vmatpush1.msra.mxu0 0.0
        %2173 = vmatprep.subr.mxu0 0.0
        %2174 = vmatpush1.msra.mxu0 0.0
        %2175 = vmatprep.subr.mxu0 0.0
        %2176 = vmatpush1.msra.mxu0 0.0
        %2177 = vmatprep.subr.mxu0 0.0
        %2178 = vmatpush1.msra.mxu0 0.0
        %2179 = vmatprep.subr.mxu0 0.0
        %2180 = vmatpush1.msra.mxu0 0.0
        %2181 = vmatprep.subr.mxu0 0.0
        %2182 = vmatpush1.msra.mxu0 0.0
        %2183 = vmatprep.subr.mxu0 0.0
        %2184 = vmatpush1.msra.mxu0 0.0
        %2185 = vmatprep.subr.mxu0 0.0
        %2186 = vmatpush1.msra.mxu0 0.0
        %2187 = vmatprep.subr.mxu0 0.0
        %2188 = vmatpush1.msra.mxu0 0.0
        %2189 = vmatprep.subr.mxu0 0.0
        %2190 = vmatpush1.msra.mxu0 0.0
        %2191 = vmatprep.subr.mxu0 0.0
        %2192 = vmatpush1.msra.mxu0 0.0
        %2193 = vmatprep.subr.mxu0 0.0
        %2194 = vmatpush1.msra.mxu0 0.0
        %2195 = vmatprep.subr.mxu0 0.0
        %2196 = vmatpush1.msra.mxu0 0.0
        %2197 = vmatprep.subr.mxu0 0.0
        %2198 = vmatpush1.msra.mxu0 0.0
        %2199 = vmatprep.subr.mxu0 0.0
        %2200 = vmatpush1.msra.mxu0 0.0
        %2201 = vmatprep.subr.mxu0 0.0
        %2202 = vmatpush1.msra.mxu0 0.0
        %2203 = vmatprep.subr.mxu0 0.0
        %2204 = vmatpush1.msra.mxu0 0.0
        %2205 = vmatprep.subr.mxu0 0.0
        %2206 = vmatpush1.msra.mxu0 0.0
        %2207 = vmatprep.subr.mxu0 0.0
        %2208 = vmatpush1.msra.mxu0 0.0
        %2209 = vmatprep.mubr.f32.mxu0 0.0
        %2210 = vmatmul.mubr.f32.gmra.mrb[0].mxu0 %v2143
        %v2211 = vpop.f32.mrb[0].mxu0
        %v2212 = vadd.f32 0.0, %v2211
        %v2213 = vpop.f32.mrb[0].mxu0
        %2214 = vdwg.mxu0
        %v2215 = vpack.c.bf16 %v2212, %v2212
        %s2216 = scalar_lea.vmem %s7, 32
        %v2217 = vld [vmem:[%s2216] sm:$0xf]
        %v2218 = vld [vmem:[%s2216 + $0x4] sm:$0xf]
        %v2219 = vld [vmem:[%s2216 + $0x8] sm:$0xf]
        %v2220 = vld [vmem:[%s2216 + $0xc] sm:$0xf]
        %v2221 = vld [vmem:[%s2216 + $0x10] sm:$0xf]
        %v2222 = vld [vmem:[%s2216 + $0x14] sm:$0xf]
        %v2223 = vld [vmem:[%s2216 + $0x18] sm:$0xf]
        %v2224 = vld [vmem:[%s2216 + $0x1c] sm:$0xf]
        %v2233 = vunpack.c.l.b16 %v2217
        %v2234 = vunpack.c.l.b16 %v2218
        %v2235 = vunpack.c.l.b16 %v2219
        %v2236 = vunpack.c.l.b16 %v2220
        %v2237 = vunpack.c.l.b16 %v2221
        %v2238 = vunpack.c.l.b16 %v2222
        %v2239 = vunpack.c.l.b16 %v2223
        %v2240 = vunpack.c.l.b16 %v2224
        %v2241 = vpack.c.b16 %v2234, %v2233
        %v2242 = vpack.c.b16 %v2236, %v2235
        %v2243 = vpack.c.b16 %v2238, %v2237
        %v2244 = vpack.c.b16 %v2240, %v2239
        %v2250 = vsel %vm726, %v2215, 0
        %2252 = vmatprep.subr.bf16.mxu0 0
        %2253 = vmatpush1.bf16.msra.mxu0 %v2241
        %2254 = vmatprep.subr.bf16.mxu0 0
        %2255 = vmatpush1.bf16.msra.mxu0 %v2242
        %2256 = vmatprep.subr.bf16.mxu0 0
        %2257 = vmatpush1.bf16.msra.mxu0 %v2243
        %2258 = vmatprep.subr.bf16.mxu0 0
        %2259 = vmatpush1.bf16.msra.mxu0 %v2244
        %2260 = vmatprep.subr.bf16.mxu0 0
        %2261 = vmatpush1.bf16.msra.mxu0 0
        %2262 = vmatprep.subr.bf16.mxu0 0
        %2263 = vmatpush1.bf16.msra.mxu0 0
        %2264 = vmatprep.subr.bf16.mxu0 0
        %2265 = vmatpush1.bf16.msra.mxu0 0
        %2266 = vmatprep.subr.bf16.mxu0 0
        %2267 = vmatpush1.bf16.msra.mxu0 0
        %2268 = vmatprep.subr.bf16.mxu0 0
        %2269 = vmatpush1.bf16.msra.mxu0 0
        %2270 = vmatprep.subr.bf16.mxu0 0
        %2271 = vmatpush1.bf16.msra.mxu0 0
        %2272 = vmatprep.subr.bf16.mxu0 0
        %2273 = vmatpush1.bf16.msra.mxu0 0
        %2274 = vmatprep.subr.bf16.mxu0 0
        %2275 = vmatpush1.bf16.msra.mxu0 0
        %2276 = vmatprep.subr.bf16.mxu0 0
        %2277 = vmatpush1.bf16.msra.mxu0 0
        %2278 = vmatprep.subr.bf16.mxu0 0
        %2279 = vmatpush1.bf16.msra.mxu0 0
        %2280 = vmatprep.subr.bf16.mxu0 0
        %2281 = vmatpush1.bf16.msra.mxu0 0
        %2282 = vmatprep.subr.bf16.mxu0 0
        %2283 = vmatpush1.bf16.msra.mxu0 0
        %2284 = vmatprep.mubr.bf16.mxu0 0
        %2285 = vmatmul.mubr.bf16.gmra.mrb[0].mxu0 %v2250
        %v2286 = vpop.f32.mrb[0].mxu0
        %v2287 = vadd.f32 0.0, %v2286
        %v2288 = vpop.f32.mrb[0].mxu0
        %v2289 = vpop.f32.mrb[0].mxu0
        %v2290 = vpop.f32.mrb[0].mxu0
        %2291 = vdwg.mxu0
        %v2300 = vunpack.c.l.b16 %v2135
        %v2301 = vunpack.c.l.b16 %v2136
        %v2302 = vunpack.c.l.b16 %v2137
        %v2303 = vunpack.c.l.b16 %v2138
        %v2304 = vunpack.c.l.b16 %v2139
        %v2305 = vunpack.c.l.b16 %v2140
        %v2306 = vunpack.c.l.b16 %v2141
        %v2307 = vunpack.c.l.b16 %v2142
        %v2308 = vpack.c.b16 %v2301, %v2300
        %v2309 = vpack.c.b16 %v2303, %v2302
        %v2310 = vpack.c.b16 %v2305, %v2304
        %v2311 = vpack.c.b16 %v2307, %v2306
        %v2317 = vsel %vm726, %v2134, 0
        %2319 = vmatprep.subr.bf16.mxu0 0
        %2320 = vmatpush1.bf16.msra.mxu0 %v2308
        %2321 = vmatprep.subr.bf16.mxu0 0
        %2322 = vmatpush1.bf16.msra.mxu0 %v2309
        %2323 = vmatprep.subr.bf16.mxu0 0
        %2324 = vmatpush1.bf16.msra.mxu0 %v2310
        %2325 = vmatprep.subr.bf16.mxu0 0
        %2326 = vmatpush1.bf16.msra.mxu0 %v2311
        %2327 = vmatprep.subr.bf16.mxu0 0
        %2328 = vmatpush1.bf16.msra.mxu0 0
        %2329 = vmatprep.subr.bf16.mxu0 0
        %2330 = vmatpush1.bf16.msra.mxu0 0
        %2331 = vmatprep.subr.bf16.mxu0 0
        %2332 = vmatpush1.bf16.msra.mxu0 0
        %2333 = vmatprep.subr.bf16.mxu0 0
        %2334 = vmatpush1.bf16.msra.mxu0 0
        %2335 = vmatprep.subr.bf16.mxu0 0
        %2336 = vmatpush1.bf16.msra.mxu0 0
        %2337 = vmatprep.subr.bf16.mxu0 0
        %2338 = vmatpush1.bf16.msra.mxu0 0
        %2339 = vmatprep.subr.bf16.mxu0 0
        %2340 = vmatpush1.bf16.msra.mxu0 0
        %2341 = vmatprep.subr.bf16.mxu0 0
        %2342 = vmatpush1.bf16.msra.mxu0 0
        %2343 = vmatprep.subr.bf16.mxu0 0
        %2344 = vmatpush1.bf16.msra.mxu0 0
        %2345 = vmatprep.subr.bf16.mxu0 0
        %2346 = vmatpush1.bf16.msra.mxu0 0
        %2347 = vmatprep.subr.bf16.mxu0 0
        %2348 = vmatpush1.bf16.msra.mxu0 0
        %2349 = vmatprep.subr.bf16.mxu0 0
        %2350 = vmatpush1.bf16.msra.mxu0 0
        %2351 = vmatprep.mubr.bf16.mxu0 0
        %2352 = vmatmul.mubr.bf16.gmra.mrb[0].mxu0 %v2317
        %v2353 = vpop.f32.mrb[0].mxu0
        %v2354 = vadd.f32 %v2287, %v2353
        %v2355 = vpop.f32.mrb[0].mxu0
        %v2356 = vpop.f32.mrb[0].mxu0
        %v2357 = vpop.f32.mrb[0].mxu0
        %2358 = vdwg.mxu0
        %v2359 = vsel %vm2061, %v722, 0
        %2361 = vmatprep.subr.mxu0 0.0
        %2362 = vmatpush1.msra.mxu0 %v2060
        %2363 = vmatprep.subr.mxu0 0.0
        %2364 = vmatpush1.msra.mxu0 0.0
        %2365 = vmatprep.subr.mxu0 0.0
        %2366 = vmatpush1.msra.mxu0 0.0
        %2367 = vmatprep.subr.mxu0 0.0
        %2368 = vmatpush1.msra.mxu0 0.0
        %2369 = vmatprep.subr.mxu0 0.0
        %2370 = vmatpush1.msra.mxu0 0.0
        %2371 = vmatprep.subr.mxu0 0.0
        %2372 = vmatpush1.msra.mxu0 0.0
        %2373 = vmatprep.subr.mxu0 0.0
        %2374 = vmatpush1.msra.mxu0 0.0
        %2375 = vmatprep.subr.mxu0 0.0
        %2376 = vmatpush1.msra.mxu0 0.0
        %2377 = vmatprep.subr.mxu0 0.0
        %2378 = vmatpush1.msra.mxu0 0.0
        %2379 = vmatprep.subr.mxu0 0.0
        %2380 = vmatpush1.msra.mxu0 0.0
        %2381 = vmatprep.subr.mxu0 0.0
        %2382 = vmatpush1.msra.mxu0 0.0
        %2383 = vmatprep.subr.mxu0 0.0
        %2384 = vmatpush1.msra.mxu0 0.0
        %2385 = vmatprep.subr.mxu0 0.0
        %2386 = vmatpush1.msra.mxu0 0.0
        %2387 = vmatprep.subr.mxu0 0.0
        %2388 = vmatpush1.msra.mxu0 0.0
        %2389 = vmatprep.subr.mxu0 0.0
        %2390 = vmatpush1.msra.mxu0 0.0
        %2391 = vmatprep.subr.mxu0 0.0
        %2392 = vmatpush1.msra.mxu0 0.0
        %2393 = vmatprep.subr.mxu0 0.0
        %2394 = vmatpush1.msra.mxu0 0.0
        %2395 = vmatprep.subr.mxu0 0.0
        %2396 = vmatpush1.msra.mxu0 0.0
        %2397 = vmatprep.subr.mxu0 0.0
        %2398 = vmatpush1.msra.mxu0 0.0
        %2399 = vmatprep.subr.mxu0 0.0
        %2400 = vmatpush1.msra.mxu0 0.0
        %2401 = vmatprep.subr.mxu0 0.0
        %2402 = vmatpush1.msra.mxu0 0.0
        %2403 = vmatprep.subr.mxu0 0.0
        %2404 = vmatpush1.msra.mxu0 0.0
        %2405 = vmatprep.subr.mxu0 0.0
        %2406 = vmatpush1.msra.mxu0 0.0
        %2407 = vmatprep.subr.mxu0 0.0
        %2408 = vmatpush1.msra.mxu0 0.0
        %2409 = vmatprep.subr.mxu0 0.0
        %2410 = vmatpush1.msra.mxu0 0.0
        %2411 = vmatprep.subr.mxu0 0.0
        %2412 = vmatpush1.msra.mxu0 0.0
        %2413 = vmatprep.subr.mxu0 0.0
        %2414 = vmatpush1.msra.mxu0 0.0
        %2415 = vmatprep.subr.mxu0 0.0
        %2416 = vmatpush1.msra.mxu0 0.0
        %2417 = vmatprep.subr.mxu0 0.0
        %2418 = vmatpush1.msra.mxu0 0.0
        %2419 = vmatprep.subr.mxu0 0.0
        %2420 = vmatpush1.msra.mxu0 0.0
        %2421 = vmatprep.subr.mxu0 0.0
        %2422 = vmatpush1.msra.mxu0 0.0
        %2423 = vmatprep.subr.mxu0 0.0
        %2424 = vmatpush1.msra.mxu0 0.0
        %2425 = vmatprep.mubr.f32.mxu0 0.0
        %2426 = vmatmul.mubr.f32.gmra.mrb[0].mxu0 %v2359
        %v2427 = vpop.f32.mrb[0].mxu0
        %v2428 = vadd.f32 0.0, %v2427
        %v2429 = vpop.f32.mrb[0].mxu0
        %2430 = vdwg.mxu0
        %v2431 = vpack.c.bf16 %v2428, %v2428
        %s2432 = scalar_lea.vmem %s7, 64
        %v2433 = vld [vmem:[%s2432] sm:$0xf]
        %v2434 = vld [vmem:[%s2432 + $0x4] sm:$0xf]
        %v2435 = vld [vmem:[%s2432 + $0x8] sm:$0xf]
        %v2436 = vld [vmem:[%s2432 + $0xc] sm:$0xf]
        %v2437 = vld [vmem:[%s2432 + $0x10] sm:$0xf]
        %v2438 = vld [vmem:[%s2432 + $0x14] sm:$0xf]
        %v2439 = vld [vmem:[%s2432 + $0x18] sm:$0xf]
        %v2440 = vld [vmem:[%s2432 + $0x1c] sm:$0xf]
        %v2449 = vunpack.c.l.b16 %v2433
        %v2450 = vunpack.c.l.b16 %v2434
        %v2451 = vunpack.c.l.b16 %v2435
        %v2452 = vunpack.c.l.b16 %v2436
        %v2453 = vunpack.c.l.b16 %v2437
        %v2454 = vunpack.c.l.b16 %v2438
        %v2455 = vunpack.c.l.b16 %v2439
        %v2456 = vunpack.c.l.b16 %v2440
        %v2457 = vpack.c.b16 %v2450, %v2449
        %v2458 = vpack.c.b16 %v2452, %v2451
        %v2459 = vpack.c.b16 %v2454, %v2453
        %v2460 = vpack.c.b16 %v2456, %v2455
        %v2466 = vsel %vm726, %v2431, 0
        %2468 = vmatprep.subr.bf16.mxu0 0
        %2469 = vmatpush1.bf16.msra.mxu0 %v2457
        %2470 = vmatprep.subr.bf16.mxu0 0
        %2471 = vmatpush1.bf16.msra.mxu0 %v2458
        %2472 = vmatprep.subr.bf16.mxu0 0
        %2473 = vmatpush1.bf16.msra.mxu0 %v2459
        %2474 = vmatprep.subr.bf16.mxu0 0
        %2475 = vmatpush1.bf16.msra.mxu0 %v2460
        %2476 = vmatprep.subr.bf16.mxu0 0
        %2477 = vmatpush1.bf16.msra.mxu0 0
        %2478 = vmatprep.subr.bf16.mxu0 0
        %2479 = vmatpush1.bf16.msra.mxu0 0
        %2480 = vmatprep.subr.bf16.mxu0 0
        %2481 = vmatpush1.bf16.msra.mxu0 0
        %2482 = vmatprep.subr.bf16.mxu0 0
        %2483 = vmatpush1.bf16.msra.mxu0 0
        %2484 = vmatprep.subr.bf16.mxu0 0
        %2485 = vmatpush1.bf16.msra.mxu0 0
        %2486 = vmatprep.subr.bf16.mxu0 0
        %2487 = vmatpush1.bf16.msra.mxu0 0
        %2488 = vmatprep.subr.bf16.mxu0 0
        %2489 = vmatpush1.bf16.msra.mxu0 0
        %2490 = vmatprep.subr.bf16.mxu0 0
        %2491 = vmatpush1.bf16.msra.mxu0 0
        %2492 = vmatprep.subr.bf16.mxu0 0
        %2493 = vmatpush1.bf16.msra.mxu0 0
        %2494 = vmatprep.subr.bf16.mxu0 0
        %2495 = vmatpush1.bf16.msra.mxu0 0
        %2496 = vmatprep.subr.bf16.mxu0 0
        %2497 = vmatpush1.bf16.msra.mxu0 0
        %2498 = vmatprep.subr.bf16.mxu0 0
        %2499 = vmatpush1.bf16.msra.mxu0 0
        %2500 = vmatprep.mubr.bf16.mxu0 0
        %2501 = vmatmul.mubr.bf16.gmra.mrb[0].mxu0 %v2466
        %v2502 = vpop.f32.mrb[0].mxu0
        %v2503 = vadd.f32 0.0, %v2502
        %v2504 = vpop.f32.mrb[0].mxu0
        %v2505 = vpop.f32.mrb[0].mxu0
        %v2506 = vpop.f32.mrb[0].mxu0
        %2507 = vdwg.mxu0
        %v2508 = vadd.f32 %v2354, %v2503
        %v2509 = vld [vmem:[%s8] sm:$0x1]
        %v2511 = vlaneseq
        %v2512 = vshrl.u32 %v2511, 7
        %v2513 = vsub.s32 0, %v2512
        %v2514 = vrot.slane %v2509, %v2513
        %v2516 = vadd.f32 %v2508, %v2514
        %vm2517 = vcmp.ge.f32.partialorder %v2516, 0.0
        %v2518 = vmul.f32 %v2516, 0.1
        %v2519 = vsel %vm2517, %v2516, %v2518
        %vm2520 = vcmask 31744
        %v2521 = vsel %vm2520, %v702, 0
        %vm2523 = vcmask 1043456
        %v2525 = vsel %vm2523, %v2519, 0
        %2527 = vmatprep.subr.mxu0 0.0
        %2528 = vmatpush1.msra.mxu0 %v2525
        %2529 = vmatprep.subr.mxu0 0.0
        %2530 = vmatpush1.msra.mxu0 0.0
        %2531 = vmatprep.subr.mxu0 0.0
        %2532 = vmatpush1.msra.mxu0 0.0
        %2533 = vmatprep.subr.mxu0 0.0
        %2534 = vmatpush1.msra.mxu0 0.0
        %2535 = vmatprep.subr.mxu0 0.0
        %2536 = vmatpush1.msra.mxu0 0.0
        %2537 = vmatprep.subr.mxu0 0.0
        %2538 = vmatpush1.msra.mxu0 0.0
        %2539 = vmatprep.subr.mxu0 0.0
        %2540 = vmatpush1.msra.mxu0 0.0
        %2541 = vmatprep.subr.mxu0 0.0
        %2542 = vmatpush1.msra.mxu0 0.0
        %2543 = vmatprep.subr.mxu0 0.0
        %2544 = vmatpush1.msra.mxu0 0.0
        %2545 = vmatprep.subr.mxu0 0.0
        %2546 = vmatpush1.msra.mxu0 0.0
        %2547 = vmatprep.subr.mxu0 0.0
        %2548 = vmatpush1.msra.mxu0 0.0
        %2549 = vmatprep.subr.mxu0 0.0
        %2550 = vmatpush1.msra.mxu0 0.0
        %2551 = vmatprep.subr.mxu0 0.0
        %2552 = vmatpush1.msra.mxu0 0.0
        %2553 = vmatprep.subr.mxu0 0.0
        %2554 = vmatpush1.msra.mxu0 0.0
        %2555 = vmatprep.subr.mxu0 0.0
        %2556 = vmatpush1.msra.mxu0 0.0
        %2557 = vmatprep.subr.mxu0 0.0
        %2558 = vmatpush1.msra.mxu0 0.0
        %2559 = vmatprep.subr.mxu0 0.0
        %2560 = vmatpush1.msra.mxu0 0.0
        %2561 = vmatprep.subr.mxu0 0.0
        %2562 = vmatpush1.msra.mxu0 0.0
        %2563 = vmatprep.subr.mxu0 0.0
        %2564 = vmatpush1.msra.mxu0 0.0
        %2565 = vmatprep.subr.mxu0 0.0
        %2566 = vmatpush1.msra.mxu0 0.0
        %2567 = vmatprep.subr.mxu0 0.0
        %2568 = vmatpush1.msra.mxu0 0.0
        %2569 = vmatprep.subr.mxu0 0.0
        %2570 = vmatpush1.msra.mxu0 0.0
        %2571 = vmatprep.subr.mxu0 0.0
        %2572 = vmatpush1.msra.mxu0 0.0
        %2573 = vmatprep.subr.mxu0 0.0
        %2574 = vmatpush1.msra.mxu0 0.0
        %2575 = vmatprep.subr.mxu0 0.0
        %2576 = vmatpush1.msra.mxu0 0.0
        %2577 = vmatprep.subr.mxu0 0.0
        %2578 = vmatpush1.msra.mxu0 0.0
        %2579 = vmatprep.subr.mxu0 0.0
        %2580 = vmatpush1.msra.mxu0 0.0
        %2581 = vmatprep.subr.mxu0 0.0
        %2582 = vmatpush1.msra.mxu0 0.0
        %2583 = vmatprep.subr.mxu0 0.0
        %2584 = vmatpush1.msra.mxu0 0.0
        %2585 = vmatprep.subr.mxu0 0.0
        %2586 = vmatpush1.msra.mxu0 0.0
        %2587 = vmatprep.subr.mxu0 0.0
        %2588 = vmatpush1.msra.mxu0 0.0
        %2589 = vmatprep.subr.mxu0 0.0
        %2590 = vmatpush1.msra.mxu0 0.0
        %2591 = vmatprep.mubr.f32.mxu0 0.0
        %2592 = vmatmul.mubr.f32.gmra.mrb[0].mxu0 %v2521
        %v2593 = vpop.f32.mrb[0].mxu0
        %v2594 = vadd.f32 0.0, %v2593
        %v2595 = vpop.f32.mrb[0].mxu0
        %2596 = vdwg.mxu0
        %v2597 = vpack.c.bf16 %v2594, %v2594
        %v2598 = vld [vmem:[%s9] sm:$0xff]
        %v2599 = vld [vmem:[%s9 + $0x8] sm:$0xff]
        %v2600 = vld [vmem:[%s9 + $0x10] sm:$0xff]
        %v2601 = vld [vmem:[%s9 + $0x18] sm:$0xff]
        %v2602 = vld [vmem:[%s9 + $0x20] sm:$0xff]
        %v2603 = vld [vmem:[%s9 + $0x28] sm:$0xff]
        %v2604 = vld [vmem:[%s9 + $0x30] sm:$0xff]
        %v2605 = vld [vmem:[%s9 + $0x38] sm:$0xff]
        %v2606 = vld [vmem:[%s9 + $0x40] sm:$0xff]
        %v2607 = vld [vmem:[%s9 + $0x48] sm:$0xff]
        %v2608 = vld [vmem:[%s9 + $0x50] sm:$0xff]
        %v2609 = vld [vmem:[%s9 + $0x58] sm:$0xff]
        %v2610 = vld [vmem:[%s9 + $0x60] sm:$0xff]
        %v2611 = vld [vmem:[%s9 + $0x68] sm:$0xff]
        %v2612 = vld [vmem:[%s9 + $0x70] sm:$0xff]
        %v2613 = vld [vmem:[%s9 + $0x78] sm:$0xff]
        %v2614 = vsel %vm2520, %v710, 0
        %2616 = vmatprep.subr.mxu0 0.0
        %2617 = vmatpush1.msra.mxu0 %v2525
        %2618 = vmatprep.subr.mxu0 0.0
        %2619 = vmatpush1.msra.mxu0 0.0
        %2620 = vmatprep.subr.mxu0 0.0
        %2621 = vmatpush1.msra.mxu0 0.0
        %2622 = vmatprep.subr.mxu0 0.0
        %2623 = vmatpush1.msra.mxu0 0.0
        %2624 = vmatprep.subr.mxu0 0.0
        %2625 = vmatpush1.msra.mxu0 0.0
        %2626 = vmatprep.subr.mxu0 0.0
        %2627 = vmatpush1.msra.mxu0 0.0
        %2628 = vmatprep.subr.mxu0 0.0
        %2629 = vmatpush1.msra.mxu0 0.0
        %2630 = vmatprep.subr.mxu0 0.0
        %2631 = vmatpush1.msra.mxu0 0.0
        %2632 = vmatprep.subr.mxu0 0.0
        %2633 = vmatpush1.msra.mxu0 0.0
        %2634 = vmatprep.subr.mxu0 0.0
        %2635 = vmatpush1.msra.mxu0 0.0
        %2636 = vmatprep.subr.mxu0 0.0
        %2637 = vmatpush1.msra.mxu0 0.0
        %2638 = vmatprep.subr.mxu0 0.0
        %2639 = vmatpush1.msra.mxu0 0.0
        %2640 = vmatprep.subr.mxu0 0.0
        %2641 = vmatpush1.msra.mxu0 0.0
        %2642 = vmatprep.subr.mxu0 0.0
        %2643 = vmatpush1.msra.mxu0 0.0
        %2644 = vmatprep.subr.mxu0 0.0
        %2645 = vmatpush1.msra.mxu0 0.0
        %2646 = vmatprep.subr.mxu0 0.0
        %2647 = vmatpush1.msra.mxu0 0.0
        %2648 = vmatprep.subr.mxu0 0.0
        %2649 = vmatpush1.msra.mxu0 0.0
        %2650 = vmatprep.subr.mxu0 0.0
        %2651 = vmatpush1.msra.mxu0 0.0
        %2652 = vmatprep.subr.mxu0 0.0
        %2653 = vmatpush1.msra.mxu0 0.0
        %2654 = vmatprep.subr.mxu0 0.0
        %2655 = vmatpush1.msra.mxu0 0.0
        %2656 = vmatprep.subr.mxu0 0.0
        %2657 = vmatpush1.msra.mxu0 0.0
        %2658 = vmatprep.subr.mxu0 0.0
        %2659 = vmatpush1.msra.mxu0 0.0
        %2660 = vmatprep.subr.mxu0 0.0
        %2661 = vmatpush1.msra.mxu0 0.0
        %2662 = vmatprep.subr.mxu0 0.0
        %2663 = vmatpush1.msra.mxu0 0.0
        %2664 = vmatprep.subr.mxu0 0.0
        %2665 = vmatpush1.msra.mxu0 0.0
        %2666 = vmatprep.subr.mxu0 0.0
        %2667 = vmatpush1.msra.mxu0 0.0
        %2668 = vmatprep.subr.mxu0 0.0
        %2669 = vmatpush1.msra.mxu0 0.0
        %2670 = vmatprep.subr.mxu0 0.0
        %2671 = vmatpush1.msra.mxu0 0.0
        %2672 = vmatprep.subr.mxu0 0.0
        %2673 = vmatpush1.msra.mxu0 0.0
        %2674 = vmatprep.subr.mxu0 0.0
        %2675 = vmatpush1.msra.mxu0 0.0
        %2676 = vmatprep.subr.mxu0 0.0
        %2677 = vmatpush1.msra.mxu0 0.0
        %2678 = vmatprep.subr.mxu0 0.0
        %2679 = vmatpush1.msra.mxu0 0.0
        %2680 = vmatprep.mubr.f32.mxu0 0.0
        %2681 = vmatmul.mubr.f32.gmra.mrb[0].mxu0 %v2614
        %v2682 = vpop.f32.mrb[0].mxu0
        %v2683 = vadd.f32 0.0, %v2682
        %v2684 = vpop.f32.mrb[0].mxu0
        %2685 = vdwg.mxu0
        %v2686 = vpack.c.bf16 %v2683, %v2683
        %s2687 = scalar_lea.vmem %s9, 128
        %v2688 = vld [vmem:[%s2687] sm:$0xff]
        %v2689 = vld [vmem:[%s2687 + $0x8] sm:$0xff]
        %v2690 = vld [vmem:[%s2687 + $0x10] sm:$0xff]
        %v2691 = vld [vmem:[%s2687 + $0x18] sm:$0xff]
        %v2692 = vld [vmem:[%s2687 + $0x20] sm:$0xff]
        %v2693 = vld [vmem:[%s2687 + $0x28] sm:$0xff]
        %v2694 = vld [vmem:[%s2687 + $0x30] sm:$0xff]
        %v2695 = vld [vmem:[%s2687 + $0x38] sm:$0xff]
        %v2696 = vld [vmem:[%s2687 + $0x40] sm:$0xff]
        %v2697 = vld [vmem:[%s2687 + $0x48] sm:$0xff]
        %v2698 = vld [vmem:[%s2687 + $0x50] sm:$0xff]
        %v2699 = vld [vmem:[%s2687 + $0x58] sm:$0xff]
        %v2700 = vld [vmem:[%s2687 + $0x60] sm:$0xff]
        %v2701 = vld [vmem:[%s2687 + $0x68] sm:$0xff]
        %v2702 = vld [vmem:[%s2687 + $0x70] sm:$0xff]
        %v2703 = vld [vmem:[%s2687 + $0x78] sm:$0xff]
        %v2720 = vunpack.c.l.b16 %v2688
        %v2721 = vunpack.c.h.b16 %v2688
        %v2722 = vunpack.c.l.b16 %v2689
        %v2723 = vunpack.c.h.b16 %v2689
        %v2724 = vunpack.c.l.b16 %v2690
        %v2725 = vunpack.c.h.b16 %v2690
        %v2726 = vunpack.c.l.b16 %v2691
        %v2727 = vunpack.c.h.b16 %v2691
        %v2728 = vunpack.c.l.b16 %v2692
        %v2729 = vunpack.c.h.b16 %v2692
        %v2730 = vunpack.c.l.b16 %v2693
        %v2731 = vunpack.c.h.b16 %v2693
        %v2732 = vunpack.c.l.b16 %v2694
        %v2733 = vunpack.c.h.b16 %v2694
        %v2734 = vunpack.c.l.b16 %v2695
        %v2735 = vunpack.c.h.b16 %v2695
        %v2736 = vunpack.c.l.b16 %v2696
        %v2737 = vunpack.c.h.b16 %v2696
        %v2738 = vunpack.c.l.b16 %v2697
        %v2739 = vunpack.c.h.b16 %v2697
        %v2740 = vunpack.c.l.b16 %v2698
        %v2741 = vunpack.c.h.b16 %v2698
        %v2742 = vunpack.c.l.b16 %v2699
        %v2743 = vunpack.c.h.b16 %v2699
        %v2744 = vunpack.c.l.b16 %v2700
        %v2745 = vunpack.c.h.b16 %v2700
        %v2746 = vunpack.c.l.b16 %v2701
        %v2747 = vunpack.c.h.b16 %v2701
        %v2748 = vunpack.c.l.b16 %v2702
        %v2749 = vunpack.c.h.b16 %v2702
        %v2750 = vunpack.c.l.b16 %v2703
        %v2751 = vunpack.c.h.b16 %v2703
        %v2752 = vpack.c.b16 %v2722, %v2720
        %v2753 = vpack.c.b16 %v2723, %v2721
        %v2754 = vpack.c.b16 %v2726, %v2724
        %v2755 = vpack.c.b16 %v2727, %v2725
        %v2756 = vpack.c.b16 %v2730, %v2728
        %v2757 = vpack.c.b16 %v2731, %v2729
        %v2758 = vpack.c.b16 %v2734, %v2732
        %v2759 = vpack.c.b16 %v2735, %v2733
        %v2760 = vpack.c.b16 %v2738, %v2736
        %v2761 = vpack.c.b16 %v2739, %v2737
        %v2762 = vpack.c.b16 %v2742, %v2740
        %v2763 = vpack.c.b16 %v2743, %v2741
        %v2764 = vpack.c.b16 %v2746, %v2744
        %v2765 = vpack.c.b16 %v2747, %v2745
        %v2766 = vpack.c.b16 %v2750, %v2748
        %v2767 = vpack.c.b16 %v2751, %v2749
        %2784 = vmatprep.subr.bf16.mxu0 %v2753
        %2785 = vmatpush1.bf16.msra.mxu0 %v2752
        %2786 = vmatprep.subr.bf16.mxu0 %v2755
        %2787 = vmatpush1.bf16.msra.mxu0 %v2754
        %2788 = vmatprep.subr.bf16.mxu0 %v2757
        %2789 = vmatpush1.bf16.msra.mxu0 %v2756
        %2790 = vmatprep.subr.bf16.mxu0 %v2759
        %2791 = vmatpush1.bf16.msra.mxu0 %v2758
        %2792 = vmatprep.subr.bf16.mxu0 %v2761
        %2793 = vmatpush1.bf16.msra.mxu0 %v2760
        %2794 = vmatprep.subr.bf16.mxu0 %v2763
        %2795 = vmatpush1.bf16.msra.mxu0 %v2762
        %2796 = vmatprep.subr.bf16.mxu0 %v2765
        %2797 = vmatpush1.bf16.msra.mxu0 %v2764
        %2798 = vmatprep.subr.bf16.mxu0 %v2767
        %2799 = vmatpush1.bf16.msra.mxu0 %v2766
        %2800 = vmatprep.subr.bf16.mxu0 0
        %2801 = vmatpush1.bf16.msra.mxu0 0
        %2802 = vmatprep.subr.bf16.mxu0 0
        %2803 = vmatpush1.bf16.msra.mxu0 0
        %2804 = vmatprep.subr.bf16.mxu0 0
        %2805 = vmatpush1.bf16.msra.mxu0 0
        %2806 = vmatprep.subr.bf16.mxu0 0
        %2807 = vmatpush1.bf16.msra.mxu0 0
        %2808 = vmatprep.subr.bf16.mxu0 0
        %2809 = vmatpush1.bf16.msra.mxu0 0
        %2810 = vmatprep.subr.bf16.mxu0 0
        %2811 = vmatpush1.bf16.msra.mxu0 0
        %2812 = vmatprep.subr.bf16.mxu0 0
        %2813 = vmatpush1.bf16.msra.mxu0 0
        %2814 = vmatprep.subr.bf16.mxu0 0
        %2815 = vmatpush1.bf16.msra.mxu0 0
        %2816 = vmatprep.mubr.bf16.mxu0 0
        %2817 = vmatmul.mubr.bf16.gmra.mrb[0].mxu0 %v2686
        %v2818 = vpop.f32.mrb[0].mxu0
        %v2819 = vadd.f32 0.0, %v2818
        %v2820 = vpop.f32.mrb[0].mxu0
        %v2821 = vadd.f32 0.0, %v2820
        %v2822 = vpop.f32.mrb[0].mxu0
        %v2823 = vpop.f32.mrb[0].mxu0
        %2824 = vdwg.mxu0
        %v2841 = vunpack.c.l.b16 %v2598
        %v2842 = vunpack.c.h.b16 %v2598
        %v2843 = vunpack.c.l.b16 %v2599
        %v2844 = vunpack.c.h.b16 %v2599
        %v2845 = vunpack.c.l.b16 %v2600
        %v2846 = vunpack.c.h.b16 %v2600
        %v2847 = vunpack.c.l.b16 %v2601
        %v2848 = vunpack.c.h.b16 %v2601
        %v2849 = vunpack.c.l.b16 %v2602
        %v2850 = vunpack.c.h.b16 %v2602
        %v2851 = vunpack.c.l.b16 %v2603
        %v2852 = vunpack.c.h.b16 %v2603
        %v2853 = vunpack.c.l.b16 %v2604
        %v2854 = vunpack.c.h.b16 %v2604
        %v2855 = vunpack.c.l.b16 %v2605
        %v2856 = vunpack.c.h.b16 %v2605
        %v2857 = vunpack.c.l.b16 %v2606
        %v2858 = vunpack.c.h.b16 %v2606
        %v2859 = vunpack.c.l.b16 %v2607
        %v2860 = vunpack.c.h.b16 %v2607
        %v2861 = vunpack.c.l.b16 %v2608
        %v2862 = vunpack.c.h.b16 %v2608
        %v2863 = vunpack.c.l.b16 %v2609
        %v2864 = vunpack.c.h.b16 %v2609
        %v2865 = vunpack.c.l.b16 %v2610
        %v2866 = vunpack.c.h.b16 %v2610
        %v2867 = vunpack.c.l.b16 %v2611
        %v2868 = vunpack.c.h.b16 %v2611
        %v2869 = vunpack.c.l.b16 %v2612
        %v2870 = vunpack.c.h.b16 %v2612
        %v2871 = vunpack.c.l.b16 %v2613
        %v2872 = vunpack.c.h.b16 %v2613
        %v2873 = vpack.c.b16 %v2843, %v2841
        %v2874 = vpack.c.b16 %v2844, %v2842
        %v2875 = vpack.c.b16 %v2847, %v2845
        %v2876 = vpack.c.b16 %v2848, %v2846
        %v2877 = vpack.c.b16 %v2851, %v2849
        %v2878 = vpack.c.b16 %v2852, %v2850
        %v2879 = vpack.c.b16 %v2855, %v2853
        %v2880 = vpack.c.b16 %v2856, %v2854
        %v2881 = vpack.c.b16 %v2859, %v2857
        %v2882 = vpack.c.b16 %v2860, %v2858
        %v2883 = vpack.c.b16 %v2863, %v2861
        %v2884 = vpack.c.b16 %v2864, %v2862
        %v2885 = vpack.c.b16 %v2867, %v2865
        %v2886 = vpack.c.b16 %v2868, %v2866
        %v2887 = vpack.c.b16 %v2871, %v2869
        %v2888 = vpack.c.b16 %v2872, %v2870
        %2905 = vmatprep.subr.bf16.mxu0 %v2874
        %2906 = vmatpush1.bf16.msra.mxu0 %v2873
        %2907 = vmatprep.subr.bf16.mxu0 %v2876
        %2908 = vmatpush1.bf16.msra.mxu0 %v2875
        %2909 = vmatprep.subr.bf16.mxu0 %v2878
        %2910 = vmatpush1.bf16.msra.mxu0 %v2877
        %2911 = vmatprep.subr.bf16.mxu0 %v2880
        %2912 = vmatpush1.bf16.msra.mxu0 %v2879
        %2913 = vmatprep.subr.bf16.mxu0 %v2882
        %2914 = vmatpush1.bf16.msra.mxu0 %v2881
        %2915 = vmatprep.subr.bf16.mxu0 %v2884
        %2916 = vmatpush1.bf16.msra.mxu0 %v2883
        %2917 = vmatprep.subr.bf16.mxu0 %v2886
        %2918 = vmatpush1.bf16.msra.mxu0 %v2885
        %2919 = vmatprep.subr.bf16.mxu0 %v2888
        %2920 = vmatpush1.bf16.msra.mxu0 %v2887
        %2921 = vmatprep.subr.bf16.mxu0 0
        %2922 = vmatpush1.bf16.msra.mxu0 0
        %2923 = vmatprep.subr.bf16.mxu0 0
        %2924 = vmatpush1.bf16.msra.mxu0 0
        %2925 = vmatprep.subr.bf16.mxu0 0
        %2926 = vmatpush1.bf16.msra.mxu0 0
        %2927 = vmatprep.subr.bf16.mxu0 0
        %2928 = vmatpush1.bf16.msra.mxu0 0
        %2929 = vmatprep.subr.bf16.mxu0 0
        %2930 = vmatpush1.bf16.msra.mxu0 0
        %2931 = vmatprep.subr.bf16.mxu0 0
        %2932 = vmatpush1.bf16.msra.mxu0 0
        %2933 = vmatprep.subr.bf16.mxu0 0
        %2934 = vmatpush1.bf16.msra.mxu0 0
        %2935 = vmatprep.subr.bf16.mxu0 0
        %2936 = vmatpush1.bf16.msra.mxu0 0
        %2937 = vmatprep.mubr.bf16.mxu0 0
        %2938 = vmatmul.mubr.bf16.gmra.mrb[0].mxu0 %v2597
        %v2939 = vpop.f32.mrb[0].mxu0
        %v2940 = vadd.f32 %v2819, %v2939
        %v2941 = vpop.f32.mrb[0].mxu0
        %v2942 = vadd.f32 %v2821, %v2941
        %v2943 = vpop.f32.mrb[0].mxu0
        %v2944 = vpop.f32.mrb[0].mxu0
        %2945 = vdwg.mxu0
        %v2946 = vsel %vm2520, %v722, 0
        %2948 = vmatprep.subr.mxu0 0.0
        %2949 = vmatpush1.msra.mxu0 %v2525
        %2950 = vmatprep.subr.mxu0 0.0
        %2951 = vmatpush1.msra.mxu0 0.0
        %2952 = vmatprep.subr.mxu0 0.0
        %2953 = vmatpush1.msra.mxu0 0.0
        %2954 = vmatprep.subr.mxu0 0.0
        %2955 = vmatpush1.msra.mxu0 0.0
        %2956 = vmatprep.subr.mxu0 0.0
        %2957 = vmatpush1.msra.mxu0 0.0
        %2958 = vmatprep.subr.mxu0 0.0
        %2959 = vmatpush1.msra.mxu0 0.0
        %2960 = vmatprep.subr.mxu0 0.0
        %2961 = vmatpush1.msra.mxu0 0.0
        %2962 = vmatprep.subr.mxu0 0.0
        %2963 = vmatpush1.msra.mxu0 0.0
        %2964 = vmatprep.subr.mxu0 0.0
        %2965 = vmatpush1.msra.mxu0 0.0
        %2966 = vmatprep.subr.mxu0 0.0
        %2967 = vmatpush1.msra.mxu0 0.0
        %2968 = vmatprep.subr.mxu0 0.0
        %2969 = vmatpush1.msra.mxu0 0.0
        %2970 = vmatprep.subr.mxu0 0.0
        %2971 = vmatpush1.msra.mxu0 0.0
        %2972 = vmatprep.subr.mxu0 0.0
        %2973 = vmatpush1.msra.mxu0 0.0
        %2974 = vmatprep.subr.mxu0 0.0
        %2975 = vmatpush1.msra.mxu0 0.0
        %2976 = vmatprep.subr.mxu0 0.0
        %2977 = vmatpush1.msra.mxu0 0.0
        %2978 = vmatprep.subr.mxu0 0.0
        %2979 = vmatpush1.msra.mxu0 0.0
        %2980 = vmatprep.subr.mxu0 0.0
        %2981 = vmatpush1.msra.mxu0 0.0
        %2982 = vmatprep.subr.mxu0 0.0
        %2983 = vmatpush1.msra.mxu0 0.0
        %2984 = vmatprep.subr.mxu0 0.0
        %2985 = vmatpush1.msra.mxu0 0.0
        %2986 = vmatprep.subr.mxu0 0.0
        %2987 = vmatpush1.msra.mxu0 0.0
        %2988 = vmatprep.subr.mxu0 0.0
        %2989 = vmatpush1.msra.mxu0 0.0
        %2990 = vmatprep.subr.mxu0 0.0
        %2991 = vmatpush1.msra.mxu0 0.0
        %2992 = vmatprep.subr.mxu0 0.0
        %2993 = vmatpush1.msra.mxu0 0.0
        %2994 = vmatprep.subr.mxu0 0.0
        %2995 = vmatpush1.msra.mxu0 0.0
        %2996 = vmatprep.subr.mxu0 0.0
        %2997 = vmatpush1.msra.mxu0 0.0
        %2998 = vmatprep.subr.mxu0 0.0
        %2999 = vmatpush1.msra.mxu0 0.0
        %3000 = vmatprep.subr.mxu0 0.0
        %3001 = vmatpush1.msra.mxu0 0.0
        %3002 = vmatprep.subr.mxu0 0.0
        %3003 = vmatpush1.msra.mxu0 0.0
        %3004 = vmatprep.subr.mxu0 0.0
        %3005 = vmatpush1.msra.mxu0 0.0
        %3006 = vmatprep.subr.mxu0 0.0
        %3007 = vmatpush1.msra.mxu0 0.0
        %3008 = vmatprep.subr.mxu0 0.0
        %3009 = vmatpush1.msra.mxu0 0.0
        %3010 = vmatprep.subr.mxu0 0.0
        %3011 = vmatpush1.msra.mxu0 0.0
        %3012 = vmatprep.mubr.f32.mxu0 0.0
        %3013 = vmatmul.mubr.f32.gmra.mrb[0].mxu0 %v2946
        %v3014 = vpop.f32.mrb[0].mxu0
        %v3015 = vadd.f32 0.0, %v3014
        %v3016 = vpop.f32.mrb[0].mxu0
        %3017 = vdwg.mxu0
        %v3018 = vpack.c.bf16 %v3015, %v3015
        %s3019 = scalar_lea.vmem %s9, 256
        %v3020 = vld [vmem:[%s3019] sm:$0xff]
        %v3021 = vld [vmem:[%s3019 + $0x8] sm:$0xff]
        %v3022 = vld [vmem:[%s3019 + $0x10] sm:$0xff]
        %v3023 = vld [vmem:[%s3019 + $0x18] sm:$0xff]
        %v3024 = vld [vmem:[%s3019 + $0x20] sm:$0xff]
        %v3025 = vld [vmem:[%s3019 + $0x28] sm:$0xff]
        %v3026 = vld [vmem:[%s3019 + $0x30] sm:$0xff]
        %v3027 = vld [vmem:[%s3019 + $0x38] sm:$0xff]
        %v3028 = vld [vmem:[%s3019 + $0x40] sm:$0xff]
        %v3029 = vld [vmem:[%s3019 + $0x48] sm:$0xff]
        %v3030 = vld [vmem:[%s3019 + $0x50] sm:$0xff]
        %v3031 = vld [vmem:[%s3019 + $0x58] sm:$0xff]
        %v3032 = vld [vmem:[%s3019 + $0x60] sm:$0xff]
        %v3033 = vld [vmem:[%s3019 + $0x68] sm:$0xff]
        %v3034 = vld [vmem:[%s3019 + $0x70] sm:$0xff]
        %v3035 = vld [vmem:[%s3019 + $0x78] sm:$0xff]
        %v3052 = vunpack.c.l.b16 %v3020
        %v3053 = vunpack.c.h.b16 %v3020
        %v3054 = vunpack.c.l.b16 %v3021
        %v3055 = vunpack.c.h.b16 %v3021
        %v3056 = vunpack.c.l.b16 %v3022
        %v3057 = vunpack.c.h.b16 %v3022
        %v3058 = vunpack.c.l.b16 %v3023
        %v3059 = vunpack.c.h.b16 %v3023
        %v3060 = vunpack.c.l.b16 %v3024
        %v3061 = vunpack.c.h.b16 %v3024
        %v3062 = vunpack.c.l.b16 %v3025
        %v3063 = vunpack.c.h.b16 %v3025
        %v3064 = vunpack.c.l.b16 %v3026
        %v3065 = vunpack.c.h.b16 %v3026
        %v3066 = vunpack.c.l.b16 %v3027
        %v3067 = vunpack.c.h.b16 %v3027
        %v3068 = vunpack.c.l.b16 %v3028
        %v3069 = vunpack.c.h.b16 %v3028
        %v3070 = vunpack.c.l.b16 %v3029
        %v3071 = vunpack.c.h.b16 %v3029
        %v3072 = vunpack.c.l.b16 %v3030
        %v3073 = vunpack.c.h.b16 %v3030
        %v3074 = vunpack.c.l.b16 %v3031
        %v3075 = vunpack.c.h.b16 %v3031
        %v3076 = vunpack.c.l.b16 %v3032
        %v3077 = vunpack.c.h.b16 %v3032
        %v3078 = vunpack.c.l.b16 %v3033
        %v3079 = vunpack.c.h.b16 %v3033
        %v3080 = vunpack.c.l.b16 %v3034
        %v3081 = vunpack.c.h.b16 %v3034
        %v3082 = vunpack.c.l.b16 %v3035
        %v3083 = vunpack.c.h.b16 %v3035
        %v3084 = vpack.c.b16 %v3054, %v3052
        %v3085 = vpack.c.b16 %v3055, %v3053
        %v3086 = vpack.c.b16 %v3058, %v3056
        %v3087 = vpack.c.b16 %v3059, %v3057
        %v3088 = vpack.c.b16 %v3062, %v3060
        %v3089 = vpack.c.b16 %v3063, %v3061
        %v3090 = vpack.c.b16 %v3066, %v3064
        %v3091 = vpack.c.b16 %v3067, %v3065
        %v3092 = vpack.c.b16 %v3070, %v3068
        %v3093 = vpack.c.b16 %v3071, %v3069
        %v3094 = vpack.c.b16 %v3074, %v3072
        %v3095 = vpack.c.b16 %v3075, %v3073
        %v3096 = vpack.c.b16 %v3078, %v3076
        %v3097 = vpack.c.b16 %v3079, %v3077
        %v3098 = vpack.c.b16 %v3082, %v3080
        %v3099 = vpack.c.b16 %v3083, %v3081
        %3116 = vmatprep.subr.bf16.mxu0 %v3085
        %3117 = vmatpush1.bf16.msra.mxu0 %v3084
        %3118 = vmatprep.subr.bf16.mxu0 %v3087
        %3119 = vmatpush1.bf16.msra.mxu0 %v3086
        %3120 = vmatprep.subr.bf16.mxu0 %v3089
        %3121 = vmatpush1.bf16.msra.mxu0 %v3088
        %3122 = vmatprep.subr.bf16.mxu0 %v3091
        %3123 = vmatpush1.bf16.msra.mxu0 %v3090
        %3124 = vmatprep.subr.bf16.mxu0 %v3093
        %3125 = vmatpush1.bf16.msra.mxu0 %v3092
        %3126 = vmatprep.subr.bf16.mxu0 %v3095
        %3127 = vmatpush1.bf16.msra.mxu0 %v3094
        %3128 = vmatprep.subr.bf16.mxu0 %v3097
        %3129 = vmatpush1.bf16.msra.mxu0 %v3096
        %3130 = vmatprep.subr.bf16.mxu0 %v3099
        %3131 = vmatpush1.bf16.msra.mxu0 %v3098
        %3132 = vmatprep.subr.bf16.mxu0 0
        %3133 = vmatpush1.bf16.msra.mxu0 0
        %3134 = vmatprep.subr.bf16.mxu0 0
        %3135 = vmatpush1.bf16.msra.mxu0 0
        %3136 = vmatprep.subr.bf16.mxu0 0
        %3137 = vmatpush1.bf16.msra.mxu0 0
        %3138 = vmatprep.subr.bf16.mxu0 0
        %3139 = vmatpush1.bf16.msra.mxu0 0
        %3140 = vmatprep.subr.bf16.mxu0 0
        %3141 = vmatpush1.bf16.msra.mxu0 0
        %3142 = vmatprep.subr.bf16.mxu0 0
        %3143 = vmatpush1.bf16.msra.mxu0 0
        %3144 = vmatprep.subr.bf16.mxu0 0
        %3145 = vmatpush1.bf16.msra.mxu0 0
        %3146 = vmatprep.subr.bf16.mxu0 0
        %3147 = vmatpush1.bf16.msra.mxu0 0
        %3148 = vmatprep.mubr.bf16.mxu0 0
        %3149 = vmatmul.mubr.bf16.gmra.mrb[0].mxu0 %v3018
        %v3150 = vpop.f32.mrb[0].mxu0
        %v3151 = vadd.f32 0.0, %v3150
        %v3152 = vpop.f32.mrb[0].mxu0
        %v3153 = vadd.f32 0.0, %v3152
        %v3154 = vpop.f32.mrb[0].mxu0
        %v3155 = vpop.f32.mrb[0].mxu0
        %3156 = vdwg.mxu0
        %v3157 = vadd.f32 %v2940, %v3151
        %v3158 = vadd.f32 %v2942, %v3153
        %v3159 = vld [vmem:[%s10] sm:$0x3]
        %v3161 = vlaneseq
        %v3162 = vshrl.u32 %v3161, 7
        %v3163 = vsub.s32 0, %v3162
        %v3164 = vrot.slane %v3159, %v3163
        %v3165 = vlaneseq
        %v3166 = vshrl.u32 %v3165, 7
        %v3167 = vsub.s32 1, %v3166
        %v3168 = vrot.slane %v3159, %v3167
        %v3171 = vadd.f32 %v3157, %v3164
        %v3172 = vadd.f32 %v3158, %v3168
        %vm3173 = vcmp.ge.f32.partialorder %v3171, 0.0
        %vm3174 = vcmp.ge.f32.partialorder %v3172, 0.0
        %v3175 = vmul.f32 %v3171, 0.1
        %v3176 = vmul.f32 %v3172, 0.1
        %v3177 = vsel %vm3173, %v3171, %v3175
        %v3178 = vsel %vm3174, %v3172, %v3176
        %v3179 = vmul.u32 %v689, 2
        %v3180 = vadd.s32 %v684, 1
        %vm3181 = vcmp.eq.s32.totalorder %v3179, %v3180
        %v3182 = vsel %vm3181, 1.0, 0.0
        %vm3183 = vcmp.eq.s32.totalorder %v3179, %v684
        %v3184 = vsel %vm3183, 1.0, 0.0
        %v3185 = vadd.s32 %v684, 4294967295
        %vm3186 = vcmp.eq.s32.totalorder %v3179, %v3185
        %v3187 = vsel %vm3186, 1.0, 0.0
        %vm3188 = vcmask 15360
        %v3190 = vsel %vm3188, %v3182, 0
        %vm3192 = vcmask 1041408
        %v3194 = vsel %vm3192, %v3177, 0
        %v3197 = vsel %vm3192, %v3178, 0
        %3199 = vmatprep.subr.mxu0 %v3197
        %3200 = vmatpush1.msra.mxu0 %v3194
        %3201 = vmatprep.subr.mxu0 0.0
        %3202 = vmatpush1.msra.mxu0 0.0
        %3203 = vmatprep.subr.mxu0 0.0
        %3204 = vmatpush1.msra.mxu0 0.0
        %3205 = vmatprep.subr.mxu0 0.0
        %3206 = vmatpush1.msra.mxu0 0.0
        %3207 = vmatprep.subr.mxu0 0.0
        %3208 = vmatpush1.msra.mxu0 0.0
        %3209 = vmatprep.subr.mxu0 0.0
        %3210 = vmatpush1.msra.mxu0 0.0
        %3211 = vmatprep.subr.mxu0 0.0
        %3212 = vmatpush1.msra.mxu0 0.0
        %3213 = vmatprep.subr.mxu0 0.0
        %3214 = vmatpush1.msra.mxu0 0.0
        %3215 = vmatprep.subr.mxu0 0.0
        %3216 = vmatpush1.msra.mxu0 0.0
        %3217 = vmatprep.subr.mxu0 0.0
        %3218 = vmatpush1.msra.mxu0 0.0
        %3219 = vmatprep.subr.mxu0 0.0
        %3220 = vmatpush1.msra.mxu0 0.0
        %3221 = vmatprep.subr.mxu0 0.0
        %3222 = vmatpush1.msra.mxu0 0.0
        %3223 = vmatprep.subr.mxu0 0.0
        %3224 = vmatpush1.msra.mxu0 0.0
        %3225 = vmatprep.subr.mxu0 0.0
        %3226 = vmatpush1.msra.mxu0 0.0
        %3227 = vmatprep.subr.mxu0 0.0
        %3228 = vmatpush1.msra.mxu0 0.0
        %3229 = vmatprep.subr.mxu0 0.0
        %3230 = vmatpush1.msra.mxu0 0.0
        %3231 = vmatprep.subr.mxu0 0.0
        %3232 = vmatpush1.msra.mxu0 0.0
        %3233 = vmatprep.subr.mxu0 0.0
        %3234 = vmatpush1.msra.mxu0 0.0
        %3235 = vmatprep.subr.mxu0 0.0
        %3236 = vmatpush1.msra.mxu0 0.0
        %3237 = vmatprep.subr.mxu0 0.0
        %3238 = vmatpush1.msra.mxu0 0.0
        %3239 = vmatprep.subr.mxu0 0.0
        %3240 = vmatpush1.msra.mxu0 0.0
        %3241 = vmatprep.subr.mxu0 0.0
        %3242 = vmatpush1.msra.mxu0 0.0
        %3243 = vmatprep.subr.mxu0 0.0
        %3244 = vmatpush1.msra.mxu0 0.0
        %3245 = vmatprep.subr.mxu0 0.0
        %3246 = vmatpush1.msra.mxu0 0.0
        %3247 = vmatprep.subr.mxu0 0.0
        %3248 = vmatpush1.msra.mxu0 0.0
        %3249 = vmatprep.subr.mxu0 0.0
        %3250 = vmatpush1.msra.mxu0 0.0
        %3251 = vmatprep.subr.mxu0 0.0
        %3252 = vmatpush1.msra.mxu0 0.0
        %3253 = vmatprep.subr.mxu0 0.0
        %3254 = vmatpush1.msra.mxu0 0.0
        %3255 = vmatprep.subr.mxu0 0.0
        %3256 = vmatpush1.msra.mxu0 0.0
        %3257 = vmatprep.subr.mxu0 0.0
        %3258 = vmatpush1.msra.mxu0 0.0
        %3259 = vmatprep.subr.mxu0 0.0
        %3260 = vmatpush1.msra.mxu0 0.0
        %3261 = vmatprep.subr.mxu0 0.0
        %3262 = vmatpush1.msra.mxu0 0.0
        %3263 = vmatprep.mubr.f32.mxu0 0.0
        %3264 = vmatmul.mubr.f32.gmra.mrb[0].mxu0 %v3190
        %v3265 = vpop.f32.mrb[0].mxu0
        %v3266 = vadd.f32 0.0, %v3265
        %v3267 = vpop.f32.mrb[0].mxu0
        %v3268 = vadd.f32 0.0, %v3267
        %3269 = vdwg.mxu0
        %v3270 = vpack.c.bf16 %v3266, %v3266
        %v3271 = vpack.c.bf16 %v3268, %v3268
        %v3272 = vld [vmem:[#allocation3] sm:$0xf]
        %v3273 = vld [vmem:[#allocation3 + $0x4] sm:$0xf]
        %v3274 = vld [vmem:[#allocation3 + $0x8] sm:$0xf]
        %v3275 = vld [vmem:[#allocation3 + $0xc] sm:$0xf]
        %v3276 = vld [vmem:[#allocation3 + $0x10] sm:$0xf]
        %v3277 = vld [vmem:[#allocation3 + $0x14] sm:$0xf]
        %v3278 = vld [vmem:[#allocation3 + $0x18] sm:$0xf]
        %v3279 = vld [vmem:[#allocation3 + $0x1c] sm:$0xf]
        %v3280 = vld [vmem:[#allocation3 + $0x20] sm:$0xf]
        %v3281 = vld [vmem:[#allocation3 + $0x24] sm:$0xf]
        %v3282 = vld [vmem:[#allocation3 + $0x28] sm:$0xf]
        %v3283 = vld [vmem:[#allocation3 + $0x2c] sm:$0xf]
        %v3284 = vld [vmem:[#allocation3 + $0x30] sm:$0xf]
        %v3285 = vld [vmem:[#allocation3 + $0x34] sm:$0xf]
        %v3286 = vld [vmem:[#allocation3 + $0x38] sm:$0xf]
        %v3287 = vld [vmem:[#allocation3 + $0x3c] sm:$0xf]
        %v3288 = vld [vmem:[#allocation3 + $0x40] sm:$0xf]
        %v3289 = vld [vmem:[#allocation3 + $0x44] sm:$0xf]
        %v3290 = vld [vmem:[#allocation3 + $0x48] sm:$0xf]
        %v3291 = vld [vmem:[#allocation3 + $0x4c] sm:$0xf]
        %v3292 = vld [vmem:[#allocation3 + $0x50] sm:$0xf]
        %v3293 = vld [vmem:[#allocation3 + $0x54] sm:$0xf]
        %v3294 = vld [vmem:[#allocation3 + $0x58] sm:$0xf]
        %v3295 = vld [vmem:[#allocation3 + $0x5c] sm:$0xf]
        %v3296 = vld [vmem:[#allocation3 + $0x60] sm:$0xf]
        %v3297 = vld [vmem:[#allocation3 + $0x64] sm:$0xf]
        %v3298 = vld [vmem:[#allocation3 + $0x68] sm:$0xf]
        %v3299 = vld [vmem:[#allocation3 + $0x6c] sm:$0xf]
        %v3300 = vld [vmem:[#allocation3 + $0x70] sm:$0xf]
        %v3301 = vld [vmem:[#allocation3 + $0x74] sm:$0xf]
        %v3302 = vld [vmem:[#allocation3 + $0x78] sm:$0xf]
        %v3303 = vld [vmem:[#allocation3 + $0x7c] sm:$0xf]
        %v3305 = vsel %vm3188, %v3184, 0
        %3307 = vmatprep.subr.mxu0 %v3197
        %3308 = vmatpush1.msra.mxu0 %v3194
        %3309 = vmatprep.subr.mxu0 0.0
        %3310 = vmatpush1.msra.mxu0 0.0
        %3311 = vmatprep.subr.mxu0 0.0
        %3312 = vmatpush1.msra.mxu0 0.0
        %3313 = vmatprep.subr.mxu0 0.0
        %3314 = vmatpush1.msra.mxu0 0.0
        %3315 = vmatprep.subr.mxu0 0.0
        %3316 = vmatpush1.msra.mxu0 0.0
        %3317 = vmatprep.subr.mxu0 0.0
        %3318 = vmatpush1.msra.mxu0 0.0
        %3319 = vmatprep.subr.mxu0 0.0
        %3320 = vmatpush1.msra.mxu0 0.0
        %3321 = vmatprep.subr.mxu0 0.0
        %3322 = vmatpush1.msra.mxu0 0.0
        %3323 = vmatprep.subr.mxu0 0.0
        %3324 = vmatpush1.msra.mxu0 0.0
        %3325 = vmatprep.subr.mxu0 0.0
        %3326 = vmatpush1.msra.mxu0 0.0
        %3327 = vmatprep.subr.mxu0 0.0
        %3328 = vmatpush1.msra.mxu0 0.0
        %3329 = vmatprep.subr.mxu0 0.0
        %3330 = vmatpush1.msra.mxu0 0.0
        %3331 = vmatprep.subr.mxu0 0.0
        %3332 = vmatpush1.msra.mxu0 0.0
        %3333 = vmatprep.subr.mxu0 0.0
        %3334 = vmatpush1.msra.mxu0 0.0
        %3335 = vmatprep.subr.mxu0 0.0
        %3336 = vmatpush1.msra.mxu0 0.0
        %3337 = vmatprep.subr.mxu0 0.0
        %3338 = vmatpush1.msra.mxu0 0.0
        %3339 = vmatprep.subr.mxu0 0.0
        %3340 = vmatpush1.msra.mxu0 0.0
        %3341 = vmatprep.subr.mxu0 0.0
        %3342 = vmatpush1.msra.mxu0 0.0
        %3343 = vmatprep.subr.mxu0 0.0
        %3344 = vmatpush1.msra.mxu0 0.0
        %3345 = vmatprep.subr.mxu0 0.0
        %3346 = vmatpush1.msra.mxu0 0.0
        %3347 = vmatprep.subr.mxu0 0.0
        %3348 = vmatpush1.msra.mxu0 0.0
        %3349 = vmatprep.subr.mxu0 0.0
        %3350 = vmatpush1.msra.mxu0 0.0
        %3351 = vmatprep.subr.mxu0 0.0
        %3352 = vmatpush1.msra.mxu0 0.0
        %3353 = vmatprep.subr.mxu0 0.0
        %3354 = vmatpush1.msra.mxu0 0.0
        %3355 = vmatprep.subr.mxu0 0.0
        %3356 = vmatpush1.msra.mxu0 0.0
        %3357 = vmatprep.subr.mxu0 0.0
        %3358 = vmatpush1.msra.mxu0 0.0
        %3359 = vmatprep.subr.mxu0 0.0
        %3360 = vmatpush1.msra.mxu0 0.0
        %3361 = vmatprep.subr.mxu0 0.0
        %3362 = vmatpush1.msra.mxu0 0.0
        %3363 = vmatprep.subr.mxu0 0.0
        %3364 = vmatpush1.msra.mxu0 0.0
        %3365 = vmatprep.subr.mxu0 0.0
        %3366 = vmatpush1.msra.mxu0 0.0
        %3367 = vmatprep.subr.mxu0 0.0
        %3368 = vmatpush1.msra.mxu0 0.0
        %3369 = vmatprep.subr.mxu0 0.0
        %3370 = vmatpush1.msra.mxu0 0.0
        %3371 = vmatprep.mubr.f32.mxu0 0.0
        %3372 = vmatmul.mubr.f32.gmra.mrb[0].mxu0 %v3305
        %v3373 = vpop.f32.mrb[0].mxu0
        %v3374 = vadd.f32 0.0, %v3373
        %v3375 = vpop.f32.mrb[0].mxu0
        %v3376 = vadd.f32 0.0, %v3375
        %3377 = vdwg.mxu0
        %v3378 = vpack.c.bf16 %v3374, %v3374
        %v3379 = vpack.c.bf16 %v3376, %v3376
        %s3380 = scalar_lea.vmem [#allocation3], 128
        %v3381 = vld [vmem:[%s3380] sm:$0xf]
        %v3382 = vld [vmem:[%s3380 + $0x4] sm:$0xf]
        %v3383 = vld [vmem:[%s3380 + $0x8] sm:$0xf]
        %v3384 = vld [vmem:[%s3380 + $0xc] sm:$0xf]
        %v3385 = vld [vmem:[%s3380 + $0x10] sm:$0xf]
        %v3386 = vld [vmem:[%s3380 + $0x14] sm:$0xf]
        %v3387 = vld [vmem:[%s3380 + $0x18] sm:$0xf]
        %v3388 = vld [vmem:[%s3380 + $0x1c] sm:$0xf]
        %v3389 = vld [vmem:[%s3380 + $0x20] sm:$0xf]
        %v3390 = vld [vmem:[%s3380 + $0x24] sm:$0xf]
        %v3391 = vld [vmem:[%s3380 + $0x28] sm:$0xf]
        %v3392 = vld [vmem:[%s3380 + $0x2c] sm:$0xf]
        %v3393 = vld [vmem:[%s3380 + $0x30] sm:$0xf]
        %v3394 = vld [vmem:[%s3380 + $0x34] sm:$0xf]
        %v3395 = vld [vmem:[%s3380 + $0x38] sm:$0xf]
        %v3396 = vld [vmem:[%s3380 + $0x3c] sm:$0xf]
        %v3397 = vld [vmem:[%s3380 + $0x40] sm:$0xf]
        %v3398 = vld [vmem:[%s3380 + $0x44] sm:$0xf]
        %v3399 = vld [vmem:[%s3380 + $0x48] sm:$0xf]
        %v3400 = vld [vmem:[%s3380 + $0x4c] sm:$0xf]
        %v3401 = vld [vmem:[%s3380 + $0x50] sm:$0xf]
        %v3402 = vld [vmem:[%s3380 + $0x54] sm:$0xf]
        %v3403 = vld [vmem:[%s3380 + $0x58] sm:$0xf]
        %v3404 = vld [vmem:[%s3380 + $0x5c] sm:$0xf]
        %v3405 = vld [vmem:[%s3380 + $0x60] sm:$0xf]
        %v3406 = vld [vmem:[%s3380 + $0x64] sm:$0xf]
        %v3407 = vld [vmem:[%s3380 + $0x68] sm:$0xf]
        %v3408 = vld [vmem:[%s3380 + $0x6c] sm:$0xf]
        %v3409 = vld [vmem:[%s3380 + $0x70] sm:$0xf]
        %v3410 = vld [vmem:[%s3380 + $0x74] sm:$0xf]
        %v3411 = vld [vmem:[%s3380 + $0x78] sm:$0xf]
        %v3412 = vld [vmem:[%s3380 + $0x7c] sm:$0xf]
        %v3445 = vunpack.c.l.b16 %v3381
        %v3446 = vunpack.c.l.b16 %v3382
        %v3447 = vunpack.c.l.b16 %v3383
        %v3448 = vunpack.c.l.b16 %v3384
        %v3449 = vunpack.c.l.b16 %v3385
        %v3450 = vunpack.c.l.b16 %v3386
        %v3451 = vunpack.c.l.b16 %v3387
        %v3452 = vunpack.c.l.b16 %v3388
        %v3453 = vunpack.c.l.b16 %v3389
        %v3454 = vunpack.c.l.b16 %v3390
        %v3455 = vunpack.c.l.b16 %v3391
        %v3456 = vunpack.c.l.b16 %v3392
        %v3457 = vunpack.c.l.b16 %v3393
        %v3458 = vunpack.c.l.b16 %v3394
        %v3459 = vunpack.c.l.b16 %v3395
        %v3460 = vunpack.c.l.b16 %v3396
        %v3461 = vunpack.c.l.b16 %v3397
        %v3462 = vunpack.c.l.b16 %v3398
        %v3463 = vunpack.c.l.b16 %v3399
        %v3464 = vunpack.c.l.b16 %v3400
        %v3465 = vunpack.c.l.b16 %v3401
        %v3466 = vunpack.c.l.b16 %v3402
        %v3467 = vunpack.c.l.b16 %v3403
        %v3468 = vunpack.c.l.b16 %v3404
        %v3469 = vunpack.c.l.b16 %v3405
        %v3470 = vunpack.c.l.b16 %v3406
        %v3471 = vunpack.c.l.b16 %v3407
        %v3472 = vunpack.c.l.b16 %v3408
        %v3473 = vunpack.c.l.b16 %v3409
        %v3474 = vunpack.c.l.b16 %v3410
        %v3475 = vunpack.c.l.b16 %v3411
        %v3476 = vunpack.c.l.b16 %v3412
        %v3477 = vpack.c.b16 %v3446, %v3445
        %v3478 = vpack.c.b16 %v3448, %v3447
        %v3479 = vpack.c.b16 %v3450, %v3449
        %v3480 = vpack.c.b16 %v3452, %v3451
        %v3481 = vpack.c.b16 %v3454, %v3453
        %v3482 = vpack.c.b16 %v3456, %v3455
        %v3483 = vpack.c.b16 %v3458, %v3457
        %v3484 = vpack.c.b16 %v3460, %v3459
        %v3485 = vpack.c.b16 %v3462, %v3461
        %v3486 = vpack.c.b16 %v3464, %v3463
        %v3487 = vpack.c.b16 %v3466, %v3465
        %v3488 = vpack.c.b16 %v3468, %v3467
        %v3489 = vpack.c.b16 %v3470, %v3469
        %v3490 = vpack.c.b16 %v3472, %v3471
        %v3491 = vpack.c.b16 %v3474, %v3473
        %v3492 = vpack.c.b16 %v3476, %v3475
        %3509 = vmatprep.subr.bf16.mxu0 0
        %3510 = vmatpush1.bf16.msra.mxu0 %v3477
        %3511 = vmatprep.subr.bf16.mxu0 0
        %3512 = vmatpush1.bf16.msra.mxu0 %v3478
        %3513 = vmatprep.subr.bf16.mxu0 0
        %3514 = vmatpush1.bf16.msra.mxu0 %v3479
        %3515 = vmatprep.subr.bf16.mxu0 0
        %3516 = vmatpush1.bf16.msra.mxu0 %v3480
        %3517 = vmatprep.subr.bf16.mxu0 0
        %3518 = vmatpush1.bf16.msra.mxu0 %v3481
        %3519 = vmatprep.subr.bf16.mxu0 0
        %3520 = vmatpush1.bf16.msra.mxu0 %v3482
        %3521 = vmatprep.subr.bf16.mxu0 0
        %3522 = vmatpush1.bf16.msra.mxu0 %v3483
        %3523 = vmatprep.subr.bf16.mxu0 0
        %3524 = vmatpush1.bf16.msra.mxu0 %v3484
        %3525 = vmatprep.subr.bf16.mxu0 0
        %3526 = vmatpush1.bf16.msra.mxu0 %v3485
        %3527 = vmatprep.subr.bf16.mxu0 0
        %3528 = vmatpush1.bf16.msra.mxu0 %v3486
        %3529 = vmatprep.subr.bf16.mxu0 0
        %3530 = vmatpush1.bf16.msra.mxu0 %v3487
        %3531 = vmatprep.subr.bf16.mxu0 0
        %3532 = vmatpush1.bf16.msra.mxu0 %v3488
        %3533 = vmatprep.subr.bf16.mxu0 0
        %3534 = vmatpush1.bf16.msra.mxu0 %v3489
        %3535 = vmatprep.subr.bf16.mxu0 0
        %3536 = vmatpush1.bf16.msra.mxu0 %v3490
        %3537 = vmatprep.subr.bf16.mxu0 0
        %3538 = vmatpush1.bf16.msra.mxu0 %v3491
        %3539 = vmatprep.subr.bf16.mxu0 0
        %3540 = vmatpush1.bf16.msra.mxu0 %v3492
        %3541 = vmatprep.mubr.bf16.mxu0 %v3379
        %3542 = vmatmul.mubr.bf16.gmra.mrb[0].mxu0 %v3378
        %v3543 = vpop.f32.mrb[0].mxu0
        %v3544 = vadd.f32 0.0, %v3543
        %v3545 = vpop.f32.mrb[0].mxu0
        %v3546 = vpop.f32.mrb[0].mxu0
        %v3547 = vpop.f32.mrb[0].mxu0
        %3548 = vdwg.mxu0
        %v3581 = vunpack.c.l.b16 %v3272
        %v3582 = vunpack.c.l.b16 %v3273
        %v3583 = vunpack.c.l.b16 %v3274
        %v3584 = vunpack.c.l.b16 %v3275
        %v3585 = vunpack.c.l.b16 %v3276
        %v3586 = vunpack.c.l.b16 %v3277
        %v3587 = vunpack.c.l.b16 %v3278
        %v3588 = vunpack.c.l.b16 %v3279
        %v3589 = vunpack.c.l.b16 %v3280
        %v3590 = vunpack.c.l.b16 %v3281
        %v3591 = vunpack.c.l.b16 %v3282
        %v3592 = vunpack.c.l.b16 %v3283
        %v3593 = vunpack.c.l.b16 %v3284
        %v3594 = vunpack.c.l.b16 %v3285
        %v3595 = vunpack.c.l.b16 %v3286
        %v3596 = vunpack.c.l.b16 %v3287
        %v3597 = vunpack.c.l.b16 %v3288
        %v3598 = vunpack.c.l.b16 %v3289
        %v3599 = vunpack.c.l.b16 %v3290
        %v3600 = vunpack.c.l.b16 %v3291
        %v3601 = vunpack.c.l.b16 %v3292
        %v3602 = vunpack.c.l.b16 %v3293
        %v3603 = vunpack.c.l.b16 %v3294
        %v3604 = vunpack.c.l.b16 %v3295
        %v3605 = vunpack.c.l.b16 %v3296
        %v3606 = vunpack.c.l.b16 %v3297
        %v3607 = vunpack.c.l.b16 %v3298
        %v3608 = vunpack.c.l.b16 %v3299
        %v3609 = vunpack.c.l.b16 %v3300
        %v3610 = vunpack.c.l.b16 %v3301
        %v3611 = vunpack.c.l.b16 %v3302
        %v3612 = vunpack.c.l.b16 %v3303
        %v3613 = vpack.c.b16 %v3582, %v3581
        %v3614 = vpack.c.b16 %v3584, %v3583
        %v3615 = vpack.c.b16 %v3586, %v3585
        %v3616 = vpack.c.b16 %v3588, %v3587
        %v3617 = vpack.c.b16 %v3590, %v3589
        %v3618 = vpack.c.b16 %v3592, %v3591
        %v3619 = vpack.c.b16 %v3594, %v3593
        %v3620 = vpack.c.b16 %v3596, %v3595
        %v3621 = vpack.c.b16 %v3598, %v3597
        %v3622 = vpack.c.b16 %v3600, %v3599
        %v3623 = vpack.c.b16 %v3602, %v3601
        %v3624 = vpack.c.b16 %v3604, %v3603
        %v3625 = vpack.c.b16 %v3606, %v3605
        %v3626 = vpack.c.b16 %v3608, %v3607
        %v3627 = vpack.c.b16 %v3610, %v3609
        %v3628 = vpack.c.b16 %v3612, %v3611
        %3645 = vmatprep.subr.bf16.mxu0 0
        %3646 = vmatpush1.bf16.msra.mxu0 %v3613
        %3647 = vmatprep.subr.bf16.mxu0 0
        %3648 = vmatpush1.bf16.msra.mxu0 %v3614
        %3649 = vmatprep.subr.bf16.mxu0 0
        %3650 = vmatpush1.bf16.msra.mxu0 %v3615
        %3651 = vmatprep.subr.bf16.mxu0 0
        %3652 = vmatpush1.bf16.msra.mxu0 %v3616
        %3653 = vmatprep.subr.bf16.mxu0 0
        %3654 = vmatpush1.bf16.msra.mxu0 %v3617
        %3655 = vmatprep.subr.bf16.mxu0 0
        %3656 = vmatpush1.bf16.msra.mxu0 %v3618
        %3657 = vmatprep.subr.bf16.mxu0 0
        %3658 = vmatpush1.bf16.msra.mxu0 %v3619
        %3659 = vmatprep.subr.bf16.mxu0 0
        %3660 = vmatpush1.bf16.msra.mxu0 %v3620
        %3661 = vmatprep.subr.bf16.mxu0 0
        %3662 = vmatpush1.bf16.msra.mxu0 %v3621
        %3663 = vmatprep.subr.bf16.mxu0 0
        %3664 = vmatpush1.bf16.msra.mxu0 %v3622
        %3665 = vmatprep.subr.bf16.mxu0 0
        %3666 = vmatpush1.bf16.msra.mxu0 %v3623
        %3667 = vmatprep.subr.bf16.mxu0 0
        %3668 = vmatpush1.bf16.msra.mxu0 %v3624
        %3669 = vmatprep.subr.bf16.mxu0 0
        %3670 = vmatpush1.bf16.msra.mxu0 %v3625
        %3671 = vmatprep.subr.bf16.mxu0 0
        %3672 = vmatpush1.bf16.msra.mxu0 %v3626
        %3673 = vmatprep.subr.bf16.mxu0 0
        %3674 = vmatpush1.bf16.msra.mxu0 %v3627
        %3675 = vmatprep.subr.bf16.mxu0 0
        %3676 = vmatpush1.bf16.msra.mxu0 %v3628
        %3677 = vmatprep.mubr.bf16.mxu0 %v3271
        %3678 = vmatmul.mubr.bf16.gmra.mrb[0].mxu0 %v3270
        %v3679 = vpop.f32.mrb[0].mxu0
        %v3680 = vadd.f32 %v3544, %v3679
        %v3681 = vpop.f32.mrb[0].mxu0
        %v3682 = vpop.f32.mrb[0].mxu0
        %v3683 = vpop.f32.mrb[0].mxu0
        %3684 = vdwg.mxu0
        %v3686 = vsel %vm3188, %v3187, 0
        %3688 = vmatprep.subr.mxu0 %v3197
        %3689 = vmatpush1.msra.mxu0 %v3194
        %3690 = vmatprep.subr.mxu0 0.0
        %3691 = vmatpush1.msra.mxu0 0.0
        %3692 = vmatprep.subr.mxu0 0.0
        %3693 = vmatpush1.msra.mxu0 0.0
        %3694 = vmatprep.subr.mxu0 0.0
        %3695 = vmatpush1.msra.mxu0 0.0
        %3696 = vmatprep.subr.mxu0 0.0
        %3697 = vmatpush1.msra.mxu0 0.0
        %3698 = vmatprep.subr.mxu0 0.0
        %3699 = vmatpush1.msra.mxu0 0.0
        %3700 = vmatprep.subr.mxu0 0.0
        %3701 = vmatpush1.msra.mxu0 0.0
        %3702 = vmatprep.subr.mxu0 0.0
        %3703 = vmatpush1.msra.mxu0 0.0
        %3704 = vmatprep.subr.mxu0 0.0
        %3705 = vmatpush1.msra.mxu0 0.0
        %3706 = vmatprep.subr.mxu0 0.0
        %3707 = vmatpush1.msra.mxu0 0.0
        %3708 = vmatprep.subr.mxu0 0.0
        %3709 = vmatpush1.msra.mxu0 0.0
        %3710 = vmatprep.subr.mxu0 0.0
        %3711 = vmatpush1.msra.mxu0 0.0
        %3712 = vmatprep.subr.mxu0 0.0
        %3713 = vmatpush1.msra.mxu0 0.0
        %3714 = vmatprep.subr.mxu0 0.0
        %3715 = vmatpush1.msra.mxu0 0.0
        %3716 = vmatprep.subr.mxu0 0.0
        %3717 = vmatpush1.msra.mxu0 0.0
        %3718 = vmatprep.subr.mxu0 0.0
        %3719 = vmatpush1.msra.mxu0 0.0
        %3720 = vmatprep.subr.mxu0 0.0
        %3721 = vmatpush1.msra.mxu0 0.0
        %3722 = vmatprep.subr.mxu0 0.0
        %3723 = vmatpush1.msra.mxu0 0.0
        %3724 = vmatprep.subr.mxu0 0.0
        %3725 = vmatpush1.msra.mxu0 0.0
        %3726 = vmatprep.subr.mxu0 0.0
        %3727 = vmatpush1.msra.mxu0 0.0
        %3728 = vmatprep.subr.mxu0 0.0
        %3729 = vmatpush1.msra.mxu0 0.0
        %3730 = vmatprep.subr.mxu0 0.0
        %3731 = vmatpush1.msra.mxu0 0.0
        %3732 = vmatprep.subr.mxu0 0.0
        %3733 = vmatpush1.msra.mxu0 0.0
        %3734 = vmatprep.subr.mxu0 0.0
        %3735 = vmatpush1.msra.mxu0 0.0
        %3736 = vmatprep.subr.mxu0 0.0
        %3737 = vmatpush1.msra.mxu0 0.0
        %3738 = vmatprep.subr.mxu0 0.0
        %3739 = vmatpush1.msra.mxu0 0.0
        %3740 = vmatprep.subr.mxu0 0.0
        %3741 = vmatpush1.msra.mxu0 0.0
        %3742 = vmatprep.subr.mxu0 0.0
        %3743 = vmatpush1.msra.mxu0 0.0
        %3744 = vmatprep.subr.mxu0 0.0
        %3745 = vmatpush1.msra.mxu0 0.0
        %3746 = vmatprep.subr.mxu0 0.0
        %3747 = vmatpush1.msra.mxu0 0.0
        %3748 = vmatprep.subr.mxu0 0.0
        %3749 = vmatpush1.msra.mxu0 0.0
        %3750 = vmatprep.subr.mxu0 0.0
        %3751 = vmatpush1.msra.mxu0 0.0
        %3752 = vmatprep.mubr.f32.mxu0 0.0
        %3753 = vmatmul.mubr.f32.gmra.mrb[0].mxu0 %v3686
        %v3754 = vpop.f32.mrb[0].mxu0
        %v3755 = vadd.f32 0.0, %v3754
        %v3756 = vpop.f32.mrb[0].mxu0
        %v3757 = vadd.f32 0.0, %v3756
        %3758 = vdwg.mxu0
        %v3759 = vpack.c.bf16 %v3755, %v3755
        %v3760 = vpack.c.bf16 %v3757, %v3757
        %s3761 = scalar_lea.vmem [#allocation3], 256
        %v3762 = vld [vmem:[%s3761] sm:$0xf]
        %v3763 = vld [vmem:[%s3761 + $0x4] sm:$0xf]
        %v3764 = vld [vmem:[%s3761 + $0x8] sm:$0xf]
        %v3765 = vld [vmem:[%s3761 + $0xc] sm:$0xf]
        %v3766 = vld [vmem:[%s3761 + $0x10] sm:$0xf]
        %v3767 = vld [vmem:[%s3761 + $0x14] sm:$0xf]
        %v3768 = vld [vmem:[%s3761 + $0x18] sm:$0xf]
        %v3769 = vld [vmem:[%s3761 + $0x1c] sm:$0xf]
        %v3770 = vld [vmem:[%s3761 + $0x20] sm:$0xf]
        %v3771 = vld [vmem:[%s3761 + $0x24] sm:$0xf]
        %v3772 = vld [vmem:[%s3761 + $0x28] sm:$0xf]
        %v3773 = vld [vmem:[%s3761 + $0x2c] sm:$0xf]
        %v3774 = vld [vmem:[%s3761 + $0x30] sm:$0xf]
        %v3775 = vld [vmem:[%s3761 + $0x34] sm:$0xf]
        %v3776 = vld [vmem:[%s3761 + $0x38] sm:$0xf]
        %v3777 = vld [vmem:[%s3761 + $0x3c] sm:$0xf]
        %v3778 = vld [vmem:[%s3761 + $0x40] sm:$0xf]
        %v3779 = vld [vmem:[%s3761 + $0x44] sm:$0xf]
        %v3780 = vld [vmem:[%s3761 + $0x48] sm:$0xf]
        %v3781 = vld [vmem:[%s3761 + $0x4c] sm:$0xf]
        %v3782 = vld [vmem:[%s3761 + $0x50] sm:$0xf]
        %v3783 = vld [vmem:[%s3761 + $0x54] sm:$0xf]
        %v3784 = vld [vmem:[%s3761 + $0x58] sm:$0xf]
        %v3785 = vld [vmem:[%s3761 + $0x5c] sm:$0xf]
        %v3786 = vld [vmem:[%s3761 + $0x60] sm:$0xf]
        %v3787 = vld [vmem:[%s3761 + $0x64] sm:$0xf]
        %v3788 = vld [vmem:[%s3761 + $0x68] sm:$0xf]
        %v3789 = vld [vmem:[%s3761 + $0x6c] sm:$0xf]
        %v3790 = vld [vmem:[%s3761 + $0x70] sm:$0xf]
        %v3791 = vld [vmem:[%s3761 + $0x74] sm:$0xf]
        %v3792 = vld [vmem:[%s3761 + $0x78] sm:$0xf]
        %v3793 = vld [vmem:[%s3761 + $0x7c] sm:$0xf]
        %v3826 = vunpack.c.l.b16 %v3762
        %v3827 = vunpack.c.l.b16 %v3763
        %v3828 = vunpack.c.l.b16 %v3764
        %v3829 = vunpack.c.l.b16 %v3765
        %v3830 = vunpack.c.l.b16 %v3766
        %v3831 = vunpack.c.l.b16 %v3767
        %v3832 = vunpack.c.l.b16 %v3768
        %v3833 = vunpack.c.l.b16 %v3769
        %v3834 = vunpack.c.l.b16 %v3770
        %v3835 = vunpack.c.l.b16 %v3771
        %v3836 = vunpack.c.l.b16 %v3772
        %v3837 = vunpack.c.l.b16 %v3773
        %v3838 = vunpack.c.l.b16 %v3774
        %v3839 = vunpack.c.l.b16 %v3775
        %v3840 = vunpack.c.l.b16 %v3776
        %v3841 = vunpack.c.l.b16 %v3777
        %v3842 = vunpack.c.l.b16 %v3778
        %v3843 = vunpack.c.l.b16 %v3779
        %v3844 = vunpack.c.l.b16 %v3780
        %v3845 = vunpack.c.l.b16 %v3781
        %v3846 = vunpack.c.l.b16 %v3782
        %v3847 = vunpack.c.l.b16 %v3783
        %v3848 = vunpack.c.l.b16 %v3784
        %v3849 = vunpack.c.l.b16 %v3785
        %v3850 = vunpack.c.l.b16 %v3786
        %v3851 = vunpack.c.l.b16 %v3787
        %v3852 = vunpack.c.l.b16 %v3788
        %v3853 = vunpack.c.l.b16 %v3789
        %v3854 = vunpack.c.l.b16 %v3790
        %v3855 = vunpack.c.l.b16 %v3791
        %v3856 = vunpack.c.l.b16 %v3792
        %v3857 = vunpack.c.l.b16 %v3793
        %v3858 = vpack.c.b16 %v3827, %v3826
        %v3859 = vpack.c.b16 %v3829, %v3828
        %v3860 = vpack.c.b16 %v3831, %v3830
        %v3861 = vpack.c.b16 %v3833, %v3832
        %v3862 = vpack.c.b16 %v3835, %v3834
        %v3863 = vpack.c.b16 %v3837, %v3836
        %v3864 = vpack.c.b16 %v3839, %v3838
        %v3865 = vpack.c.b16 %v3841, %v3840
        %v3866 = vpack.c.b16 %v3843, %v3842
        %v3867 = vpack.c.b16 %v3845, %v3844
        %v3868 = vpack.c.b16 %v3847, %v3846
        %v3869 = vpack.c.b16 %v3849, %v3848
        %v3870 = vpack.c.b16 %v3851, %v3850
        %v3871 = vpack.c.b16 %v3853, %v3852
        %v3872 = vpack.c.b16 %v3855, %v3854
        %v3873 = vpack.c.b16 %v3857, %v3856
        %3890 = vmatprep.subr.bf16.mxu0 0
        %3891 = vmatpush1.bf16.msra.mxu0 %v3858
        %3892 = vmatprep.subr.bf16.mxu0 0
        %3893 = vmatpush1.bf16.msra.mxu0 %v3859
        %3894 = vmatprep.subr.bf16.mxu0 0
        %3895 = vmatpush1.bf16.msra.mxu0 %v3860
        %3896 = vmatprep.subr.bf16.mxu0 0
        %3897 = vmatpush1.bf16.msra.mxu0 %v3861
        %3898 = vmatprep.subr.bf16.mxu0 0
        %3899 = vmatpush1.bf16.msra.mxu0 %v3862
        %3900 = vmatprep.subr.bf16.mxu0 0
        %3901 = vmatpush1.bf16.msra.mxu0 %v3863
        %3902 = vmatprep.subr.bf16.mxu0 0
        %3903 = vmatpush1.bf16.msra.mxu0 %v3864
        %3904 = vmatprep.subr.bf16.mxu0 0
        %3905 = vmatpush1.bf16.msra.mxu0 %v3865
        %3906 = vmatprep.subr.bf16.mxu0 0
        %3907 = vmatpush1.bf16.msra.mxu0 %v3866
        %3908 = vmatprep.subr.bf16.mxu0 0
        %3909 = vmatpush1.bf16.msra.mxu0 %v3867
        %3910 = vmatprep.subr.bf16.mxu0 0
        %3911 = vmatpush1.bf16.msra.mxu0 %v3868
        %3912 = vmatprep.subr.bf16.mxu0 0
        %3913 = vmatpush1.bf16.msra.mxu0 %v3869
        %3914 = vmatprep.subr.bf16.mxu0 0
        %3915 = vmatpush1.bf16.msra.mxu0 %v3870
        %3916 = vmatprep.subr.bf16.mxu0 0
        %3917 = vmatpush1.bf16.msra.mxu0 %v3871
        %3918 = vmatprep.subr.bf16.mxu0 0
        %3919 = vmatpush1.bf16.msra.mxu0 %v3872
        %3920 = vmatprep.subr.bf16.mxu0 0
        %3921 = vmatpush1.bf16.msra.mxu0 %v3873
        %3922 = vmatprep.mubr.bf16.mxu0 %v3760
        %3923 = vmatmul.mubr.bf16.gmra.mrb[0].mxu0 %v3759
        %v3924 = vpop.f32.mrb[0].mxu0
        %v3925 = vadd.f32 0.0, %v3924
        %v3926 = vpop.f32.mrb[0].mxu0
        %v3927 = vpop.f32.mrb[0].mxu0
        %v3928 = vpop.f32.mrb[0].mxu0
        %3929 = vdwg.mxu0
        %v3930 = vadd.f32 %v3680, %v3925
        %v3931 = vld [vmem:[%s12] sm:$0x1]
        %v3933 = vlaneseq
        %v3934 = vshrl.u32 %v3933, 7
        %v3935 = vsub.s32 0, %v3934
        %v3936 = vrot.slane %v3931, %v3935
        %v3938 = vadd.f32 %v3930, %v3936
        %vm3939 = vcmp.ge.f32.partialorder %v3938, 0.0
        %v3940 = vmul.f32 %v3938, 0.1
        %v3941 = vsel %vm3939, %v3938, %v3940
        %v3942 = vsel %vm2520, %v3182, 0
        %v3945 = vsel %vm2523, %v3941, 0
        %3947 = vmatprep.subr.mxu0 0.0
        %3948 = vmatpush1.msra.mxu0 %v3945
        %3949 = vmatprep.subr.mxu0 0.0
        %3950 = vmatpush1.msra.mxu0 0.0
        %3951 = vmatprep.subr.mxu0 0.0
        %3952 = vmatpush1.msra.mxu0 0.0
        %3953 = vmatprep.subr.mxu0 0.0
        %3954 = vmatpush1.msra.mxu0 0.0
        %3955 = vmatprep.subr.mxu0 0.0
        %3956 = vmatpush1.msra.mxu0 0.0
        %3957 = vmatprep.subr.mxu0 0.0
        %3958 = vmatpush1.msra.mxu0 0.0
        %3959 = vmatprep.subr.mxu0 0.0
        %3960 = vmatpush1.msra.mxu0 0.0
        %3961 = vmatprep.subr.mxu0 0.0
        %3962 = vmatpush1.msra.mxu0 0.0
        %3963 = vmatprep.subr.mxu0 0.0
        %3964 = vmatpush1.msra.mxu0 0.0
        %3965 = vmatprep.subr.mxu0 0.0
        %3966 = vmatpush1.msra.mxu0 0.0
        %3967 = vmatprep.subr.mxu0 0.0
        %3968 = vmatpush1.msra.mxu0 0.0
        %3969 = vmatprep.subr.mxu0 0.0
        %3970 = vmatpush1.msra.mxu0 0.0
        %3971 = vmatprep.subr.mxu0 0.0
        %3972 = vmatpush1.msra.mxu0 0.0
        %3973 = vmatprep.subr.mxu0 0.0
        %3974 = vmatpush1.msra.mxu0 0.0
        %3975 = vmatprep.subr.mxu0 0.0
        %3976 = vmatpush1.msra.mxu0 0.0
        %3977 = vmatprep.subr.mxu0 0.0
        %3978 = vmatpush1.msra.mxu0 0.0
        %3979 = vmatprep.subr.mxu0 0.0
        %3980 = vmatpush1.msra.mxu0 0.0
        %3981 = vmatprep.subr.mxu0 0.0
        %3982 = vmatpush1.msra.mxu0 0.0
        %3983 = vmatprep.subr.mxu0 0.0
        %3984 = vmatpush1.msra.mxu0 0.0
        %3985 = vmatprep.subr.mxu0 0.0
        %3986 = vmatpush1.msra.mxu0 0.0
        %3987 = vmatprep.subr.mxu0 0.0
        %3988 = vmatpush1.msra.mxu0 0.0
        %3989 = vmatprep.subr.mxu0 0.0
        %3990 = vmatpush1.msra.mxu0 0.0
        %3991 = vmatprep.subr.mxu0 0.0
        %3992 = vmatpush1.msra.mxu0 0.0
        %3993 = vmatprep.subr.mxu0 0.0
        %3994 = vmatpush1.msra.mxu0 0.0
        %3995 = vmatprep.subr.mxu0 0.0
        %3996 = vmatpush1.msra.mxu0 0.0
        %3997 = vmatprep.subr.mxu0 0.0
        %3998 = vmatpush1.msra.mxu0 0.0
        %3999 = vmatprep.subr.mxu0 0.0
        %4000 = vmatpush1.msra.mxu0 0.0
        %4001 = vmatprep.subr.mxu0 0.0
        %4002 = vmatpush1.msra.mxu0 0.0
        %4003 = vmatprep.subr.mxu0 0.0
        %4004 = vmatpush1.msra.mxu0 0.0
        %4005 = vmatprep.subr.mxu0 0.0
        %4006 = vmatpush1.msra.mxu0 0.0
        %4007 = vmatprep.subr.mxu0 0.0
        %4008 = vmatpush1.msra.mxu0 0.0
        %4009 = vmatprep.subr.mxu0 0.0
        %4010 = vmatpush1.msra.mxu0 0.0
        %4011 = vmatprep.mubr.f32.mxu0 0.0
        %4012 = vmatmul.mubr.f32.gmra.mrb[0].mxu0 %v3942
        %v4013 = vpop.f32.mrb[0].mxu0
        %v4014 = vadd.f32 0.0, %v4013
        %v4015 = vpop.f32.mrb[0].mxu0
        %4016 = vdwg.mxu0
        %v4017 = vpack.c.bf16 %v4014, %v4014
        %v4018 = vld [vmem:[%s13] sm:$0xf]
        %v4019 = vld [vmem:[%s13 + $0x4] sm:$0xf]
        %v4020 = vld [vmem:[%s13 + $0x8] sm:$0xf]
        %v4021 = vld [vmem:[%s13 + $0xc] sm:$0xf]
        %v4022 = vld [vmem:[%s13 + $0x10] sm:$0xf]
        %v4023 = vld [vmem:[%s13 + $0x14] sm:$0xf]
        %v4024 = vld [vmem:[%s13 + $0x18] sm:$0xf]
        %v4025 = vld [vmem:[%s13 + $0x1c] sm:$0xf]
        %v4026 = vld [vmem:[%s13 + $0x20] sm:$0xf]
        %v4027 = vld [vmem:[%s13 + $0x24] sm:$0xf]
        %v4028 = vld [vmem:[%s13 + $0x28] sm:$0xf]
        %v4029 = vld [vmem:[%s13 + $0x2c] sm:$0xf]
        %v4030 = vld [vmem:[%s13 + $0x30] sm:$0xf]
        %v4031 = vld [vmem:[%s13 + $0x34] sm:$0xf]
        %v4032 = vld [vmem:[%s13 + $0x38] sm:$0xf]
        %v4033 = vld [vmem:[%s13 + $0x3c] sm:$0xf]
        %v4034 = vsel %vm2520, %v3184, 0
        %4036 = vmatprep.subr.mxu0 0.0
        %4037 = vmatpush1.msra.mxu0 %v3945
        %4038 = vmatprep.subr.mxu0 0.0
        %4039 = vmatpush1.msra.mxu0 0.0
        %4040 = vmatprep.subr.mxu0 0.0
        %4041 = vmatpush1.msra.mxu0 0.0
        %4042 = vmatprep.subr.mxu0 0.0
        %4043 = vmatpush1.msra.mxu0 0.0
        %4044 = vmatprep.subr.mxu0 0.0
        %4045 = vmatpush1.msra.mxu0 0.0
        %4046 = vmatprep.subr.mxu0 0.0
        %4047 = vmatpush1.msra.mxu0 0.0
        %4048 = vmatprep.subr.mxu0 0.0
        %4049 = vmatpush1.msra.mxu0 0.0
        %4050 = vmatprep.subr.mxu0 0.0
        %4051 = vmatpush1.msra.mxu0 0.0
        %4052 = vmatprep.subr.mxu0 0.0
        %4053 = vmatpush1.msra.mxu0 0.0
        %4054 = vmatprep.subr.mxu0 0.0
        %4055 = vmatpush1.msra.mxu0 0.0
        %4056 = vmatprep.subr.mxu0 0.0
        %4057 = vmatpush1.msra.mxu0 0.0
        %4058 = vmatprep.subr.mxu0 0.0
        %4059 = vmatpush1.msra.mxu0 0.0
        %4060 = vmatprep.subr.mxu0 0.0
        %4061 = vmatpush1.msra.mxu0 0.0
        %4062 = vmatprep.subr.mxu0 0.0
        %4063 = vmatpush1.msra.mxu0 0.0
        %4064 = vmatprep.subr.mxu0 0.0
        %4065 = vmatpush1.msra.mxu0 0.0
        %4066 = vmatprep.subr.mxu0 0.0
        %4067 = vmatpush1.msra.mxu0 0.0
        %4068 = vmatprep.subr.mxu0 0.0
        %4069 = vmatpush1.msra.mxu0 0.0
        %4070 = vmatprep.subr.mxu0 0.0
        %4071 = vmatpush1.msra.mxu0 0.0
        %4072 = vmatprep.subr.mxu0 0.0
        %4073 = vmatpush1.msra.mxu0 0.0
        %4074 = vmatprep.subr.mxu0 0.0
        %4075 = vmatpush1.msra.mxu0 0.0
        %4076 = vmatprep.subr.mxu0 0.0
        %4077 = vmatpush1.msra.mxu0 0.0
        %4078 = vmatprep.subr.mxu0 0.0
        %4079 = vmatpush1.msra.mxu0 0.0
        %4080 = vmatprep.subr.mxu0 0.0
        %4081 = vmatpush1.msra.mxu0 0.0
        %4082 = vmatprep.subr.mxu0 0.0
        %4083 = vmatpush1.msra.mxu0 0.0
        %4084 = vmatprep.subr.mxu0 0.0
        %4085 = vmatpush1.msra.mxu0 0.0
        %4086 = vmatprep.subr.mxu0 0.0
        %4087 = vmatpush1.msra.mxu0 0.0
        %4088 = vmatprep.subr.mxu0 0.0
        %4089 = vmatpush1.msra.mxu0 0.0
        %4090 = vmatprep.subr.mxu0 0.0
        %4091 = vmatpush1.msra.mxu0 0.0
        %4092 = vmatprep.subr.mxu0 0.0
        %4093 = vmatpush1.msra.mxu0 0.0
        %4094 = vmatprep.subr.mxu0 0.0
        %4095 = vmatpush1.msra.mxu0 0.0
        %4096 = vmatprep.subr.mxu0 0.0
        %4097 = vmatpush1.msra.mxu0 0.0
        %4098 = vmatprep.subr.mxu0 0.0
        %4099 = vmatpush1.msra.mxu0 0.0
        %4100 = vmatprep.mubr.f32.mxu0 0.0
        %4101 = vmatmul.mubr.f32.gmra.mrb[0].mxu0 %v4034
        %v4102 = vpop.f32.mrb[0].mxu0
        %v4103 = vadd.f32 0.0, %v4102
        %v4104 = vpop.f32.mrb[0].mxu0
        %4105 = vdwg.mxu0
        %v4106 = vpack.c.bf16 %v4103, %v4103
        %s4107 = scalar_lea.vmem %s13, 64
        %v4108 = vld [vmem:[%s4107] sm:$0xf]
        %v4109 = vld [vmem:[%s4107 + $0x4] sm:$0xf]
        %v4110 = vld [vmem:[%s4107 + $0x8] sm:$0xf]
        %v4111 = vld [vmem:[%s4107 + $0xc] sm:$0xf]
        %v4112 = vld [vmem:[%s4107 + $0x10] sm:$0xf]
        %v4113 = vld [vmem:[%s4107 + $0x14] sm:$0xf]
        %v4114 = vld [vmem:[%s4107 + $0x18] sm:$0xf]
        %v4115 = vld [vmem:[%s4107 + $0x1c] sm:$0xf]
        %v4116 = vld [vmem:[%s4107 + $0x20] sm:$0xf]
        %v4117 = vld [vmem:[%s4107 + $0x24] sm:$0xf]
        %v4118 = vld [vmem:[%s4107 + $0x28] sm:$0xf]
        %v4119 = vld [vmem:[%s4107 + $0x2c] sm:$0xf]
        %v4120 = vld [vmem:[%s4107 + $0x30] sm:$0xf]
        %v4121 = vld [vmem:[%s4107 + $0x34] sm:$0xf]
        %v4122 = vld [vmem:[%s4107 + $0x38] sm:$0xf]
        %v4123 = vld [vmem:[%s4107 + $0x3c] sm:$0xf]
        %v4140 = vunpack.c.l.b16 %v4108
        %v4141 = vunpack.c.l.b16 %v4109
        %v4142 = vunpack.c.l.b16 %v4110
        %v4143 = vunpack.c.l.b16 %v4111
        %v4144 = vunpack.c.l.b16 %v4112
        %v4145 = vunpack.c.l.b16 %v4113
        %v4146 = vunpack.c.l.b16 %v4114
        %v4147 = vunpack.c.l.b16 %v4115
        %v4148 = vunpack.c.l.b16 %v4116
        %v4149 = vunpack.c.l.b16 %v4117
        %v4150 = vunpack.c.l.b16 %v4118
        %v4151 = vunpack.c.l.b16 %v4119
        %v4152 = vunpack.c.l.b16 %v4120
        %v4153 = vunpack.c.l.b16 %v4121
        %v4154 = vunpack.c.l.b16 %v4122
        %v4155 = vunpack.c.l.b16 %v4123
        %v4156 = vpack.c.b16 %v4141, %v4140
        %v4157 = vpack.c.b16 %v4143, %v4142
        %v4158 = vpack.c.b16 %v4145, %v4144
        %v4159 = vpack.c.b16 %v4147, %v4146
        %v4160 = vpack.c.b16 %v4149, %v4148
        %v4161 = vpack.c.b16 %v4151, %v4150
        %v4162 = vpack.c.b16 %v4153, %v4152
        %v4163 = vpack.c.b16 %v4155, %v4154
        %4172 = vmatprep.subr.bf16.mxu0 0
        %4173 = vmatpush1.bf16.msra.mxu0 %v4156
        %4174 = vmatprep.subr.bf16.mxu0 0
        %4175 = vmatpush1.bf16.msra.mxu0 %v4157
        %4176 = vmatprep.subr.bf16.mxu0 0
        %4177 = vmatpush1.bf16.msra.mxu0 %v4158
        %4178 = vmatprep.subr.bf16.mxu0 0
        %4179 = vmatpush1.bf16.msra.mxu0 %v4159
        %4180 = vmatprep.subr.bf16.mxu0 0
        %4181 = vmatpush1.bf16.msra.mxu0 %v4160
        %4182 = vmatprep.subr.bf16.mxu0 0
        %4183 = vmatpush1.bf16.msra.mxu0 %v4161
        %4184 = vmatprep.subr.bf16.mxu0 0
        %4185 = vmatpush1.bf16.msra.mxu0 %v4162
        %4186 = vmatprep.subr.bf16.mxu0 0
        %4187 = vmatpush1.bf16.msra.mxu0 %v4163
        %4188 = vmatprep.subr.bf16.mxu0 0
        %4189 = vmatpush1.bf16.msra.mxu0 0
        %4190 = vmatprep.subr.bf16.mxu0 0
        %4191 = vmatpush1.bf16.msra.mxu0 0
        %4192 = vmatprep.subr.bf16.mxu0 0
        %4193 = vmatpush1.bf16.msra.mxu0 0
        %4194 = vmatprep.subr.bf16.mxu0 0
        %4195 = vmatpush1.bf16.msra.mxu0 0
        %4196 = vmatprep.subr.bf16.mxu0 0
        %4197 = vmatpush1.bf16.msra.mxu0 0
        %4198 = vmatprep.subr.bf16.mxu0 0
        %4199 = vmatpush1.bf16.msra.mxu0 0
        %4200 = vmatprep.subr.bf16.mxu0 0
        %4201 = vmatpush1.bf16.msra.mxu0 0
        %4202 = vmatprep.subr.bf16.mxu0 0
        %4203 = vmatpush1.bf16.msra.mxu0 0
        %4204 = vmatprep.mubr.bf16.mxu0 0
        %4205 = vmatmul.mubr.bf16.gmra.mrb[0].mxu0 %v4106
        %v4206 = vpop.f32.mrb[0].mxu0
        %v4207 = vadd.f32 0.0, %v4206
        %v4208 = vpop.f32.mrb[0].mxu0
        %v4209 = vpop.f32.mrb[0].mxu0
        %v4210 = vpop.f32.mrb[0].mxu0
        %4211 = vdwg.mxu0
        %v4228 = vunpack.c.l.b16 %v4018
        %v4229 = vunpack.c.l.b16 %v4019
        %v4230 = vunpack.c.l.b16 %v4020
        %v4231 = vunpack.c.l.b16 %v4021
        %v4232 = vunpack.c.l.b16 %v4022
        %v4233 = vunpack.c.l.b16 %v4023
        %v4234 = vunpack.c.l.b16 %v4024
        %v4235 = vunpack.c.l.b16 %v4025
        %v4236 = vunpack.c.l.b16 %v4026
        %v4237 = vunpack.c.l.b16 %v4027
        %v4238 = vunpack.c.l.b16 %v4028
        %v4239 = vunpack.c.l.b16 %v4029
        %v4240 = vunpack.c.l.b16 %v4030
        %v4241 = vunpack.c.l.b16 %v4031
        %v4242 = vunpack.c.l.b16 %v4032
        %v4243 = vunpack.c.l.b16 %v4033
        %v4244 = vpack.c.b16 %v4229, %v4228
        %v4245 = vpack.c.b16 %v4231, %v4230
        %v4246 = vpack.c.b16 %v4233, %v4232
        %v4247 = vpack.c.b16 %v4235, %v4234
        %v4248 = vpack.c.b16 %v4237, %v4236
        %v4249 = vpack.c.b16 %v4239, %v4238
        %v4250 = vpack.c.b16 %v4241, %v4240
        %v4251 = vpack.c.b16 %v4243, %v4242
        %4260 = vmatprep.subr.bf16.mxu0 0
        %4261 = vmatpush1.bf16.msra.mxu0 %v4244
        %4262 = vmatprep.subr.bf16.mxu0 0
        %4263 = vmatpush1.bf16.msra.mxu0 %v4245
        %4264 = vmatprep.subr.bf16.mxu0 0
        %4265 = vmatpush1.bf16.msra.mxu0 %v4246
        %4266 = vmatprep.subr.bf16.mxu0 0
        %4267 = vmatpush1.bf16.msra.mxu0 %v4247
        %4268 = vmatprep.subr.bf16.mxu0 0
        %4269 = vmatpush1.bf16.msra.mxu0 %v4248
        %4270 = vmatprep.subr.bf16.mxu0 0
        %4271 = vmatpush1.bf16.msra.mxu0 %v4249
        %4272 = vmatprep.subr.bf16.mxu0 0
        %4273 = vmatpush1.bf16.msra.mxu0 %v4250
        %4274 = vmatprep.subr.bf16.mxu0 0
        %4275 = vmatpush1.bf16.msra.mxu0 %v4251
        %4276 = vmatprep.subr.bf16.mxu0 0
        %4277 = vmatpush1.bf16.msra.mxu0 0
        %4278 = vmatprep.subr.bf16.mxu0 0
        %4279 = vmatpush1.bf16.msra.mxu0 0
        %4280 = vmatprep.subr.bf16.mxu0 0
        %4281 = vmatpush1.bf16.msra.mxu0 0
        %4282 = vmatprep.subr.bf16.mxu0 0
        %4283 = vmatpush1.bf16.msra.mxu0 0
        %4284 = vmatprep.subr.bf16.mxu0 0
        %4285 = vmatpush1.bf16.msra.mxu0 0
        %4286 = vmatprep.subr.bf16.mxu0 0
        %4287 = vmatpush1.bf16.msra.mxu0 0
        %4288 = vmatprep.subr.bf16.mxu0 0
        %4289 = vmatpush1.bf16.msra.mxu0 0
        %4290 = vmatprep.subr.bf16.mxu0 0
        %4291 = vmatpush1.bf16.msra.mxu0 0
        %4292 = vmatprep.mubr.bf16.mxu0 0
        %4293 = vmatmul.mubr.bf16.gmra.mrb[0].mxu0 %v4017
        %v4294 = vpop.f32.mrb[0].mxu0
        %v4295 = vadd.f32 %v4207, %v4294
        %v4296 = vpop.f32.mrb[0].mxu0
        %v4297 = vpop.f32.mrb[0].mxu0
        %v4298 = vpop.f32.mrb[0].mxu0
        %4299 = vdwg.mxu0
        %v4300 = vsel %vm2520, %v3187, 0
        %4302 = vmatprep.subr.mxu0 0.0
        %4303 = vmatpush1.msra.mxu0 %v3945
        %4304 = vmatprep.subr.mxu0 0.0
        %4305 = vmatpush1.msra.mxu0 0.0
        %4306 = vmatprep.subr.mxu0 0.0
        %4307 = vmatpush1.msra.mxu0 0.0
        %4308 = vmatprep.subr.mxu0 0.0
        %4309 = vmatpush1.msra.mxu0 0.0
        %4310 = vmatprep.subr.mxu0 0.0
        %4311 = vmatpush1.msra.mxu0 0.0
        %4312 = vmatprep.subr.mxu0 0.0
        %4313 = vmatpush1.msra.mxu0 0.0
        %4314 = vmatprep.subr.mxu0 0.0
        %4315 = vmatpush1.msra.mxu0 0.0
        %4316 = vmatprep.subr.mxu0 0.0
        %4317 = vmatpush1.msra.mxu0 0.0
        %4318 = vmatprep.subr.mxu0 0.0
        %4319 = vmatpush1.msra.mxu0 0.0
        %4320 = vmatprep.subr.mxu0 0.0
        %4321 = vmatpush1.msra.mxu0 0.0
        %4322 = vmatprep.subr.mxu0 0.0
        %4323 = vmatpush1.msra.mxu0 0.0
        %4324 = vmatprep.subr.mxu0 0.0
        %4325 = vmatpush1.msra.mxu0 0.0
        %4326 = vmatprep.subr.mxu0 0.0
        %4327 = vmatpush1.msra.mxu0 0.0
        %4328 = vmatprep.subr.mxu0 0.0
        %4329 = vmatpush1.msra.mxu0 0.0
        %4330 = vmatprep.subr.mxu0 0.0
        %4331 = vmatpush1.msra.mxu0 0.0
        %4332 = vmatprep.subr.mxu0 0.0
        %4333 = vmatpush1.msra.mxu0 0.0
        %4334 = vmatprep.subr.mxu0 0.0
        %4335 = vmatpush1.msra.mxu0 0.0
        %4336 = vmatprep.subr.mxu0 0.0
        %4337 = vmatpush1.msra.mxu0 0.0
        %4338 = vmatprep.subr.mxu0 0.0
        %4339 = vmatpush1.msra.mxu0 0.0
        %4340 = vmatprep.subr.mxu0 0.0
        %4341 = vmatpush1.msra.mxu0 0.0
        %4342 = vmatprep.subr.mxu0 0.0
        %4343 = vmatpush1.msra.mxu0 0.0
        %4344 = vmatprep.subr.mxu0 0.0
        %4345 = vmatpush1.msra.mxu0 0.0
        %4346 = vmatprep.subr.mxu0 0.0
        %4347 = vmatpush1.msra.mxu0 0.0
        %4348 = vmatprep.subr.mxu0 0.0
        %4349 = vmatpush1.msra.mxu0 0.0
        %4350 = vmatprep.subr.mxu0 0.0
        %4351 = vmatpush1.msra.mxu0 0.0
        %4352 = vmatprep.subr.mxu0 0.0
        %4353 = vmatpush1.msra.mxu0 0.0
        %4354 = vmatprep.subr.mxu0 0.0
        %4355 = vmatpush1.msra.mxu0 0.0
        %4356 = vmatprep.subr.mxu0 0.0
        %4357 = vmatpush1.msra.mxu0 0.0
        %4358 = vmatprep.subr.mxu0 0.0
        %4359 = vmatpush1.msra.mxu0 0.0
        %4360 = vmatprep.subr.mxu0 0.0
        %4361 = vmatpush1.msra.mxu0 0.0
        %4362 = vmatprep.subr.mxu0 0.0
        %4363 = vmatpush1.msra.mxu0 0.0
        %4364 = vmatprep.subr.mxu0 0.0
        %4365 = vmatpush1.msra.mxu0 0.0
        %4366 = vmatprep.mubr.f32.mxu0 0.0
        %4367 = vmatmul.mubr.f32.gmra.mrb[0].mxu0 %v4300
        %v4368 = vpop.f32.mrb[0].mxu0
        %v4369 = vadd.f32 0.0, %v4368
        %v4370 = vpop.f32.mrb[0].mxu0
        %4371 = vdwg.mxu0
        %v4372 = vpack.c.bf16 %v4369, %v4369
        %s4373 = scalar_lea.vmem %s13, 128
        %v4374 = vld [vmem:[%s4373] sm:$0xf]
        %v4375 = vld [vmem:[%s4373 + $0x4] sm:$0xf]
        %v4376 = vld [vmem:[%s4373 + $0x8] sm:$0xf]
        %v4377 = vld [vmem:[%s4373 + $0xc] sm:$0xf]
        %v4378 = vld [vmem:[%s4373 + $0x10] sm:$0xf]
        %v4379 = vld [vmem:[%s4373 + $0x14] sm:$0xf]
        %v4380 = vld [vmem:[%s4373 + $0x18] sm:$0xf]
        %v4381 = vld [vmem:[%s4373 + $0x1c] sm:$0xf]
        %v4382 = vld [vmem:[%s4373 + $0x20] sm:$0xf]
        %v4383 = vld [vmem:[%s4373 + $0x24] sm:$0xf]
        %v4384 = vld [vmem:[%s4373 + $0x28] sm:$0xf]
        %v4385 = vld [vmem:[%s4373 + $0x2c] sm:$0xf]
        %v4386 = vld [vmem:[%s4373 + $0x30] sm:$0xf]
        %v4387 = vld [vmem:[%s4373 + $0x34] sm:$0xf]
        %v4388 = vld [vmem:[%s4373 + $0x38] sm:$0xf]
        %v4389 = vld [vmem:[%s4373 + $0x3c] sm:$0xf]
        %v4406 = vunpack.c.l.b16 %v4374
        %v4407 = vunpack.c.l.b16 %v4375
        %v4408 = vunpack.c.l.b16 %v4376
        %v4409 = vunpack.c.l.b16 %v4377
        %v4410 = vunpack.c.l.b16 %v4378
        %v4411 = vunpack.c.l.b16 %v4379
        %v4412 = vunpack.c.l.b16 %v4380
        %v4413 = vunpack.c.l.b16 %v4381
        %v4414 = vunpack.c.l.b16 %v4382
        %v4415 = vunpack.c.l.b16 %v4383
        %v4416 = vunpack.c.l.b16 %v4384
        %v4417 = vunpack.c.l.b16 %v4385
        %v4418 = vunpack.c.l.b16 %v4386
        %v4419 = vunpack.c.l.b16 %v4387
        %v4420 = vunpack.c.l.b16 %v4388
        %v4421 = vunpack.c.l.b16 %v4389
        %v4422 = vpack.c.b16 %v4407, %v4406
        %v4423 = vpack.c.b16 %v4409, %v4408
        %v4424 = vpack.c.b16 %v4411, %v4410
        %v4425 = vpack.c.b16 %v4413, %v4412
        %v4426 = vpack.c.b16 %v4415, %v4414
        %v4427 = vpack.c.b16 %v4417, %v4416
        %v4428 = vpack.c.b16 %v4419, %v4418
        %v4429 = vpack.c.b16 %v4421, %v4420
        %4438 = vmatprep.subr.bf16.mxu0 0
        %4439 = vmatpush1.bf16.msra.mxu0 %v4422
        %4440 = vmatprep.subr.bf16.mxu0 0
        %4441 = vmatpush1.bf16.msra.mxu0 %v4423
        %4442 = vmatprep.subr.bf16.mxu0 0
        %4443 = vmatpush1.bf16.msra.mxu0 %v4424
        %4444 = vmatprep.subr.bf16.mxu0 0
        %4445 = vmatpush1.bf16.msra.mxu0 %v4425
        %4446 = vmatprep.subr.bf16.mxu0 0
        %4447 = vmatpush1.bf16.msra.mxu0 %v4426
        %4448 = vmatprep.subr.bf16.mxu0 0
        %4449 = vmatpush1.bf16.msra.mxu0 %v4427
        %4450 = vmatprep.subr.bf16.mxu0 0
        %4451 = vmatpush1.bf16.msra.mxu0 %v4428
        %4452 = vmatprep.subr.bf16.mxu0 0
        %4453 = vmatpush1.bf16.msra.mxu0 %v4429
        %4454 = vmatprep.subr.bf16.mxu0 0
        %4455 = vmatpush1.bf16.msra.mxu0 0
        %4456 = vmatprep.subr.bf16.mxu0 0
        %4457 = vmatpush1.bf16.msra.mxu0 0
        %4458 = vmatprep.subr.bf16.mxu0 0
        %4459 = vmatpush1.bf16.msra.mxu0 0
        %4460 = vmatprep.subr.bf16.mxu0 0
        %4461 = vmatpush1.bf16.msra.mxu0 0
        %4462 = vmatprep.subr.bf16.mxu0 0
        %4463 = vmatpush1.bf16.msra.mxu0 0
        %4464 = vmatprep.subr.bf16.mxu0 0
        %4465 = vmatpush1.bf16.msra.mxu0 0
        %4466 = vmatprep.subr.bf16.mxu0 0
        %4467 = vmatpush1.bf16.msra.mxu0 0
        %4468 = vmatprep.subr.bf16.mxu0 0
        %4469 = vmatpush1.bf16.msra.mxu0 0
        %4470 = vmatprep.mubr.bf16.mxu0 0
        %4471 = vmatmul.mubr.bf16.gmra.mrb[0].mxu0 %v4372
        %v4472 = vpop.f32.mrb[0].mxu0
        %v4473 = vadd.f32 0.0, %v4472
        %v4474 = vpop.f32.mrb[0].mxu0
        %v4475 = vpop.f32.mrb[0].mxu0
        %v4476 = vpop.f32.mrb[0].mxu0
        %4477 = vdwg.mxu0
        %v4478 = vadd.f32 %v4295, %v4473
        %v4479 = vld [vmem:[%s14] sm:$0x1]
        %v4481 = vlaneseq
        %v4482 = vshrl.u32 %v4481, 7
        %v4483 = vsub.s32 0, %v4482
        %v4484 = vrot.slane %v4479, %v4483
        %v4486 = vadd.f32 %v4478, %v4484
        %vm4487 = vcmp.ge.f32.partialorder %v4486, 0.0
        %v4488 = vmul.f32 %v4486, 0.1
        %v4489 = vsel %vm4487, %v4486, %v4488
        %v4490 = vadd.s32 %v685, 1
        %vm4491 = vcmp.eq.s32.totalorder %v3179, %v4490
        %v4492 = vsel %vm4491, 1.0, 0.0
        %vm4493 = vcmp.eq.s32.totalorder %v3179, %v685
        %v4494 = vsel %vm4493, 1.0, 0.0
        %v4495 = vadd.s32 %v685, 4294967295
        %vm4496 = vcmp.eq.s32.totalorder %v3179, %v4495
        %v4497 = vsel %vm4496, 1.0, 0.0
        %v4498 = vsel %vm2061, %v3182, 0
        %v4501 = vsel %vm2061, %v4492, 0
        %4503 = vmatprep.subr.mxu0 0.0
        %4504 = vmatpush1.msra.mxu0 %v4489
        %4505 = vmatprep.subr.mxu0 0.0
        %4506 = vmatpush1.msra.mxu0 0.0
        %4507 = vmatprep.subr.mxu0 0.0
        %4508 = vmatpush1.msra.mxu0 0.0
        %4509 = vmatprep.subr.mxu0 0.0
        %4510 = vmatpush1.msra.mxu0 0.0
        %4511 = vmatprep.subr.mxu0 0.0
        %4512 = vmatpush1.msra.mxu0 0.0
        %4513 = vmatprep.subr.mxu0 0.0
        %4514 = vmatpush1.msra.mxu0 0.0
        %4515 = vmatprep.subr.mxu0 0.0
        %4516 = vmatpush1.msra.mxu0 0.0
        %4517 = vmatprep.subr.mxu0 0.0
        %4518 = vmatpush1.msra.mxu0 0.0
        %4519 = vmatprep.subr.mxu0 0.0
        %4520 = vmatpush1.msra.mxu0 0.0
        %4521 = vmatprep.subr.mxu0 0.0
        %4522 = vmatpush1.msra.mxu0 0.0
        %4523 = vmatprep.subr.mxu0 0.0
        %4524 = vmatpush1.msra.mxu0 0.0
        %4525 = vmatprep.subr.mxu0 0.0
        %4526 = vmatpush1.msra.mxu0 0.0
        %4527 = vmatprep.subr.mxu0 0.0
        %4528 = vmatpush1.msra.mxu0 0.0
        %4529 = vmatprep.subr.mxu0 0.0
        %4530 = vmatpush1.msra.mxu0 0.0
        %4531 = vmatprep.subr.mxu0 0.0
        %4532 = vmatpush1.msra.mxu0 0.0
        %4533 = vmatprep.subr.mxu0 0.0
        %4534 = vmatpush1.msra.mxu0 0.0
        %4535 = vmatprep.subr.mxu0 0.0
        %4536 = vmatpush1.msra.mxu0 0.0
        %4537 = vmatprep.subr.mxu0 0.0
        %4538 = vmatpush1.msra.mxu0 0.0
        %4539 = vmatprep.subr.mxu0 0.0
        %4540 = vmatpush1.msra.mxu0 0.0
        %4541 = vmatprep.subr.mxu0 0.0
        %4542 = vmatpush1.msra.mxu0 0.0
        %4543 = vmatprep.subr.mxu0 0.0
        %4544 = vmatpush1.msra.mxu0 0.0
        %4545 = vmatprep.subr.mxu0 0.0
        %4546 = vmatpush1.msra.mxu0 0.0
        %4547 = vmatprep.subr.mxu0 0.0
        %4548 = vmatpush1.msra.mxu0 0.0
        %4549 = vmatprep.subr.mxu0 0.0
        %4550 = vmatpush1.msra.mxu0 0.0
        %4551 = vmatprep.subr.mxu0 0.0
        %4552 = vmatpush1.msra.mxu0 0.0
        %4553 = vmatprep.subr.mxu0 0.0
        %4554 = vmatpush1.msra.mxu0 0.0
        %4555 = vmatprep.subr.mxu0 0.0
        %4556 = vmatpush1.msra.mxu0 0.0
        %4557 = vmatprep.subr.mxu0 0.0
        %4558 = vmatpush1.msra.mxu0 0.0
        %4559 = vmatprep.subr.mxu0 0.0
        %4560 = vmatpush1.msra.mxu0 0.0
        %4561 = vmatprep.subr.mxu0 0.0
        %4562 = vmatpush1.msra.mxu0 0.0
        %4563 = vmatprep.subr.mxu0 0.0
        %4564 = vmatpush1.msra.mxu0 0.0
        %4565 = vmatprep.subr.mxu0 0.0
        %4566 = vmatpush1.msra.mxu0 0.0
        %4567 = vmatprep.mubr.f32.mxu0 0.0
        %4568 = vmatmul.mubr.f32.gmra.mrb[0].mxu0 %v4498
        %v4569 = vpop.f32.mrb[0].mxu0
        %v4570 = vadd.f32 0.0, %v4569
        %v4571 = vpop.f32.mrb[0].mxu0
        %4572 = vmatprep.mubr.f32.mxu0 0.0
        %4573 = vmatmul.mubr.f32.gmra.mrb[0].mxu0 %v4501
        %v4574 = vpop.f32.mrb[0].mxu0
        %v4575 = vadd.f32 0.0, %v4574
        %v4576 = vpop.f32.mrb[0].mxu0
        %4577 = vdwg.mxu0
        %v4578 = vpack.c.bf16 %v4575, %v4570
        %v4579 = vld [vmem:[%s15] sm:$0xf]
        %v4580 = vld [vmem:[%s15 + $0x4] sm:$0xf]
        %v4581 = vld [vmem:[%s15 + $0x8] sm:$0xf]
        %v4582 = vld [vmem:[%s15 + $0xc] sm:$0xf]
        %v4583 = vld [vmem:[%s15 + $0x10] sm:$0xf]
        %v4584 = vld [vmem:[%s15 + $0x14] sm:$0xf]
        %v4585 = vld [vmem:[%s15 + $0x18] sm:$0xf]
        %v4586 = vld [vmem:[%s15 + $0x1c] sm:$0xf]
        %v4587 = vsel %vm2061, %v3184, 0
        %v4590 = vsel %vm2061, %v4494, 0
        %4592 = vmatprep.subr.mxu0 0.0
        %4593 = vmatpush1.msra.mxu0 %v4489
        %4594 = vmatprep.subr.mxu0 0.0
        %4595 = vmatpush1.msra.mxu0 0.0
        %4596 = vmatprep.subr.mxu0 0.0
        %4597 = vmatpush1.msra.mxu0 0.0
        %4598 = vmatprep.subr.mxu0 0.0
        %4599 = vmatpush1.msra.mxu0 0.0
        %4600 = vmatprep.subr.mxu0 0.0
        %4601 = vmatpush1.msra.mxu0 0.0
        %4602 = vmatprep.subr.mxu0 0.0
        %4603 = vmatpush1.msra.mxu0 0.0
        %4604 = vmatprep.subr.mxu0 0.0
        %4605 = vmatpush1.msra.mxu0 0.0
        %4606 = vmatprep.subr.mxu0 0.0
        %4607 = vmatpush1.msra.mxu0 0.0
        %4608 = vmatprep.subr.mxu0 0.0
        %4609 = vmatpush1.msra.mxu0 0.0
        %4610 = vmatprep.subr.mxu0 0.0
        %4611 = vmatpush1.msra.mxu0 0.0
        %4612 = vmatprep.subr.mxu0 0.0
        %4613 = vmatpush1.msra.mxu0 0.0
        %4614 = vmatprep.subr.mxu0 0.0
        %4615 = vmatpush1.msra.mxu0 0.0
        %4616 = vmatprep.subr.mxu0 0.0
        %4617 = vmatpush1.msra.mxu0 0.0
        %4618 = vmatprep.subr.mxu0 0.0
        %4619 = vmatpush1.msra.mxu0 0.0
        %4620 = vmatprep.subr.mxu0 0.0
        %4621 = vmatpush1.msra.mxu0 0.0
        %4622 = vmatprep.subr.mxu0 0.0
        %4623 = vmatpush1.msra.mxu0 0.0
        %4624 = vmatprep.subr.mxu0 0.0
        %4625 = vmatpush1.msra.mxu0 0.0
        %4626 = vmatprep.subr.mxu0 0.0
        %4627 = vmatpush1.msra.mxu0 0.0
        %4628 = vmatprep.subr.mxu0 0.0
        %4629 = vmatpush1.msra.mxu0 0.0
        %4630 = vmatprep.subr.mxu0 0.0
        %4631 = vmatpush1.msra.mxu0 0.0
        %4632 = vmatprep.subr.mxu0 0.0
        %4633 = vmatpush1.msra.mxu0 0.0
        %4634 = vmatprep.subr.mxu0 0.0
        %4635 = vmatpush1.msra.mxu0 0.0
        %4636 = vmatprep.subr.mxu0 0.0
        %4637 = vmatpush1.msra.mxu0 0.0
        %4638 = vmatprep.subr.mxu0 0.0
        %4639 = vmatpush1.msra.mxu0 0.0
        %4640 = vmatprep.subr.mxu0 0.0
        %4641 = vmatpush1.msra.mxu0 0.0
        %4642 = vmatprep.subr.mxu0 0.0
        %4643 = vmatpush1.msra.mxu0 0.0
        %4644 = vmatprep.subr.mxu0 0.0
        %4645 = vmatpush1.msra.mxu0 0.0
        %4646 = vmatprep.subr.mxu0 0.0
        %4647 = vmatpush1.msra.mxu0 0.0
        %4648 = vmatprep.subr.mxu0 0.0
        %4649 = vmatpush1.msra.mxu0 0.0
        %4650 = vmatprep.subr.mxu0 0.0
        %4651 = vmatpush1.msra.mxu0 0.0
        %4652 = vmatprep.subr.mxu0 0.0
        %4653 = vmatpush1.msra.mxu0 0.0
        %4654 = vmatprep.subr.mxu0 0.0
        %4655 = vmatpush1.msra.mxu0 0.0
        %4656 = vmatprep.mubr.f32.mxu0 0.0
        %4657 = vmatmul.mubr.f32.gmra.mrb[0].mxu0 %v4587
        %v4658 = vpop.f32.mrb[0].mxu0
        %v4659 = vadd.f32 0.0, %v4658
        %v4660 = vpop.f32.mrb[0].mxu0
        %4661 = vmatprep.mubr.f32.mxu0 0.0
        %4662 = vmatmul.mubr.f32.gmra.mrb[0].mxu0 %v4590
        %v4663 = vpop.f32.mrb[0].mxu0
        %v4664 = vadd.f32 0.0, %v4663
        %v4665 = vpop.f32.mrb[0].mxu0
        %4666 = vdwg.mxu0
        %v4667 = vpack.c.bf16 %v4664, %v4659
        %s4668 = scalar_lea.vmem %s15, 32
        %v4669 = vld [vmem:[%s4668] sm:$0xf]
        %v4670 = vld [vmem:[%s4668 + $0x4] sm:$0xf]
        %v4671 = vld [vmem:[%s4668 + $0x8] sm:$0xf]
        %v4672 = vld [vmem:[%s4668 + $0xc] sm:$0xf]
        %v4673 = vld [vmem:[%s4668 + $0x10] sm:$0xf]
        %v4674 = vld [vmem:[%s4668 + $0x14] sm:$0xf]
        %v4675 = vld [vmem:[%s4668 + $0x18] sm:$0xf]
        %v4676 = vld [vmem:[%s4668 + $0x1c] sm:$0xf]
        %v4685 = vunpack.c.l.b16 %v4669
        %v4686 = vunpack.c.l.b16 %v4670
        %v4687 = vunpack.c.l.b16 %v4671
        %v4688 = vunpack.c.l.b16 %v4672
        %v4689 = vunpack.c.l.b16 %v4673
        %v4690 = vunpack.c.l.b16 %v4674
        %v4691 = vunpack.c.l.b16 %v4675
        %v4692 = vunpack.c.l.b16 %v4676
        %v4693 = vpack.c.b16 %v4686, %v4685
        %v4694 = vpack.c.b16 %v4688, %v4687
        %v4695 = vpack.c.b16 %v4690, %v4689
        %v4696 = vpack.c.b16 %v4692, %v4691
        %v4702 = vsel %vm726, %v4667, 0
        %4704 = vmatprep.subr.bf16.mxu0 0
        %4705 = vmatpush1.bf16.msra.mxu0 %v4693
        %4706 = vmatprep.subr.bf16.mxu0 0
        %4707 = vmatpush1.bf16.msra.mxu0 %v4694
        %4708 = vmatprep.subr.bf16.mxu0 0
        %4709 = vmatpush1.bf16.msra.mxu0 %v4695
        %4710 = vmatprep.subr.bf16.mxu0 0
        %4711 = vmatpush1.bf16.msra.mxu0 %v4696
        %4712 = vmatprep.subr.bf16.mxu0 0
        %4713 = vmatpush1.bf16.msra.mxu0 0
        %4714 = vmatprep.subr.bf16.mxu0 0
        %4715 = vmatpush1.bf16.msra.mxu0 0
        %4716 = vmatprep.subr.bf16.mxu0 0
        %4717 = vmatpush1.bf16.msra.mxu0 0
        %4718 = vmatprep.subr.bf16.mxu0 0
        %4719 = vmatpush1.bf16.msra.mxu0 0
        %4720 = vmatprep.subr.bf16.mxu0 0
        %4721 = vmatpush1.bf16.msra.mxu0 0
        %4722 = vmatprep.subr.bf16.mxu0 0
        %4723 = vmatpush1.bf16.msra.mxu0 0
        %4724 = vmatprep.subr.bf16.mxu0 0
        %4725 = vmatpush1.bf16.msra.mxu0 0
        %4726 = vmatprep.subr.bf16.mxu0 0
        %4727 = vmatpush1.bf16.msra.mxu0 0
        %4728 = vmatprep.subr.bf16.mxu0 0
        %4729 = vmatpush1.bf16.msra.mxu0 0
        %4730 = vmatprep.subr.bf16.mxu0 0
        %4731 = vmatpush1.bf16.msra.mxu0 0
        %4732 = vmatprep.subr.bf16.mxu0 0
        %4733 = vmatpush1.bf16.msra.mxu0 0
        %4734 = vmatprep.subr.bf16.mxu0 0
        %4735 = vmatpush1.bf16.msra.mxu0 0
        %4736 = vmatprep.mubr.bf16.mxu0 0
        %4737 = vmatmul.mubr.bf16.gmra.mrb[0].mxu0 %v4702
        %v4738 = vpop.f32.mrb[0].mxu0
        %v4739 = vadd.f32 0.0, %v4738
        %v4740 = vpop.f32.mrb[0].mxu0
        %v4741 = vpop.f32.mrb[0].mxu0
        %v4742 = vadd.f32 0.0, %v4741
        %v4743 = vpop.f32.mrb[0].mxu0
        %4744 = vdwg.mxu0
        %v4753 = vunpack.c.l.b16 %v4579
        %v4754 = vunpack.c.l.b16 %v4580
        %v4755 = vunpack.c.l.b16 %v4581
        %v4756 = vunpack.c.l.b16 %v4582
        %v4757 = vunpack.c.l.b16 %v4583
        %v4758 = vunpack.c.l.b16 %v4584
        %v4759 = vunpack.c.l.b16 %v4585
        %v4760 = vunpack.c.l.b16 %v4586
        %v4761 = vpack.c.b16 %v4754, %v4753
        %v4762 = vpack.c.b16 %v4756, %v4755
        %v4763 = vpack.c.b16 %v4758, %v4757
        %v4764 = vpack.c.b16 %v4760, %v4759
        %v4770 = vsel %vm726, %v4578, 0
        %4772 = vmatprep.subr.bf16.mxu0 0
        %4773 = vmatpush1.bf16.msra.mxu0 %v4761
        %4774 = vmatprep.subr.bf16.mxu0 0
        %4775 = vmatpush1.bf16.msra.mxu0 %v4762
        %4776 = vmatprep.subr.bf16.mxu0 0
        %4777 = vmatpush1.bf16.msra.mxu0 %v4763
        %4778 = vmatprep.subr.bf16.mxu0 0
        %4779 = vmatpush1.bf16.msra.mxu0 %v4764
        %4780 = vmatprep.subr.bf16.mxu0 0
        %4781 = vmatpush1.bf16.msra.mxu0 0
        %4782 = vmatprep.subr.bf16.mxu0 0
        %4783 = vmatpush1.bf16.msra.mxu0 0
        %4784 = vmatprep.subr.bf16.mxu0 0
        %4785 = vmatpush1.bf16.msra.mxu0 0
        %4786 = vmatprep.subr.bf16.mxu0 0
        %4787 = vmatpush1.bf16.msra.mxu0 0
        %4788 = vmatprep.subr.bf16.mxu0 0
        %4789 = vmatpush1.bf16.msra.mxu0 0
        %4790 = vmatprep.subr.bf16.mxu0 0
        %4791 = vmatpush1.bf16.msra.mxu0 0
        %4792 = vmatprep.subr.bf16.mxu0 0
        %4793 = vmatpush1.bf16.msra.mxu0 0
        %4794 = vmatprep.subr.bf16.mxu0 0
        %4795 = vmatpush1.bf16.msra.mxu0 0
        %4796 = vmatprep.subr.bf16.mxu0 0
        %4797 = vmatpush1.bf16.msra.mxu0 0
        %4798 = vmatprep.subr.bf16.mxu0 0
        %4799 = vmatpush1.bf16.msra.mxu0 0
        %4800 = vmatprep.subr.bf16.mxu0 0
        %4801 = vmatpush1.bf16.msra.mxu0 0
        %4802 = vmatprep.subr.bf16.mxu0 0
        %4803 = vmatpush1.bf16.msra.mxu0 0
        %4804 = vmatprep.mubr.bf16.mxu0 0
        %4805 = vmatmul.mubr.bf16.gmra.mrb[0].mxu0 %v4770
        %v4806 = vpop.f32.mrb[0].mxu0
        %v4807 = vadd.f32 %v4739, %v4806
        %v4808 = vpop.f32.mrb[0].mxu0
        %v4809 = vpop.f32.mrb[0].mxu0
        %v4810 = vadd.f32 %v4742, %v4809
        %v4811 = vpop.f32.mrb[0].mxu0
        %4812 = vdwg.mxu0
        %v4813 = vsel %vm2061, %v3187, 0
        %v4816 = vsel %vm2061, %v4497, 0
        %4818 = vmatprep.subr.mxu0 0.0
        %4819 = vmatpush1.msra.mxu0 %v4489
        %4820 = vmatprep.subr.mxu0 0.0
        %4821 = vmatpush1.msra.mxu0 0.0
        %4822 = vmatprep.subr.mxu0 0.0
        %4823 = vmatpush1.msra.mxu0 0.0
        %4824 = vmatprep.subr.mxu0 0.0
        %4825 = vmatpush1.msra.mxu0 0.0
        %4826 = vmatprep.subr.mxu0 0.0
        %4827 = vmatpush1.msra.mxu0 0.0
        %4828 = vmatprep.subr.mxu0 0.0
        %4829 = vmatpush1.msra.mxu0 0.0
        %4830 = vmatprep.subr.mxu0 0.0
        %4831 = vmatpush1.msra.mxu0 0.0
        %4832 = vmatprep.subr.mxu0 0.0
        %4833 = vmatpush1.msra.mxu0 0.0
        %4834 = vmatprep.subr.mxu0 0.0
        %4835 = vmatpush1.msra.mxu0 0.0
        %4836 = vmatprep.subr.mxu0 0.0
        %4837 = vmatpush1.msra.mxu0 0.0
        %4838 = vmatprep.subr.mxu0 0.0
        %4839 = vmatpush1.msra.mxu0 0.0
        %4840 = vmatprep.subr.mxu0 0.0
        %4841 = vmatpush1.msra.mxu0 0.0
        %4842 = vmatprep.subr.mxu0 0.0
        %4843 = vmatpush1.msra.mxu0 0.0
        %4844 = vmatprep.subr.mxu0 0.0
        %4845 = vmatpush1.msra.mxu0 0.0
        %4846 = vmatprep.subr.mxu0 0.0
        %4847 = vmatpush1.msra.mxu0 0.0
        %4848 = vmatprep.subr.mxu0 0.0
        %4849 = vmatpush1.msra.mxu0 0.0
        %4850 = vmatprep.subr.mxu0 0.0
        %4851 = vmatpush1.msra.mxu0 0.0
        %4852 = vmatprep.subr.mxu0 0.0
        %4853 = vmatpush1.msra.mxu0 0.0
        %4854 = vmatprep.subr.mxu0 0.0
        %4855 = vmatpush1.msra.mxu0 0.0
        %4856 = vmatprep.subr.mxu0 0.0
        %4857 = vmatpush1.msra.mxu0 0.0
        %4858 = vmatprep.subr.mxu0 0.0
        %4859 = vmatpush1.msra.mxu0 0.0
        %4860 = vmatprep.subr.mxu0 0.0
        %4861 = vmatpush1.msra.mxu0 0.0
        %4862 = vmatprep.subr.mxu0 0.0
        %4863 = vmatpush1.msra.mxu0 0.0
        %4864 = vmatprep.subr.mxu0 0.0
        %4865 = vmatpush1.msra.mxu0 0.0
        %4866 = vmatprep.subr.mxu0 0.0
        %4867 = vmatpush1.msra.mxu0 0.0
        %4868 = vmatprep.subr.mxu0 0.0
        %4869 = vmatpush1.msra.mxu0 0.0
        %4870 = vmatprep.subr.mxu0 0.0
        %4871 = vmatpush1.msra.mxu0 0.0
        %4872 = vmatprep.subr.mxu0 0.0
        %4873 = vmatpush1.msra.mxu0 0.0
        %4874 = vmatprep.subr.mxu0 0.0
        %4875 = vmatpush1.msra.mxu0 0.0
        %4876 = vmatprep.subr.mxu0 0.0
        %4877 = vmatpush1.msra.mxu0 0.0
        %4878 = vmatprep.subr.mxu0 0.0
        %4879 = vmatpush1.msra.mxu0 0.0
        %4880 = vmatprep.subr.mxu0 0.0
        %4881 = vmatpush1.msra.mxu0 0.0
        %4882 = vmatprep.mubr.f32.mxu0 0.0
        %4883 = vmatmul.mubr.f32.gmra.mrb[0].mxu0 %v4813
        %v4884 = vpop.f32.mrb[0].mxu0
        %v4885 = vadd.f32 0.0, %v4884
        %v4886 = vpop.f32.mrb[0].mxu0
        %4887 = vmatprep.mubr.f32.mxu0 0.0
        %4888 = vmatmul.mubr.f32.gmra.mrb[0].mxu0 %v4816
        %v4889 = vpop.f32.mrb[0].mxu0
        %v4890 = vadd.f32 0.0, %v4889
        %v4891 = vpop.f32.mrb[0].mxu0
        %4892 = vdwg.mxu0
        %v4893 = vpack.c.bf16 %v4890, %v4885
        %s4894 = scalar_lea.vmem %s15, 64
        %v4895 = vld [vmem:[%s4894] sm:$0xf]
        %v4896 = vld [vmem:[%s4894 + $0x4] sm:$0xf]
        %v4897 = vld [vmem:[%s4894 + $0x8] sm:$0xf]
        %v4898 = vld [vmem:[%s4894 + $0xc] sm:$0xf]
        %v4899 = vld [vmem:[%s4894 + $0x10] sm:$0xf]
        %v4900 = vld [vmem:[%s4894 + $0x14] sm:$0xf]
        %v4901 = vld [vmem:[%s4894 + $0x18] sm:$0xf]
        %v4902 = vld [vmem:[%s4894 + $0x1c] sm:$0xf]
        %v4911 = vunpack.c.l.b16 %v4895
        %v4912 = vunpack.c.l.b16 %v4896
        %v4913 = vunpack.c.l.b16 %v4897
        %v4914 = vunpack.c.l.b16 %v4898
        %v4915 = vunpack.c.l.b16 %v4899
        %v4916 = vunpack.c.l.b16 %v4900
        %v4917 = vunpack.c.l.b16 %v4901
        %v4918 = vunpack.c.l.b16 %v4902
        %v4919 = vpack.c.b16 %v4912, %v4911
        %v4920 = vpack.c.b16 %v4914, %v4913
        %v4921 = vpack.c.b16 %v4916, %v4915
        %v4922 = vpack.c.b16 %v4918, %v4917
        %v4928 = vsel %vm726, %v4893, 0
        %4930 = vmatprep.subr.bf16.mxu0 0
        %4931 = vmatpush1.bf16.msra.mxu0 %v4919
        %4932 = vmatprep.subr.bf16.mxu0 0
        %4933 = vmatpush1.bf16.msra.mxu0 %v4920
        %4934 = vmatprep.subr.bf16.mxu0 0
        %4935 = vmatpush1.bf16.msra.mxu0 %v4921
        %4936 = vmatprep.subr.bf16.mxu0 0
        %4937 = vmatpush1.bf16.msra.mxu0 %v4922
        %4938 = vmatprep.subr.bf16.mxu0 0
        %4939 = vmatpush1.bf16.msra.mxu0 0
        %4940 = vmatprep.subr.bf16.mxu0 0
        %4941 = vmatpush1.bf16.msra.mxu0 0
        %4942 = vmatprep.subr.bf16.mxu0 0
        %4943 = vmatpush1.bf16.msra.mxu0 0
        %4944 = vmatprep.subr.bf16.mxu0 0
        %4945 = vmatpush1.bf16.msra.mxu0 0
        %4946 = vmatprep.subr.bf16.mxu0 0
        %4947 = vmatpush1.bf16.msra.mxu0 0
        %4948 = vmatprep.subr.bf16.mxu0 0
        %4949 = vmatpush1.bf16.msra.mxu0 0
        %4950 = vmatprep.subr.bf16.mxu0 0
        %4951 = vmatpush1.bf16.msra.mxu0 0
        %4952 = vmatprep.subr.bf16.mxu0 0
        %4953 = vmatpush1.bf16.msra.mxu0 0
        %4954 = vmatprep.subr.bf16.mxu0 0
        %4955 = vmatpush1.bf16.msra.mxu0 0
        %4956 = vmatprep.subr.bf16.mxu0 0
        %4957 = vmatpush1.bf16.msra.mxu0 0
        %4958 = vmatprep.subr.bf16.mxu0 0
        %4959 = vmatpush1.bf16.msra.mxu0 0
        %4960 = vmatprep.subr.bf16.mxu0 0
        %4961 = vmatpush1.bf16.msra.mxu0 0
        %4962 = vmatprep.mubr.bf16.mxu0 0
        %4963 = vmatmul.mubr.bf16.gmra.mrb[0].mxu0 %v4928
        %v4964 = vpop.f32.mrb[0].mxu0
        %v4965 = vadd.f32 0.0, %v4964
        %v4966 = vpop.f32.mrb[0].mxu0
        %v4967 = vpop.f32.mrb[0].mxu0
        %v4968 = vadd.f32 0.0, %v4967
        %v4969 = vpop.f32.mrb[0].mxu0
        %4970 = vdwg.mxu0
        %v4971 = vadd.f32 %v4807, %v4965
        %v4972 = vadd.f32 %v4810, %v4968
        %v4973 = vld [vmem:[%s16] sm:$0x1]
        %v4975 = vlaneseq
        %v4976 = vshrl.u32 %v4975, 7
        %v4977 = vsub.s32 0, %v4976
        %v4978 = vrot.slane %v4973, %v4977
        %v4980 = vadd.f32 %v4971, %v4978
        %v4981 = vadd.f32 %v4972, %v4978
        %vm4982 = vcmp.ge.f32.partialorder %v4980, 0.0
        %vm4983 = vcmp.ge.f32.partialorder %v4981, 0.0
        %v4984 = vmul.f32 %v4980, 0.1
        %v4985 = vmul.f32 %v4981, 0.1
        %v4986 = vsel %vm4982, %v4980, %v4984
        %v4987 = vsel %vm4983, %v4981, %v4985
        %v4988 = vadd.s32 %v686, 1
        %v4989 = vadd.s32 %v687, 1
        %vm4990 = vcmp.eq.s32.totalorder %v3179, %v4988
        %vm4991 = vcmp.eq.s32.totalorder %v3179, %v4989
        %v4992 = vsel %vm4990, 1.0, 0.0
        %v4993 = vsel %vm4991, 1.0, 0.0
        %vm4994 = vcmp.eq.s32.totalorder %v3179, %v686
        %vm4995 = vcmp.eq.s32.totalorder %v3179, %v687
        %v4996 = vsel %vm4994, 1.0, 0.0
        %v4997 = vsel %vm4995, 1.0, 0.0
        %v4998 = vadd.s32 %v686, 4294967295
        %v4999 = vadd.s32 %v687, 4294967295
        %vm5000 = vcmp.eq.s32.totalorder %v3179, %v4998
        %vm5001 = vcmp.eq.s32.totalorder %v3179, %v4999
        %v5002 = vsel %vm5000, 1.0, 0.0
        %v5003 = vsel %vm5001, 1.0, 0.0
        %v5004 = vsel %vm1406, %v3182, 0
        %v5006 = vsel %vm1406, %v4492, 0
        %v5009 = vsel %vm1406, %v4992, 0
        %v5012 = vsel %vm1406, %v4993, 0
        %5014 = vmatprep.subr.mxu0 0.0
        %5015 = vmatpush1.msra.mxu0 %v4986
        %5016 = vmatprep.subr.mxu0 0.0
        %5017 = vmatpush1.msra.mxu0 %v4987
        %5018 = vmatprep.subr.mxu0 0.0
        %5019 = vmatpush1.msra.mxu0 0.0
        %5020 = vmatprep.subr.mxu0 0.0
        %5021 = vmatpush1.msra.mxu0 0.0
        %5022 = vmatprep.subr.mxu0 0.0
        %5023 = vmatpush1.msra.mxu0 0.0
        %5024 = vmatprep.subr.mxu0 0.0
        %5025 = vmatpush1.msra.mxu0 0.0
        %5026 = vmatprep.subr.mxu0 0.0
        %5027 = vmatpush1.msra.mxu0 0.0
        %5028 = vmatprep.subr.mxu0 0.0
        %5029 = vmatpush1.msra.mxu0 0.0
        %5030 = vmatprep.subr.mxu0 0.0
        %5031 = vmatpush1.msra.mxu0 0.0
        %5032 = vmatprep.subr.mxu0 0.0
        %5033 = vmatpush1.msra.mxu0 0.0
        %5034 = vmatprep.subr.mxu0 0.0
        %5035 = vmatpush1.msra.mxu0 0.0
        %5036 = vmatprep.subr.mxu0 0.0
        %5037 = vmatpush1.msra.mxu0 0.0
        %5038 = vmatprep.subr.mxu0 0.0
        %5039 = vmatpush1.msra.mxu0 0.0
        %5040 = vmatprep.subr.mxu0 0.0
        %5041 = vmatpush1.msra.mxu0 0.0
        %5042 = vmatprep.subr.mxu0 0.0
        %5043 = vmatpush1.msra.mxu0 0.0
        %5044 = vmatprep.subr.mxu0 0.0
        %5045 = vmatpush1.msra.mxu0 0.0
        %5046 = vmatprep.subr.mxu0 0.0
        %5047 = vmatpush1.msra.mxu0 0.0
        %5048 = vmatprep.subr.mxu0 0.0
        %5049 = vmatpush1.msra.mxu0 0.0
        %5050 = vmatprep.subr.mxu0 0.0
        %5051 = vmatpush1.msra.mxu0 0.0
        %5052 = vmatprep.subr.mxu0 0.0
        %5053 = vmatpush1.msra.mxu0 0.0
        %5054 = vmatprep.subr.mxu0 0.0
        %5055 = vmatpush1.msra.mxu0 0.0
        %5056 = vmatprep.subr.mxu0 0.0
        %5057 = vmatpush1.msra.mxu0 0.0
        %5058 = vmatprep.subr.mxu0 0.0
        %5059 = vmatpush1.msra.mxu0 0.0
        %5060 = vmatprep.subr.mxu0 0.0
        %5061 = vmatpush1.msra.mxu0 0.0
        %5062 = vmatprep.subr.mxu0 0.0
        %5063 = vmatpush1.msra.mxu0 0.0
        %5064 = vmatprep.subr.mxu0 0.0
        %5065 = vmatpush1.msra.mxu0 0.0
        %5066 = vmatprep.subr.mxu0 0.0
        %5067 = vmatpush1.msra.mxu0 0.0
        %5068 = vmatprep.subr.mxu0 0.0
        %5069 = vmatpush1.msra.mxu0 0.0
        %5070 = vmatprep.subr.mxu0 0.0
        %5071 = vmatpush1.msra.mxu0 0.0
        %5072 = vmatprep.subr.mxu0 0.0
        %5073 = vmatpush1.msra.mxu0 0.0
        %5074 = vmatprep.subr.mxu0 0.0
        %5075 = vmatpush1.msra.mxu0 0.0
        %5076 = vmatprep.subr.mxu0 0.0
        %5077 = vmatpush1.msra.mxu0 0.0
        %5078 = vmatprep.mubr.f32.mxu0 0.0
        %5079 = vmatmul.mubr.f32.gmra.mrb[0].mxu0 %v5004
        %v5080 = vpop.f32.mrb[0].mxu0
        %v5081 = vadd.f32 0.0, %v5080
        %v5082 = vpop.f32.mrb[0].mxu0
        %5083 = vmatprep.mubr.f32.mxu0 0.0
        %5084 = vmatmul.mubr.f32.gmra.mrb[0].mxu0 %v5006
        %v5085 = vpop.f32.mrb[0].mxu0
        %v5086 = vadd.f32 0.0, %v5085
        %v5087 = vpop.f32.mrb[0].mxu0
        %5088 = vmatprep.mubr.f32.mxu0 0.0
        %5089 = vmatmul.mubr.f32.gmra.mrb[0].mxu0 %v5009
        %v5090 = vpop.f32.mrb[0].mxu0
        %v5091 = vadd.f32 0.0, %v5090
        %v5092 = vpop.f32.mrb[0].mxu0
        %5093 = vmatprep.mubr.f32.mxu0 0.0
        %5094 = vmatmul.mubr.f32.gmra.mrb[0].mxu0 %v5012
        %v5095 = vpop.f32.mrb[0].mxu0
        %v5096 = vadd.f32 0.0, %v5095
        %v5097 = vpop.f32.mrb[0].mxu0
        %5098 = vdwg.mxu0
        %v5099 = vpack.c.bf16 %v5086, %v5081
        %v5100 = vpack.c.bf16 %v5096, %v5091
        %v5101 = vld [vmem:[%s17] sm:$0xf]
        %v5102 = vld [vmem:[%s17 + $0x4] sm:$0xf]
        %v5103 = vld [vmem:[%s17 + $0x8] sm:$0xf]
        %v5104 = vld [vmem:[%s17 + $0xc] sm:$0xf]
        %v5105 = vsel %vm1406, %v3184, 0
        %v5107 = vsel %vm1406, %v4494, 0
        %v5110 = vsel %vm1406, %v4996, 0
        %v5113 = vsel %vm1406, %v4997, 0
        %5115 = vmatprep.subr.mxu0 0.0
        %5116 = vmatpush1.msra.mxu0 %v4986
        %5117 = vmatprep.subr.mxu0 0.0
        %5118 = vmatpush1.msra.mxu0 %v4987
        %5119 = vmatprep.subr.mxu0 0.0
        %5120 = vmatpush1.msra.mxu0 0.0
        %5121 = vmatprep.subr.mxu0 0.0
        %5122 = vmatpush1.msra.mxu0 0.0
        %5123 = vmatprep.subr.mxu0 0.0
        %5124 = vmatpush1.msra.mxu0 0.0
        %5125 = vmatprep.subr.mxu0 0.0
        %5126 = vmatpush1.msra.mxu0 0.0
        %5127 = vmatprep.subr.mxu0 0.0
        %5128 = vmatpush1.msra.mxu0 0.0
        %5129 = vmatprep.subr.mxu0 0.0
        %5130 = vmatpush1.msra.mxu0 0.0
        %5131 = vmatprep.subr.mxu0 0.0
        %5132 = vmatpush1.msra.mxu0 0.0
        %5133 = vmatprep.subr.mxu0 0.0
        %5134 = vmatpush1.msra.mxu0 0.0
        %5135 = vmatprep.subr.mxu0 0.0
        %5136 = vmatpush1.msra.mxu0 0.0
        %5137 = vmatprep.subr.mxu0 0.0
        %5138 = vmatpush1.msra.mxu0 0.0
        %5139 = vmatprep.subr.mxu0 0.0
        %5140 = vmatpush1.msra.mxu0 0.0
        %5141 = vmatprep.subr.mxu0 0.0
        %5142 = vmatpush1.msra.mxu0 0.0
        %5143 = vmatprep.subr.mxu0 0.0
        %5144 = vmatpush1.msra.mxu0 0.0
        %5145 = vmatprep.subr.mxu0 0.0
        %5146 = vmatpush1.msra.mxu0 0.0
        %5147 = vmatprep.subr.mxu0 0.0
        %5148 = vmatpush1.msra.mxu0 0.0
        %5149 = vmatprep.subr.mxu0 0.0
        %5150 = vmatpush1.msra.mxu0 0.0
        %5151 = vmatprep.subr.mxu0 0.0
        %5152 = vmatpush1.msra.mxu0 0.0
        %5153 = vmatprep.subr.mxu0 0.0
        %5154 = vmatpush1.msra.mxu0 0.0
        %5155 = vmatprep.subr.mxu0 0.0
        %5156 = vmatpush1.msra.mxu0 0.0
        %5157 = vmatprep.subr.mxu0 0.0
        %5158 = vmatpush1.msra.mxu0 0.0
        %5159 = vmatprep.subr.mxu0 0.0
        %5160 = vmatpush1.msra.mxu0 0.0
        %5161 = vmatprep.subr.mxu0 0.0
        %5162 = vmatpush1.msra.mxu0 0.0
        %5163 = vmatprep.subr.mxu0 0.0
        %5164 = vmatpush1.msra.mxu0 0.0
        %5165 = vmatprep.subr.mxu0 0.0
        %5166 = vmatpush1.msra.mxu0 0.0
        %5167 = vmatprep.subr.mxu0 0.0
        %5168 = vmatpush1.msra.mxu0 0.0
        %5169 = vmatprep.subr.mxu0 0.0
        %5170 = vmatpush1.msra.mxu0 0.0
        %5171 = vmatprep.subr.mxu0 0.0
        %5172 = vmatpush1.msra.mxu0 0.0
        %5173 = vmatprep.subr.mxu0 0.0
        %5174 = vmatpush1.msra.mxu0 0.0
        %5175 = vmatprep.subr.mxu0 0.0
        %5176 = vmatpush1.msra.mxu0 0.0
        %5177 = vmatprep.subr.mxu0 0.0
        %5178 = vmatpush1.msra.mxu0 0.0
        %5179 = vmatprep.mubr.f32.mxu0 0.0
        %5180 = vmatmul.mubr.f32.gmra.mrb[0].mxu0 %v5105
        %v5181 = vpop.f32.mrb[0].mxu0
        %v5182 = vadd.f32 0.0, %v5181
        %v5183 = vpop.f32.mrb[0].mxu0
        %5184 = vmatprep.mubr.f32.mxu0 0.0
        %5185 = vmatmul.mubr.f32.gmra.mrb[0].mxu0 %v5107
        %v5186 = vpop.f32.mrb[0].mxu0
        %v5187 = vadd.f32 0.0, %v5186
        %v5188 = vpop.f32.mrb[0].mxu0
        %5189 = vmatprep.mubr.f32.mxu0 0.0
        %5190 = vmatmul.mubr.f32.gmra.mrb[0].mxu0 %v5110
        %v5191 = vpop.f32.mrb[0].mxu0
        %v5192 = vadd.f32 0.0, %v5191
        %v5193 = vpop.f32.mrb[0].mxu0
        %5194 = vmatprep.mubr.f32.mxu0 0.0
        %5195 = vmatmul.mubr.f32.gmra.mrb[0].mxu0 %v5113
        %v5196 = vpop.f32.mrb[0].mxu0
        %v5197 = vadd.f32 0.0, %v5196
        %v5198 = vpop.f32.mrb[0].mxu0
        %5199 = vdwg.mxu0
        %v5200 = vpack.c.bf16 %v5187, %v5182
        %v5201 = vpack.c.bf16 %v5197, %v5192
        %s5202 = scalar_lea.vmem %s17, 16
        %v5203 = vld [vmem:[%s5202] sm:$0xf]
        %v5204 = vld [vmem:[%s5202 + $0x4] sm:$0xf]
        %v5205 = vld [vmem:[%s5202 + $0x8] sm:$0xf]
        %v5206 = vld [vmem:[%s5202 + $0xc] sm:$0xf]
        %v5211 = vunpack.c.l.b16 %v5203
        %v5212 = vunpack.c.l.b16 %v5204
        %v5213 = vunpack.c.l.b16 %v5205
        %v5214 = vunpack.c.l.b16 %v5206
        %v5215 = vpack.c.b16 %v5212, %v5211
        %v5216 = vpack.c.b16 %v5214, %v5213
        %v5220 = vsel %vm1234, %v5200, 0
        %v5223 = vsel %vm1234, %v5201, 0
        %5225 = vmatprep.subr.bf16.mxu0 0
        %5226 = vmatpush1.bf16.msra.mxu0 %v5215
        %5227 = vmatprep.subr.bf16.mxu0 0
        %5228 = vmatpush1.bf16.msra.mxu0 %v5216
        %5229 = vmatprep.subr.bf16.mxu0 0
        %5230 = vmatpush1.bf16.msra.mxu0 0
        %5231 = vmatprep.subr.bf16.mxu0 0
        %5232 = vmatpush1.bf16.msra.mxu0 0
        %5233 = vmatprep.subr.bf16.mxu0 0
        %5234 = vmatpush1.bf16.msra.mxu0 0
        %5235 = vmatprep.subr.bf16.mxu0 0
        %5236 = vmatpush1.bf16.msra.mxu0 0
        %5237 = vmatprep.subr.bf16.mxu0 0
        %5238 = vmatpush1.bf16.msra.mxu0 0
        %5239 = vmatprep.subr.bf16.mxu0 0
        %5240 = vmatpush1.bf16.msra.mxu0 0
        %5241 = vmatprep.subr.bf16.mxu0 0
        %5242 = vmatpush1.bf16.msra.mxu0 0
        %5243 = vmatprep.subr.bf16.mxu0 0
        %5244 = vmatpush1.bf16.msra.mxu0 0
        %5245 = vmatprep.subr.bf16.mxu0 0
        %5246 = vmatpush1.bf16.msra.mxu0 0
        %5247 = vmatprep.subr.bf16.mxu0 0
        %5248 = vmatpush1.bf16.msra.mxu0 0
        %5249 = vmatprep.subr.bf16.mxu0 0
        %5250 = vmatpush1.bf16.msra.mxu0 0
        %5251 = vmatprep.subr.bf16.mxu0 0
        %5252 = vmatpush1.bf16.msra.mxu0 0
        %5253 = vmatprep.subr.bf16.mxu0 0
        %5254 = vmatpush1.bf16.msra.mxu0 0
        %5255 = vmatprep.subr.bf16.mxu0 0
        %5256 = vmatpush1.bf16.msra.mxu0 0
        %5257 = vmatprep.mubr.bf16.mxu0 0
        %5258 = vmatmul.mubr.bf16.gmra.mrb[0].mxu0 %v5220
        %v5259 = vpop.f32.mrb[0].mxu0
        %v5260 = vadd.f32 0.0, %v5259
        %v5261 = vpop.f32.mrb[0].mxu0
        %v5262 = vpop.f32.mrb[0].mxu0
        %v5263 = vadd.f32 0.0, %v5262
        %v5264 = vpop.f32.mrb[0].mxu0
        %5265 = vmatprep.mubr.bf16.mxu0 0
        %5266 = vmatmul.mubr.bf16.gmra.mrb[0].mxu0 %v5223
        %v5267 = vpop.f32.mrb[0].mxu0
        %v5268 = vadd.f32 0.0, %v5267
        %v5269 = vpop.f32.mrb[0].mxu0
        %v5270 = vpop.f32.mrb[0].mxu0
        %v5271 = vadd.f32 0.0, %v5270
        %v5272 = vpop.f32.mrb[0].mxu0
        %5273 = vdwg.mxu0
        %v5278 = vunpack.c.l.b16 %v5101
        %v5279 = vunpack.c.l.b16 %v5102
        %v5280 = vunpack.c.l.b16 %v5103
        %v5281 = vunpack.c.l.b16 %v5104
        %v5282 = vpack.c.b16 %v5279, %v5278
        %v5283 = vpack.c.b16 %v5281, %v5280
        %v5287 = vsel %vm1234, %v5099, 0
        %v5290 = vsel %vm1234, %v5100, 0
        %5292 = vmatprep.subr.bf16.mxu0 0
        %5293 = vmatpush1.bf16.msra.mxu0 %v5282
        %5294 = vmatprep.subr.bf16.mxu0 0
        %5295 = vmatpush1.bf16.msra.mxu0 %v5283
        %5296 = vmatprep.subr.bf16.mxu0 0
        %5297 = vmatpush1.bf16.msra.mxu0 0
        %5298 = vmatprep.subr.bf16.mxu0 0
        %5299 = vmatpush1.bf16.msra.mxu0 0
        %5300 = vmatprep.subr.bf16.mxu0 0
        %5301 = vmatpush1.bf16.msra.mxu0 0
        %5302 = vmatprep.subr.bf16.mxu0 0
        %5303 = vmatpush1.bf16.msra.mxu0 0
        %5304 = vmatprep.subr.bf16.mxu0 0
        %5305 = vmatpush1.bf16.msra.mxu0 0
        %5306 = vmatprep.subr.bf16.mxu0 0
        %5307 = vmatpush1.bf16.msra.mxu0 0
        %5308 = vmatprep.subr.bf16.mxu0 0
        %5309 = vmatpush1.bf16.msra.mxu0 0
        %5310 = vmatprep.subr.bf16.mxu0 0
        %5311 = vmatpush1.bf16.msra.mxu0 0
        %5312 = vmatprep.subr.bf16.mxu0 0
        %5313 = vmatpush1.bf16.msra.mxu0 0
        %5314 = vmatprep.subr.bf16.mxu0 0
        %5315 = vmatpush1.bf16.msra.mxu0 0
        %5316 = vmatprep.subr.bf16.mxu0 0
        %5317 = vmatpush1.bf16.msra.mxu0 0
        %5318 = vmatprep.subr.bf16.mxu0 0
        %5319 = vmatpush1.bf16.msra.mxu0 0
        %5320 = vmatprep.subr.bf16.mxu0 0
        %5321 = vmatpush1.bf16.msra.mxu0 0
        %5322 = vmatprep.subr.bf16.mxu0 0
        %5323 = vmatpush1.bf16.msra.mxu0 0
        %5324 = vmatprep.mubr.bf16.mxu0 0
        %5325 = vmatmul.mubr.bf16.gmra.mrb[0].mxu0 %v5287
        %v5326 = vpop.f32.mrb[0].mxu0
        %v5327 = vadd.f32 %v5260, %v5326
        %v5328 = vpop.f32.mrb[0].mxu0
        %v5329 = vpop.f32.mrb[0].mxu0
        %v5330 = vadd.f32 %v5263, %v5329
        %v5331 = vpop.f32.mrb[0].mxu0
        %5332 = vmatprep.mubr.bf16.mxu0 0
        %5333 = vmatmul.mubr.bf16.gmra.mrb[0].mxu0 %v5290
        %v5334 = vpop.f32.mrb[0].mxu0
        %v5335 = vadd.f32 %v5268, %v5334
        %v5336 = vpop.f32.mrb[0].mxu0
        %v5337 = vpop.f32.mrb[0].mxu0
        %v5338 = vadd.f32 %v5271, %v5337
        %v5339 = vpop.f32.mrb[0].mxu0
        %5340 = vdwg.mxu0
        %v5341 = vsel %vm1406, %v3187, 0
        %v5343 = vsel %vm1406, %v4497, 0
        %v5346 = vsel %vm1406, %v5002, 0
        %v5349 = vsel %vm1406, %v5003, 0
        %5351 = vmatprep.subr.mxu0 0.0
        %5352 = vmatpush1.msra.mxu0 %v4986
        %5353 = vmatprep.subr.mxu0 0.0
        %5354 = vmatpush1.msra.mxu0 %v4987
        %5355 = vmatprep.subr.mxu0 0.0
        %5356 = vmatpush1.msra.mxu0 0.0
        %5357 = vmatprep.subr.mxu0 0.0
        %5358 = vmatpush1.msra.mxu0 0.0
        %5359 = vmatprep.subr.mxu0 0.0
        %5360 = vmatpush1.msra.mxu0 0.0
        %5361 = vmatprep.subr.mxu0 0.0
        %5362 = vmatpush1.msra.mxu0 0.0
        %5363 = vmatprep.subr.mxu0 0.0
        %5364 = vmatpush1.msra.mxu0 0.0
        %5365 = vmatprep.subr.mxu0 0.0
        %5366 = vmatpush1.msra.mxu0 0.0
        %5367 = vmatprep.subr.mxu0 0.0
        %5368 = vmatpush1.msra.mxu0 0.0
        %5369 = vmatprep.subr.mxu0 0.0
        %5370 = vmatpush1.msra.mxu0 0.0
        %5371 = vmatprep.subr.mxu0 0.0
        %5372 = vmatpush1.msra.mxu0 0.0
        %5373 = vmatprep.subr.mxu0 0.0
        %5374 = vmatpush1.msra.mxu0 0.0
        %5375 = vmatprep.subr.mxu0 0.0
        %5376 = vmatpush1.msra.mxu0 0.0
        %5377 = vmatprep.subr.mxu0 0.0
        %5378 = vmatpush1.msra.mxu0 0.0
        %5379 = vmatprep.subr.mxu0 0.0
        %5380 = vmatpush1.msra.mxu0 0.0
        %5381 = vmatprep.subr.mxu0 0.0
        %5382 = vmatpush1.msra.mxu0 0.0
        %5383 = vmatprep.subr.mxu0 0.0
        %5384 = vmatpush1.msra.mxu0 0.0
        %5385 = vmatprep.subr.mxu0 0.0
        %5386 = vmatpush1.msra.mxu0 0.0
        %5387 = vmatprep.subr.mxu0 0.0
        %5388 = vmatpush1.msra.mxu0 0.0
        %5389 = vmatprep.subr.mxu0 0.0
        %5390 = vmatpush1.msra.mxu0 0.0
        %5391 = vmatprep.subr.mxu0 0.0
        %5392 = vmatpush1.msra.mxu0 0.0
        %5393 = vmatprep.subr.mxu0 0.0
        %5394 = vmatpush1.msra.mxu0 0.0
        %5395 = vmatprep.subr.mxu0 0.0
        %5396 = vmatpush1.msra.mxu0 0.0
        %5397 = vmatprep.subr.mxu0 0.0
        %5398 = vmatpush1.msra.mxu0 0.0
        %5399 = vmatprep.subr.mxu0 0.0
        %5400 = vmatpush1.msra.mxu0 0.0
        %5401 = vmatprep.subr.mxu0 0.0
        %5402 = vmatpush1.msra.mxu0 0.0
        %5403 = vmatprep.subr.mxu0 0.0
        %5404 = vmatpush1.msra.mxu0 0.0
        %5405 = vmatprep.subr.mxu0 0.0
        %5406 = vmatpush1.msra.mxu0 0.0
        %5407 = vmatprep.subr.mxu0 0.0
        %5408 = vmatpush1.msra.mxu0 0.0
        %5409 = vmatprep.subr.mxu0 0.0
        %5410 = vmatpush1.msra.mxu0 0.0
        %5411 = vmatprep.subr.mxu0 0.0
        %5412 = vmatpush1.msra.mxu0 0.0
        %5413 = vmatprep.subr.mxu0 0.0
        %5414 = vmatpush1.msra.mxu0 0.0
        %5415 = vmatprep.mubr.f32.mxu0 0.0
        %5416 = vmatmul.mubr.f32.gmra.mrb[0].mxu0 %v5341
        %v5417 = vpop.f32.mrb[0].mxu0
        %v5418 = vadd.f32 0.0, %v5417
        %v5419 = vpop.f32.mrb[0].mxu0
        %5420 = vmatprep.mubr.f32.mxu0 0.0
        %5421 = vmatmul.mubr.f32.gmra.mrb[0].mxu0 %v5343
        %v5422 = vpop.f32.mrb[0].mxu0
        %v5423 = vadd.f32 0.0, %v5422
        %v5424 = vpop.f32.mrb[0].mxu0
        %5425 = vmatprep.mubr.f32.mxu0 0.0
        %5426 = vmatmul.mubr.f32.gmra.mrb[0].mxu0 %v5346
        %v5427 = vpop.f32.mrb[0].mxu0
        %v5428 = vadd.f32 0.0, %v5427
        %v5429 = vpop.f32.mrb[0].mxu0
        %5430 = vmatprep.mubr.f32.mxu0 0.0
        %5431 = vmatmul.mubr.f32.gmra.mrb[0].mxu0 %v5349
        %v5432 = vpop.f32.mrb[0].mxu0
        %v5433 = vadd.f32 0.0, %v5432
        %v5434 = vpop.f32.mrb[0].mxu0
        %5435 = vdwg.mxu0
        %v5436 = vpack.c.bf16 %v5423, %v5418
        %v5437 = vpack.c.bf16 %v5433, %v5428
        %s5438 = scalar_lea.vmem %s17, 32
        %v5439 = vld [vmem:[%s5438] sm:$0xf]
        %v5440 = vld [vmem:[%s5438 + $0x4] sm:$0xf]
        %v5441 = vld [vmem:[%s5438 + $0x8] sm:$0xf]
        %v5442 = vld [vmem:[%s5438 + $0xc] sm:$0xf]
        %v5447 = vunpack.c.l.b16 %v5439
        %v5448 = vunpack.c.l.b16 %v5440
        %v5449 = vunpack.c.l.b16 %v5441
        %v5450 = vunpack.c.l.b16 %v5442
        %v5451 = vpack.c.b16 %v5448, %v5447
        %v5452 = vpack.c.b16 %v5450, %v5449
        %v5456 = vsel %vm1234, %v5436, 0
        %v5459 = vsel %vm1234, %v5437, 0
        %5461 = vmatprep.subr.bf16.mxu0 0
        %5462 = vmatpush1.bf16.msra.mxu0 %v5451
        %5463 = vmatprep.subr.bf16.mxu0 0
        %5464 = vmatpush1.bf16.msra.mxu0 %v5452
        %5465 = vmatprep.subr.bf16.mxu0 0
        %5466 = vmatpush1.bf16.msra.mxu0 0
        %5467 = vmatprep.subr.bf16.mxu0 0
        %5468 = vmatpush1.bf16.msra.mxu0 0
        %5469 = vmatprep.subr.bf16.mxu0 0
        %5470 = vmatpush1.bf16.msra.mxu0 0
        %5471 = vmatprep.subr.bf16.mxu0 0
        %5472 = vmatpush1.bf16.msra.mxu0 0
        %5473 = vmatprep.subr.bf16.mxu0 0
        %5474 = vmatpush1.bf16.msra.mxu0 0
        %5475 = vmatprep.subr.bf16.mxu0 0
        %5476 = vmatpush1.bf16.msra.mxu0 0
        %5477 = vmatprep.subr.bf16.mxu0 0
        %5478 = vmatpush1.bf16.msra.mxu0 0
        %5479 = vmatprep.subr.bf16.mxu0 0
        %5480 = vmatpush1.bf16.msra.mxu0 0
        %5481 = vmatprep.subr.bf16.mxu0 0
        %5482 = vmatpush1.bf16.msra.mxu0 0
        %5483 = vmatprep.subr.bf16.mxu0 0
        %5484 = vmatpush1.bf16.msra.mxu0 0
        %5485 = vmatprep.subr.bf16.mxu0 0
        %5486 = vmatpush1.bf16.msra.mxu0 0
        %5487 = vmatprep.subr.bf16.mxu0 0
        %5488 = vmatpush1.bf16.msra.mxu0 0
        %5489 = vmatprep.subr.bf16.mxu0 0
        %5490 = vmatpush1.bf16.msra.mxu0 0
        %5491 = vmatprep.subr.bf16.mxu0 0
        %5492 = vmatpush1.bf16.msra.mxu0 0
        %5493 = vmatprep.mubr.bf16.mxu0 0
        %5494 = vmatmul.mubr.bf16.gmra.mrb[0].mxu0 %v5456
        %v5495 = vpop.f32.mrb[0].mxu0
        %v5496 = vadd.f32 0.0, %v5495
        %v5497 = vpop.f32.mrb[0].mxu0
        %v5498 = vpop.f32.mrb[0].mxu0
        %v5499 = vadd.f32 0.0, %v5498
        %v5500 = vpop.f32.mrb[0].mxu0
        %5501 = vmatprep.mubr.bf16.mxu0 0
        %5502 = vmatmul.mubr.bf16.gmra.mrb[0].mxu0 %v5459
        %v5503 = vpop.f32.mrb[0].mxu0
        %v5504 = vadd.f32 0.0, %v5503
        %v5505 = vpop.f32.mrb[0].mxu0
        %v5506 = vpop.f32.mrb[0].mxu0
        %v5507 = vadd.f32 0.0, %v5506
        %v5508 = vpop.f32.mrb[0].mxu0
        %5509 = vdwg.mxu0
        %v5510 = vadd.f32 %v5327, %v5496
        %v5511 = vadd.f32 %v5330, %v5499
        %v5512 = vadd.f32 %v5335, %v5504
        %v5513 = vadd.f32 %v5338, %v5507
        %v5514 = vld [vmem:[%s18] sm:$0x1]
        %v5516 = vlaneseq
        %v5517 = vshrl.u32 %v5516, 7
        %v5518 = vsub.s32 0, %v5517
        %v5519 = vrot.slane %v5514, %v5518
        %v5521 = vadd.f32 %v5510, %v5519
        %v5522 = vadd.f32 %v5511, %v5519
        %v5523 = vadd.f32 %v5512, %v5519
        %v5524 = vadd.f32 %v5513, %v5519
        %vm5525 = vcmp.ge.f32.partialorder %v5521, 0.0
        %vm5526 = vcmp.ge.f32.partialorder %v5522, 0.0
        %vm5527 = vcmp.ge.f32.partialorder %v5523, 0.0
        %vm5528 = vcmp.ge.f32.partialorder %v5524, 0.0
        %v5529 = vmul.f32 %v5521, 0.1
        %v5530 = vmul.f32 %v5522, 0.1
        %v5531 = vmul.f32 %v5523, 0.1
        %v5532 = vmul.f32 %v5524, 0.1
        %v5533 = vsel %vm5525, %v5521, %v5529
        %v5534 = vsel %vm5526, %v5522, %v5530
        %v5535 = vsel %vm5527, %v5523, %v5531
        %v5536 = vsel %vm5528, %v5524, %v5532
        %v5537 = vadd.s32 %v684, 32
        %v5538 = vadd.s32 %v684, 40
        %v5539 = vadd.s32 %v684, 48
        %v5540 = vadd.s32 %v684, 56
        %v5541 = vadd.s32 %v5537, 1
        %v5542 = vadd.s32 %v5538, 1
        %v5543 = vadd.s32 %v5539, 1
        %v5544 = vadd.s32 %v5540, 1
        %vm5545 = vcmp.eq.s32.totalorder %v3179, %v5541
        %vm5546 = vcmp.eq.s32.totalorder %v3179, %v5542
        %vm5547 = vcmp.eq.s32.totalorder %v3179, %v5543
        %vm5548 = vcmp.eq.s32.totalorder %v3179, %v5544
        %v5549 = vsel %vm5545, 1.0, 0.0
        %v5550 = vsel %vm5546, 1.0, 0.0
        %v5551 = vsel %vm5547, 1.0, 0.0
        %v5552 = vsel %vm5548, 1.0, 0.0
        %vm5553 = vcmp.eq.s32.totalorder %v3179, %v5537
        %vm5554 = vcmp.eq.s32.totalorder %v3179, %v5538
        %vm5555 = vcmp.eq.s32.totalorder %v3179, %v5539
        %vm5556 = vcmp.eq.s32.totalorder %v3179, %v5540
        %v5557 = vsel %vm5553, 1.0, 0.0
        %v5558 = vsel %vm5554, 1.0, 0.0
        %v5559 = vsel %vm5555, 1.0, 0.0
        %v5560 = vsel %vm5556, 1.0, 0.0
        %v5561 = vadd.s32 %v5537, 4294967295
        %v5562 = vadd.s32 %v5538, 4294967295
        %v5563 = vadd.s32 %v5539, 4294967295
        %v5564 = vadd.s32 %v5540, 4294967295
        %vm5565 = vcmp.eq.s32.totalorder %v3179, %v5561
        %vm5566 = vcmp.eq.s32.totalorder %v3179, %v5562
        %vm5567 = vcmp.eq.s32.totalorder %v3179, %v5563
        %vm5568 = vcmp.eq.s32.totalorder %v3179, %v5564
        %v5569 = vsel %vm5565, 1.0, 0.0
        %v5570 = vsel %vm5566, 1.0, 0.0
        %v5571 = vsel %vm5567, 1.0, 0.0
        %v5572 = vsel %vm5568, 1.0, 0.0
        %v5573 = vsel %vm1234, %v3182, 0
        %v5575 = vsel %vm1234, %v4492, 0
        %v5577 = vsel %vm1234, %v4992, 0
        %v5579 = vsel %vm1234, %v4993, 0
        %v5582 = vsel %vm1234, %v5549, 0
        %v5585 = vsel %vm1234, %v5550, 0
        %v5588 = vsel %vm1234, %v5551, 0
        %v5591 = vsel %vm1234, %v5552, 0
        %5593 = vmatprep.subr.mxu0 0.0
        %5594 = vmatpush1.msra.mxu0 %v5533
        %5595 = vmatprep.subr.mxu0 0.0
        %5596 = vmatpush1.msra.mxu0 %v5534
        %5597 = vmatprep.subr.mxu0 0.0
        %5598 = vmatpush1.msra.mxu0 %v5535
        %5599 = vmatprep.subr.mxu0 0.0
        %5600 = vmatpush1.msra.mxu0 %v5536
        %5601 = vmatprep.subr.mxu0 0.0
        %5602 = vmatpush1.msra.mxu0 0.0
        %5603 = vmatprep.subr.mxu0 0.0
        %5604 = vmatpush1.msra.mxu0 0.0
        %5605 = vmatprep.subr.mxu0 0.0
        %5606 = vmatpush1.msra.mxu0 0.0
        %5607 = vmatprep.subr.mxu0 0.0
        %5608 = vmatpush1.msra.mxu0 0.0
        %5609 = vmatprep.subr.mxu0 0.0
        %5610 = vmatpush1.msra.mxu0 0.0
        %5611 = vmatprep.subr.mxu0 0.0
        %5612 = vmatpush1.msra.mxu0 0.0
        %5613 = vmatprep.subr.mxu0 0.0
        %5614 = vmatpush1.msra.mxu0 0.0
        %5615 = vmatprep.subr.mxu0 0.0
        %5616 = vmatpush1.msra.mxu0 0.0
        %5617 = vmatprep.subr.mxu0 0.0
        %5618 = vmatpush1.msra.mxu0 0.0
        %5619 = vmatprep.subr.mxu0 0.0
        %5620 = vmatpush1.msra.mxu0 0.0
        %5621 = vmatprep.subr.mxu0 0.0
        %5622 = vmatpush1.msra.mxu0 0.0
        %5623 = vmatprep.subr.mxu0 0.0
        %5624 = vmatpush1.msra.mxu0 0.0
        %5625 = vmatprep.subr.mxu0 0.0
        %5626 = vmatpush1.msra.mxu0 0.0
        %5627 = vmatprep.subr.mxu0 0.0
        %5628 = vmatpush1.msra.mxu0 0.0
        %5629 = vmatprep.subr.mxu0 0.0
        %5630 = vmatpush1.msra.mxu0 0.0
        %5631 = vmatprep.subr.mxu0 0.0
        %5632 = vmatpush1.msra.mxu0 0.0
        %5633 = vmatprep.subr.mxu0 0.0
        %5634 = vmatpush1.msra.mxu0 0.0
        %5635 = vmatprep.subr.mxu0 0.0
        %5636 = vmatpush1.msra.mxu0 0.0
        %5637 = vmatprep.subr.mxu0 0.0
        %5638 = vmatpush1.msra.mxu0 0.0
        %5639 = vmatprep.subr.mxu0 0.0
        %5640 = vmatpush1.msra.mxu0 0.0
        %5641 = vmatprep.subr.mxu0 0.0
        %5642 = vmatpush1.msra.mxu0 0.0
        %5643 = vmatprep.subr.mxu0 0.0
        %5644 = vmatpush1.msra.mxu0 0.0
        %5645 = vmatprep.subr.mxu0 0.0
        %5646 = vmatpush1.msra.mxu0 0.0
        %5647 = vmatprep.subr.mxu0 0.0
        %5648 = vmatpush1.msra.mxu0 0.0
        %5649 = vmatprep.subr.mxu0 0.0
        %5650 = vmatpush1.msra.mxu0 0.0
        %5651 = vmatprep.subr.mxu0 0.0
        %5652 = vmatpush1.msra.mxu0 0.0
        %5653 = vmatprep.subr.mxu0 0.0
        %5654 = vmatpush1.msra.mxu0 0.0
        %5655 = vmatprep.subr.mxu0 0.0
        %5656 = vmatpush1.msra.mxu0 0.0
        %5657 = vmatprep.mubr.f32.mxu0 0.0
        %5658 = vmatmul.mubr.f32.gmra.mrb[0].mxu0 %v5573
        %v5659 = vpop.f32.mrb[0].mxu0
        %v5660 = vadd.f32 0.0, %v5659
        %v5661 = vpop.f32.mrb[0].mxu0
        %5662 = vmatprep.mubr.f32.mxu0 0.0
        %5663 = vmatmul.mubr.f32.gmra.mrb[0].mxu0 %v5575
        %v5664 = vpop.f32.mrb[0].mxu0
        %v5665 = vadd.f32 0.0, %v5664
        %v5666 = vpop.f32.mrb[0].mxu0
        %5667 = vmatprep.mubr.f32.mxu0 0.0
        %5668 = vmatmul.mubr.f32.gmra.mrb[0].mxu0 %v5577
        %v5669 = vpop.f32.mrb[0].mxu0
        %v5670 = vadd.f32 0.0, %v5669
        %v5671 = vpop.f32.mrb[0].mxu0
        %5672 = vmatprep.mubr.f32.mxu0 0.0
        %5673 = vmatmul.mubr.f32.gmra.mrb[0].mxu0 %v5579
        %v5674 = vpop.f32.mrb[0].mxu0
        %v5675 = vadd.f32 0.0, %v5674
        %v5676 = vpop.f32.mrb[0].mxu0
        %5677 = vmatprep.mubr.f32.mxu0 0.0
        %5678 = vmatmul.mubr.f32.gmra.mrb[0].mxu0 %v5582
        %v5679 = vpop.f32.mrb[0].mxu0
        %v5680 = vadd.f32 0.0, %v5679
        %v5681 = vpop.f32.mrb[0].mxu0
        %5682 = vmatprep.mubr.f32.mxu0 0.0
        %5683 = vmatmul.mubr.f32.gmra.mrb[0].mxu0 %v5585
        %v5684 = vpop.f32.mrb[0].mxu0
        %v5685 = vadd.f32 0.0, %v5684
        %v5686 = vpop.f32.mrb[0].mxu0
        %5687 = vmatprep.mubr.f32.mxu0 0.0
        %5688 = vmatmul.mubr.f32.gmra.mrb[0].mxu0 %v5588
        %v5689 = vpop.f32.mrb[0].mxu0
        %v5690 = vadd.f32 0.0, %v5689
        %v5691 = vpop.f32.mrb[0].mxu0
        %5692 = vmatprep.mubr.f32.mxu0 0.0
        %5693 = vmatmul.mubr.f32.gmra.mrb[0].mxu0 %v5591
        %v5694 = vpop.f32.mrb[0].mxu0
        %v5695 = vadd.f32 0.0, %v5694
        %v5696 = vpop.f32.mrb[0].mxu0
        %5697 = vdwg.mxu0
        %v5698 = vpack.c.bf16 %v5665, %v5660
        %v5699 = vpack.c.bf16 %v5675, %v5670
        %v5700 = vpack.c.bf16 %v5685, %v5680
        %v5701 = vpack.c.bf16 %v5695, %v5690
        %v5702 = vld [vmem:[%s19] sm:$0xf]
        %v5703 = vld [vmem:[%s19 + $0x4] sm:$0xf]
        %v5704 = vsel %vm1234, %v3184, 0
        %v5706 = vsel %vm1234, %v4494, 0
        %v5708 = vsel %vm1234, %v4996, 0
        %v5710 = vsel %vm1234, %v4997, 0
        %v5713 = vsel %vm1234, %v5557, 0
        %v5716 = vsel %vm1234, %v5558, 0
        %v5719 = vsel %vm1234, %v5559, 0
        %v5722 = vsel %vm1234, %v5560, 0
        %5724 = vmatprep.subr.mxu0 0.0
        %5725 = vmatpush1.msra.mxu0 %v5533
        %5726 = vmatprep.subr.mxu0 0.0
        %5727 = vmatpush1.msra.mxu0 %v5534
        %5728 = vmatprep.subr.mxu0 0.0
        %5729 = vmatpush1.msra.mxu0 %v5535
        %5730 = vmatprep.subr.mxu0 0.0
        %5731 = vmatpush1.msra.mxu0 %v5536
        %5732 = vmatprep.subr.mxu0 0.0
        %5733 = vmatpush1.msra.mxu0 0.0
        %5734 = vmatprep.subr.mxu0 0.0
        %5735 = vmatpush1.msra.mxu0 0.0
        %5736 = vmatprep.subr.mxu0 0.0
        %5737 = vmatpush1.msra.mxu0 0.0
        %5738 = vmatprep.subr.mxu0 0.0
        %5739 = vmatpush1.msra.mxu0 0.0
        %5740 = vmatprep.subr.mxu0 0.0
        %5741 = vmatpush1.msra.mxu0 0.0
        %5742 = vmatprep.subr.mxu0 0.0
        %5743 = vmatpush1.msra.mxu0 0.0
        %5744 = vmatprep.subr.mxu0 0.0
        %5745 = vmatpush1.msra.mxu0 0.0
        %5746 = vmatprep.subr.mxu0 0.0
        %5747 = vmatpush1.msra.mxu0 0.0
        %5748 = vmatprep.subr.mxu0 0.0
        %5749 = vmatpush1.msra.mxu0 0.0
        %5750 = vmatprep.subr.mxu0 0.0
        %5751 = vmatpush1.msra.mxu0 0.0
        %5752 = vmatprep.subr.mxu0 0.0
        %5753 = vmatpush1.msra.mxu0 0.0
        %5754 = vmatprep.subr.mxu0 0.0
        %5755 = vmatpush1.msra.mxu0 0.0
        %5756 = vmatprep.subr.mxu0 0.0
        %5757 = vmatpush1.msra.mxu0 0.0
        %5758 = vmatprep.subr.mxu0 0.0
        %5759 = vmatpush1.msra.mxu0 0.0
        %5760 = vmatprep.subr.mxu0 0.0
        %5761 = vmatpush1.msra.mxu0 0.0
        %5762 = vmatprep.subr.mxu0 0.0
        %5763 = vmatpush1.msra.mxu0 0.0
        %5764 = vmatprep.subr.mxu0 0.0
        %5765 = vmatpush1.msra.mxu0 0.0
        %5766 = vmatprep.subr.mxu0 0.0
        %5767 = vmatpush1.msra.mxu0 0.0
        %5768 = vmatprep.subr.mxu0 0.0
        %5769 = vmatpush1.msra.mxu0 0.0
        %5770 = vmatprep.subr.mxu0 0.0
        %5771 = vmatpush1.msra.mxu0 0.0
        %5772 = vmatprep.subr.mxu0 0.0
        %5773 = vmatpush1.msra.mxu0 0.0
        %5774 = vmatprep.subr.mxu0 0.0
        %5775 = vmatpush1.msra.mxu0 0.0
        %5776 = vmatprep.subr.mxu0 0.0
        %5777 = vmatpush1.msra.mxu0 0.0
        %5778 = vmatprep.subr.mxu0 0.0
        %5779 = vmatpush1.msra.mxu0 0.0
        %5780 = vmatprep.subr.mxu0 0.0
        %5781 = vmatpush1.msra.mxu0 0.0
        %5782 = vmatprep.subr.mxu0 0.0
        %5783 = vmatpush1.msra.mxu0 0.0
        %5784 = vmatprep.subr.mxu0 0.0
        %5785 = vmatpush1.msra.mxu0 0.0
        %5786 = vmatprep.subr.mxu0 0.0
        %5787 = vmatpush1.msra.mxu0 0.0
        %5788 = vmatprep.mubr.f32.mxu0 0.0
        %5789 = vmatmul.mubr.f32.gmra.mrb[0].mxu0 %v5704
        %v5790 = vpop.f32.mrb[0].mxu0
        %v5791 = vadd.f32 0.0, %v5790
        %v5792 = vpop.f32.mrb[0].mxu0
        %5793 = vmatprep.mubr.f32.mxu0 0.0
        %5794 = vmatmul.mubr.f32.gmra.mrb[0].mxu0 %v5706
        %v5795 = vpop.f32.mrb[0].mxu0
        %v5796 = vadd.f32 0.0, %v5795
        %v5797 = vpop.f32.mrb[0].mxu0
        %5798 = vmatprep.mubr.f32.mxu0 0.0
        %5799 = vmatmul.mubr.f32.gmra.mrb[0].mxu0 %v5708
        %v5800 = vpop.f32.mrb[0].mxu0
        %v5801 = vadd.f32 0.0, %v5800
        %v5802 = vpop.f32.mrb[0].mxu0
        %5803 = vmatprep.mubr.f32.mxu0 0.0
        %5804 = vmatmul.mubr.f32.gmra.mrb[0].mxu0 %v5710
        %v5805 = vpop.f32.mrb[0].mxu0
        %v5806 = vadd.f32 0.0, %v5805
        %v5807 = vpop.f32.mrb[0].mxu0
        %5808 = vmatprep.mubr.f32.mxu0 0.0
        %5809 = vmatmul.mubr.f32.gmra.mrb[0].mxu0 %v5713
        %v5810 = vpop.f32.mrb[0].mxu0
        %v5811 = vadd.f32 0.0, %v5810
        %v5812 = vpop.f32.mrb[0].mxu0
        %5813 = vmatprep.mubr.f32.mxu0 0.0
        %5814 = vmatmul.mubr.f32.gmra.mrb[0].mxu0 %v5716
        %v5815 = vpop.f32.mrb[0].mxu0
        %v5816 = vadd.f32 0.0, %v5815
        %v5817 = vpop.f32.mrb[0].mxu0
        %5818 = vmatprep.mubr.f32.mxu0 0.0
        %5819 = vmatmul.mubr.f32.gmra.mrb[0].mxu0 %v5719
        %v5820 = vpop.f32.mrb[0].mxu0
        %v5821 = vadd.f32 0.0, %v5820
        %v5822 = vpop.f32.mrb[0].mxu0
        %5823 = vmatprep.mubr.f32.mxu0 0.0
        %5824 = vmatmul.mubr.f32.gmra.mrb[0].mxu0 %v5722
        %v5825 = vpop.f32.mrb[0].mxu0
        %v5826 = vadd.f32 0.0, %v5825
        %v5827 = vpop.f32.mrb[0].mxu0
        %5828 = vdwg.mxu0
        %v5829 = vpack.c.bf16 %v5796, %v5791
        %v5830 = vpack.c.bf16 %v5806, %v5801
        %v5831 = vpack.c.bf16 %v5816, %v5811
        %v5832 = vpack.c.bf16 %v5826, %v5821
        %s5833 = scalar_lea.vmem %s19, 8
        %v5834 = vld [vmem:[%s5833] sm:$0xf]
        %v5835 = vld [vmem:[%s5833 + $0x4] sm:$0xf]
        %v5838 = vunpack.c.l.b16 %v5834
        %v5839 = vunpack.c.l.b16 %v5835
        %v5840 = vpack.c.b16 %v5839, %v5838
        %v5843 = vsel %vm1406, %v5829, 0
        %v5846 = vsel %vm1406, %v5830, 0
        %v5849 = vsel %vm1406, %v5831, 0
        %v5852 = vsel %vm1406, %v5832, 0
        %5854 = vmatprep.subr.bf16.mxu0 0
        %5855 = vmatpush1.bf16.msra.mxu0 %v5840
        %5856 = vmatprep.subr.bf16.mxu0 0
        %5857 = vmatpush1.bf16.msra.mxu0 0
        %5858 = vmatprep.subr.bf16.mxu0 0
        %5859 = vmatpush1.bf16.msra.mxu0 0
        %5860 = vmatprep.subr.bf16.mxu0 0
        %5861 = vmatpush1.bf16.msra.mxu0 0
        %5862 = vmatprep.subr.bf16.mxu0 0
        %5863 = vmatpush1.bf16.msra.mxu0 0
        %5864 = vmatprep.subr.bf16.mxu0 0
        %5865 = vmatpush1.bf16.msra.mxu0 0
        %5866 = vmatprep.subr.bf16.mxu0 0
        %5867 = vmatpush1.bf16.msra.mxu0 0
        %5868 = vmatprep.subr.bf16.mxu0 0
        %5869 = vmatpush1.bf16.msra.mxu0 0
        %5870 = vmatprep.subr.bf16.mxu0 0
        %5871 = vmatpush1.bf16.msra.mxu0 0
        %5872 = vmatprep.subr.bf16.mxu0 0
        %5873 = vmatpush1.bf16.msra.mxu0 0
        %5874 = vmatprep.subr.bf16.mxu0 0
        %5875 = vmatpush1.bf16.msra.mxu0 0
        %5876 = vmatprep.subr.bf16.mxu0 0
        %5877 = vmatpush1.bf16.msra.mxu0 0
        %5878 = vmatprep.subr.bf16.mxu0 0
        %5879 = vmatpush1.bf16.msra.mxu0 0
        %5880 = vmatprep.subr.bf16.mxu0 0
        %5881 = vmatpush1.bf16.msra.mxu0 0
        %5882 = vmatprep.subr.bf16.mxu0 0
        %5883 = vmatpush1.bf16.msra.mxu0 0
        %5884 = vmatprep.subr.bf16.mxu0 0
        %5885 = vmatpush1.bf16.msra.mxu0 0
        %5886 = vmatprep.mubr.bf16.mxu0 0
        %5887 = vmatmul.mubr.bf16.gmra.mrb[0].mxu0 %v5843
        %v5888 = vpop.f32.mrb[0].mxu0
        %v5889 = vadd.f32 0.0, %v5888
        %v5890 = vpop.f32.mrb[0].mxu0
        %v5891 = vpop.f32.mrb[0].mxu0
        %v5892 = vadd.f32 0.0, %v5891
        %v5893 = vpop.f32.mrb[0].mxu0
        %5894 = vmatprep.mubr.bf16.mxu0 0
        %5895 = vmatmul.mubr.bf16.gmra.mrb[0].mxu0 %v5846
        %v5896 = vpop.f32.mrb[0].mxu0
        %v5897 = vadd.f32 0.0, %v5896
        %v5898 = vpop.f32.mrb[0].mxu0
        %v5899 = vpop.f32.mrb[0].mxu0
        %v5900 = vadd.f32 0.0, %v5899
        %v5901 = vpop.f32.mrb[0].mxu0
        %5902 = vmatprep.mubr.bf16.mxu0 0
        %5903 = vmatmul.mubr.bf16.gmra.mrb[0].mxu0 %v5849
        %v5904 = vpop.f32.mrb[0].mxu0
        %v5905 = vadd.f32 0.0, %v5904
        %v5906 = vpop.f32.mrb[0].mxu0
        %v5907 = vpop.f32.mrb[0].mxu0
        %v5908 = vadd.f32 0.0, %v5907
        %v5909 = vpop.f32.mrb[0].mxu0
        %5910 = vmatprep.mubr.bf16.mxu0 0
        %5911 = vmatmul.mubr.bf16.gmra.mrb[0].mxu0 %v5852
        %v5912 = vpop.f32.mrb[0].mxu0
        %v5913 = vadd.f32 0.0, %v5912
        %v5914 = vpop.f32.mrb[0].mxu0
        %v5915 = vpop.f32.mrb[0].mxu0
        %v5916 = vadd.f32 0.0, %v5915
        %v5917 = vpop.f32.mrb[0].mxu0
        %5918 = vdwg.mxu0
        %v5921 = vunpack.c.l.b16 %v5702
        %v5922 = vunpack.c.l.b16 %v5703
        %v5923 = vpack.c.b16 %v5922, %v5921
        %v5926 = vsel %vm1406, %v5698, 0
        %v5929 = vsel %vm1406, %v5699, 0
        %v5932 = vsel %vm1406, %v5700, 0
        %v5935 = vsel %vm1406, %v5701, 0
        %5937 = vmatprep.subr.bf16.mxu0 0
        %5938 = vmatpush1.bf16.msra.mxu0 %v5923
        %5939 = vmatprep.subr.bf16.mxu0 0
        %5940 = vmatpush1.bf16.msra.mxu0 0
        %5941 = vmatprep.subr.bf16.mxu0 0
        %5942 = vmatpush1.bf16.msra.mxu0 0
        %5943 = vmatprep.subr.bf16.mxu0 0
        %5944 = vmatpush1.bf16.msra.mxu0 0
        %5945 = vmatprep.subr.bf16.mxu0 0
        %5946 = vmatpush1.bf16.msra.mxu0 0
        %5947 = vmatprep.subr.bf16.mxu0 0
        %5948 = vmatpush1.bf16.msra.mxu0 0
        %5949 = vmatprep.subr.bf16.mxu0 0
        %5950 = vmatpush1.bf16.msra.mxu0 0
        %5951 = vmatprep.subr.bf16.mxu0 0
        %5952 = vmatpush1.bf16.msra.mxu0 0
        %5953 = vmatprep.subr.bf16.mxu0 0
        %5954 = vmatpush1.bf16.msra.mxu0 0
        %5955 = vmatprep.subr.bf16.mxu0 0
        %5956 = vmatpush1.bf16.msra.mxu0 0
        %5957 = vmatprep.subr.bf16.mxu0 0
        %5958 = vmatpush1.bf16.msra.mxu0 0
        %5959 = vmatprep.subr.bf16.mxu0 0
        %5960 = vmatpush1.bf16.msra.mxu0 0
        %5961 = vmatprep.subr.bf16.mxu0 0
        %5962 = vmatpush1.bf16.msra.mxu0 0
        %5963 = vmatprep.subr.bf16.mxu0 0
        %5964 = vmatpush1.bf16.msra.mxu0 0
        %5965 = vmatprep.subr.bf16.mxu0 0
        %5966 = vmatpush1.bf16.msra.mxu0 0
        %5967 = vmatprep.subr.bf16.mxu0 0
        %5968 = vmatpush1.bf16.msra.mxu0 0
        %5969 = vmatprep.mubr.bf16.mxu0 0
        %5970 = vmatmul.mubr.bf16.gmra.mrb[0].mxu0 %v5926
        %v5971 = vpop.f32.mrb[0].mxu0
        %v5972 = vadd.f32 %v5889, %v5971
        %v5973 = vpop.f32.mrb[0].mxu0
        %v5974 = vpop.f32.mrb[0].mxu0
        %v5975 = vadd.f32 %v5892, %v5974
        %v5976 = vpop.f32.mrb[0].mxu0
        %5977 = vmatprep.mubr.bf16.mxu0 0
        %5978 = vmatmul.mubr.bf16.gmra.mrb[0].mxu0 %v5929
        %v5979 = vpop.f32.mrb[0].mxu0
        %v5980 = vadd.f32 %v5897, %v5979
        %v5981 = vpop.f32.mrb[0].mxu0
        %v5982 = vpop.f32.mrb[0].mxu0
        %v5983 = vadd.f32 %v5900, %v5982
        %v5984 = vpop.f32.mrb[0].mxu0
        %5985 = vmatprep.mubr.bf16.mxu0 0
        %5986 = vmatmul.mubr.bf16.gmra.mrb[0].mxu0 %v5932
        %v5987 = vpop.f32.mrb[0].mxu0
        %v5988 = vadd.f32 %v5905, %v5987
        %v5989 = vpop.f32.mrb[0].mxu0
        %v5990 = vpop.f32.mrb[0].mxu0
        %v5991 = vadd.f32 %v5908, %v5990
        %v5992 = vpop.f32.mrb[0].mxu0
        %5993 = vmatprep.mubr.bf16.mxu0 0
        %5994 = vmatmul.mubr.bf16.gmra.mrb[0].mxu0 %v5935
        %v5995 = vpop.f32.mrb[0].mxu0
        %v5996 = vadd.f32 %v5913, %v5995
        %v5997 = vpop.f32.mrb[0].mxu0
        %v5998 = vpop.f32.mrb[0].mxu0
        %v5999 = vadd.f32 %v5916, %v5998
        %v6000 = vpop.f32.mrb[0].mxu0
        %6001 = vdwg.mxu0
        %v6002 = vsel %vm1234, %v3187, 0
        %v6004 = vsel %vm1234, %v4497, 0
        %v6006 = vsel %vm1234, %v5002, 0
        %v6008 = vsel %vm1234, %v5003, 0
        %v6011 = vsel %vm1234, %v5569, 0
        %v6014 = vsel %vm1234, %v5570, 0
        %v6017 = vsel %vm1234, %v5571, 0
        %v6020 = vsel %vm1234, %v5572, 0
        %6022 = vmatprep.subr.mxu0 0.0
        %6023 = vmatpush1.msra.mxu0 %v5533
        %6024 = vmatprep.subr.mxu0 0.0
        %6025 = vmatpush1.msra.mxu0 %v5534
        %6026 = vmatprep.subr.mxu0 0.0
        %6027 = vmatpush1.msra.mxu0 %v5535
        %6028 = vmatprep.subr.mxu0 0.0
        %6029 = vmatpush1.msra.mxu0 %v5536
        %6030 = vmatprep.subr.mxu0 0.0
        %6031 = vmatpush1.msra.mxu0 0.0
        %6032 = vmatprep.subr.mxu0 0.0
        %6033 = vmatpush1.msra.mxu0 0.0
        %6034 = vmatprep.subr.mxu0 0.0
        %6035 = vmatpush1.msra.mxu0 0.0
        %6036 = vmatprep.subr.mxu0 0.0
        %6037 = vmatpush1.msra.mxu0 0.0
        %6038 = vmatprep.subr.mxu0 0.0
        %6039 = vmatpush1.msra.mxu0 0.0
        %6040 = vmatprep.subr.mxu0 0.0
        %6041 = vmatpush1.msra.mxu0 0.0
        %6042 = vmatprep.subr.mxu0 0.0
        %6043 = vmatpush1.msra.mxu0 0.0
        %6044 = vmatprep.subr.mxu0 0.0
        %6045 = vmatpush1.msra.mxu0 0.0
        %6046 = vmatprep.subr.mxu0 0.0
        %6047 = vmatpush1.msra.mxu0 0.0
        %6048 = vmatprep.subr.mxu0 0.0
        %6049 = vmatpush1.msra.mxu0 0.0
        %6050 = vmatprep.subr.mxu0 0.0
        %6051 = vmatpush1.msra.mxu0 0.0
        %6052 = vmatprep.subr.mxu0 0.0
        %6053 = vmatpush1.msra.mxu0 0.0
        %6054 = vmatprep.subr.mxu0 0.0
        %6055 = vmatpush1.msra.mxu0 0.0
        %6056 = vmatprep.subr.mxu0 0.0
        %6057 = vmatpush1.msra.mxu0 0.0
        %6058 = vmatprep.subr.mxu0 0.0
        %6059 = vmatpush1.msra.mxu0 0.0
        %6060 = vmatprep.subr.mxu0 0.0
        %6061 = vmatpush1.msra.mxu0 0.0
        %6062 = vmatprep.subr.mxu0 0.0
        %6063 = vmatpush1.msra.mxu0 0.0
        %6064 = vmatprep.subr.mxu0 0.0
        %6065 = vmatpush1.msra.mxu0 0.0
        %6066 = vmatprep.subr.mxu0 0.0
        %6067 = vmatpush1.msra.mxu0 0.0
        %6068 = vmatprep.subr.mxu0 0.0
        %6069 = vmatpush1.msra.mxu0 0.0
        %6070 = vmatprep.subr.mxu0 0.0
        %6071 = vmatpush1.msra.mxu0 0.0
        %6072 = vmatprep.subr.mxu0 0.0
        %6073 = vmatpush1.msra.mxu0 0.0
        %6074 = vmatprep.subr.mxu0 0.0
        %6075 = vmatpush1.msra.mxu0 0.0
        %6076 = vmatprep.subr.mxu0 0.0
        %6077 = vmatpush1.msra.mxu0 0.0
        %6078 = vmatprep.subr.mxu0 0.0
        %6079 = vmatpush1.msra.mxu0 0.0
        %6080 = vmatprep.subr.mxu0 0.0
        %6081 = vmatpush1.msra.mxu0 0.0
        %6082 = vmatprep.subr.mxu0 0.0
        %6083 = vmatpush1.msra.mxu0 0.0
        %6084 = vmatprep.subr.mxu0 0.0
        %6085 = vmatpush1.msra.mxu0 0.0
        %6086 = vmatprep.mubr.f32.mxu0 0.0
        %6087 = vmatmul.mubr.f32.gmra.mrb[0].mxu0 %v6002
        %v6088 = vpop.f32.mrb[0].mxu0
        %v6089 = vadd.f32 0.0, %v6088
        %v6090 = vpop.f32.mrb[0].mxu0
        %6091 = vmatprep.mubr.f32.mxu0 0.0
        %6092 = vmatmul.mubr.f32.gmra.mrb[0].mxu0 %v6004
        %v6093 = vpop.f32.mrb[0].mxu0
        %v6094 = vadd.f32 0.0, %v6093
        %v6095 = vpop.f32.mrb[0].mxu0
        %6096 = vmatprep.mubr.f32.mxu0 0.0
        %6097 = vmatmul.mubr.f32.gmra.mrb[0].mxu0 %v6006
        %v6098 = vpop.f32.mrb[0].mxu0
        %v6099 = vadd.f32 0.0, %v6098
        %v6100 = vpop.f32.mrb[0].mxu0
        %6101 = vmatprep.mubr.f32.mxu0 0.0
        %6102 = vmatmul.mubr.f32.gmra.mrb[0].mxu0 %v6008
        %v6103 = vpop.f32.mrb[0].mxu0
        %v6104 = vadd.f32 0.0, %v6103
        %v6105 = vpop.f32.mrb[0].mxu0
        %6106 = vmatprep.mubr.f32.mxu0 0.0
        %6107 = vmatmul.mubr.f32.gmra.mrb[0].mxu0 %v6011
        %v6108 = vpop.f32.mrb[0].mxu0
        %v6109 = vadd.f32 0.0, %v6108
        %v6110 = vpop.f32.mrb[0].mxu0
        %6111 = vmatprep.mubr.f32.mxu0 0.0
        %6112 = vmatmul.mubr.f32.gmra.mrb[0].mxu0 %v6014
        %v6113 = vpop.f32.mrb[0].mxu0
        %v6114 = vadd.f32 0.0, %v6113
        %v6115 = vpop.f32.mrb[0].mxu0
        %6116 = vmatprep.mubr.f32.mxu0 0.0
        %6117 = vmatmul.mubr.f32.gmra.mrb[0].mxu0 %v6017
        %v6118 = vpop.f32.mrb[0].mxu0
        %v6119 = vadd.f32 0.0, %v6118
        %v6120 = vpop.f32.mrb[0].mxu0
        %6121 = vmatprep.mubr.f32.mxu0 0.0
        %6122 = vmatmul.mubr.f32.gmra.mrb[0].mxu0 %v6020
        %v6123 = vpop.f32.mrb[0].mxu0
        %v6124 = vadd.f32 0.0, %v6123
        %v6125 = vpop.f32.mrb[0].mxu0
        %6126 = vdwg.mxu0
        %v6127 = vpack.c.bf16 %v6094, %v6089
        %v6128 = vpack.c.bf16 %v6104, %v6099
        %v6129 = vpack.c.bf16 %v6114, %v6109
        %v6130 = vpack.c.bf16 %v6124, %v6119
        %s6131 = scalar_lea.vmem %s19, 16
        %v6132 = vld [vmem:[%s6131] sm:$0xf]
        %v6133 = vld [vmem:[%s6131 + $0x4] sm:$0xf]
        %v6136 = vunpack.c.l.b16 %v6132
        %v6137 = vunpack.c.l.b16 %v6133
        %v6138 = vpack.c.b16 %v6137, %v6136
        %v6141 = vsel %vm1406, %v6127, 0
        %v6144 = vsel %vm1406, %v6128, 0
        %v6147 = vsel %vm1406, %v6129, 0
        %v6150 = vsel %vm1406, %v6130, 0
        %6152 = vmatprep.subr.bf16.mxu0 0
        %6153 = vmatpush1.bf16.msra.mxu0 %v6138
        %6154 = vmatprep.subr.bf16.mxu0 0
        %6155 = vmatpush1.bf16.msra.mxu0 0
        %6156 = vmatprep.subr.bf16.mxu0 0
        %6157 = vmatpush1.bf16.msra.mxu0 0
        %6158 = vmatprep.subr.bf16.mxu0 0
        %6159 = vmatpush1.bf16.msra.mxu0 0
        %6160 = vmatprep.subr.bf16.mxu0 0
        %6161 = vmatpush1.bf16.msra.mxu0 0
        %6162 = vmatprep.subr.bf16.mxu0 0
        %6163 = vmatpush1.bf16.msra.mxu0 0
        %6164 = vmatprep.subr.bf16.mxu0 0
        %6165 = vmatpush1.bf16.msra.mxu0 0
        %6166 = vmatprep.subr.bf16.mxu0 0
        %6167 = vmatpush1.bf16.msra.mxu0 0
        %6168 = vmatprep.subr.bf16.mxu0 0
        %6169 = vmatpush1.bf16.msra.mxu0 0
        %6170 = vmatprep.subr.bf16.mxu0 0
        %6171 = vmatpush1.bf16.msra.mxu0 0
        %6172 = vmatprep.subr.bf16.mxu0 0
        %6173 = vmatpush1.bf16.msra.mxu0 0
        %6174 = vmatprep.subr.bf16.mxu0 0
        %6175 = vmatpush1.bf16.msra.mxu0 0
        %6176 = vmatprep.subr.bf16.mxu0 0
        %6177 = vmatpush1.bf16.msra.mxu0 0
        %6178 = vmatprep.subr.bf16.mxu0 0
        %6179 = vmatpush1.bf16.msra.mxu0 0
        %6180 = vmatprep.subr.bf16.mxu0 0
        %6181 = vmatpush1.bf16.msra.mxu0 0
        %6182 = vmatprep.subr.bf16.mxu0 0
        %6183 = vmatpush1.bf16.msra.mxu0 0
        %6184 = vmatprep.mubr.bf16.mxu0 0
        %6185 = vmatmul.mubr.bf16.gmra.mrb[0].mxu0 %v6141
        %v6186 = vpop.f32.mrb[0].mxu0
        %v6187 = vadd.f32 0.0, %v6186
        %v6188 = vpop.f32.mrb[0].mxu0
        %v6189 = vpop.f32.mrb[0].mxu0
        %v6190 = vadd.f32 0.0, %v6189
        %v6191 = vpop.f32.mrb[0].mxu0
        %6192 = vmatprep.mubr.bf16.mxu0 0
        %6193 = vmatmul.mubr.bf16.gmra.mrb[0].mxu0 %v6144
        %v6194 = vpop.f32.mrb[0].mxu0
        %v6195 = vadd.f32 0.0, %v6194
        %v6196 = vpop.f32.mrb[0].mxu0
        %v6197 = vpop.f32.mrb[0].mxu0
        %v6198 = vadd.f32 0.0, %v6197
        %v6199 = vpop.f32.mrb[0].mxu0
        %6200 = vmatprep.mubr.bf16.mxu0 0
        %6201 = vmatmul.mubr.bf16.gmra.mrb[0].mxu0 %v6147
        %v6202 = vpop.f32.mrb[0].mxu0
        %v6203 = vadd.f32 0.0, %v6202
        %v6204 = vpop.f32.mrb[0].mxu0
        %v6205 = vpop.f32.mrb[0].mxu0
        %v6206 = vadd.f32 0.0, %v6205
        %v6207 = vpop.f32.mrb[0].mxu0
        %6208 = vmatprep.mubr.bf16.mxu0 0
        %6209 = vmatmul.mubr.bf16.gmra.mrb[0].mxu0 %v6150
        %v6210 = vpop.f32.mrb[0].mxu0
        %v6211 = vadd.f32 0.0, %v6210
        %v6212 = vpop.f32.mrb[0].mxu0
        %v6213 = vpop.f32.mrb[0].mxu0
        %v6214 = vadd.f32 0.0, %v6213
        %v6215 = vpop.f32.mrb[0].mxu0
        %6216 = vdwg.mxu0
        %v6217 = vadd.f32 %v5972, %v6187
        %v6218 = vadd.f32 %v5975, %v6190
        %v6219 = vadd.f32 %v5980, %v6195
        %v6220 = vadd.f32 %v5983, %v6198
        %v6221 = vadd.f32 %v5988, %v6203
        %v6222 = vadd.f32 %v5991, %v6206
        %v6223 = vadd.f32 %v5996, %v6211
        %v6224 = vadd.f32 %v5999, %v6214
        %v6225 = vld [vmem:[#allocation2] sm:$0x1]
        %v6227 = vlaneseq
        %v6228 = vshrl.u32 %v6227, 7
        %v6229 = vsub.s32 0, %v6228
        %v6230 = vrot.slane %v6225, %v6229
        %v6232 = vadd.f32 %v6217, %v6230
        %v6233 = vadd.f32 %v6218, %v6230
        %v6234 = vadd.f32 %v6219, %v6230
        %v6235 = vadd.f32 %v6220, %v6230
        %v6236 = vadd.f32 %v6221, %v6230
        %v6237 = vadd.f32 %v6222, %v6230
        %v6238 = vadd.f32 %v6223, %v6230
        %v6239 = vadd.f32 %v6224, %v6230
        %v6240 = vsub.f32 0.0, %v6232
        %v6241 = vsub.f32 0.0, %v6233
        %v6242 = vsub.f32 0.0, %v6234
        %v6243 = vsub.f32 0.0, %v6235
        %v6244 = vsub.f32 0.0, %v6236
        %v6245 = vsub.f32 0.0, %v6237
        %v6246 = vsub.f32 0.0, %v6238
        %v6247 = vsub.f32 0.0, %v6239
        %v6248 = vmul.f32 %v6240, 1.442695
        %v6249 = vpow.pop %v6248
        %v6250 = vmul.f32 %v6241, 1.442695
        %v6251 = vpow.pop %v6250
        %v6252 = vmul.f32 %v6242, 1.442695
        %v6253 = vpow.pop %v6252
        %v6254 = vmul.f32 %v6243, 1.442695
        %v6255 = vpow.pop %v6254
        %v6256 = vmul.f32 %v6244, 1.442695
        %v6257 = vpow.pop %v6256
        %v6258 = vmul.f32 %v6245, 1.442695
        %v6259 = vpow.pop %v6258
        %v6260 = vmul.f32 %v6246, 1.442695
        %v6261 = vpow.pop %v6260
        %v6262 = vmul.f32 %v6247, 1.442695
        %v6263 = vpow.pop %v6262
        %v6264 = vadd.f32 %v6249, 1.0
        %v6265 = vadd.f32 %v6251, 1.0
        %v6266 = vadd.f32 %v6253, 1.0
        %v6267 = vadd.f32 %v6255, 1.0
        %v6268 = vadd.f32 %v6257, 1.0
        %v6269 = vadd.f32 %v6259, 1.0
        %v6270 = vadd.f32 %v6261, 1.0
        %v6271 = vadd.f32 %v6263, 1.0
        %v6272 = vrcp.pop %v6264
        %v6273 = vmul.f32 1.0, %v6272
        %v6274 = vrcp.pop %v6265
        %v6275 = vmul.f32 1.0, %v6274
        %v6276 = vrcp.pop %v6266
        %v6277 = vmul.f32 1.0, %v6276
        %v6278 = vrcp.pop %v6267
        %v6279 = vmul.f32 1.0, %v6278
        %v6280 = vrcp.pop %v6268
        %v6281 = vmul.f32 1.0, %v6280
        %v6282 = vrcp.pop %v6269
        %v6283 = vmul.f32 1.0, %v6282
        %v6284 = vrcp.pop %v6270
        %v6285 = vmul.f32 1.0, %v6284
        %v6286 = vrcp.pop %v6271
        %v6287 = vmul.f32 1.0, %v6286
        %vm6288 = vcmp.lt.s32.totalorder %v684, 63
        %vm6289 = vcmp.lt.s32.totalorder %v685, 63
        %vm6290 = vcmp.lt.s32.totalorder %v686, 63
        %vm6291 = vcmp.lt.s32.totalorder %v687, 63
        %vm6292 = vcmp.lt.s32.totalorder %v5537, 63
        %vm6293 = vcmp.lt.s32.totalorder %v5538, 63
        %vm6294 = vcmp.lt.s32.totalorder %v5539, 63
        %vm6295 = vcmp.lt.s32.totalorder %v5540, 63
        %v6296 = vsel %vm6288, %v6273, 0.0
        %v6297 = vsel %vm6289, %v6275, 0.0
        %v6298 = vsel %vm6290, %v6277, 0.0
        %v6299 = vsel %vm6291, %v6279, 0.0
        %v6300 = vsel %vm6292, %v6281, 0.0
        %v6301 = vsel %vm6293, %v6283, 0.0
        %v6302 = vsel %vm6294, %v6285, 0.0
        %v6303 = vsel %vm6295, %v6287, 0.0
        %6304 = vst.msk [vmem:[%s673] sm:$0xff] %vm928, %v6296
        %6305 = vst.msk [vmem:[%s673 + $0x8] sm:$0xff] %vm928, %v6297
        %6306 = vst.msk [vmem:[%s673 + $0x10] sm:$0xff] %vm928, %v6298
        %6307 = vst.msk [vmem:[%s673 + $0x18] sm:$0xff] %vm928, %v6299
        %6308 = vst.msk [vmem:[%s673 + $0x20] sm:$0xff] %vm928, %v6300
        %6309 = vst.msk [vmem:[%s673 + $0x28] sm:$0xff] %vm928, %v6301
        %6310 = vst.msk [vmem:[%s673 + $0x30] sm:$0xff] %vm928, %v6302
        %6311 = vst.msk [vmem:[%s673 + $0x38] sm:$0xff] %vm928, %v6303
        %p6312 = scmp.lt.s32.totalorder %s35, 1
        %s6313 = scalar_select %p6312, %s35, 1
        %s6314 = smul.addr %s6313, 8
        %s6315 = smul.addr %s6314, 8
        %s6316 = scalar_lea.vmem %s21, %s6315
        // Predicated region
        $region109: #{autoencoder_forward.1} parent=103 // pred_check
          %p6317 = pneg %p499
        $region110: #{autoencoder_forward.1} parent=103 // pred_check_branch
          %6319 = sbr.rel (%p6317) target = $region112
        $region111: #{autoencoder_forward.1} parent=103 // pred_region
          _
        $region112: #{autoencoder_forward.1} parent=103 // pred_fallthru
          _
      $region104: #{autoencoder_forward.1} parent=5 // pred_fallthru
        _
      %p6320 = scmp.le.s32.totalorder 2, %s30
      // Predicated region
      $region113: #{autoencoder_forward.1} parent=5 // pred_check
        %p6321 = pneg %p6320
      $region114: #{autoencoder_forward.1} parent=5 // pred_check_branch
        %6323 = sbr.rel (%p6321) target = $region116
      $region115: #{autoencoder_forward.1} parent=5 // pred_region
        %s6324 = ssub.s32 %s30, 2
        // Predicated region
        $region117: #{autoencoder_forward.1} parent=115 // pred_check
          %p6325 = pneg %p505
        $region118: #{autoencoder_forward.1} parent=115 // pred_check_branch
          %6327 = sbr.rel (%p6325) target = $region120
        $region119: #{autoencoder_forward.1} parent=115 // pred_region
          %p6328 = scmp.lt.s32.totalorder %s36, 1
          %s6329 = scalar_select %p6328, %s36, 1
          %s6330 = smul.addr %s6329, 8
          %s6331 = smul.addr %s6330, 8
          %s6332 = scalar_lea.vmem %s21, %s6331
        $region120: #{autoencoder_forward.1} parent=115 // pred_fallthru
          _
      $region116: #{autoencoder_forward.1} parent=5 // pred_fallthru
        _
    $region6: #{autoencoder_forward.1} parent=1 // loop_footer
      %s34 = sadd.s32 1, %s30
    $region7: #{autoencoder_forward.1} parent=1 // loop_footer_branch
      %29 = sbr.rel target = $region3
    $region8: #{autoencoder_forward.1} parent=1 // loop_exit
      _
    %6333 = vsyncpa [#allocation4], 1
    %s6334 = scalar_lea.sflag [#allocation4], 1
    %6335 = vsyncpa %s6334, 1

</llo_original>
